<compile_context>
chip_gen: v7x
topology: tpu7x:2x2x1
jax: 0.10.0
libtpu: 0.0.40
codegen_flags: <defaults>
</compile_context>

<pallas_src>
import jax
import jax.numpy as jnp
import numpy as np
from jax import lax
from jax.experimental import pallas as pl
from jax.experimental.pallas import tpu as pltpu

TIME_SLOT = 10
DEPTH = 8
NUM_CLASS = 4
CHANNEL = 1
HALF = TIME_SLOT // 2  # GRU5 hidden size per direction


# ----------------------------------------------------------------------------
# Fused forward kernel
# ----------------------------------------------------------------------------
def fused_forward_kernel(x_ref, w1ih_ref, w1hh_ref, b1ih_ref, b1hh_ref,
                         wih5_ref, whh5_ref, bih5_ref, bhh5_ref,
                         wd_ref, bd_ref, out_ref):
    """Whole PModelHHJ84 forward in one kernel.

    x_ref:    (B, T)               input with the size-1 channel squeezed
    w1ih_ref: (1, 3*H1)            GRU1 input weights  [r|z|n]
    w1hh_ref: (H1, 3*H1)           GRU1 hidden weights
    b1ih/b1hh:(1, 3*H1)            GRU1 biases
    wih5_ref: (DEPTH, 2*H1, 6*H5)  fused fwd+bwd GRU5 input weights, gate-major
                                   columns [r_f|r_b|z_f|z_b|n_f|n_b]; rows 0:H1
                                   act on cur, rows H1:2*H1 on block-reversed cur
    whh5_ref: (DEPTH, 2*H5, 6*H5)  block-diagonal fused recurrent weights
    bih5/bhh5:(DEPTH, 1, 6*H5)     fused biases (gate-major)
    wd_ref:   (H1, C), bd_ref: (1, C)  folded Dense1000->Dense64->CLS affine map
    out_ref:  (B*T, C)
    """
    B, T = x_ref.shape
    H1 = w1hh_ref.shape[0]            # 10
    HH = whh5_ref.shape[1]            # 10 = fused (fwd|bwd) GRU5 hidden width
    H5 = HH // 2                      # 5
    GW = whh5_ref.shape[2]            # 30 = fused gate width
    depth = wih5_ref.shape[0]
    BT = B * T

    x = x_ref[...]                    # (B, T)

    # ------------------ GRU1: recur over T, batch = B ------------------------
    w1hh = w1hh_ref[...]
    # Hoisted broadcasts (JAX does not CSE broadcast_in_dim inside the loop).
    w1ih_full = jnp.broadcast_to(w1ih_ref[...], (B, 3 * H1))
    b1ih_full = jnp.broadcast_to(b1ih_ref[...], (B, 3 * H1))
    b1hh_full = jnp.broadcast_to(b1hh_ref[...], (B, 3 * H1))

    # Batch-major re-ordering of GRU1 outputs (row b*T + t = h_t[b]) done with
    # exact one-hot selection matmuls instead of masked single-row VMEM stores:
    #   cur += sel_t @ h_t   with   sel_t[i, b] = (i == b*T + t).
    ri = lax.broadcasted_iota(jnp.int32, (BT, B), 0)
    ci = lax.broadcasted_iota(jnp.int32, (BT, B), 1)
    tgt0 = ci * T

    h = jnp.zeros((B, H1), jnp.float32)            # PyTorch zero initial state
    cur = jnp.zeros((BT, H1), jnp.float32)
    for t in range(T):
        # K=1 input projection on the VPU (broadcast-multiply), not the MXU.
        gx = x[:, t:t + 1] * w1ih_full + b1ih_full
        gh = jnp.dot(h, w1hh, preferred_element_type=jnp.float32) + b1hh_full
        rz = jax.nn.sigmoid(gx[:, 0:2 * H1] + gh[:, 0:2 * H1])  # one EUP dispatch
        r = rz[:, 0:H1]
        z = rz[:, H1:2 * H1]
        n = jnp.tanh(gx[:, 2 * H1:] + r * gh[:, 2 * H1:])
        h = (1.0 - z) * n + z * h
        sel = (ri == tgt0 + t).astype(jnp.float32)               # (BT, B) one-hot
        cur = cur + jnp.dot(sel, h, preferred_element_type=jnp.float32)

    # ------------- GRU5: depth layers, fwd+bwd fused per layer ----------------
    # cur is (B*T, H1) batch-major; GRU5 recurs over the B row-blocks with T rows
    # as its batch, running the forward (blocks 0..B-1) and backward (B-1..0)
    # directions as one block-diagonal chain.
    for layer in range(depth):
        # Block-reversed copy (static, 8-sublane-aligned slices; once per layer).
        cur_rev = jnp.concatenate(
            [cur[(B - 1 - s) * T:(B - s) * T, :] for s in range(B)], axis=0)
        x_aug = jnp.concatenate([cur, cur_rev], axis=1)           # (BT, 2*H1)
        # One fused input projection for both directions and all B*T positions:
        # row-block s of `pre` holds [r_f|r_b|z_f|z_b|n_f|n_b] pre-activations,
        # fwd gates from cur block s and bwd gates from cur block B-1-s.
        pre = (jnp.dot(x_aug, wih5_ref[layer], preferred_element_type=jnp.float32)
               + jnp.broadcast_to(bih5_ref[layer], (BT, GW)))
        whh = whh5_ref[layer]                                     # (HH, GW) blk-diag
        bhh_full = jnp.broadcast_to(bhh5_ref[layer], (T, GW))     # hoisted

        hd = jnp.zeros((T, HH), jnp.float32)                      # [h_fwd | h_bwd]
        outs_f = [None] * B
        outs_b = [None] * B
        for s in range(B):
            gx = pre[s * T:(s + 1) * T, :]                        # (T, GW), aligned
            gh = jnp.dot(hd, whh, preferred_element_type=jnp.float32) + bhh_full
            # Single sigmoid over the contiguous r|z lanes of both directions.
            rz = jax.nn.sigmoid(gx[:, 0:2 * HH] + gh[:, 0:2 * HH])
            r = rz[:, 0:HH]
            z = rz[:, HH:2 * HH]
            # r (lanes 0:HH) multiplies gh_n (lanes 2*HH:3*HH); the single lane
            # re-alignment this needs lands in the otherwise idle XLU slot.
            n = jnp.tanh(gx[:, 2 * HH:] + r * gh[:, 2 * HH:])
            hd = (1.0 - z) * n + z * hd
            outs_f[s] = hd[:, 0:H5]             # fwd output at sequence position s
            outs_b[B - 1 - s] = hd[:, H5:HH]    # bwd output at position B-1-s
        cur = jnp.concatenate(
            [jnp.concatenate([outs_f[p], outs_b[p]], axis=1) for p in range(B)],
            axis=0)                                               # (BT, HH)

    # ---- Dense1000 -> Dropout(eval identity) -> Dense64 -> CLS, pre-folded ----
    # TODO(synk): training-mode stochastic Dropout(0.5) would prevent this fold;
    # at inference it is an identity, so the affine chain collapses exactly.
    out_ref[...] = (jnp.dot(cur, wd_ref[...], preferred_element_type=jnp.float32)
                    + jnp.broadcast_to(bd_ref[...], (BT, out_ref.shape[1])))


# ----------------------------------------------------------------------------
# Wrapper
# ----------------------------------------------------------------------------
def _fused_forward(x2d, params):
    B, T = x2d.shape
    g1, g5, dn = params["gru1"], params["gru5"], params["dense"]
    args = (x2d, g1["wih"], g1["whh"], g1["bih"], g1["bhh"],
            g5["wih"], g5["whh"], g5["bih"], g5["bhh"],
            dn["wd"], dn["bd"])
    return pl.pallas_call(
        fused_forward_kernel,
        out_shape=jax.ShapeDtypeStruct((B * T, NUM_CLASS), jnp.float32),
        in_specs=[pl.BlockSpec(memory_space=pltpu.MemorySpace.VMEM)] * len(args),
        out_specs=pl.BlockSpec(memory_space=pltpu.MemorySpace.VMEM),
    )(*args)


@jax.jit
def model_forward(x, params):
    B, T, C = x.shape
    assert C == CHANNEL == 1
    x2d = x[:, :, 0]                               # squeeze the size-1 channel
    out = _fused_forward(x2d, params)              # (B*T, NUM_CLASS)
    return out.reshape(B, T, NUM_CLASS)


# ----------------------------------------------------------------------------
# Parameter construction (torch-shaped init, then repacked for the kernel)
# ----------------------------------------------------------------------------
def _make_gru_dir_params(key, in_size, hidden):
    k = 1.0 / np.sqrt(hidden)
    ks = jax.random.split(key, 4)
    w_ih = jax.random.uniform(ks[0], (3 * hidden, in_size), jnp.float32, -k, k)
    w_hh = jax.random.uniform(ks[1], (3 * hidden, hidden), jnp.float32, -k, k)
    b_ih = jax.random.uniform(ks[2], (3 * hidden,), jnp.float32, -k, k)
    b_hh = jax.random.uniform(ks[3], (3 * hidden,), jnp.float32, -k, k)
    return dict(
        wih=jnp.transpose(w_ih),                   # (in, 3H), gate order [r|z|n]
        whh=jnp.transpose(w_hh),                   # (H, 3H)
        bih=b_ih.reshape(1, 3 * hidden),
        bhh=b_hh.reshape(1, 3 * hidden),
    )


def _fuse_block_gate_major(wf, wb):
    """(Kf,3H) fwd + (Kb,3H) bwd -> (Kf+Kb, 6H) block matrix, gate-major columns
    [r_f|r_b|z_f|z_b|n_f|n_b]; fwd operand rows on top, bwd operand rows below."""
    H = wf.shape[1] // 3
    zf = jnp.zeros((wf.shape[0], H), jnp.float32)
    zb = jnp.zeros((wb.shape[0], H), jnp.float32)
    top = jnp.concatenate([wf[:, 0:H], zf, wf[:, H:2 * H], zf, wf[:, 2 * H:], zf], axis=1)
    bot = jnp.concatenate([zb, wb[:, 0:H], zb, wb[:, H:2 * H], zb, wb[:, 2 * H:]], axis=1)
    return jnp.concatenate([top, bot], axis=0)


def _fuse_bias_gate_major(bf, bb):
    H = bf.shape[1] // 3
    return jnp.concatenate([bf[:, 0:H], bb[:, 0:H], bf[:, H:2 * H],
                            bb[:, H:2 * H], bf[:, 2 * H:], bb[:, 2 * H:]], axis=1)


def _make_linear_params(key, in_f, out_f):
    k = 1.0 / np.sqrt(in_f)
    k1, k2 = jax.random.split(key)
    w = jax.random.uniform(k1, (out_f, in_f), jnp.float32, -k, k)   # torch layout
    b = jax.random.uniform(k2, (out_f,), jnp.float32, -k, k)
    return jnp.transpose(w), b.reshape(1, out_f)


def init_params(key):
    keys = jax.random.split(key, 1 + 2 * DEPTH + 3)
    gru1 = _make_gru_dir_params(keys[0], CHANNEL, TIME_SLOT)

    # GRU5: 8 layers x {fwd, bwd}; each layer's two directions fused at init into
    # one gate-major block input projection and one block-diagonal recurrence.
    wih, whh, bih, bhh = [], [], [], []
    for layer in range(DEPTH):
        f = _make_gru_dir_params(keys[1 + 2 * layer], TIME_SLOT, HALF)   # fwd
        b = _make_gru_dir_params(keys[2 + 2 * layer], TIME_SLOT, HALF)   # bwd
        wih.append(_fuse_block_gate_major(f["wih"], b["wih"]))   # (20, 30)
        whh.append(_fuse_block_gate_major(f["whh"], b["whh"]))   # (10, 30)
        bih.append(_fuse_bias_gate_major(f["bih"], b["bih"]))    # (1, 30)
        bhh.append(_fuse_bias_gate_major(f["bhh"], b["bhh"]))    # (1, 30)
    gru5 = dict(wih=jnp.stack(wih), whh=jnp.stack(whh),
                bih=jnp.stack(bih), bhh=jnp.stack(bhh))

    # Dense1000 (10->1000), Dense64 (1000->10), CLS (10->4): bare Linear layers
    # with only an (eval-identity) Dropout between them -> fold exactly.
    w1, b1 = _make_linear_params(keys[1 + 2 * DEPTH], TIME_SLOT, 1000)
    w2, b2 = _make_linear_params(keys[2 + 2 * DEPTH], 1000, TIME_SLOT)
    wc, bc = _make_linear_params(keys[3 + 2 * DEPTH], TIME_SLOT, NUM_CLASS)
    wd = w1 @ w2 @ wc                              # (10, 4)
    bd = (b1 @ w2 + b2) @ wc + bc                  # (1, 4)
    return dict(gru1=gru1, gru5=gru5, dense=dict(wd=wd, bd=bd))


if __name__ == "__main__":
    key = jax.random.PRNGKey(0)
    pkey, xkey = jax.random.split(key)
    params = init_params(pkey)

    B, T = 4, 8
    x = jax.random.normal(xkey, (B, T, CHANNEL), dtype=jnp.float32)

    out = model_forward(x, params)
    out = jax.block_until_ready(out)

    assert out.shape == (B, T, NUM_CLASS), out.shape
    assert out.dtype == jnp.float32
    assert bool(jnp.all(jnp.isfinite(out)))
    print("KERNEL_OK")
</pallas_src>

<mosaic_0001>
module attributes {stable_mosaic.version = 11 : i64} {
  func.func @fused_forward_kernel(%arg0: memref<4x8xf32, #tpu.memory_space<vmem>>, %arg1: memref<1x30xf32, #tpu.memory_space<vmem>>, %arg2: memref<10x30xf32, #tpu.memory_space<vmem>>, %arg3: memref<1x30xf32, #tpu.memory_space<vmem>>, %arg4: memref<1x30xf32, #tpu.memory_space<vmem>>, %arg5: memref<8x20x30xf32, #tpu.memory_space<vmem>>, %arg6: memref<8x10x30xf32, #tpu.memory_space<vmem>>, %arg7: memref<8x1x30xf32, #tpu.memory_space<vmem>>, %arg8: memref<8x1x30xf32, #tpu.memory_space<vmem>>, %arg9: memref<10x4xf32, #tpu.memory_space<vmem>>, %arg10: memref<1x4xf32, #tpu.memory_space<vmem>>, %arg11: memref<32x4xf32, #tpu.memory_space<vmem>>) attributes {dimension_semantics = [], scalar_prefetch = 0 : i64, scratch_operands = 0 : i64, tpu.core_type = #tpu.core_type<tc>} {
    %c0 = arith.constant 0 : index
    %c0_0 = arith.constant 0 : index
    %0 = vector.load %arg0[%c0, %c0_0] : memref<4x8xf32, #tpu.memory_space<vmem>>, vector<4x8xf32>
    %c0_1 = arith.constant 0 : index
    %c0_2 = arith.constant 0 : index
    %1 = vector.load %arg2[%c0_1, %c0_2] : memref<10x30xf32, #tpu.memory_space<vmem>>, vector<10x30xf32>
    %c0_3 = arith.constant 0 : index
    %c0_4 = arith.constant 0 : index
    %2 = vector.load %arg1[%c0_3, %c0_4] : memref<1x30xf32, #tpu.memory_space<vmem>>, vector<1x30xf32>
    %3 = vector.shape_cast %2 : vector<1x30xf32> to vector<1x30xf32>
    %4 = vector.broadcast %3 : vector<1x30xf32> to vector<4x30xf32>
    %c0_5 = arith.constant 0 : index
    %c0_6 = arith.constant 0 : index
    %5 = vector.load %arg3[%c0_5, %c0_6] : memref<1x30xf32, #tpu.memory_space<vmem>>, vector<1x30xf32>
    %6 = vector.shape_cast %5 : vector<1x30xf32> to vector<1x30xf32>
    %7 = vector.broadcast %6 : vector<1x30xf32> to vector<4x30xf32>
    %c0_7 = arith.constant 0 : index
    %c0_8 = arith.constant 0 : index
    %8 = vector.load %arg4[%c0_7, %c0_8] : memref<1x30xf32, #tpu.memory_space<vmem>>, vector<1x30xf32>
    %9 = vector.shape_cast %8 : vector<1x30xf32> to vector<1x30xf32>
    %10 = vector.broadcast %9 : vector<1x30xf32> to vector<4x30xf32>
    %11 = tpu.iota {dimensions = array<i32: 0>} : vector<32x4xi32>
    %12 = tpu.iota {dimensions = array<i32: 1>} : vector<32x4xi32>
    %c8_i32 = arith.constant 8 : i32
    %13 = vector.broadcast %c8_i32 : i32 to vector<32x4xi32>
    %14 = arith.muli %12, %13 : vector<32x4xi32>
    %cst = arith.constant 0.000000e+00 : f32
    %15 = vector.broadcast %cst : f32 to vector<4x10xf32>
    %cst_9 = arith.constant 0.000000e+00 : f32
    %16 = vector.broadcast %cst_9 : f32 to vector<32x10xf32>
    %17 = vector.extract_strided_slice %0 {offsets = [0, 0], sizes = [4, 1], strides = [1, 1]} : vector<4x8xf32> to vector<4x1xf32>
    %18 = vector.broadcast %17 : vector<4x1xf32> to vector<4x30xf32>
    %19 = arith.mulf %18, %4 : vector<4x30xf32>
    %20 = arith.addf %19, %7 : vector<4x30xf32>
    %cst_10 = arith.constant dense<0.000000e+00> : vector<4x30xf32>
    %21 = tpu.matmul %15, %1, %cst_10 {dimension_numbers = #tpu.dot_dimension_numbers<[1], [0], [0], [1], [0, 0, 1, 1], [], []>} : vector<4x10xf32>, vector<10x30xf32>, vector<4x30xf32> -> vector<4x30xf32>
    %22 = arith.addf %21, %10 : vector<4x30xf32>
    %23 = vector.extract_strided_slice %20 {offsets = [0, 0], sizes = [4, 20], strides = [1, 1]} : vector<4x30xf32> to vector<4x20xf32>
    %24 = vector.extract_strided_slice %22 {offsets = [0, 0], sizes = [4, 20], strides = [1, 1]} : vector<4x30xf32> to vector<4x20xf32>
    %25 = arith.addf %23, %24 : vector<4x20xf32>
    %26 = arith.negf %25 : vector<4x20xf32>
    %27 = math.exp %26 : vector<4x20xf32>
    %cst_11 = arith.constant 1.000000e+00 : f32
    %28 = vector.broadcast %cst_11 : f32 to vector<4x20xf32>
    %29 = arith.addf %28, %27 : vector<4x20xf32>
    %30 = arith.divf %28, %29 : vector<4x20xf32>
    %31 = vector.extract_strided_slice %30 {offsets = [0, 0], sizes = [4, 10], strides = [1, 1]} : vector<4x20xf32> to vector<4x10xf32>
    %32 = vector.extract_strided_slice %30 {offsets = [0, 10], sizes = [4, 10], strides = [1, 1]} : vector<4x20xf32> to vector<4x10xf32>
    %33 = vector.extract_strided_slice %20 {offsets = [0, 20], sizes = [4, 10], strides = [1, 1]} : vector<4x30xf32> to vector<4x10xf32>
    %34 = vector.extract_strided_slice %22 {offsets = [0, 20], sizes = [4, 10], strides = [1, 1]} : vector<4x30xf32> to vector<4x10xf32>
    %35 = arith.mulf %31, %34 : vector<4x10xf32>
    %36 = arith.addf %33, %35 : vector<4x10xf32>
    %37 = math.tanh %36 : vector<4x10xf32>
    %cst_12 = arith.constant 1.000000e+00 : f32
    %38 = vector.broadcast %cst_12 : f32 to vector<4x10xf32>
    %39 = arith.subf %38, %32 : vector<4x10xf32>
    %40 = arith.mulf %39, %37 : vector<4x10xf32>
    %41 = arith.mulf %32, %15 : vector<4x10xf32>
    %42 = arith.addf %40, %41 : vector<4x10xf32>
    %c0_i32 = arith.constant 0 : i32
    %43 = vector.broadcast %c0_i32 : i32 to vector<32x4xi32>
    %44 = arith.addi %14, %43 : vector<32x4xi32>
    %45 = arith.cmpi eq, %11, %44 : vector<32x4xi32>
    %46 = arith.extui %45 : vector<32x4xi1> to vector<32x4xi32>
    %47 = arith.sitofp %46 : vector<32x4xi32> to vector<32x4xf32>
    %cst_13 = arith.constant dense<0.000000e+00> : vector<32x10xf32>
    %48 = tpu.matmul %47, %42, %cst_13 {dimension_numbers = #tpu.dot_dimension_numbers<[1], [0], [0], [1], [0, 0, 1, 1], [], []>} : vector<32x4xf32>, vector<4x10xf32>, vector<32x10xf32> -> vector<32x10xf32>
    %49 = arith.addf %16, %48 : vector<32x10xf32>
    %50 = vector.extract_strided_slice %0 {offsets = [0, 1], sizes = [4, 1], strides = [1, 1]} : vector<4x8xf32> to vector<4x1xf32>
    %51 = vector.broadcast %50 : vector<4x1xf32> to vector<4x30xf32>
    %52 = arith.mulf %51, %4 : vector<4x30xf32>
    %53 = arith.addf %52, %7 : vector<4x30xf32>
    %cst_14 = arith.constant dense<0.000000e+00> : vector<4x30xf32>
    %54 = tpu.matmul %42, %1, %cst_14 {dimension_numbers = #tpu.dot_dimension_numbers<[1], [0], [0], [1], [0, 0, 1, 1], [], []>} : vector<4x10xf32>, vector<10x30xf32>, vector<4x30xf32> -> vector<4x30xf32>
    %55 = arith.addf %54, %10 : vector<4x30xf32>
    %56 = vector.extract_strided_slice %53 {offsets = [0, 0], sizes = [4, 20], strides = [1, 1]} : vector<4x30xf32> to vector<4x20xf32>
    %57 = vector.extract_strided_slice %55 {offsets = [0, 0], sizes = [4, 20], strides = [1, 1]} : vector<4x30xf32> to vector<4x20xf32>
    %58 = arith.addf %56, %57 : vector<4x20xf32>
    %59 = arith.negf %58 : vector<4x20xf32>
    %60 = math.exp %59 : vector<4x20xf32>
    %cst_15 = arith.constant 1.000000e+00 : f32
    %61 = vector.broadcast %cst_15 : f32 to vector<4x20xf32>
    %62 = arith.addf %61, %60 : vector<4x20xf32>
    %63 = arith.divf %61, %62 : vector<4x20xf32>
    %64 = vector.extract_strided_slice %63 {offsets = [0, 0], sizes = [4, 10], strides = [1, 1]} : vector<4x20xf32> to vector<4x10xf32>
    %65 = vector.extract_strided_slice %63 {offsets = [0, 10], sizes = [4, 10], strides = [1, 1]} : vector<4x20xf32> to vector<4x10xf32>
    %66 = vector.extract_strided_slice %53 {offsets = [0, 20], sizes = [4, 10], strides = [1, 1]} : vector<4x30xf32> to vector<4x10xf32>
    %67 = vector.extract_strided_slice %55 {offsets = [0, 20], sizes = [4, 10], strides = [1, 1]} : vector<4x30xf32> to vector<4x10xf32>
    %68 = arith.mulf %64, %67 : vector<4x10xf32>
    %69 = arith.addf %66, %68 : vector<4x10xf32>
    %70 = math.tanh %69 : vector<4x10xf32>
    %cst_16 = arith.constant 1.000000e+00 : f32
    %71 = vector.broadcast %cst_16 : f32 to vector<4x10xf32>
    %72 = arith.subf %71, %65 : vector<4x10xf32>
    %73 = arith.mulf %72, %70 : vector<4x10xf32>
    %74 = arith.mulf %65, %42 : vector<4x10xf32>
    %75 = arith.addf %73, %74 : vector<4x10xf32>
    %c1_i32 = arith.constant 1 : i32
    %76 = vector.broadcast %c1_i32 : i32 to vector<32x4xi32>
    %77 = arith.addi %14, %76 : vector<32x4xi32>
    %78 = arith.cmpi eq, %11, %77 : vector<32x4xi32>
    %79 = arith.extui %78 : vector<32x4xi1> to vector<32x4xi32>
    %80 = arith.sitofp %79 : vector<32x4xi32> to vector<32x4xf32>
    %cst_17 = arith.constant dense<0.000000e+00> : vector<32x10xf32>
    %81 = tpu.matmul %80, %75, %cst_17 {dimension_numbers = #tpu.dot_dimension_numbers<[1], [0], [0], [1], [0, 0, 1, 1], [], []>} : vector<32x4xf32>, vector<4x10xf32>, vector<32x10xf32> -> vector<32x10xf32>
    %82 = arith.addf %49, %81 : vector<32x10xf32>
    %83 = vector.extract_strided_slice %0 {offsets = [0, 2], sizes = [4, 1], strides = [1, 1]} : vector<4x8xf32> to vector<4x1xf32>
    %84 = vector.broadcast %83 : vector<4x1xf32> to vector<4x30xf32>
    %85 = arith.mulf %84, %4 : vector<4x30xf32>
    %86 = arith.addf %85, %7 : vector<4x30xf32>
    %cst_18 = arith.constant dense<0.000000e+00> : vector<4x30xf32>
    %87 = tpu.matmul %75, %1, %cst_18 {dimension_numbers = #tpu.dot_dimension_numbers<[1], [0], [0], [1], [0, 0, 1, 1], [], []>} : vector<4x10xf32>, vector<10x30xf32>, vector<4x30xf32> -> vector<4x30xf32>
    %88 = arith.addf %87, %10 : vector<4x30xf32>
    %89 = vector.extract_strided_slice %86 {offsets = [0, 0], sizes = [4, 20], strides = [1, 1]} : vector<4x30xf32> to vector<4x20xf32>
    %90 = vector.extract_strided_slice %88 {offsets = [0, 0], sizes = [4, 20], strides = [1, 1]} : vector<4x30xf32> to vector<4x20xf32>
    %91 = arith.addf %89, %90 : vector<4x20xf32>
    %92 = arith.negf %91 : vector<4x20xf32>
    %93 = math.exp %92 : vector<4x20xf32>
    %cst_19 = arith.constant 1.000000e+00 : f32
    %94 = vector.broadcast %cst_19 : f32 to vector<4x20xf32>
    %95 = arith.addf %94, %93 : vector<4x20xf32>
    %96 = arith.divf %94, %95 : vector<4x20xf32>
    %97 = vector.extract_strided_slice %96 {offsets = [0, 0], sizes = [4, 10], strides = [1, 1]} : vector<4x20xf32> to vector<4x10xf32>
    %98 = vector.extract_strided_slice %96 {offsets = [0, 10], sizes = [4, 10], strides = [1, 1]} : vector<4x20xf32> to vector<4x10xf32>
    %99 = vector.extract_strided_slice %86 {offsets = [0, 20], sizes = [4, 10], strides = [1, 1]} : vector<4x30xf32> to vector<4x10xf32>
    %100 = vector.extract_strided_slice %88 {offsets = [0, 20], sizes = [4, 10], strides = [1, 1]} : vector<4x30xf32> to vector<4x10xf32>
    %101 = arith.mulf %97, %100 : vector<4x10xf32>
    %102 = arith.addf %99, %101 : vector<4x10xf32>
    %103 = math.tanh %102 : vector<4x10xf32>
    %cst_20 = arith.constant 1.000000e+00 : f32
    %104 = vector.broadcast %cst_20 : f32 to vector<4x10xf32>
    %105 = arith.subf %104, %98 : vector<4x10xf32>
    %106 = arith.mulf %105, %103 : vector<4x10xf32>
    %107 = arith.mulf %98, %75 : vector<4x10xf32>
    %108 = arith.addf %106, %107 : vector<4x10xf32>
    %c2_i32 = arith.constant 2 : i32
    %109 = vector.broadcast %c2_i32 : i32 to vector<32x4xi32>
    %110 = arith.addi %14, %109 : vector<32x4xi32>
    %111 = arith.cmpi eq, %11, %110 : vector<32x4xi32>
    %112 = arith.extui %111 : vector<32x4xi1> to vector<32x4xi32>
    %113 = arith.sitofp %112 : vector<32x4xi32> to vector<32x4xf32>
    %cst_21 = arith.constant dense<0.000000e+00> : vector<32x10xf32>
    %114 = tpu.matmul %113, %108, %cst_21 {dimension_numbers = #tpu.dot_dimension_numbers<[1], [0], [0], [1], [0, 0, 1, 1], [], []>} : vector<32x4xf32>, vector<4x10xf32>, vector<32x10xf32> -> vector<32x10xf32>
    %115 = arith.addf %82, %114 : vector<32x10xf32>
    %116 = vector.extract_strided_slice %0 {offsets = [0, 3], sizes = [4, 1], strides = [1, 1]} : vector<4x8xf32> to vector<4x1xf32>
    %117 = vector.broadcast %116 : vector<4x1xf32> to vector<4x30xf32>
    %118 = arith.mulf %117, %4 : vector<4x30xf32>
    %119 = arith.addf %118, %7 : vector<4x30xf32>
    %cst_22 = arith.constant dense<0.000000e+00> : vector<4x30xf32>
    %120 = tpu.matmul %108, %1, %cst_22 {dimension_numbers = #tpu.dot_dimension_numbers<[1], [0], [0], [1], [0, 0, 1, 1], [], []>} : vector<4x10xf32>, vector<10x30xf32>, vector<4x30xf32> -> vector<4x30xf32>
    %121 = arith.addf %120, %10 : vector<4x30xf32>
    %122 = vector.extract_strided_slice %119 {offsets = [0, 0], sizes = [4, 20], strides = [1, 1]} : vector<4x30xf32> to vector<4x20xf32>
    %123 = vector.extract_strided_slice %121 {offsets = [0, 0], sizes = [4, 20], strides = [1, 1]} : vector<4x30xf32> to vector<4x20xf32>
    %124 = arith.addf %122, %123 : vector<4x20xf32>
    %125 = arith.negf %124 : vector<4x20xf32>
    %126 = math.exp %125 : vector<4x20xf32>
    %cst_23 = arith.constant 1.000000e+00 : f32
    %127 = vector.broadcast %cst_23 : f32 to vector<4x20xf32>
    %128 = arith.addf %127, %126 : vector<4x20xf32>
    %129 = arith.divf %127, %128 : vector<4x20xf32>
    %130 = vector.extract_strided_slice %129 {offsets = [0, 0], sizes = [4, 10], strides = [1, 1]} : vector<4x20xf32> to vector<4x10xf32>
    %131 = vector.extract_strided_slice %129 {offsets = [0, 10], sizes = [4, 10], strides = [1, 1]} : vector<4x20xf32> to vector<4x10xf32>
    %132 = vector.extract_strided_slice %119 {offsets = [0, 20], sizes = [4, 10], strides = [1, 1]} : vector<4x30xf32> to vector<4x10xf32>
    %133 = vector.extract_strided_slice %121 {offsets = [0, 20], sizes = [4, 10], strides = [1, 1]} : vector<4x30xf32> to vector<4x10xf32>
    %134 = arith.mulf %130, %133 : vector<4x10xf32>
    %135 = arith.addf %132, %134 : vector<4x10xf32>
    %136 = math.tanh %135 : vector<4x10xf32>
    %cst_24 = arith.constant 1.000000e+00 : f32
    %137 = vector.broadcast %cst_24 : f32 to vector<4x10xf32>
    %138 = arith.subf %137, %131 : vector<4x10xf32>
    %139 = arith.mulf %138, %136 : vector<4x10xf32>
    %140 = arith.mulf %131, %108 : vector<4x10xf32>
    %141 = arith.addf %139, %140 : vector<4x10xf32>
    %c3_i32 = arith.constant 3 : i32
    %142 = vector.broadcast %c3_i32 : i32 to vector<32x4xi32>
    %143 = arith.addi %14, %142 : vector<32x4xi32>
    %144 = arith.cmpi eq, %11, %143 : vector<32x4xi32>
    %145 = arith.extui %144 : vector<32x4xi1> to vector<32x4xi32>
    %146 = arith.sitofp %145 : vector<32x4xi32> to vector<32x4xf32>
    %cst_25 = arith.constant dense<0.000000e+00> : vector<32x10xf32>
    %147 = tpu.matmul %146, %141, %cst_25 {dimension_numbers = #tpu.dot_dimension_numbers<[1], [0], [0], [1], [0, 0, 1, 1], [], []>} : vector<32x4xf32>, vector<4x10xf32>, vector<32x10xf32> -> vector<32x10xf32>
    %148 = arith.addf %115, %147 : vector<32x10xf32>
    %149 = vector.extract_strided_slice %0 {offsets = [0, 4], sizes = [4, 1], strides = [1, 1]} : vector<4x8xf32> to vector<4x1xf32>
    %150 = vector.broadcast %149 : vector<4x1xf32> to vector<4x30xf32>
    %151 = arith.mulf %150, %4 : vector<4x30xf32>
    %152 = arith.addf %151, %7 : vector<4x30xf32>
    %cst_26 = arith.constant dense<0.000000e+00> : vector<4x30xf32>
    %153 = tpu.matmul %141, %1, %cst_26 {dimension_numbers = #tpu.dot_dimension_numbers<[1], [0], [0], [1], [0, 0, 1, 1], [], []>} : vector<4x10xf32>, vector<10x30xf32>, vector<4x30xf32> -> vector<4x30xf32>
    %154 = arith.addf %153, %10 : vector<4x30xf32>
    %155 = vector.extract_strided_slice %152 {offsets = [0, 0], sizes = [4, 20], strides = [1, 1]} : vector<4x30xf32> to vector<4x20xf32>
    %156 = vector.extract_strided_slice %154 {offsets = [0, 0], sizes = [4, 20], strides = [1, 1]} : vector<4x30xf32> to vector<4x20xf32>
    %157 = arith.addf %155, %156 : vector<4x20xf32>
    %158 = arith.negf %157 : vector<4x20xf32>
    %159 = math.exp %158 : vector<4x20xf32>
    %cst_27 = arith.constant 1.000000e+00 : f32
    %160 = vector.broadcast %cst_27 : f32 to vector<4x20xf32>
    %161 = arith.addf %160, %159 : vector<4x20xf32>
    %162 = arith.divf %160, %161 : vector<4x20xf32>
    %163 = vector.extract_strided_slice %162 {offsets = [0, 0], sizes = [4, 10], strides = [1, 1]} : vector<4x20xf32> to vector<4x10xf32>
    %164 = vector.extract_strided_slice %162 {offsets = [0, 10], sizes = [4, 10], strides = [1, 1]} : vector<4x20xf32> to vector<4x10xf32>
    %165 = vector.extract_strided_slice %152 {offsets = [0, 20], sizes = [4, 10], strides = [1, 1]} : vector<4x30xf32> to vector<4x10xf32>
    %166 = vector.extract_strided_slice %154 {offsets = [0, 20], sizes = [4, 10], strides = [1, 1]} : vector<4x30xf32> to vector<4x10xf32>
    %167 = arith.mulf %163, %166 : vector<4x10xf32>
    %168 = arith.addf %165, %167 : vector<4x10xf32>
    %169 = math.tanh %168 : vector<4x10xf32>
    %cst_28 = arith.constant 1.000000e+00 : f32
    %170 = vector.broadcast %cst_28 : f32 to vector<4x10xf32>
    %171 = arith.subf %170, %164 : vector<4x10xf32>
    %172 = arith.mulf %171, %169 : vector<4x10xf32>
    %173 = arith.mulf %164, %141 : vector<4x10xf32>
    %174 = arith.addf %172, %173 : vector<4x10xf32>
    %c4_i32 = arith.constant 4 : i32
    %175 = vector.broadcast %c4_i32 : i32 to vector<32x4xi32>
    %176 = arith.addi %14, %175 : vector<32x4xi32>
    %177 = arith.cmpi eq, %11, %176 : vector<32x4xi32>
    %178 = arith.extui %177 : vector<32x4xi1> to vector<32x4xi32>
    %179 = arith.sitofp %178 : vector<32x4xi32> to vector<32x4xf32>
    %cst_29 = arith.constant dense<0.000000e+00> : vector<32x10xf32>
    %180 = tpu.matmul %179, %174, %cst_29 {dimension_numbers = #tpu.dot_dimension_numbers<[1], [0], [0], [1], [0, 0, 1, 1], [], []>} : vector<32x4xf32>, vector<4x10xf32>, vector<32x10xf32> -> vector<32x10xf32>
    %181 = arith.addf %148, %180 : vector<32x10xf32>
    %182 = vector.extract_strided_slice %0 {offsets = [0, 5], sizes = [4, 1], strides = [1, 1]} : vector<4x8xf32> to vector<4x1xf32>
    %183 = vector.broadcast %182 : vector<4x1xf32> to vector<4x30xf32>
    %184 = arith.mulf %183, %4 : vector<4x30xf32>
    %185 = arith.addf %184, %7 : vector<4x30xf32>
    %cst_30 = arith.constant dense<0.000000e+00> : vector<4x30xf32>
    %186 = tpu.matmul %174, %1, %cst_30 {dimension_numbers = #tpu.dot_dimension_numbers<[1], [0], [0], [1], [0, 0, 1, 1], [], []>} : vector<4x10xf32>, vector<10x30xf32>, vector<4x30xf32> -> vector<4x30xf32>
    %187 = arith.addf %186, %10 : vector<4x30xf32>
    %188 = vector.extract_strided_slice %185 {offsets = [0, 0], sizes = [4, 20], strides = [1, 1]} : vector<4x30xf32> to vector<4x20xf32>
    %189 = vector.extract_strided_slice %187 {offsets = [0, 0], sizes = [4, 20], strides = [1, 1]} : vector<4x30xf32> to vector<4x20xf32>
    %190 = arith.addf %188, %189 : vector<4x20xf32>
    %191 = arith.negf %190 : vector<4x20xf32>
    %192 = math.exp %191 : vector<4x20xf32>
    %cst_31 = arith.constant 1.000000e+00 : f32
    %193 = vector.broadcast %cst_31 : f32 to vector<4x20xf32>
    %194 = arith.addf %193, %192 : vector<4x20xf32>
    %195 = arith.divf %193, %194 : vector<4x20xf32>
    %196 = vector.extract_strided_slice %195 {offsets = [0, 0], sizes = [4, 10], strides = [1, 1]} : vector<4x20xf32> to vector<4x10xf32>
    %197 = vector.extract_strided_slice %195 {offsets = [0, 10], sizes = [4, 10], strides = [1, 1]} : vector<4x20xf32> to vector<4x10xf32>
    %198 = vector.extract_strided_slice %185 {offsets = [0, 20], sizes = [4, 10], strides = [1, 1]} : vector<4x30xf32> to vector<4x10xf32>
    %199 = vector.extract_strided_slice %187 {offsets = [0, 20], sizes = [4, 10], strides = [1, 1]} : vector<4x30xf32> to vector<4x10xf32>
    %200 = arith.mulf %196, %199 : vector<4x10xf32>
    %201 = arith.addf %198, %200 : vector<4x10xf32>
    %202 = math.tanh %201 : vector<4x10xf32>
    %cst_32 = arith.constant 1.000000e+00 : f32
    %203 = vector.broadcast %cst_32 : f32 to vector<4x10xf32>
    %204 = arith.subf %203, %197 : vector<4x10xf32>
    %205 = arith.mulf %204, %202 : vector<4x10xf32>
    %206 = arith.mulf %197, %174 : vector<4x10xf32>
    %207 = arith.addf %205, %206 : vector<4x10xf32>
    %c5_i32 = arith.constant 5 : i32
    %208 = vector.broadcast %c5_i32 : i32 to vector<32x4xi32>
    %209 = arith.addi %14, %208 : vector<32x4xi32>
    %210 = arith.cmpi eq, %11, %209 : vector<32x4xi32>
    %211 = arith.extui %210 : vector<32x4xi1> to vector<32x4xi32>
    %212 = arith.sitofp %211 : vector<32x4xi32> to vector<32x4xf32>
    %cst_33 = arith.constant dense<0.000000e+00> : vector<32x10xf32>
    %213 = tpu.matmul %212, %207, %cst_33 {dimension_numbers = #tpu.dot_dimension_numbers<[1], [0], [0], [1], [0, 0, 1, 1], [], []>} : vector<32x4xf32>, vector<4x10xf32>, vector<32x10xf32> -> vector<32x10xf32>
    %214 = arith.addf %181, %213 : vector<32x10xf32>
    %215 = vector.extract_strided_slice %0 {offsets = [0, 6], sizes = [4, 1], strides = [1, 1]} : vector<4x8xf32> to vector<4x1xf32>
    %216 = vector.broadcast %215 : vector<4x1xf32> to vector<4x30xf32>
    %217 = arith.mulf %216, %4 : vector<4x30xf32>
    %218 = arith.addf %217, %7 : vector<4x30xf32>
    %cst_34 = arith.constant dense<0.000000e+00> : vector<4x30xf32>
    %219 = tpu.matmul %207, %1, %cst_34 {dimension_numbers = #tpu.dot_dimension_numbers<[1], [0], [0], [1], [0, 0, 1, 1], [], []>} : vector<4x10xf32>, vector<10x30xf32>, vector<4x30xf32> -> vector<4x30xf32>
    %220 = arith.addf %219, %10 : vector<4x30xf32>
    %221 = vector.extract_strided_slice %218 {offsets = [0, 0], sizes = [4, 20], strides = [1, 1]} : vector<4x30xf32> to vector<4x20xf32>
    %222 = vector.extract_strided_slice %220 {offsets = [0, 0], sizes = [4, 20], strides = [1, 1]} : vector<4x30xf32> to vector<4x20xf32>
    %223 = arith.addf %221, %222 : vector<4x20xf32>
    %224 = arith.negf %223 : vector<4x20xf32>
    %225 = math.exp %224 : vector<4x20xf32>
    %cst_35 = arith.constant 1.000000e+00 : f32
    %226 = vector.broadcast %cst_35 : f32 to vector<4x20xf32>
    %227 = arith.addf %226, %225 : vector<4x20xf32>
    %228 = arith.divf %226, %227 : vector<4x20xf32>
    %229 = vector.extract_strided_slice %228 {offsets = [0, 0], sizes = [4, 10], strides = [1, 1]} : vector<4x20xf32> to vector<4x10xf32>
    %230 = vector.extract_strided_slice %228 {offsets = [0, 10], sizes = [4, 10], strides = [1, 1]} : vector<4x20xf32> to vector<4x10xf32>
    %231 = vector.extract_strided_slice %218 {offsets = [0, 20], sizes = [4, 10], strides = [1, 1]} : vector<4x30xf32> to vector<4x10xf32>
    %232 = vector.extract_strided_slice %220 {offsets = [0, 20], sizes = [4, 10], strides = [1, 1]} : vector<4x30xf32> to vector<4x10xf32>
    %233 = arith.mulf %229, %232 : vector<4x10xf32>
    %234 = arith.addf %231, %233 : vector<4x10xf32>
    %235 = math.tanh %234 : vector<4x10xf32>
    %cst_36 = arith.constant 1.000000e+00 : f32
    %236 = vector.broadcast %cst_36 : f32 to vector<4x10xf32>
    %237 = arith.subf %236, %230 : vector<4x10xf32>
    %238 = arith.mulf %237, %235 : vector<4x10xf32>
    %239 = arith.mulf %230, %207 : vector<4x10xf32>
    %240 = arith.addf %238, %239 : vector<4x10xf32>
    %c6_i32 = arith.constant 6 : i32
    %241 = vector.broadcast %c6_i32 : i32 to vector<32x4xi32>
    %242 = arith.addi %14, %241 : vector<32x4xi32>
    %243 = arith.cmpi eq, %11, %242 : vector<32x4xi32>
    %244 = arith.extui %243 : vector<32x4xi1> to vector<32x4xi32>
    %245 = arith.sitofp %244 : vector<32x4xi32> to vector<32x4xf32>
    %cst_37 = arith.constant dense<0.000000e+00> : vector<32x10xf32>
    %246 = tpu.matmul %245, %240, %cst_37 {dimension_numbers = #tpu.dot_dimension_numbers<[1], [0], [0], [1], [0, 0, 1, 1], [], []>} : vector<32x4xf32>, vector<4x10xf32>, vector<32x10xf32> -> vector<32x10xf32>
    %247 = arith.addf %214, %246 : vector<32x10xf32>
    %248 = vector.extract_strided_slice %0 {offsets = [0, 7], sizes = [4, 1], strides = [1, 1]} : vector<4x8xf32> to vector<4x1xf32>
    %249 = vector.broadcast %248 : vector<4x1xf32> to vector<4x30xf32>
    %250 = arith.mulf %249, %4 : vector<4x30xf32>
    %251 = arith.addf %250, %7 : vector<4x30xf32>
    %cst_38 = arith.constant dense<0.000000e+00> : vector<4x30xf32>
    %252 = tpu.matmul %240, %1, %cst_38 {dimension_numbers = #tpu.dot_dimension_numbers<[1], [0], [0], [1], [0, 0, 1, 1], [], []>} : vector<4x10xf32>, vector<10x30xf32>, vector<4x30xf32> -> vector<4x30xf32>
    %253 = arith.addf %252, %10 : vector<4x30xf32>
    %254 = vector.extract_strided_slice %251 {offsets = [0, 0], sizes = [4, 20], strides = [1, 1]} : vector<4x30xf32> to vector<4x20xf32>
    %255 = vector.extract_strided_slice %253 {offsets = [0, 0], sizes = [4, 20], strides = [1, 1]} : vector<4x30xf32> to vector<4x20xf32>
    %256 = arith.addf %254, %255 : vector<4x20xf32>
    %257 = arith.negf %256 : vector<4x20xf32>
    %258 = math.exp %257 : vector<4x20xf32>
    %cst_39 = arith.constant 1.000000e+00 : f32
    %259 = vector.broadcast %cst_39 : f32 to vector<4x20xf32>
    %260 = arith.addf %259, %258 : vector<4x20xf32>
    %261 = arith.divf %259, %260 : vector<4x20xf32>
    %262 = vector.extract_strided_slice %261 {offsets = [0, 0], sizes = [4, 10], strides = [1, 1]} : vector<4x20xf32> to vector<4x10xf32>
    %263 = vector.extract_strided_slice %261 {offsets = [0, 10], sizes = [4, 10], strides = [1, 1]} : vector<4x20xf32> to vector<4x10xf32>
    %264 = vector.extract_strided_slice %251 {offsets = [0, 20], sizes = [4, 10], strides = [1, 1]} : vector<4x30xf32> to vector<4x10xf32>
    %265 = vector.extract_strided_slice %253 {offsets = [0, 20], sizes = [4, 10], strides = [1, 1]} : vector<4x30xf32> to vector<4x10xf32>
    %266 = arith.mulf %262, %265 : vector<4x10xf32>
    %267 = arith.addf %264, %266 : vector<4x10xf32>
    %268 = math.tanh %267 : vector<4x10xf32>
    %cst_40 = arith.constant 1.000000e+00 : f32
    %269 = vector.broadcast %cst_40 : f32 to vector<4x10xf32>
    %270 = arith.subf %269, %263 : vector<4x10xf32>
    %271 = arith.mulf %270, %268 : vector<4x10xf32>
    %272 = arith.mulf %263, %240 : vector<4x10xf32>
    %273 = arith.addf %271, %272 : vector<4x10xf32>
    %c7_i32 = arith.constant 7 : i32
    %274 = vector.broadcast %c7_i32 : i32 to vector<32x4xi32>
    %275 = arith.addi %14, %274 : vector<32x4xi32>
    %276 = arith.cmpi eq, %11, %275 : vector<32x4xi32>
    %277 = arith.extui %276 : vector<32x4xi1> to vector<32x4xi32>
    %278 = arith.sitofp %277 : vector<32x4xi32> to vector<32x4xf32>
    %cst_41 = arith.constant dense<0.000000e+00> : vector<32x10xf32>
    %279 = tpu.matmul %278, %273, %cst_41 {dimension_numbers = #tpu.dot_dimension_numbers<[1], [0], [0], [1], [0, 0, 1, 1], [], []>} : vector<32x4xf32>, vector<4x10xf32>, vector<32x10xf32> -> vector<32x10xf32>
    %280 = arith.addf %247, %279 : vector<32x10xf32>
    %281 = vector.extract_strided_slice %280 {offsets = [24, 0], sizes = [8, 10], strides = [1, 1]} : vector<32x10xf32> to vector<8x10xf32>
    %282 = vector.extract_strided_slice %280 {offsets = [16, 0], sizes = [8, 10], strides = [1, 1]} : vector<32x10xf32> to vector<8x10xf32>
    %283 = vector.extract_strided_slice %280 {offsets = [8, 0], sizes = [8, 10], strides = [1, 1]} : vector<32x10xf32> to vector<8x10xf32>
    %284 = vector.extract_strided_slice %280 {offsets = [0, 0], sizes = [8, 10], strides = [1, 1]} : vector<32x10xf32> to vector<8x10xf32>
    %285 = tpu.concatenate %281, %282, %283, %284 in 0 : vector<8x10xf32>, vector<8x10xf32>, vector<8x10xf32>, vector<8x10xf32> -> vector<32x10xf32>
    %286 = tpu.concatenate %280, %285 in 1 : vector<32x10xf32>, vector<32x10xf32> -> vector<32x20xf32>
    %c0_42 = arith.constant 0 : index
    %c0_43 = arith.constant 0 : index
    %c0_44 = arith.constant 0 : index
    %287 = vector.load %arg5[%c0_42, %c0_43, %c0_44] : memref<8x20x30xf32, #tpu.memory_space<vmem>>, vector<1x20x30xf32>
    %288 = vector.shape_cast %287 : vector<1x20x30xf32> to vector<20x30xf32>
    %cst_45 = arith.constant dense<0.000000e+00> : vector<32x30xf32>
    %289 = tpu.matmul %286, %288, %cst_45 {dimension_numbers = #tpu.dot_dimension_numbers<[1], [0], [0], [1], [0, 0, 1, 1], [], []>} : vector<32x20xf32>, vector<20x30xf32>, vector<32x30xf32> -> vector<32x30xf32>
    %c0_46 = arith.constant 0 : index
    %c0_47 = arith.constant 0 : index
    %c0_48 = arith.constant 0 : index
    %290 = vector.load %arg7[%c0_46, %c0_47, %c0_48] : memref<8x1x30xf32, #tpu.memory_space<vmem>>, vector<1x1x30xf32>
    %291 = vector.shape_cast %290 : vector<1x1x30xf32> to vector<1x30xf32>
    %292 = vector.shape_cast %291 : vector<1x30xf32> to vector<1x30xf32>
    %293 = vector.broadcast %292 : vector<1x30xf32> to vector<32x30xf32>
    %294 = arith.addf %289, %293 : vector<32x30xf32>
    %c0_49 = arith.constant 0 : index
    %c0_50 = arith.constant 0 : index
    %c0_51 = arith.constant 0 : index
    %295 = vector.load %arg6[%c0_49, %c0_50, %c0_51] : memref<8x10x30xf32, #tpu.memory_space<vmem>>, vector<1x10x30xf32>
    %296 = vector.shape_cast %295 : vector<1x10x30xf32> to vector<10x30xf32>
    %c0_52 = arith.constant 0 : index
    %c0_53 = arith.constant 0 : index
    %c0_54 = arith.constant 0 : index
    %297 = vector.load %arg8[%c0_52, %c0_53, %c0_54] : memref<8x1x30xf32, #tpu.memory_space<vmem>>, vector<1x1x30xf32>
    %298 = vector.shape_cast %297 : vector<1x1x30xf32> to vector<1x30xf32>
    %299 = vector.shape_cast %298 : vector<1x30xf32> to vector<1x30xf32>
    %300 = vector.broadcast %299 : vector<1x30xf32> to vector<8x30xf32>
    %cst_55 = arith.constant 0.000000e+00 : f32
    %301 = vector.broadcast %cst_55 : f32 to vector<8x10xf32>
    %302 = vector.extract_strided_slice %294 {offsets = [0, 0], sizes = [8, 30], strides = [1, 1]} : vector<32x30xf32> to vector<8x30xf32>
    %cst_56 = arith.constant dense<0.000000e+00> : vector<8x30xf32>
    %303 = tpu.matmul %301, %296, %cst_56 {dimension_numbers = #tpu.dot_dimension_numbers<[1], [0], [0], [1], [0, 0, 1, 1], [], []>} : vector<8x10xf32>, vector<10x30xf32>, vector<8x30xf32> -> vector<8x30xf32>
    %304 = arith.addf %303, %300 : vector<8x30xf32>
    %305 = vector.extract_strided_slice %302 {offsets = [0, 0], sizes = [8, 20], strides = [1, 1]} : vector<8x30xf32> to vector<8x20xf32>
    %306 = vector.extract_strided_slice %304 {offsets = [0, 0], sizes = [8, 20], strides = [1, 1]} : vector<8x30xf32> to vector<8x20xf32>
    %307 = arith.addf %305, %306 : vector<8x20xf32>
    %308 = arith.negf %307 : vector<8x20xf32>
    %309 = math.exp %308 : vector<8x20xf32>
    %cst_57 = arith.constant 1.000000e+00 : f32
    %310 = vector.broadcast %cst_57 : f32 to vector<8x20xf32>
    %311 = arith.addf %310, %309 : vector<8x20xf32>
    %312 = arith.divf %310, %311 : vector<8x20xf32>
    %313 = vector.extract_strided_slice %312 {offsets = [0, 0], sizes = [8, 10], strides = [1, 1]} : vector<8x20xf32> to vector<8x10xf32>
    %314 = vector.extract_strided_slice %312 {offsets = [0, 10], sizes = [8, 10], strides = [1, 1]} : vector<8x20xf32> to vector<8x10xf32>
    %315 = vector.extract_strided_slice %302 {offsets = [0, 20], sizes = [8, 10], strides = [1, 1]} : vector<8x30xf32> to vector<8x10xf32>
    %316 = vector.extract_strided_slice %304 {offsets = [0, 20], sizes = [8, 10], strides = [1, 1]} : vector<8x30xf32> to vector<8x10xf32>
    %317 = arith.mulf %313, %316 : vector<8x10xf32>
    %318 = arith.addf %315, %317 : vector<8x10xf32>
    %319 = math.tanh %318 : vector<8x10xf32>
    %cst_58 = arith.constant 1.000000e+00 : f32
    %320 = vector.broadcast %cst_58 : f32 to vector<8x10xf32>
    %321 = arith.subf %320, %314 : vector<8x10xf32>
    %322 = arith.mulf %321, %319 : vector<8x10xf32>
    %323 = arith.mulf %314, %301 : vector<8x10xf32>
    %324 = arith.addf %322, %323 : vector<8x10xf32>
    %325 = vector.extract_strided_slice %324 {offsets = [0, 0], sizes = [8, 5], strides = [1, 1]} : vector<8x10xf32> to vector<8x5xf32>
    %326 = vector.extract_strided_slice %324 {offsets = [0, 5], sizes = [8, 5], strides = [1, 1]} : vector<8x10xf32> to vector<8x5xf32>
    %327 = vector.extract_strided_slice %294 {offsets = [8, 0], sizes = [8, 30], strides = [1, 1]} : vector<32x30xf32> to vector<8x30xf32>
    %cst_59 = arith.constant dense<0.000000e+00> : vector<8x30xf32>
    %328 = tpu.matmul %324, %296, %cst_59 {dimension_numbers = #tpu.dot_dimension_numbers<[1], [0], [0], [1], [0, 0, 1, 1], [], []>} : vector<8x10xf32>, vector<10x30xf32>, vector<8x30xf32> -> vector<8x30xf32>
    %329 = arith.addf %328, %300 : vector<8x30xf32>
    %330 = vector.extract_strided_slice %327 {offsets = [0, 0], sizes = [8, 20], strides = [1, 1]} : vector<8x30xf32> to vector<8x20xf32>
    %331 = vector.extract_strided_slice %329 {offsets = [0, 0], sizes = [8, 20], strides = [1, 1]} : vector<8x30xf32> to vector<8x20xf32>
    %332 = arith.addf %330, %331 : vector<8x20xf32>
    %333 = arith.negf %332 : vector<8x20xf32>
    %334 = math.exp %333 : vector<8x20xf32>
    %cst_60 = arith.constant 1.000000e+00 : f32
    %335 = vector.broadcast %cst_60 : f32 to vector<8x20xf32>
    %336 = arith.addf %335, %334 : vector<8x20xf32>
    %337 = arith.divf %335, %336 : vector<8x20xf32>
    %338 = vector.extract_strided_slice %337 {offsets = [0, 0], sizes = [8, 10], strides = [1, 1]} : vector<8x20xf32> to vector<8x10xf32>
    %339 = vector.extract_strided_slice %337 {offsets = [0, 10], sizes = [8, 10], strides = [1, 1]} : vector<8x20xf32> to vector<8x10xf32>
    %340 = vector.extract_strided_slice %327 {offsets = [0, 20], sizes = [8, 10], strides = [1, 1]} : vector<8x30xf32> to vector<8x10xf32>
    %341 = vector.extract_strided_slice %329 {offsets = [0, 20], sizes = [8, 10], strides = [1, 1]} : vector<8x30xf32> to vector<8x10xf32>
    %342 = arith.mulf %338, %341 : vector<8x10xf32>
    %343 = arith.addf %340, %342 : vector<8x10xf32>
    %344 = math.tanh %343 : vector<8x10xf32>
    %cst_61 = arith.constant 1.000000e+00 : f32
    %345 = vector.broadcast %cst_61 : f32 to vector<8x10xf32>
    %346 = arith.subf %345, %339 : vector<8x10xf32>
    %347 = arith.mulf %346, %344 : vector<8x10xf32>
    %348 = arith.mulf %339, %324 : vector<8x10xf32>
    %349 = arith.addf %347, %348 : vector<8x10xf32>
    %350 = vector.extract_strided_slice %349 {offsets = [0, 0], sizes = [8, 5], strides = [1, 1]} : vector<8x10xf32> to vector<8x5xf32>
    %351 = vector.extract_strided_slice %349 {offsets = [0, 5], sizes = [8, 5], strides = [1, 1]} : vector<8x10xf32> to vector<8x5xf32>
    %352 = vector.extract_strided_slice %294 {offsets = [16, 0], sizes = [8, 30], strides = [1, 1]} : vector<32x30xf32> to vector<8x30xf32>
    %cst_62 = arith.constant dense<0.000000e+00> : vector<8x30xf32>
    %353 = tpu.matmul %349, %296, %cst_62 {dimension_numbers = #tpu.dot_dimension_numbers<[1], [0], [0], [1], [0, 0, 1, 1], [], []>} : vector<8x10xf32>, vector<10x30xf32>, vector<8x30xf32> -> vector<8x30xf32>
    %354 = arith.addf %353, %300 : vector<8x30xf32>
    %355 = vector.extract_strided_slice %352 {offsets = [0, 0], sizes = [8, 20], strides = [1, 1]} : vector<8x30xf32> to vector<8x20xf32>
    %356 = vector.extract_strided_slice %354 {offsets = [0, 0], sizes = [8, 20], strides = [1, 1]} : vector<8x30xf32> to vector<8x20xf32>
    %357 = arith.addf %355, %356 : vector<8x20xf32>
    %358 = arith.negf %357 : vector<8x20xf32>
    %359 = math.exp %358 : vector<8x20xf32>
    %cst_63 = arith.constant 1.000000e+00 : f32
    %360 = vector.broadcast %cst_63 : f32 to vector<8x20xf32>
    %361 = arith.addf %360, %359 : vector<8x20xf32>
    %362 = arith.divf %360, %361 : vector<8x20xf32>
    %363 = vector.extract_strided_slice %362 {offsets = [0, 0], sizes = [8, 10], strides = [1, 1]} : vector<8x20xf32> to vector<8x10xf32>
    %364 = vector.extract_strided_slice %362 {offsets = [0, 10], sizes = [8, 10], strides = [1, 1]} : vector<8x20xf32> to vector<8x10xf32>
    %365 = vector.extract_strided_slice %352 {offsets = [0, 20], sizes = [8, 10], strides = [1, 1]} : vector<8x30xf32> to vector<8x10xf32>
    %366 = vector.extract_strided_slice %354 {offsets = [0, 20], sizes = [8, 10], strides = [1, 1]} : vector<8x30xf32> to vector<8x10xf32>
    %367 = arith.mulf %363, %366 : vector<8x10xf32>
    %368 = arith.addf %365, %367 : vector<8x10xf32>
    %369 = math.tanh %368 : vector<8x10xf32>
    %cst_64 = arith.constant 1.000000e+00 : f32
    %370 = vector.broadcast %cst_64 : f32 to vector<8x10xf32>
    %371 = arith.subf %370, %364 : vector<8x10xf32>
    %372 = arith.mulf %371, %369 : vector<8x10xf32>
    %373 = arith.mulf %364, %349 : vector<8x10xf32>
    %374 = arith.addf %372, %373 : vector<8x10xf32>
    %375 = vector.extract_strided_slice %374 {offsets = [0, 0], sizes = [8, 5], strides = [1, 1]} : vector<8x10xf32> to vector<8x5xf32>
    %376 = vector.extract_strided_slice %374 {offsets = [0, 5], sizes = [8, 5], strides = [1, 1]} : vector<8x10xf32> to vector<8x5xf32>
    %377 = vector.extract_strided_slice %294 {offsets = [24, 0], sizes = [8, 30], strides = [1, 1]} : vector<32x30xf32> to vector<8x30xf32>
    %cst_65 = arith.constant dense<0.000000e+00> : vector<8x30xf32>
    %378 = tpu.matmul %374, %296, %cst_65 {dimension_numbers = #tpu.dot_dimension_numbers<[1], [0], [0], [1], [0, 0, 1, 1], [], []>} : vector<8x10xf32>, vector<10x30xf32>, vector<8x30xf32> -> vector<8x30xf32>
    %379 = arith.addf %378, %300 : vector<8x30xf32>
    %380 = vector.extract_strided_slice %377 {offsets = [0, 0], sizes = [8, 20], strides = [1, 1]} : vector<8x30xf32> to vector<8x20xf32>
    %381 = vector.extract_strided_slice %379 {offsets = [0, 0], sizes = [8, 20], strides = [1, 1]} : vector<8x30xf32> to vector<8x20xf32>
    %382 = arith.addf %380, %381 : vector<8x20xf32>
    %383 = arith.negf %382 : vector<8x20xf32>
    %384 = math.exp %383 : vector<8x20xf32>
    %cst_66 = arith.constant 1.000000e+00 : f32
    %385 = vector.broadcast %cst_66 : f32 to vector<8x20xf32>
    %386 = arith.addf %385, %384 : vector<8x20xf32>
    %387 = arith.divf %385, %386 : vector<8x20xf32>
    %388 = vector.extract_strided_slice %387 {offsets = [0, 0], sizes = [8, 10], strides = [1, 1]} : vector<8x20xf32> to vector<8x10xf32>
    %389 = vector.extract_strided_slice %387 {offsets = [0, 10], sizes = [8, 10], strides = [1, 1]} : vector<8x20xf32> to vector<8x10xf32>
    %390 = vector.extract_strided_slice %377 {offsets = [0, 20], sizes = [8, 10], strides = [1, 1]} : vector<8x30xf32> to vector<8x10xf32>
    %391 = vector.extract_strided_slice %379 {offsets = [0, 20], sizes = [8, 10], strides = [1, 1]} : vector<8x30xf32> to vector<8x10xf32>
    %392 = arith.mulf %388, %391 : vector<8x10xf32>
    %393 = arith.addf %390, %392 : vector<8x10xf32>
    %394 = math.tanh %393 : vector<8x10xf32>
    %cst_67 = arith.constant 1.000000e+00 : f32
    %395 = vector.broadcast %cst_67 : f32 to vector<8x10xf32>
    %396 = arith.subf %395, %389 : vector<8x10xf32>
    %397 = arith.mulf %396, %394 : vector<8x10xf32>
    %398 = arith.mulf %389, %374 : vector<8x10xf32>
    %399 = arith.addf %397, %398 : vector<8x10xf32>
    %400 = vector.extract_strided_slice %399 {offsets = [0, 0], sizes = [8, 5], strides = [1, 1]} : vector<8x10xf32> to vector<8x5xf32>
    %401 = vector.extract_strided_slice %399 {offsets = [0, 5], sizes = [8, 5], strides = [1, 1]} : vector<8x10xf32> to vector<8x5xf32>
    %402 = tpu.concatenate %325, %401 in 1 : vector<8x5xf32>, vector<8x5xf32> -> vector<8x10xf32>
    %403 = tpu.concatenate %350, %376 in 1 : vector<8x5xf32>, vector<8x5xf32> -> vector<8x10xf32>
    %404 = tpu.concatenate %375, %351 in 1 : vector<8x5xf32>, vector<8x5xf32> -> vector<8x10xf32>
    %405 = tpu.concatenate %400, %326 in 1 : vector<8x5xf32>, vector<8x5xf32> -> vector<8x10xf32>
    %406 = tpu.concatenate %402, %403, %404, %405 in 0 : vector<8x10xf32>, vector<8x10xf32>, vector<8x10xf32>, vector<8x10xf32> -> vector<32x10xf32>
    %407 = vector.extract_strided_slice %406 {offsets = [24, 0], sizes = [8, 10], strides = [1, 1]} : vector<32x10xf32> to vector<8x10xf32>
    %408 = vector.extract_strided_slice %406 {offsets = [16, 0], sizes = [8, 10], strides = [1, 1]} : vector<32x10xf32> to vector<8x10xf32>
    %409 = vector.extract_strided_slice %406 {offsets = [8, 0], sizes = [8, 10], strides = [1, 1]} : vector<32x10xf32> to vector<8x10xf32>
    %410 = vector.extract_strided_slice %406 {offsets = [0, 0], sizes = [8, 10], strides = [1, 1]} : vector<32x10xf32> to vector<8x10xf32>
    %411 = tpu.concatenate %407, %408, %409, %410 in 0 : vector<8x10xf32>, vector<8x10xf32>, vector<8x10xf32>, vector<8x10xf32> -> vector<32x10xf32>
    %412 = tpu.concatenate %406, %411 in 1 : vector<32x10xf32>, vector<32x10xf32> -> vector<32x20xf32>
    %c1 = arith.constant 1 : index
    %c0_68 = arith.constant 0 : index
    %c0_69 = arith.constant 0 : index
    %413 = vector.load %arg5[%c1, %c0_68, %c0_69] : memref<8x20x30xf32, #tpu.memory_space<vmem>>, vector<1x20x30xf32>
    %414 = vector.shape_cast %413 : vector<1x20x30xf32> to vector<20x30xf32>
    %cst_70 = arith.constant dense<0.000000e+00> : vector<32x30xf32>
    %415 = tpu.matmul %412, %414, %cst_70 {dimension_numbers = #tpu.dot_dimension_numbers<[1], [0], [0], [1], [0, 0, 1, 1], [], []>} : vector<32x20xf32>, vector<20x30xf32>, vector<32x30xf32> -> vector<32x30xf32>
    %c1_71 = arith.constant 1 : index
    %c0_72 = arith.constant 0 : index
    %c0_73 = arith.constant 0 : index
    %416 = vector.load %arg7[%c1_71, %c0_72, %c0_73] : memref<8x1x30xf32, #tpu.memory_space<vmem>>, vector<1x1x30xf32>
    %417 = vector.shape_cast %416 : vector<1x1x30xf32> to vector<1x30xf32>
    %418 = vector.shape_cast %417 : vector<1x30xf32> to vector<1x30xf32>
    %419 = vector.broadcast %418 : vector<1x30xf32> to vector<32x30xf32>
    %420 = arith.addf %415, %419 : vector<32x30xf32>
    %c1_74 = arith.constant 1 : index
    %c0_75 = arith.constant 0 : index
    %c0_76 = arith.constant 0 : index
    %421 = vector.load %arg6[%c1_74, %c0_75, %c0_76] : memref<8x10x30xf32, #tpu.memory_space<vmem>>, vector<1x10x30xf32>
    %422 = vector.shape_cast %421 : vector<1x10x30xf32> to vector<10x30xf32>
    %c1_77 = arith.constant 1 : index
    %c0_78 = arith.constant 0 : index
    %c0_79 = arith.constant 0 : index
    %423 = vector.load %arg8[%c1_77, %c0_78, %c0_79] : memref<8x1x30xf32, #tpu.memory_space<vmem>>, vector<1x1x30xf32>
    %424 = vector.shape_cast %423 : vector<1x1x30xf32> to vector<1x30xf32>
    %425 = vector.shape_cast %424 : vector<1x30xf32> to vector<1x30xf32>
    %426 = vector.broadcast %425 : vector<1x30xf32> to vector<8x30xf32>
    %cst_80 = arith.constant 0.000000e+00 : f32
    %427 = vector.broadcast %cst_80 : f32 to vector<8x10xf32>
    %428 = vector.extract_strided_slice %420 {offsets = [0, 0], sizes = [8, 30], strides = [1, 1]} : vector<32x30xf32> to vector<8x30xf32>
    %cst_81 = arith.constant dense<0.000000e+00> : vector<8x30xf32>
    %429 = tpu.matmul %427, %422, %cst_81 {dimension_numbers = #tpu.dot_dimension_numbers<[1], [0], [0], [1], [0, 0, 1, 1], [], []>} : vector<8x10xf32>, vector<10x30xf32>, vector<8x30xf32> -> vector<8x30xf32>
    %430 = arith.addf %429, %426 : vector<8x30xf32>
    %431 = vector.extract_strided_slice %428 {offsets = [0, 0], sizes = [8, 20], strides = [1, 1]} : vector<8x30xf32> to vector<8x20xf32>
    %432 = vector.extract_strided_slice %430 {offsets = [0, 0], sizes = [8, 20], strides = [1, 1]} : vector<8x30xf32> to vector<8x20xf32>
    %433 = arith.addf %431, %432 : vector<8x20xf32>
    %434 = arith.negf %433 : vector<8x20xf32>
    %435 = math.exp %434 : vector<8x20xf32>
    %cst_82 = arith.constant 1.000000e+00 : f32
    %436 = vector.broadcast %cst_82 : f32 to vector<8x20xf32>
    %437 = arith.addf %436, %435 : vector<8x20xf32>
    %438 = arith.divf %436, %437 : vector<8x20xf32>
    %439 = vector.extract_strided_slice %438 {offsets = [0, 0], sizes = [8, 10], strides = [1, 1]} : vector<8x20xf32> to vector<8x10xf32>
    %440 = vector.extract_strided_slice %438 {offsets = [0, 10], sizes = [8, 10], strides = [1, 1]} : vector<8x20xf32> to vector<8x10xf32>
    %441 = vector.extract_strided_slice %428 {offsets = [0, 20], sizes = [8, 10], strides = [1, 1]} : vector<8x30xf32> to vector<8x10xf32>
    %442 = vector.extract_strided_slice %430 {offsets = [0, 20], sizes = [8, 10], strides = [1, 1]} : vector<8x30xf32> to vector<8x10xf32>
    %443 = arith.mulf %439, %442 : vector<8x10xf32>
    %444 = arith.addf %441, %443 : vector<8x10xf32>
    %445 = math.tanh %444 : vector<8x10xf32>
    %cst_83 = arith.constant 1.000000e+00 : f32
    %446 = vector.broadcast %cst_83 : f32 to vector<8x10xf32>
    %447 = arith.subf %446, %440 : vector<8x10xf32>
    %448 = arith.mulf %447, %445 : vector<8x10xf32>
    %449 = arith.mulf %440, %427 : vector<8x10xf32>
    %450 = arith.addf %448, %449 : vector<8x10xf32>
    %451 = vector.extract_strided_slice %450 {offsets = [0, 0], sizes = [8, 5], strides = [1, 1]} : vector<8x10xf32> to vector<8x5xf32>
    %452 = vector.extract_strided_slice %450 {offsets = [0, 5], sizes = [8, 5], strides = [1, 1]} : vector<8x10xf32> to vector<8x5xf32>
    %453 = vector.extract_strided_slice %420 {offsets = [8, 0], sizes = [8, 30], strides = [1, 1]} : vector<32x30xf32> to vector<8x30xf32>
    %cst_84 = arith.constant dense<0.000000e+00> : vector<8x30xf32>
    %454 = tpu.matmul %450, %422, %cst_84 {dimension_numbers = #tpu.dot_dimension_numbers<[1], [0], [0], [1], [0, 0, 1, 1], [], []>} : vector<8x10xf32>, vector<10x30xf32>, vector<8x30xf32> -> vector<8x30xf32>
    %455 = arith.addf %454, %426 : vector<8x30xf32>
    %456 = vector.extract_strided_slice %453 {offsets = [0, 0], sizes = [8, 20], strides = [1, 1]} : vector<8x30xf32> to vector<8x20xf32>
    %457 = vector.extract_strided_slice %455 {offsets = [0, 0], sizes = [8, 20], strides = [1, 1]} : vector<8x30xf32> to vector<8x20xf32>
    %458 = arith.addf %456, %457 : vector<8x20xf32>
    %459 = arith.negf %458 : vector<8x20xf32>
    %460 = math.exp %459 : vector<8x20xf32>
    %cst_85 = arith.constant 1.000000e+00 : f32
    %461 = vector.broadcast %cst_85 : f32 to vector<8x20xf32>
    %462 = arith.addf %461, %460 : vector<8x20xf32>
    %463 = arith.divf %461, %462 : vector<8x20xf32>
    %464 = vector.extract_strided_slice %463 {offsets = [0, 0], sizes = [8, 10], strides = [1, 1]} : vector<8x20xf32> to vector<8x10xf32>
    %465 = vector.extract_strided_slice %463 {offsets = [0, 10], sizes = [8, 10], strides = [1, 1]} : vector<8x20xf32> to vector<8x10xf32>
    %466 = vector.extract_strided_slice %453 {offsets = [0, 20], sizes = [8, 10], strides = [1, 1]} : vector<8x30xf32> to vector<8x10xf32>
    %467 = vector.extract_strided_slice %455 {offsets = [0, 20], sizes = [8, 10], strides = [1, 1]} : vector<8x30xf32> to vector<8x10xf32>
    %468 = arith.mulf %464, %467 : vector<8x10xf32>
    %469 = arith.addf %466, %468 : vector<8x10xf32>
    %470 = math.tanh %469 : vector<8x10xf32>
    %cst_86 = arith.constant 1.000000e+00 : f32
    %471 = vector.broadcast %cst_86 : f32 to vector<8x10xf32>
    %472 = arith.subf %471, %465 : vector<8x10xf32>
    %473 = arith.mulf %472, %470 : vector<8x10xf32>
    %474 = arith.mulf %465, %450 : vector<8x10xf32>
    %475 = arith.addf %473, %474 : vector<8x10xf32>
    %476 = vector.extract_strided_slice %475 {offsets = [0, 0], sizes = [8, 5], strides = [1, 1]} : vector<8x10xf32> to vector<8x5xf32>
    %477 = vector.extract_strided_slice %475 {offsets = [0, 5], sizes = [8, 5], strides = [1, 1]} : vector<8x10xf32> to vector<8x5xf32>
    %478 = vector.extract_strided_slice %420 {offsets = [16, 0], sizes = [8, 30], strides = [1, 1]} : vector<32x30xf32> to vector<8x30xf32>
    %cst_87 = arith.constant dense<0.000000e+00> : vector<8x30xf32>
    %479 = tpu.matmul %475, %422, %cst_87 {dimension_numbers = #tpu.dot_dimension_numbers<[1], [0], [0], [1], [0, 0, 1, 1], [], []>} : vector<8x10xf32>, vector<10x30xf32>, vector<8x30xf32> -> vector<8x30xf32>
    %480 = arith.addf %479, %426 : vector<8x30xf32>
    %481 = vector.extract_strided_slice %478 {offsets = [0, 0], sizes = [8, 20], strides = [1, 1]} : vector<8x30xf32> to vector<8x20xf32>
    %482 = vector.extract_strided_slice %480 {offsets = [0, 0], sizes = [8, 20], strides = [1, 1]} : vector<8x30xf32> to vector<8x20xf32>
    %483 = arith.addf %481, %482 : vector<8x20xf32>
    %484 = arith.negf %483 : vector<8x20xf32>
    %485 = math.exp %484 : vector<8x20xf32>
    %cst_88 = arith.constant 1.000000e+00 : f32
    %486 = vector.broadcast %cst_88 : f32 to vector<8x20xf32>
    %487 = arith.addf %486, %485 : vector<8x20xf32>
    %488 = arith.divf %486, %487 : vector<8x20xf32>
    %489 = vector.extract_strided_slice %488 {offsets = [0, 0], sizes = [8, 10], strides = [1, 1]} : vector<8x20xf32> to vector<8x10xf32>
    %490 = vector.extract_strided_slice %488 {offsets = [0, 10], sizes = [8, 10], strides = [1, 1]} : vector<8x20xf32> to vector<8x10xf32>
    %491 = vector.extract_strided_slice %478 {offsets = [0, 20], sizes = [8, 10], strides = [1, 1]} : vector<8x30xf32> to vector<8x10xf32>
    %492 = vector.extract_strided_slice %480 {offsets = [0, 20], sizes = [8, 10], strides = [1, 1]} : vector<8x30xf32> to vector<8x10xf32>
    %493 = arith.mulf %489, %492 : vector<8x10xf32>
    %494 = arith.addf %491, %493 : vector<8x10xf32>
    %495 = math.tanh %494 : vector<8x10xf32>
    %cst_89 = arith.constant 1.000000e+00 : f32
    %496 = vector.broadcast %cst_89 : f32 to vector<8x10xf32>
    %497 = arith.subf %496, %490 : vector<8x10xf32>
    %498 = arith.mulf %497, %495 : vector<8x10xf32>
    %499 = arith.mulf %490, %475 : vector<8x10xf32>
    %500 = arith.addf %498, %499 : vector<8x10xf32>
    %501 = vector.extract_strided_slice %500 {offsets = [0, 0], sizes = [8, 5], strides = [1, 1]} : vector<8x10xf32> to vector<8x5xf32>
    %502 = vector.extract_strided_slice %500 {offsets = [0, 5], sizes = [8, 5], strides = [1, 1]} : vector<8x10xf32> to vector<8x5xf32>
    %503 = vector.extract_strided_slice %420 {offsets = [24, 0], sizes = [8, 30], strides = [1, 1]} : vector<32x30xf32> to vector<8x30xf32>
    %cst_90 = arith.constant dense<0.000000e+00> : vector<8x30xf32>
    %504 = tpu.matmul %500, %422, %cst_90 {dimension_numbers = #tpu.dot_dimension_numbers<[1], [0], [0], [1], [0, 0, 1, 1], [], []>} : vector<8x10xf32>, vector<10x30xf32>, vector<8x30xf32> -> vector<8x30xf32>
    %505 = arith.addf %504, %426 : vector<8x30xf32>
    %506 = vector.extract_strided_slice %503 {offsets = [0, 0], sizes = [8, 20], strides = [1, 1]} : vector<8x30xf32> to vector<8x20xf32>
    %507 = vector.extract_strided_slice %505 {offsets = [0, 0], sizes = [8, 20], strides = [1, 1]} : vector<8x30xf32> to vector<8x20xf32>
    %508 = arith.addf %506, %507 : vector<8x20xf32>
    %509 = arith.negf %508 : vector<8x20xf32>
    %510 = math.exp %509 : vector<8x20xf32>
    %cst_91 = arith.constant 1.000000e+00 : f32
    %511 = vector.broadcast %cst_91 : f32 to vector<8x20xf32>
    %512 = arith.addf %511, %510 : vector<8x20xf32>
    %513 = arith.divf %511, %512 : vector<8x20xf32>
    %514 = vector.extract_strided_slice %513 {offsets = [0, 0], sizes = [8, 10], strides = [1, 1]} : vector<8x20xf32> to vector<8x10xf32>
    %515 = vector.extract_strided_slice %513 {offsets = [0, 10], sizes = [8, 10], strides = [1, 1]} : vector<8x20xf32> to vector<8x10xf32>
    %516 = vector.extract_strided_slice %503 {offsets = [0, 20], sizes = [8, 10], strides = [1, 1]} : vector<8x30xf32> to vector<8x10xf32>
    %517 = vector.extract_strided_slice %505 {offsets = [0, 20], sizes = [8, 10], strides = [1, 1]} : vector<8x30xf32> to vector<8x10xf32>
    %518 = arith.mulf %514, %517 : vector<8x10xf32>
    %519 = arith.addf %516, %518 : vector<8x10xf32>
    %520 = math.tanh %519 : vector<8x10xf32>
    %cst_92 = arith.constant 1.000000e+00 : f32
    %521 = vector.broadcast %cst_92 : f32 to vector<8x10xf32>
    %522 = arith.subf %521, %515 : vector<8x10xf32>
    %523 = arith.mulf %522, %520 : vector<8x10xf32>
    %524 = arith.mulf %515, %500 : vector<8x10xf32>
    %525 = arith.addf %523, %524 : vector<8x10xf32>
    %526 = vector.extract_strided_slice %525 {offsets = [0, 0], sizes = [8, 5], strides = [1, 1]} : vector<8x10xf32> to vector<8x5xf32>
    %527 = vector.extract_strided_slice %525 {offsets = [0, 5], sizes = [8, 5], strides = [1, 1]} : vector<8x10xf32> to vector<8x5xf32>
    %528 = tpu.concatenate %451, %527 in 1 : vector<8x5xf32>, vector<8x5xf32> -> vector<8x10xf32>
    %529 = tpu.concatenate %476, %502 in 1 : vector<8x5xf32>, vector<8x5xf32> -> vector<8x10xf32>
    %530 = tpu.concatenate %501, %477 in 1 : vector<8x5xf32>, vector<8x5xf32> -> vector<8x10xf32>
    %531 = tpu.concatenate %526, %452 in 1 : vector<8x5xf32>, vector<8x5xf32> -> vector<8x10xf32>
    %532 = tpu.concatenate %528, %529, %530, %531 in 0 : vector<8x10xf32>, vector<8x10xf32>, vector<8x10xf32>, vector<8x10xf32> -> vector<32x10xf32>
    %533 = vector.extract_strided_slice %532 {offsets = [24, 0], sizes = [8, 10], strides = [1, 1]} : vector<32x10xf32> to vector<8x10xf32>
    %534 = vector.extract_strided_slice %532 {offsets = [16, 0], sizes = [8, 10], strides = [1, 1]} : vector<32x10xf32> to vector<8x10xf32>
    %535 = vector.extract_strided_slice %532 {offsets = [8, 0], sizes = [8, 10], strides = [1, 1]} : vector<32x10xf32> to vector<8x10xf32>
    %536 = vector.extract_strided_slice %532 {offsets = [0, 0], sizes = [8, 10], strides = [1, 1]} : vector<32x10xf32> to vector<8x10xf32>
    %537 = tpu.concatenate %533, %534, %535, %536 in 0 : vector<8x10xf32>, vector<8x10xf32>, vector<8x10xf32>, vector<8x10xf32> -> vector<32x10xf32>
    %538 = tpu.concatenate %532, %537 in 1 : vector<32x10xf32>, vector<32x10xf32> -> vector<32x20xf32>
    %c2 = arith.constant 2 : index
    %c0_93 = arith.constant 0 : index
    %c0_94 = arith.constant 0 : index
    %539 = vector.load %arg5[%c2, %c0_93, %c0_94] : memref<8x20x30xf32, #tpu.memory_space<vmem>>, vector<1x20x30xf32>
    %540 = vector.shape_cast %539 : vector<1x20x30xf32> to vector<20x30xf32>
    %cst_95 = arith.constant dense<0.000000e+00> : vector<32x30xf32>
    %541 = tpu.matmul %538, %540, %cst_95 {dimension_numbers = #tpu.dot_dimension_numbers<[1], [0], [0], [1], [0, 0, 1, 1], [], []>} : vector<32x20xf32>, vector<20x30xf32>, vector<32x30xf32> -> vector<32x30xf32>
    %c2_96 = arith.constant 2 : index
    %c0_97 = arith.constant 0 : index
    %c0_98 = arith.constant 0 : index
    %542 = vector.load %arg7[%c2_96, %c0_97, %c0_98] : memref<8x1x30xf32, #tpu.memory_space<vmem>>, vector<1x1x30xf32>
    %543 = vector.shape_cast %542 : vector<1x1x30xf32> to vector<1x30xf32>
    %544 = vector.shape_cast %543 : vector<1x30xf32> to vector<1x30xf32>
    %545 = vector.broadcast %544 : vector<1x30xf32> to vector<32x30xf32>
    %546 = arith.addf %541, %545 : vector<32x30xf32>
    %c2_99 = arith.constant 2 : index
    %c0_100 = arith.constant 0 : index
    %c0_101 = arith.constant 0 : index
    %547 = vector.load %arg6[%c2_99, %c0_100, %c0_101] : memref<8x10x30xf32, #tpu.memory_space<vmem>>, vector<1x10x30xf32>
    %548 = vector.shape_cast %547 : vector<1x10x30xf32> to vector<10x30xf32>
    %c2_102 = arith.constant 2 : index
    %c0_103 = arith.constant 0 : index
    %c0_104 = arith.constant 0 : index
    %549 = vector.load %arg8[%c2_102, %c0_103, %c0_104] : memref<8x1x30xf32, #tpu.memory_space<vmem>>, vector<1x1x30xf32>
    %550 = vector.shape_cast %549 : vector<1x1x30xf32> to vector<1x30xf32>
    %551 = vector.shape_cast %550 : vector<1x30xf32> to vector<1x30xf32>
    %552 = vector.broadcast %551 : vector<1x30xf32> to vector<8x30xf32>
    %cst_105 = arith.constant 0.000000e+00 : f32
    %553 = vector.broadcast %cst_105 : f32 to vector<8x10xf32>
    %554 = vector.extract_strided_slice %546 {offsets = [0, 0], sizes = [8, 30], strides = [1, 1]} : vector<32x30xf32> to vector<8x30xf32>
    %cst_106 = arith.constant dense<0.000000e+00> : vector<8x30xf32>
    %555 = tpu.matmul %553, %548, %cst_106 {dimension_numbers = #tpu.dot_dimension_numbers<[1], [0], [0], [1], [0, 0, 1, 1], [], []>} : vector<8x10xf32>, vector<10x30xf32>, vector<8x30xf32> -> vector<8x30xf32>
    %556 = arith.addf %555, %552 : vector<8x30xf32>
    %557 = vector.extract_strided_slice %554 {offsets = [0, 0], sizes = [8, 20], strides = [1, 1]} : vector<8x30xf32> to vector<8x20xf32>
    %558 = vector.extract_strided_slice %556 {offsets = [0, 0], sizes = [8, 20], strides = [1, 1]} : vector<8x30xf32> to vector<8x20xf32>
    %559 = arith.addf %557, %558 : vector<8x20xf32>
    %560 = arith.negf %559 : vector<8x20xf32>
    %561 = math.exp %560 : vector<8x20xf32>
    %cst_107 = arith.constant 1.000000e+00 : f32
    %562 = vector.broadcast %cst_107 : f32 to vector<8x20xf32>
    %563 = arith.addf %562, %561 : vector<8x20xf32>
    %564 = arith.divf %562, %563 : vector<8x20xf32>
    %565 = vector.extract_strided_slice %564 {offsets = [0, 0], sizes = [8, 10], strides = [1, 1]} : vector<8x20xf32> to vector<8x10xf32>
    %566 = vector.extract_strided_slice %564 {offsets = [0, 10], sizes = [8, 10], strides = [1, 1]} : vector<8x20xf32> to vector<8x10xf32>
    %567 = vector.extract_strided_slice %554 {offsets = [0, 20], sizes = [8, 10], strides = [1, 1]} : vector<8x30xf32> to vector<8x10xf32>
    %568 = vector.extract_strided_slice %556 {offsets = [0, 20], sizes = [8, 10], strides = [1, 1]} : vector<8x30xf32> to vector<8x10xf32>
    %569 = arith.mulf %565, %568 : vector<8x10xf32>
    %570 = arith.addf %567, %569 : vector<8x10xf32>
    %571 = math.tanh %570 : vector<8x10xf32>
    %cst_108 = arith.constant 1.000000e+00 : f32
    %572 = vector.broadcast %cst_108 : f32 to vector<8x10xf32>
    %573 = arith.subf %572, %566 : vector<8x10xf32>
    %574 = arith.mulf %573, %571 : vector<8x10xf32>
    %575 = arith.mulf %566, %553 : vector<8x10xf32>
    %576 = arith.addf %574, %575 : vector<8x10xf32>
    %577 = vector.extract_strided_slice %576 {offsets = [0, 0], sizes = [8, 5], strides = [1, 1]} : vector<8x10xf32> to vector<8x5xf32>
    %578 = vector.extract_strided_slice %576 {offsets = [0, 5], sizes = [8, 5], strides = [1, 1]} : vector<8x10xf32> to vector<8x5xf32>
    %579 = vector.extract_strided_slice %546 {offsets = [8, 0], sizes = [8, 30], strides = [1, 1]} : vector<32x30xf32> to vector<8x30xf32>
    %cst_109 = arith.constant dense<0.000000e+00> : vector<8x30xf32>
    %580 = tpu.matmul %576, %548, %cst_109 {dimension_numbers = #tpu.dot_dimension_numbers<[1], [0], [0], [1], [0, 0, 1, 1], [], []>} : vector<8x10xf32>, vector<10x30xf32>, vector<8x30xf32> -> vector<8x30xf32>
    %581 = arith.addf %580, %552 : vector<8x30xf32>
    %582 = vector.extract_strided_slice %579 {offsets = [0, 0], sizes = [8, 20], strides = [1, 1]} : vector<8x30xf32> to vector<8x20xf32>
    %583 = vector.extract_strided_slice %581 {offsets = [0, 0], sizes = [8, 20], strides = [1, 1]} : vector<8x30xf32> to vector<8x20xf32>
    %584 = arith.addf %582, %583 : vector<8x20xf32>
    %585 = arith.negf %584 : vector<8x20xf32>
    %586 = math.exp %585 : vector<8x20xf32>
    %cst_110 = arith.constant 1.000000e+00 : f32
    %587 = vector.broadcast %cst_110 : f32 to vector<8x20xf32>
    %588 = arith.addf %587, %586 : vector<8x20xf32>
    %589 = arith.divf %587, %588 : vector<8x20xf32>
    %590 = vector.extract_strided_slice %589 {offsets = [0, 0], sizes = [8, 10], strides = [1, 1]} : vector<8x20xf32> to vector<8x10xf32>
    %591 = vector.extract_strided_slice %589 {offsets = [0, 10], sizes = [8, 10], strides = [1, 1]} : vector<8x20xf32> to vector<8x10xf32>
    %592 = vector.extract_strided_slice %579 {offsets = [0, 20], sizes = [8, 10], strides = [1, 1]} : vector<8x30xf32> to vector<8x10xf32>
    %593 = vector.extract_strided_slice %581 {offsets = [0, 20], sizes = [8, 10], strides = [1, 1]} : vector<8x30xf32> to vector<8x10xf32>
    %594 = arith.mulf %590, %593 : vector<8x10xf32>
    %595 = arith.addf %592, %594 : vector<8x10xf32>
    %596 = math.tanh %595 : vector<8x10xf32>
    %cst_111 = arith.constant 1.000000e+00 : f32
    %597 = vector.broadcast %cst_111 : f32 to vector<8x10xf32>
    %598 = arith.subf %597, %591 : vector<8x10xf32>
    %599 = arith.mulf %598, %596 : vector<8x10xf32>
    %600 = arith.mulf %591, %576 : vector<8x10xf32>
    %601 = arith.addf %599, %600 : vector<8x10xf32>
    %602 = vector.extract_strided_slice %601 {offsets = [0, 0], sizes = [8, 5], strides = [1, 1]} : vector<8x10xf32> to vector<8x5xf32>
    %603 = vector.extract_strided_slice %601 {offsets = [0, 5], sizes = [8, 5], strides = [1, 1]} : vector<8x10xf32> to vector<8x5xf32>
    %604 = vector.extract_strided_slice %546 {offsets = [16, 0], sizes = [8, 30], strides = [1, 1]} : vector<32x30xf32> to vector<8x30xf32>
    %cst_112 = arith.constant dense<0.000000e+00> : vector<8x30xf32>
    %605 = tpu.matmul %601, %548, %cst_112 {dimension_numbers = #tpu.dot_dimension_numbers<[1], [0], [0], [1], [0, 0, 1, 1], [], []>} : vector<8x10xf32>, vector<10x30xf32>, vector<8x30xf32> -> vector<8x30xf32>
    %606 = arith.addf %605, %552 : vector<8x30xf32>
    %607 = vector.extract_strided_slice %604 {offsets = [0, 0], sizes = [8, 20], strides = [1, 1]} : vector<8x30xf32> to vector<8x20xf32>
    %608 = vector.extract_strided_slice %606 {offsets = [0, 0], sizes = [8, 20], strides = [1, 1]} : vector<8x30xf32> to vector<8x20xf32>
    %609 = arith.addf %607, %608 : vector<8x20xf32>
    %610 = arith.negf %609 : vector<8x20xf32>
    %611 = math.exp %610 : vector<8x20xf32>
    %cst_113 = arith.constant 1.000000e+00 : f32
    %612 = vector.broadcast %cst_113 : f32 to vector<8x20xf32>
    %613 = arith.addf %612, %611 : vector<8x20xf32>
    %614 = arith.divf %612, %613 : vector<8x20xf32>
    %615 = vector.extract_strided_slice %614 {offsets = [0, 0], sizes = [8, 10], strides = [1, 1]} : vector<8x20xf32> to vector<8x10xf32>
    %616 = vector.extract_strided_slice %614 {offsets = [0, 10], sizes = [8, 10], strides = [1, 1]} : vector<8x20xf32> to vector<8x10xf32>
    %617 = vector.extract_strided_slice %604 {offsets = [0, 20], sizes = [8, 10], strides = [1, 1]} : vector<8x30xf32> to vector<8x10xf32>
    %618 = vector.extract_strided_slice %606 {offsets = [0, 20], sizes = [8, 10], strides = [1, 1]} : vector<8x30xf32> to vector<8x10xf32>
    %619 = arith.mulf %615, %618 : vector<8x10xf32>
    %620 = arith.addf %617, %619 : vector<8x10xf32>
    %621 = math.tanh %620 : vector<8x10xf32>
    %cst_114 = arith.constant 1.000000e+00 : f32
    %622 = vector.broadcast %cst_114 : f32 to vector<8x10xf32>
    %623 = arith.subf %622, %616 : vector<8x10xf32>
    %624 = arith.mulf %623, %621 : vector<8x10xf32>
    %625 = arith.mulf %616, %601 : vector<8x10xf32>
    %626 = arith.addf %624, %625 : vector<8x10xf32>
    %627 = vector.extract_strided_slice %626 {offsets = [0, 0], sizes = [8, 5], strides = [1, 1]} : vector<8x10xf32> to vector<8x5xf32>
    %628 = vector.extract_strided_slice %626 {offsets = [0, 5], sizes = [8, 5], strides = [1, 1]} : vector<8x10xf32> to vector<8x5xf32>
    %629 = vector.extract_strided_slice %546 {offsets = [24, 0], sizes = [8, 30], strides = [1, 1]} : vector<32x30xf32> to vector<8x30xf32>
    %cst_115 = arith.constant dense<0.000000e+00> : vector<8x30xf32>
    %630 = tpu.matmul %626, %548, %cst_115 {dimension_numbers = #tpu.dot_dimension_numbers<[1], [0], [0], [1], [0, 0, 1, 1], [], []>} : vector<8x10xf32>, vector<10x30xf32>, vector<8x30xf32> -> vector<8x30xf32>
    %631 = arith.addf %630, %552 : vector<8x30xf32>
    %632 = vector.extract_strided_slice %629 {offsets = [0, 0], sizes = [8, 20], strides = [1, 1]} : vector<8x30xf32> to vector<8x20xf32>
    %633 = vector.extract_strided_slice %631 {offsets = [0, 0], sizes = [8, 20], strides = [1, 1]} : vector<8x30xf32> to vector<8x20xf32>
    %634 = arith.addf %632, %633 : vector<8x20xf32>
    %635 = arith.negf %634 : vector<8x20xf32>
    %636 = math.exp %635 : vector<8x20xf32>
    %cst_116 = arith.constant 1.000000e+00 : f32
    %637 = vector.broadcast %cst_116 : f32 to vector<8x20xf32>
    %638 = arith.addf %637, %636 : vector<8x20xf32>
    %639 = arith.divf %637, %638 : vector<8x20xf32>
    %640 = vector.extract_strided_slice %639 {offsets = [0, 0], sizes = [8, 10], strides = [1, 1]} : vector<8x20xf32> to vector<8x10xf32>
    %641 = vector.extract_strided_slice %639 {offsets = [0, 10], sizes = [8, 10], strides = [1, 1]} : vector<8x20xf32> to vector<8x10xf32>
    %642 = vector.extract_strided_slice %629 {offsets = [0, 20], sizes = [8, 10], strides = [1, 1]} : vector<8x30xf32> to vector<8x10xf32>
    %643 = vector.extract_strided_slice %631 {offsets = [0, 20], sizes = [8, 10], strides = [1, 1]} : vector<8x30xf32> to vector<8x10xf32>
    %644 = arith.mulf %640, %643 : vector<8x10xf32>
    %645 = arith.addf %642, %644 : vector<8x10xf32>
    %646 = math.tanh %645 : vector<8x10xf32>
    %cst_117 = arith.constant 1.000000e+00 : f32
    %647 = vector.broadcast %cst_117 : f32 to vector<8x10xf32>
    %648 = arith.subf %647, %641 : vector<8x10xf32>
    %649 = arith.mulf %648, %646 : vector<8x10xf32>
    %650 = arith.mulf %641, %626 : vector<8x10xf32>
    %651 = arith.addf %649, %650 : vector<8x10xf32>
    %652 = vector.extract_strided_slice %651 {offsets = [0, 0], sizes = [8, 5], strides = [1, 1]} : vector<8x10xf32> to vector<8x5xf32>
    %653 = vector.extract_strided_slice %651 {offsets = [0, 5], sizes = [8, 5], strides = [1, 1]} : vector<8x10xf32> to vector<8x5xf32>
    %654 = tpu.concatenate %577, %653 in 1 : vector<8x5xf32>, vector<8x5xf32> -> vector<8x10xf32>
    %655 = tpu.concatenate %602, %628 in 1 : vector<8x5xf32>, vector<8x5xf32> -> vector<8x10xf32>
    %656 = tpu.concatenate %627, %603 in 1 : vector<8x5xf32>, vector<8x5xf32> -> vector<8x10xf32>
    %657 = tpu.concatenate %652, %578 in 1 : vector<8x5xf32>, vector<8x5xf32> -> vector<8x10xf32>
    %658 = tpu.concatenate %654, %655, %656, %657 in 0 : vector<8x10xf32>, vector<8x10xf32>, vector<8x10xf32>, vector<8x10xf32> -> vector<32x10xf32>
    %659 = vector.extract_strided_slice %658 {offsets = [24, 0], sizes = [8, 10], strides = [1, 1]} : vector<32x10xf32> to vector<8x10xf32>
    %660 = vector.extract_strided_slice %658 {offsets = [16, 0], sizes = [8, 10], strides = [1, 1]} : vector<32x10xf32> to vector<8x10xf32>
    %661 = vector.extract_strided_slice %658 {offsets = [8, 0], sizes = [8, 10], strides = [1, 1]} : vector<32x10xf32> to vector<8x10xf32>
    %662 = vector.extract_strided_slice %658 {offsets = [0, 0], sizes = [8, 10], strides = [1, 1]} : vector<32x10xf32> to vector<8x10xf32>
    %663 = tpu.concatenate %659, %660, %661, %662 in 0 : vector<8x10xf32>, vector<8x10xf32>, vector<8x10xf32>, vector<8x10xf32> -> vector<32x10xf32>
    %664 = tpu.concatenate %658, %663 in 1 : vector<32x10xf32>, vector<32x10xf32> -> vector<32x20xf32>
    %c3 = arith.constant 3 : index
    %c0_118 = arith.constant 0 : index
    %c0_119 = arith.constant 0 : index
    %665 = vector.load %arg5[%c3, %c0_118, %c0_119] : memref<8x20x30xf32, #tpu.memory_space<vmem>>, vector<1x20x30xf32>
    %666 = vector.shape_cast %665 : vector<1x20x30xf32> to vector<20x30xf32>
    %cst_120 = arith.constant dense<0.000000e+00> : vector<32x30xf32>
    %667 = tpu.matmul %664, %666, %cst_120 {dimension_numbers = #tpu.dot_dimension_numbers<[1], [0], [0], [1], [0, 0, 1, 1], [], []>} : vector<32x20xf32>, vector<20x30xf32>, vector<32x30xf32> -> vector<32x30xf32>
    %c3_121 = arith.constant 3 : index
    %c0_122 = arith.constant 0 : index
    %c0_123 = arith.constant 0 : index
    %668 = vector.load %arg7[%c3_121, %c0_122, %c0_123] : memref<8x1x30xf32, #tpu.memory_space<vmem>>, vector<1x1x30xf32>
    %669 = vector.shape_cast %668 : vector<1x1x30xf32> to vector<1x30xf32>
    %670 = vector.shape_cast %669 : vector<1x30xf32> to vector<1x30xf32>
    %671 = vector.broadcast %670 : vector<1x30xf32> to vector<32x30xf32>
    %672 = arith.addf %667, %671 : vector<32x30xf32>
    %c3_124 = arith.constant 3 : index
    %c0_125 = arith.constant 0 : index
    %c0_126 = arith.constant 0 : index
    %673 = vector.load %arg6[%c3_124, %c0_125, %c0_126] : memref<8x10x30xf32, #tpu.memory_space<vmem>>, vector<1x10x30xf32>
    %674 = vector.shape_cast %673 : vector<1x10x30xf32> to vector<10x30xf32>
    %c3_127 = arith.constant 3 : index
    %c0_128 = arith.constant 0 : index
    %c0_129 = arith.constant 0 : index
    %675 = vector.load %arg8[%c3_127, %c0_128, %c0_129] : memref<8x1x30xf32, #tpu.memory_space<vmem>>, vector<1x1x30xf32>
    %676 = vector.shape_cast %675 : vector<1x1x30xf32> to vector<1x30xf32>
    %677 = vector.shape_cast %676 : vector<1x30xf32> to vector<1x30xf32>
    %678 = vector.broadcast %677 : vector<1x30xf32> to vector<8x30xf32>
    %cst_130 = arith.constant 0.000000e+00 : f32
    %679 = vector.broadcast %cst_130 : f32 to vector<8x10xf32>
    %680 = vector.extract_strided_slice %672 {offsets = [0, 0], sizes = [8, 30], strides = [1, 1]} : vector<32x30xf32> to vector<8x30xf32>
    %cst_131 = arith.constant dense<0.000000e+00> : vector<8x30xf32>
    %681 = tpu.matmul %679, %674, %cst_131 {dimension_numbers = #tpu.dot_dimension_numbers<[1], [0], [0], [1], [0, 0, 1, 1], [], []>} : vector<8x10xf32>, vector<10x30xf32>, vector<8x30xf32> -> vector<8x30xf32>
    %682 = arith.addf %681, %678 : vector<8x30xf32>
    %683 = vector.extract_strided_slice %680 {offsets = [0, 0], sizes = [8, 20], strides = [1, 1]} : vector<8x30xf32> to vector<8x20xf32>
    %684 = vector.extract_strided_slice %682 {offsets = [0, 0], sizes = [8, 20], strides = [1, 1]} : vector<8x30xf32> to vector<8x20xf32>
    %685 = arith.addf %683, %684 : vector<8x20xf32>
    %686 = arith.negf %685 : vector<8x20xf32>
    %687 = math.exp %686 : vector<8x20xf32>
    %cst_132 = arith.constant 1.000000e+00 : f32
    %688 = vector.broadcast %cst_132 : f32 to vector<8x20xf32>
    %689 = arith.addf %688, %687 : vector<8x20xf32>
    %690 = arith.divf %688, %689 : vector<8x20xf32>
    %691 = vector.extract_strided_slice %690 {offsets = [0, 0], sizes = [8, 10], strides = [1, 1]} : vector<8x20xf32> to vector<8x10xf32>
    %692 = vector.extract_strided_slice %690 {offsets = [0, 10], sizes = [8, 10], strides = [1, 1]} : vector<8x20xf32> to vector<8x10xf32>
    %693 = vector.extract_strided_slice %680 {offsets = [0, 20], sizes = [8, 10], strides = [1, 1]} : vector<8x30xf32> to vector<8x10xf32>
    %694 = vector.extract_strided_slice %682 {offsets = [0, 20], sizes = [8, 10], strides = [1, 1]} : vector<8x30xf32> to vector<8x10xf32>
    %695 = arith.mulf %691, %694 : vector<8x10xf32>
    %696 = arith.addf %693, %695 : vector<8x10xf32>
    %697 = math.tanh %696 : vector<8x10xf32>
    %cst_133 = arith.constant 1.000000e+00 : f32
    %698 = vector.broadcast %cst_133 : f32 to vector<8x10xf32>
    %699 = arith.subf %698, %692 : vector<8x10xf32>
    %700 = arith.mulf %699, %697 : vector<8x10xf32>
    %701 = arith.mulf %692, %679 : vector<8x10xf32>
    %702 = arith.addf %700, %701 : vector<8x10xf32>
    %703 = vector.extract_strided_slice %702 {offsets = [0, 0], sizes = [8, 5], strides = [1, 1]} : vector<8x10xf32> to vector<8x5xf32>
    %704 = vector.extract_strided_slice %702 {offsets = [0, 5], sizes = [8, 5], strides = [1, 1]} : vector<8x10xf32> to vector<8x5xf32>
    %705 = vector.extract_strided_slice %672 {offsets = [8, 0], sizes = [8, 30], strides = [1, 1]} : vector<32x30xf32> to vector<8x30xf32>
    %cst_134 = arith.constant dense<0.000000e+00> : vector<8x30xf32>
    %706 = tpu.matmul %702, %674, %cst_134 {dimension_numbers = #tpu.dot_dimension_numbers<[1], [0], [0], [1], [0, 0, 1, 1], [], []>} : vector<8x10xf32>, vector<10x30xf32>, vector<8x30xf32> -> vector<8x30xf32>
    %707 = arith.addf %706, %678 : vector<8x30xf32>
    %708 = vector.extract_strided_slice %705 {offsets = [0, 0], sizes = [8, 20], strides = [1, 1]} : vector<8x30xf32> to vector<8x20xf32>
    %709 = vector.extract_strided_slice %707 {offsets = [0, 0], sizes = [8, 20], strides = [1, 1]} : vector<8x30xf32> to vector<8x20xf32>
    %710 = arith.addf %708, %709 : vector<8x20xf32>
    %711 = arith.negf %710 : vector<8x20xf32>
    %712 = math.exp %711 : vector<8x20xf32>
    %cst_135 = arith.constant 1.000000e+00 : f32
    %713 = vector.broadcast %cst_135 : f32 to vector<8x20xf32>
    %714 = arith.addf %713, %712 : vector<8x20xf32>
    %715 = arith.divf %713, %714 : vector<8x20xf32>
    %716 = vector.extract_strided_slice %715 {offsets = [0, 0], sizes = [8, 10], strides = [1, 1]} : vector<8x20xf32> to vector<8x10xf32>
    %717 = vector.extract_strided_slice %715 {offsets = [0, 10], sizes = [8, 10], strides = [1, 1]} : vector<8x20xf32> to vector<8x10xf32>
    %718 = vector.extract_strided_slice %705 {offsets = [0, 20], sizes = [8, 10], strides = [1, 1]} : vector<8x30xf32> to vector<8x10xf32>
    %719 = vector.extract_strided_slice %707 {offsets = [0, 20], sizes = [8, 10], strides = [1, 1]} : vector<8x30xf32> to vector<8x10xf32>
    %720 = arith.mulf %716, %719 : vector<8x10xf32>
    %721 = arith.addf %718, %720 : vector<8x10xf32>
    %722 = math.tanh %721 : vector<8x10xf32>
    %cst_136 = arith.constant 1.000000e+00 : f32
    %723 = vector.broadcast %cst_136 : f32 to vector<8x10xf32>
    %724 = arith.subf %723, %717 : vector<8x10xf32>
    %725 = arith.mulf %724, %722 : vector<8x10xf32>
    %726 = arith.mulf %717, %702 : vector<8x10xf32>
    %727 = arith.addf %725, %726 : vector<8x10xf32>
    %728 = vector.extract_strided_slice %727 {offsets = [0, 0], sizes = [8, 5], strides = [1, 1]} : vector<8x10xf32> to vector<8x5xf32>
    %729 = vector.extract_strided_slice %727 {offsets = [0, 5], sizes = [8, 5], strides = [1, 1]} : vector<8x10xf32> to vector<8x5xf32>
    %730 = vector.extract_strided_slice %672 {offsets = [16, 0], sizes = [8, 30], strides = [1, 1]} : vector<32x30xf32> to vector<8x30xf32>
    %cst_137 = arith.constant dense<0.000000e+00> : vector<8x30xf32>
    %731 = tpu.matmul %727, %674, %cst_137 {dimension_numbers = #tpu.dot_dimension_numbers<[1], [0], [0], [1], [0, 0, 1, 1], [], []>} : vector<8x10xf32>, vector<10x30xf32>, vector<8x30xf32> -> vector<8x30xf32>
    %732 = arith.addf %731, %678 : vector<8x30xf32>
    %733 = vector.extract_strided_slice %730 {offsets = [0, 0], sizes = [8, 20], strides = [1, 1]} : vector<8x30xf32> to vector<8x20xf32>
    %734 = vector.extract_strided_slice %732 {offsets = [0, 0], sizes = [8, 20], strides = [1, 1]} : vector<8x30xf32> to vector<8x20xf32>
    %735 = arith.addf %733, %734 : vector<8x20xf32>
    %736 = arith.negf %735 : vector<8x20xf32>
    %737 = math.exp %736 : vector<8x20xf32>
    %cst_138 = arith.constant 1.000000e+00 : f32
    %738 = vector.broadcast %cst_138 : f32 to vector<8x20xf32>
    %739 = arith.addf %738, %737 : vector<8x20xf32>
    %740 = arith.divf %738, %739 : vector<8x20xf32>
    %741 = vector.extract_strided_slice %740 {offsets = [0, 0], sizes = [8, 10], strides = [1, 1]} : vector<8x20xf32> to vector<8x10xf32>
    %742 = vector.extract_strided_slice %740 {offsets = [0, 10], sizes = [8, 10], strides = [1, 1]} : vector<8x20xf32> to vector<8x10xf32>
    %743 = vector.extract_strided_slice %730 {offsets = [0, 20], sizes = [8, 10], strides = [1, 1]} : vector<8x30xf32> to vector<8x10xf32>
    %744 = vector.extract_strided_slice %732 {offsets = [0, 20], sizes = [8, 10], strides = [1, 1]} : vector<8x30xf32> to vector<8x10xf32>
    %745 = arith.mulf %741, %744 : vector<8x10xf32>
    %746 = arith.addf %743, %745 : vector<8x10xf32>
    %747 = math.tanh %746 : vector<8x10xf32>
    %cst_139 = arith.constant 1.000000e+00 : f32
    %748 = vector.broadcast %cst_139 : f32 to vector<8x10xf32>
    %749 = arith.subf %748, %742 : vector<8x10xf32>
    %750 = arith.mulf %749, %747 : vector<8x10xf32>
    %751 = arith.mulf %742, %727 : vector<8x10xf32>
    %752 = arith.addf %750, %751 : vector<8x10xf32>
    %753 = vector.extract_strided_slice %752 {offsets = [0, 0], sizes = [8, 5], strides = [1, 1]} : vector<8x10xf32> to vector<8x5xf32>
    %754 = vector.extract_strided_slice %752 {offsets = [0, 5], sizes = [8, 5], strides = [1, 1]} : vector<8x10xf32> to vector<8x5xf32>
    %755 = vector.extract_strided_slice %672 {offsets = [24, 0], sizes = [8, 30], strides = [1, 1]} : vector<32x30xf32> to vector<8x30xf32>
    %cst_140 = arith.constant dense<0.000000e+00> : vector<8x30xf32>
    %756 = tpu.matmul %752, %674, %cst_140 {dimension_numbers = #tpu.dot_dimension_numbers<[1], [0], [0], [1], [0, 0, 1, 1], [], []>} : vector<8x10xf32>, vector<10x30xf32>, vector<8x30xf32> -> vector<8x30xf32>
    %757 = arith.addf %756, %678 : vector<8x30xf32>
    %758 = vector.extract_strided_slice %755 {offsets = [0, 0], sizes = [8, 20], strides = [1, 1]} : vector<8x30xf32> to vector<8x20xf32>
    %759 = vector.extract_strided_slice %757 {offsets = [0, 0], sizes = [8, 20], strides = [1, 1]} : vector<8x30xf32> to vector<8x20xf32>
    %760 = arith.addf %758, %759 : vector<8x20xf32>
    %761 = arith.negf %760 : vector<8x20xf32>
    %762 = math.exp %761 : vector<8x20xf32>
    %cst_141 = arith.constant 1.000000e+00 : f32
    %763 = vector.broadcast %cst_141 : f32 to vector<8x20xf32>
    %764 = arith.addf %763, %762 : vector<8x20xf32>
    %765 = arith.divf %763, %764 : vector<8x20xf32>
    %766 = vector.extract_strided_slice %765 {offsets = [0, 0], sizes = [8, 10], strides = [1, 1]} : vector<8x20xf32> to vector<8x10xf32>
    %767 = vector.extract_strided_slice %765 {offsets = [0, 10], sizes = [8, 10], strides = [1, 1]} : vector<8x20xf32> to vector<8x10xf32>
    %768 = vector.extract_strided_slice %755 {offsets = [0, 20], sizes = [8, 10], strides = [1, 1]} : vector<8x30xf32> to vector<8x10xf32>
    %769 = vector.extract_strided_slice %757 {offsets = [0, 20], sizes = [8, 10], strides = [1, 1]} : vector<8x30xf32> to vector<8x10xf32>
    %770 = arith.mulf %766, %769 : vector<8x10xf32>
    %771 = arith.addf %768, %770 : vector<8x10xf32>
    %772 = math.tanh %771 : vector<8x10xf32>
    %cst_142 = arith.constant 1.000000e+00 : f32
    %773 = vector.broadcast %cst_142 : f32 to vector<8x10xf32>
    %774 = arith.subf %773, %767 : vector<8x10xf32>
    %775 = arith.mulf %774, %772 : vector<8x10xf32>
    %776 = arith.mulf %767, %752 : vector<8x10xf32>
    %777 = arith.addf %775, %776 : vector<8x10xf32>
    %778 = vector.extract_strided_slice %777 {offsets = [0, 0], sizes = [8, 5], strides = [1, 1]} : vector<8x10xf32> to vector<8x5xf32>
    %779 = vector.extract_strided_slice %777 {offsets = [0, 5], sizes = [8, 5], strides = [1, 1]} : vector<8x10xf32> to vector<8x5xf32>
    %780 = tpu.concatenate %703, %779 in 1 : vector<8x5xf32>, vector<8x5xf32> -> vector<8x10xf32>
    %781 = tpu.concatenate %728, %754 in 1 : vector<8x5xf32>, vector<8x5xf32> -> vector<8x10xf32>
    %782 = tpu.concatenate %753, %729 in 1 : vector<8x5xf32>, vector<8x5xf32> -> vector<8x10xf32>
    %783 = tpu.concatenate %778, %704 in 1 : vector<8x5xf32>, vector<8x5xf32> -> vector<8x10xf32>
    %784 = tpu.concatenate %780, %781, %782, %783 in 0 : vector<8x10xf32>, vector<8x10xf32>, vector<8x10xf32>, vector<8x10xf32> -> vector<32x10xf32>
    %785 = vector.extract_strided_slice %784 {offsets = [24, 0], sizes = [8, 10], strides = [1, 1]} : vector<32x10xf32> to vector<8x10xf32>
    %786 = vector.extract_strided_slice %784 {offsets = [16, 0], sizes = [8, 10], strides = [1, 1]} : vector<32x10xf32> to vector<8x10xf32>
    %787 = vector.extract_strided_slice %784 {offsets = [8, 0], sizes = [8, 10], strides = [1, 1]} : vector<32x10xf32> to vector<8x10xf32>
    %788 = vector.extract_strided_slice %784 {offsets = [0, 0], sizes = [8, 10], strides = [1, 1]} : vector<32x10xf32> to vector<8x10xf32>
    %789 = tpu.concatenate %785, %786, %787, %788 in 0 : vector<8x10xf32>, vector<8x10xf32>, vector<8x10xf32>, vector<8x10xf32> -> vector<32x10xf32>
    %790 = tpu.concatenate %784, %789 in 1 : vector<32x10xf32>, vector<32x10xf32> -> vector<32x20xf32>
    %c4 = arith.constant 4 : index
    %c0_143 = arith.constant 0 : index
    %c0_144 = arith.constant 0 : index
    %791 = vector.load %arg5[%c4, %c0_143, %c0_144] : memref<8x20x30xf32, #tpu.memory_space<vmem>>, vector<1x20x30xf32>
    %792 = vector.shape_cast %791 : vector<1x20x30xf32> to vector<20x30xf32>
    %cst_145 = arith.constant dense<0.000000e+00> : vector<32x30xf32>
    %793 = tpu.matmul %790, %792, %cst_145 {dimension_numbers = #tpu.dot_dimension_numbers<[1], [0], [0], [1], [0, 0, 1, 1], [], []>} : vector<32x20xf32>, vector<20x30xf32>, vector<32x30xf32> -> vector<32x30xf32>
    %c4_146 = arith.constant 4 : index
    %c0_147 = arith.constant 0 : index
    %c0_148 = arith.constant 0 : index
    %794 = vector.load %arg7[%c4_146, %c0_147, %c0_148] : memref<8x1x30xf32, #tpu.memory_space<vmem>>, vector<1x1x30xf32>
    %795 = vector.shape_cast %794 : vector<1x1x30xf32> to vector<1x30xf32>
    %796 = vector.shape_cast %795 : vector<1x30xf32> to vector<1x30xf32>
    %797 = vector.broadcast %796 : vector<1x30xf32> to vector<32x30xf32>
    %798 = arith.addf %793, %797 : vector<32x30xf32>
    %c4_149 = arith.constant 4 : index
    %c0_150 = arith.constant 0 : index
    %c0_151 = arith.constant 0 : index
    %799 = vector.load %arg6[%c4_149, %c0_150, %c0_151] : memref<8x10x30xf32, #tpu.memory_space<vmem>>, vector<1x10x30xf32>
    %800 = vector.shape_cast %799 : vector<1x10x30xf32> to vector<10x30xf32>
    %c4_152 = arith.constant 4 : index
    %c0_153 = arith.constant 0 : index
    %c0_154 = arith.constant 0 : index
    %801 = vector.load %arg8[%c4_152, %c0_153, %c0_154] : memref<8x1x30xf32, #tpu.memory_space<vmem>>, vector<1x1x30xf32>
    %802 = vector.shape_cast %801 : vector<1x1x30xf32> to vector<1x30xf32>
    %803 = vector.shape_cast %802 : vector<1x30xf32> to vector<1x30xf32>
    %804 = vector.broadcast %803 : vector<1x30xf32> to vector<8x30xf32>
    %cst_155 = arith.constant 0.000000e+00 : f32
    %805 = vector.broadcast %cst_155 : f32 to vector<8x10xf32>
    %806 = vector.extract_strided_slice %798 {offsets = [0, 0], sizes = [8, 30], strides = [1, 1]} : vector<32x30xf32> to vector<8x30xf32>
    %cst_156 = arith.constant dense<0.000000e+00> : vector<8x30xf32>
    %807 = tpu.matmul %805, %800, %cst_156 {dimension_numbers = #tpu.dot_dimension_numbers<[1], [0], [0], [1], [0, 0, 1, 1], [], []>} : vector<8x10xf32>, vector<10x30xf32>, vector<8x30xf32> -> vector<8x30xf32>
    %808 = arith.addf %807, %804 : vector<8x30xf32>
    %809 = vector.extract_strided_slice %806 {offsets = [0, 0], sizes = [8, 20], strides = [1, 1]} : vector<8x30xf32> to vector<8x20xf32>
    %810 = vector.extract_strided_slice %808 {offsets = [0, 0], sizes = [8, 20], strides = [1, 1]} : vector<8x30xf32> to vector<8x20xf32>
    %811 = arith.addf %809, %810 : vector<8x20xf32>
    %812 = arith.negf %811 : vector<8x20xf32>
    %813 = math.exp %812 : vector<8x20xf32>
    %cst_157 = arith.constant 1.000000e+00 : f32
    %814 = vector.broadcast %cst_157 : f32 to vector<8x20xf32>
    %815 = arith.addf %814, %813 : vector<8x20xf32>
    %816 = arith.divf %814, %815 : vector<8x20xf32>
    %817 = vector.extract_strided_slice %816 {offsets = [0, 0], sizes = [8, 10], strides = [1, 1]} : vector<8x20xf32> to vector<8x10xf32>
    %818 = vector.extract_strided_slice %816 {offsets = [0, 10], sizes = [8, 10], strides = [1, 1]} : vector<8x20xf32> to vector<8x10xf32>
    %819 = vector.extract_strided_slice %806 {offsets = [0, 20], sizes = [8, 10], strides = [1, 1]} : vector<8x30xf32> to vector<8x10xf32>
    %820 = vector.extract_strided_slice %808 {offsets = [0, 20], sizes = [8, 10], strides = [1, 1]} : vector<8x30xf32> to vector<8x10xf32>
    %821 = arith.mulf %817, %820 : vector<8x10xf32>
    %822 = arith.addf %819, %821 : vector<8x10xf32>
    %823 = math.tanh %822 : vector<8x10xf32>
    %cst_158 = arith.constant 1.000000e+00 : f32
    %824 = vector.broadcast %cst_158 : f32 to vector<8x10xf32>
    %825 = arith.subf %824, %818 : vector<8x10xf32>
    %826 = arith.mulf %825, %823 : vector<8x10xf32>
    %827 = arith.mulf %818, %805 : vector<8x10xf32>
    %828 = arith.addf %826, %827 : vector<8x10xf32>
    %829 = vector.extract_strided_slice %828 {offsets = [0, 0], sizes = [8, 5], strides = [1, 1]} : vector<8x10xf32> to vector<8x5xf32>
    %830 = vector.extract_strided_slice %828 {offsets = [0, 5], sizes = [8, 5], strides = [1, 1]} : vector<8x10xf32> to vector<8x5xf32>
    %831 = vector.extract_strided_slice %798 {offsets = [8, 0], sizes = [8, 30], strides = [1, 1]} : vector<32x30xf32> to vector<8x30xf32>
    %cst_159 = arith.constant dense<0.000000e+00> : vector<8x30xf32>
    %832 = tpu.matmul %828, %800, %cst_159 {dimension_numbers = #tpu.dot_dimension_numbers<[1], [0], [0], [1], [0, 0, 1, 1], [], []>} : vector<8x10xf32>, vector<10x30xf32>, vector<8x30xf32> -> vector<8x30xf32>
    %833 = arith.addf %832, %804 : vector<8x30xf32>
    %834 = vector.extract_strided_slice %831 {offsets = [0, 0], sizes = [8, 20], strides = [1, 1]} : vector<8x30xf32> to vector<8x20xf32>
    %835 = vector.extract_strided_slice %833 {offsets = [0, 0], sizes = [8, 20], strides = [1, 1]} : vector<8x30xf32> to vector<8x20xf32>
    %836 = arith.addf %834, %835 : vector<8x20xf32>
    %837 = arith.negf %836 : vector<8x20xf32>
    %838 = math.exp %837 : vector<8x20xf32>
    %cst_160 = arith.constant 1.000000e+00 : f32
    %839 = vector.broadcast %cst_160 : f32 to vector<8x20xf32>
    %840 = arith.addf %839, %838 : vector<8x20xf32>
    %841 = arith.divf %839, %840 : vector<8x20xf32>
    %842 = vector.extract_strided_slice %841 {offsets = [0, 0], sizes = [8, 10], strides = [1, 1]} : vector<8x20xf32> to vector<8x10xf32>
    %843 = vector.extract_strided_slice %841 {offsets = [0, 10], sizes = [8, 10], strides = [1, 1]} : vector<8x20xf32> to vector<8x10xf32>
    %844 = vector.extract_strided_slice %831 {offsets = [0, 20], sizes = [8, 10], strides = [1, 1]} : vector<8x30xf32> to vector<8x10xf32>
    %845 = vector.extract_strided_slice %833 {offsets = [0, 20], sizes = [8, 10], strides = [1, 1]} : vector<8x30xf32> to vector<8x10xf32>
    %846 = arith.mulf %842, %845 : vector<8x10xf32>
    %847 = arith.addf %844, %846 : vector<8x10xf32>
    %848 = math.tanh %847 : vector<8x10xf32>
    %cst_161 = arith.constant 1.000000e+00 : f32
    %849 = vector.broadcast %cst_161 : f32 to vector<8x10xf32>
    %850 = arith.subf %849, %843 : vector<8x10xf32>
    %851 = arith.mulf %850, %848 : vector<8x10xf32>
    %852 = arith.mulf %843, %828 : vector<8x10xf32>
    %853 = arith.addf %851, %852 : vector<8x10xf32>
    %854 = vector.extract_strided_slice %853 {offsets = [0, 0], sizes = [8, 5], strides = [1, 1]} : vector<8x10xf32> to vector<8x5xf32>
    %855 = vector.extract_strided_slice %853 {offsets = [0, 5], sizes = [8, 5], strides = [1, 1]} : vector<8x10xf32> to vector<8x5xf32>
    %856 = vector.extract_strided_slice %798 {offsets = [16, 0], sizes = [8, 30], strides = [1, 1]} : vector<32x30xf32> to vector<8x30xf32>
    %cst_162 = arith.constant dense<0.000000e+00> : vector<8x30xf32>
    %857 = tpu.matmul %853, %800, %cst_162 {dimension_numbers = #tpu.dot_dimension_numbers<[1], [0], [0], [1], [0, 0, 1, 1], [], []>} : vector<8x10xf32>, vector<10x30xf32>, vector<8x30xf32> -> vector<8x30xf32>
    %858 = arith.addf %857, %804 : vector<8x30xf32>
    %859 = vector.extract_strided_slice %856 {offsets = [0, 0], sizes = [8, 20], strides = [1, 1]} : vector<8x30xf32> to vector<8x20xf32>
    %860 = vector.extract_strided_slice %858 {offsets = [0, 0], sizes = [8, 20], strides = [1, 1]} : vector<8x30xf32> to vector<8x20xf32>
    %861 = arith.addf %859, %860 : vector<8x20xf32>
    %862 = arith.negf %861 : vector<8x20xf32>
    %863 = math.exp %862 : vector<8x20xf32>
    %cst_163 = arith.constant 1.000000e+00 : f32
    %864 = vector.broadcast %cst_163 : f32 to vector<8x20xf32>
    %865 = arith.addf %864, %863 : vector<8x20xf32>
    %866 = arith.divf %864, %865 : vector<8x20xf32>
    %867 = vector.extract_strided_slice %866 {offsets = [0, 0], sizes = [8, 10], strides = [1, 1]} : vector<8x20xf32> to vector<8x10xf32>
    %868 = vector.extract_strided_slice %866 {offsets = [0, 10], sizes = [8, 10], strides = [1, 1]} : vector<8x20xf32> to vector<8x10xf32>
    %869 = vector.extract_strided_slice %856 {offsets = [0, 20], sizes = [8, 10], strides = [1, 1]} : vector<8x30xf32> to vector<8x10xf32>
    %870 = vector.extract_strided_slice %858 {offsets = [0, 20], sizes = [8, 10], strides = [1, 1]} : vector<8x30xf32> to vector<8x10xf32>
    %871 = arith.mulf %867, %870 : vector<8x10xf32>
    %872 = arith.addf %869, %871 : vector<8x10xf32>
    %873 = math.tanh %872 : vector<8x10xf32>
    %cst_164 = arith.constant 1.000000e+00 : f32
    %874 = vector.broadcast %cst_164 : f32 to vector<8x10xf32>
    %875 = arith.subf %874, %868 : vector<8x10xf32>
    %876 = arith.mulf %875, %873 : vector<8x10xf32>
    %877 = arith.mulf %868, %853 : vector<8x10xf32>
    %878 = arith.addf %876, %877 : vector<8x10xf32>
    %879 = vector.extract_strided_slice %878 {offsets = [0, 0], sizes = [8, 5], strides = [1, 1]} : vector<8x10xf32> to vector<8x5xf32>
    %880 = vector.extract_strided_slice %878 {offsets = [0, 5], sizes = [8, 5], strides = [1, 1]} : vector<8x10xf32> to vector<8x5xf32>
    %881 = vector.extract_strided_slice %798 {offsets = [24, 0], sizes = [8, 30], strides = [1, 1]} : vector<32x30xf32> to vector<8x30xf32>
    %cst_165 = arith.constant dense<0.000000e+00> : vector<8x30xf32>
    %882 = tpu.matmul %878, %800, %cst_165 {dimension_numbers = #tpu.dot_dimension_numbers<[1], [0], [0], [1], [0, 0, 1, 1], [], []>} : vector<8x10xf32>, vector<10x30xf32>, vector<8x30xf32> -> vector<8x30xf32>
    %883 = arith.addf %882, %804 : vector<8x30xf32>
    %884 = vector.extract_strided_slice %881 {offsets = [0, 0], sizes = [8, 20], strides = [1, 1]} : vector<8x30xf32> to vector<8x20xf32>
    %885 = vector.extract_strided_slice %883 {offsets = [0, 0], sizes = [8, 20], strides = [1, 1]} : vector<8x30xf32> to vector<8x20xf32>
    %886 = arith.addf %884, %885 : vector<8x20xf32>
    %887 = arith.negf %886 : vector<8x20xf32>
    %888 = math.exp %887 : vector<8x20xf32>
    %cst_166 = arith.constant 1.000000e+00 : f32
    %889 = vector.broadcast %cst_166 : f32 to vector<8x20xf32>
    %890 = arith.addf %889, %888 : vector<8x20xf32>
    %891 = arith.divf %889, %890 : vector<8x20xf32>
    %892 = vector.extract_strided_slice %891 {offsets = [0, 0], sizes = [8, 10], strides = [1, 1]} : vector<8x20xf32> to vector<8x10xf32>
    %893 = vector.extract_strided_slice %891 {offsets = [0, 10], sizes = [8, 10], strides = [1, 1]} : vector<8x20xf32> to vector<8x10xf32>
    %894 = vector.extract_strided_slice %881 {offsets = [0, 20], sizes = [8, 10], strides = [1, 1]} : vector<8x30xf32> to vector<8x10xf32>
    %895 = vector.extract_strided_slice %883 {offsets = [0, 20], sizes = [8, 10], strides = [1, 1]} : vector<8x30xf32> to vector<8x10xf32>
    %896 = arith.mulf %892, %895 : vector<8x10xf32>
    %897 = arith.addf %894, %896 : vector<8x10xf32>
    %898 = math.tanh %897 : vector<8x10xf32>
    %cst_167 = arith.constant 1.000000e+00 : f32
    %899 = vector.broadcast %cst_167 : f32 to vector<8x10xf32>
    %900 = arith.subf %899, %893 : vector<8x10xf32>
    %901 = arith.mulf %900, %898 : vector<8x10xf32>
    %902 = arith.mulf %893, %878 : vector<8x10xf32>
    %903 = arith.addf %901, %902 : vector<8x10xf32>
    %904 = vector.extract_strided_slice %903 {offsets = [0, 0], sizes = [8, 5], strides = [1, 1]} : vector<8x10xf32> to vector<8x5xf32>
    %905 = vector.extract_strided_slice %903 {offsets = [0, 5], sizes = [8, 5], strides = [1, 1]} : vector<8x10xf32> to vector<8x5xf32>
    %906 = tpu.concatenate %829, %905 in 1 : vector<8x5xf32>, vector<8x5xf32> -> vector<8x10xf32>
    %907 = tpu.concatenate %854, %880 in 1 : vector<8x5xf32>, vector<8x5xf32> -> vector<8x10xf32>
    %908 = tpu.concatenate %879, %855 in 1 : vector<8x5xf32>, vector<8x5xf32> -> vector<8x10xf32>
    %909 = tpu.concatenate %904, %830 in 1 : vector<8x5xf32>, vector<8x5xf32> -> vector<8x10xf32>
    %910 = tpu.concatenate %906, %907, %908, %909 in 0 : vector<8x10xf32>, vector<8x10xf32>, vector<8x10xf32>, vector<8x10xf32> -> vector<32x10xf32>
    %911 = vector.extract_strided_slice %910 {offsets = [24, 0], sizes = [8, 10], strides = [1, 1]} : vector<32x10xf32> to vector<8x10xf32>
    %912 = vector.extract_strided_slice %910 {offsets = [16, 0], sizes = [8, 10], strides = [1, 1]} : vector<32x10xf32> to vector<8x10xf32>
    %913 = vector.extract_strided_slice %910 {offsets = [8, 0], sizes = [8, 10], strides = [1, 1]} : vector<32x10xf32> to vector<8x10xf32>
    %914 = vector.extract_strided_slice %910 {offsets = [0, 0], sizes = [8, 10], strides = [1, 1]} : vector<32x10xf32> to vector<8x10xf32>
    %915 = tpu.concatenate %911, %912, %913, %914 in 0 : vector<8x10xf32>, vector<8x10xf32>, vector<8x10xf32>, vector<8x10xf32> -> vector<32x10xf32>
    %916 = tpu.concatenate %910, %915 in 1 : vector<32x10xf32>, vector<32x10xf32> -> vector<32x20xf32>
    %c5 = arith.constant 5 : index
    %c0_168 = arith.constant 0 : index
    %c0_169 = arith.constant 0 : index
    %917 = vector.load %arg5[%c5, %c0_168, %c0_169] : memref<8x20x30xf32, #tpu.memory_space<vmem>>, vector<1x20x30xf32>
    %918 = vector.shape_cast %917 : vector<1x20x30xf32> to vector<20x30xf32>
    %cst_170 = arith.constant dense<0.000000e+00> : vector<32x30xf32>
    %919 = tpu.matmul %916, %918, %cst_170 {dimension_numbers = #tpu.dot_dimension_numbers<[1], [0], [0], [1], [0, 0, 1, 1], [], []>} : vector<32x20xf32>, vector<20x30xf32>, vector<32x30xf32> -> vector<32x30xf32>
    %c5_171 = arith.constant 5 : index
    %c0_172 = arith.constant 0 : index
    %c0_173 = arith.constant 0 : index
    %920 = vector.load %arg7[%c5_171, %c0_172, %c0_173] : memref<8x1x30xf32, #tpu.memory_space<vmem>>, vector<1x1x30xf32>
    %921 = vector.shape_cast %920 : vector<1x1x30xf32> to vector<1x30xf32>
    %922 = vector.shape_cast %921 : vector<1x30xf32> to vector<1x30xf32>
    %923 = vector.broadcast %922 : vector<1x30xf32> to vector<32x30xf32>
    %924 = arith.addf %919, %923 : vector<32x30xf32>
    %c5_174 = arith.constant 5 : index
    %c0_175 = arith.constant 0 : index
    %c0_176 = arith.constant 0 : index
    %925 = vector.load %arg6[%c5_174, %c0_175, %c0_176] : memref<8x10x30xf32, #tpu.memory_space<vmem>>, vector<1x10x30xf32>
    %926 = vector.shape_cast %925 : vector<1x10x30xf32> to vector<10x30xf32>
    %c5_177 = arith.constant 5 : index
    %c0_178 = arith.constant 0 : index
    %c0_179 = arith.constant 0 : index
    %927 = vector.load %arg8[%c5_177, %c0_178, %c0_179] : memref<8x1x30xf32, #tpu.memory_space<vmem>>, vector<1x1x30xf32>
    %928 = vector.shape_cast %927 : vector<1x1x30xf32> to vector<1x30xf32>
    %929 = vector.shape_cast %928 : vector<1x30xf32> to vector<1x30xf32>
    %930 = vector.broadcast %929 : vector<1x30xf32> to vector<8x30xf32>
    %cst_180 = arith.constant 0.000000e+00 : f32
    %931 = vector.broadcast %cst_180 : f32 to vector<8x10xf32>
    %932 = vector.extract_strided_slice %924 {offsets = [0, 0], sizes = [8, 30], strides = [1, 1]} : vector<32x30xf32> to vector<8x30xf32>
    %cst_181 = arith.constant dense<0.000000e+00> : vector<8x30xf32>
    %933 = tpu.matmul %931, %926, %cst_181 {dimension_numbers = #tpu.dot_dimension_numbers<[1], [0], [0], [1], [0, 0, 1, 1], [], []>} : vector<8x10xf32>, vector<10x30xf32>, vector<8x30xf32> -> vector<8x30xf32>
    %934 = arith.addf %933, %930 : vector<8x30xf32>
    %935 = vector.extract_strided_slice %932 {offsets = [0, 0], sizes = [8, 20], strides = [1, 1]} : vector<8x30xf32> to vector<8x20xf32>
    %936 = vector.extract_strided_slice %934 {offsets = [0, 0], sizes = [8, 20], strides = [1, 1]} : vector<8x30xf32> to vector<8x20xf32>
    %937 = arith.addf %935, %936 : vector<8x20xf32>
    %938 = arith.negf %937 : vector<8x20xf32>
    %939 = math.exp %938 : vector<8x20xf32>
    %cst_182 = arith.constant 1.000000e+00 : f32
    %940 = vector.broadcast %cst_182 : f32 to vector<8x20xf32>
    %941 = arith.addf %940, %939 : vector<8x20xf32>
    %942 = arith.divf %940, %941 : vector<8x20xf32>
    %943 = vector.extract_strided_slice %942 {offsets = [0, 0], sizes = [8, 10], strides = [1, 1]} : vector<8x20xf32> to vector<8x10xf32>
    %944 = vector.extract_strided_slice %942 {offsets = [0, 10], sizes = [8, 10], strides = [1, 1]} : vector<8x20xf32> to vector<8x10xf32>
    %945 = vector.extract_strided_slice %932 {offsets = [0, 20], sizes = [8, 10], strides = [1, 1]} : vector<8x30xf32> to vector<8x10xf32>
    %946 = vector.extract_strided_slice %934 {offsets = [0, 20], sizes = [8, 10], strides = [1, 1]} : vector<8x30xf32> to vector<8x10xf32>
    %947 = arith.mulf %943, %946 : vector<8x10xf32>
    %948 = arith.addf %945, %947 : vector<8x10xf32>
    %949 = math.tanh %948 : vector<8x10xf32>
    %cst_183 = arith.constant 1.000000e+00 : f32
    %950 = vector.broadcast %cst_183 : f32 to vector<8x10xf32>
    %951 = arith.subf %950, %944 : vector<8x10xf32>
    %952 = arith.mulf %951, %949 : vector<8x10xf32>
    %953 = arith.mulf %944, %931 : vector<8x10xf32>
    %954 = arith.addf %952, %953 : vector<8x10xf32>
    %955 = vector.extract_strided_slice %954 {offsets = [0, 0], sizes = [8, 5], strides = [1, 1]} : vector<8x10xf32> to vector<8x5xf32>
    %956 = vector.extract_strided_slice %954 {offsets = [0, 5], sizes = [8, 5], strides = [1, 1]} : vector<8x10xf32> to vector<8x5xf32>
    %957 = vector.extract_strided_slice %924 {offsets = [8, 0], sizes = [8, 30], strides = [1, 1]} : vector<32x30xf32> to vector<8x30xf32>
    %cst_184 = arith.constant dense<0.000000e+00> : vector<8x30xf32>
    %958 = tpu.matmul %954, %926, %cst_184 {dimension_numbers = #tpu.dot_dimension_numbers<[1], [0], [0], [1], [0, 0, 1, 1], [], []>} : vector<8x10xf32>, vector<10x30xf32>, vector<8x30xf32> -> vector<8x30xf32>
    %959 = arith.addf %958, %930 : vector<8x30xf32>
    %960 = vector.extract_strided_slice %957 {offsets = [0, 0], sizes = [8, 20], strides = [1, 1]} : vector<8x30xf32> to vector<8x20xf32>
    %961 = vector.extract_strided_slice %959 {offsets = [0, 0], sizes = [8, 20], strides = [1, 1]} : vector<8x30xf32> to vector<8x20xf32>
    %962 = arith.addf %960, %961 : vector<8x20xf32>
    %963 = arith.negf %962 : vector<8x20xf32>
    %964 = math.exp %963 : vector<8x20xf32>
    %cst_185 = arith.constant 1.000000e+00 : f32
    %965 = vector.broadcast %cst_185 : f32 to vector<8x20xf32>
    %966 = arith.addf %965, %964 : vector<8x20xf32>
    %967 = arith.divf %965, %966 : vector<8x20xf32>
    %968 = vector.extract_strided_slice %967 {offsets = [0, 0], sizes = [8, 10], strides = [1, 1]} : vector<8x20xf32> to vector<8x10xf32>
    %969 = vector.extract_strided_slice %967 {offsets = [0, 10], sizes = [8, 10], strides = [1, 1]} : vector<8x20xf32> to vector<8x10xf32>
    %970 = vector.extract_strided_slice %957 {offsets = [0, 20], sizes = [8, 10], strides = [1, 1]} : vector<8x30xf32> to vector<8x10xf32>
    %971 = vector.extract_strided_slice %959 {offsets = [0, 20], sizes = [8, 10], strides = [1, 1]} : vector<8x30xf32> to vector<8x10xf32>
    %972 = arith.mulf %968, %971 : vector<8x10xf32>
    %973 = arith.addf %970, %972 : vector<8x10xf32>
    %974 = math.tanh %973 : vector<8x10xf32>
    %cst_186 = arith.constant 1.000000e+00 : f32
    %975 = vector.broadcast %cst_186 : f32 to vector<8x10xf32>
    %976 = arith.subf %975, %969 : vector<8x10xf32>
    %977 = arith.mulf %976, %974 : vector<8x10xf32>
    %978 = arith.mulf %969, %954 : vector<8x10xf32>
    %979 = arith.addf %977, %978 : vector<8x10xf32>
    %980 = vector.extract_strided_slice %979 {offsets = [0, 0], sizes = [8, 5], strides = [1, 1]} : vector<8x10xf32> to vector<8x5xf32>
    %981 = vector.extract_strided_slice %979 {offsets = [0, 5], sizes = [8, 5], strides = [1, 1]} : vector<8x10xf32> to vector<8x5xf32>
    %982 = vector.extract_strided_slice %924 {offsets = [16, 0], sizes = [8, 30], strides = [1, 1]} : vector<32x30xf32> to vector<8x30xf32>
    %cst_187 = arith.constant dense<0.000000e+00> : vector<8x30xf32>
    %983 = tpu.matmul %979, %926, %cst_187 {dimension_numbers = #tpu.dot_dimension_numbers<[1], [0], [0], [1], [0, 0, 1, 1], [], []>} : vector<8x10xf32>, vector<10x30xf32>, vector<8x30xf32> -> vector<8x30xf32>
    %984 = arith.addf %983, %930 : vector<8x30xf32>
    %985 = vector.extract_strided_slice %982 {offsets = [0, 0], sizes = [8, 20], strides = [1, 1]} : vector<8x30xf32> to vector<8x20xf32>
    %986 = vector.extract_strided_slice %984 {offsets = [0, 0], sizes = [8, 20], strides = [1, 1]} : vector<8x30xf32> to vector<8x20xf32>
    %987 = arith.addf %985, %986 : vector<8x20xf32>
    %988 = arith.negf %987 : vector<8x20xf32>
    %989 = math.exp %988 : vector<8x20xf32>
    %cst_188 = arith.constant 1.000000e+00 : f32
    %990 = vector.broadcast %cst_188 : f32 to vector<8x20xf32>
    %991 = arith.addf %990, %989 : vector<8x20xf32>
    %992 = arith.divf %990, %991 : vector<8x20xf32>
    %993 = vector.extract_strided_slice %992 {offsets = [0, 0], sizes = [8, 10], strides = [1, 1]} : vector<8x20xf32> to vector<8x10xf32>
    %994 = vector.extract_strided_slice %992 {offsets = [0, 10], sizes = [8, 10], strides = [1, 1]} : vector<8x20xf32> to vector<8x10xf32>
    %995 = vector.extract_strided_slice %982 {offsets = [0, 20], sizes = [8, 10], strides = [1, 1]} : vector<8x30xf32> to vector<8x10xf32>
    %996 = vector.extract_strided_slice %984 {offsets = [0, 20], sizes = [8, 10], strides = [1, 1]} : vector<8x30xf32> to vector<8x10xf32>
    %997 = arith.mulf %993, %996 : vector<8x10xf32>
    %998 = arith.addf %995, %997 : vector<8x10xf32>
    %999 = math.tanh %998 : vector<8x10xf32>
    %cst_189 = arith.constant 1.000000e+00 : f32
    %1000 = vector.broadcast %cst_189 : f32 to vector<8x10xf32>
    %1001 = arith.subf %1000, %994 : vector<8x10xf32>
    %1002 = arith.mulf %1001, %999 : vector<8x10xf32>
    %1003 = arith.mulf %994, %979 : vector<8x10xf32>
    %1004 = arith.addf %1002, %1003 : vector<8x10xf32>
    %1005 = vector.extract_strided_slice %1004 {offsets = [0, 0], sizes = [8, 5], strides = [1, 1]} : vector<8x10xf32> to vector<8x5xf32>
    %1006 = vector.extract_strided_slice %1004 {offsets = [0, 5], sizes = [8, 5], strides = [1, 1]} : vector<8x10xf32> to vector<8x5xf32>
    %1007 = vector.extract_strided_slice %924 {offsets = [24, 0], sizes = [8, 30], strides = [1, 1]} : vector<32x30xf32> to vector<8x30xf32>
    %cst_190 = arith.constant dense<0.000000e+00> : vector<8x30xf32>
    %1008 = tpu.matmul %1004, %926, %cst_190 {dimension_numbers = #tpu.dot_dimension_numbers<[1], [0], [0], [1], [0, 0, 1, 1], [], []>} : vector<8x10xf32>, vector<10x30xf32>, vector<8x30xf32> -> vector<8x30xf32>
    %1009 = arith.addf %1008, %930 : vector<8x30xf32>
    %1010 = vector.extract_strided_slice %1007 {offsets = [0, 0], sizes = [8, 20], strides = [1, 1]} : vector<8x30xf32> to vector<8x20xf32>
    %1011 = vector.extract_strided_slice %1009 {offsets = [0, 0], sizes = [8, 20], strides = [1, 1]} : vector<8x30xf32> to vector<8x20xf32>
    %1012 = arith.addf %1010, %1011 : vector<8x20xf32>
    %1013 = arith.negf %1012 : vector<8x20xf32>
    %1014 = math.exp %1013 : vector<8x20xf32>
    %cst_191 = arith.constant 1.000000e+00 : f32
    %1015 = vector.broadcast %cst_191 : f32 to vector<8x20xf32>
    %1016 = arith.addf %1015, %1014 : vector<8x20xf32>
    %1017 = arith.divf %1015, %1016 : vector<8x20xf32>
    %1018 = vector.extract_strided_slice %1017 {offsets = [0, 0], sizes = [8, 10], strides = [1, 1]} : vector<8x20xf32> to vector<8x10xf32>
    %1019 = vector.extract_strided_slice %1017 {offsets = [0, 10], sizes = [8, 10], strides = [1, 1]} : vector<8x20xf32> to vector<8x10xf32>
    %1020 = vector.extract_strided_slice %1007 {offsets = [0, 20], sizes = [8, 10], strides = [1, 1]} : vector<8x30xf32> to vector<8x10xf32>
    %1021 = vector.extract_strided_slice %1009 {offsets = [0, 20], sizes = [8, 10], strides = [1, 1]} : vector<8x30xf32> to vector<8x10xf32>
    %1022 = arith.mulf %1018, %1021 : vector<8x10xf32>
    %1023 = arith.addf %1020, %1022 : vector<8x10xf32>
    %1024 = math.tanh %1023 : vector<8x10xf32>
    %cst_192 = arith.constant 1.000000e+00 : f32
    %1025 = vector.broadcast %cst_192 : f32 to vector<8x10xf32>
    %1026 = arith.subf %1025, %1019 : vector<8x10xf32>
    %1027 = arith.mulf %1026, %1024 : vector<8x10xf32>
    %1028 = arith.mulf %1019, %1004 : vector<8x10xf32>
    %1029 = arith.addf %1027, %1028 : vector<8x10xf32>
    %1030 = vector.extract_strided_slice %1029 {offsets = [0, 0], sizes = [8, 5], strides = [1, 1]} : vector<8x10xf32> to vector<8x5xf32>
    %1031 = vector.extract_strided_slice %1029 {offsets = [0, 5], sizes = [8, 5], strides = [1, 1]} : vector<8x10xf32> to vector<8x5xf32>
    %1032 = tpu.concatenate %955, %1031 in 1 : vector<8x5xf32>, vector<8x5xf32> -> vector<8x10xf32>
    %1033 = tpu.concatenate %980, %1006 in 1 : vector<8x5xf32>, vector<8x5xf32> -> vector<8x10xf32>
    %1034 = tpu.concatenate %1005, %981 in 1 : vector<8x5xf32>, vector<8x5xf32> -> vector<8x10xf32>
    %1035 = tpu.concatenate %1030, %956 in 1 : vector<8x5xf32>, vector<8x5xf32> -> vector<8x10xf32>
    %1036 = tpu.concatenate %1032, %1033, %1034, %1035 in 0 : vector<8x10xf32>, vector<8x10xf32>, vector<8x10xf32>, vector<8x10xf32> -> vector<32x10xf32>
    %1037 = vector.extract_strided_slice %1036 {offsets = [24, 0], sizes = [8, 10], strides = [1, 1]} : vector<32x10xf32> to vector<8x10xf32>
    %1038 = vector.extract_strided_slice %1036 {offsets = [16, 0], sizes = [8, 10], strides = [1, 1]} : vector<32x10xf32> to vector<8x10xf32>
    %1039 = vector.extract_strided_slice %1036 {offsets = [8, 0], sizes = [8, 10], strides = [1, 1]} : vector<32x10xf32> to vector<8x10xf32>
    %1040 = vector.extract_strided_slice %1036 {offsets = [0, 0], sizes = [8, 10], strides = [1, 1]} : vector<32x10xf32> to vector<8x10xf32>
    %1041 = tpu.concatenate %1037, %1038, %1039, %1040 in 0 : vector<8x10xf32>, vector<8x10xf32>, vector<8x10xf32>, vector<8x10xf32> -> vector<32x10xf32>
    %1042 = tpu.concatenate %1036, %1041 in 1 : vector<32x10xf32>, vector<32x10xf32> -> vector<32x20xf32>
    %c6 = arith.constant 6 : index
    %c0_193 = arith.constant 0 : index
    %c0_194 = arith.constant 0 : index
    %1043 = vector.load %arg5[%c6, %c0_193, %c0_194] : memref<8x20x30xf32, #tpu.memory_space<vmem>>, vector<1x20x30xf32>
    %1044 = vector.shape_cast %1043 : vector<1x20x30xf32> to vector<20x30xf32>
    %cst_195 = arith.constant dense<0.000000e+00> : vector<32x30xf32>
    %1045 = tpu.matmul %1042, %1044, %cst_195 {dimension_numbers = #tpu.dot_dimension_numbers<[1], [0], [0], [1], [0, 0, 1, 1], [], []>} : vector<32x20xf32>, vector<20x30xf32>, vector<32x30xf32> -> vector<32x30xf32>
    %c6_196 = arith.constant 6 : index
    %c0_197 = arith.constant 0 : index
    %c0_198 = arith.constant 0 : index
    %1046 = vector.load %arg7[%c6_196, %c0_197, %c0_198] : memref<8x1x30xf32, #tpu.memory_space<vmem>>, vector<1x1x30xf32>
    %1047 = vector.shape_cast %1046 : vector<1x1x30xf32> to vector<1x30xf32>
    %1048 = vector.shape_cast %1047 : vector<1x30xf32> to vector<1x30xf32>
    %1049 = vector.broadcast %1048 : vector<1x30xf32> to vector<32x30xf32>
    %1050 = arith.addf %1045, %1049 : vector<32x30xf32>
    %c6_199 = arith.constant 6 : index
    %c0_200 = arith.constant 0 : index
    %c0_201 = arith.constant 0 : index
    %1051 = vector.load %arg6[%c6_199, %c0_200, %c0_201] : memref<8x10x30xf32, #tpu.memory_space<vmem>>, vector<1x10x30xf32>
    %1052 = vector.shape_cast %1051 : vector<1x10x30xf32> to vector<10x30xf32>
    %c6_202 = arith.constant 6 : index
    %c0_203 = arith.constant 0 : index
    %c0_204 = arith.constant 0 : index
    %1053 = vector.load %arg8[%c6_202, %c0_203, %c0_204] : memref<8x1x30xf32, #tpu.memory_space<vmem>>, vector<1x1x30xf32>
    %1054 = vector.shape_cast %1053 : vector<1x1x30xf32> to vector<1x30xf32>
    %1055 = vector.shape_cast %1054 : vector<1x30xf32> to vector<1x30xf32>
    %1056 = vector.broadcast %1055 : vector<1x30xf32> to vector<8x30xf32>
    %cst_205 = arith.constant 0.000000e+00 : f32
    %1057 = vector.broadcast %cst_205 : f32 to vector<8x10xf32>
    %1058 = vector.extract_strided_slice %1050 {offsets = [0, 0], sizes = [8, 30], strides = [1, 1]} : vector<32x30xf32> to vector<8x30xf32>
    %cst_206 = arith.constant dense<0.000000e+00> : vector<8x30xf32>
    %1059 = tpu.matmul %1057, %1052, %cst_206 {dimension_numbers = #tpu.dot_dimension_numbers<[1], [0], [0], [1], [0, 0, 1, 1], [], []>} : vector<8x10xf32>, vector<10x30xf32>, vector<8x30xf32> -> vector<8x30xf32>
    %1060 = arith.addf %1059, %1056 : vector<8x30xf32>
    %1061 = vector.extract_strided_slice %1058 {offsets = [0, 0], sizes = [8, 20], strides = [1, 1]} : vector<8x30xf32> to vector<8x20xf32>
    %1062 = vector.extract_strided_slice %1060 {offsets = [0, 0], sizes = [8, 20], strides = [1, 1]} : vector<8x30xf32> to vector<8x20xf32>
    %1063 = arith.addf %1061, %1062 : vector<8x20xf32>
    %1064 = arith.negf %1063 : vector<8x20xf32>
    %1065 = math.exp %1064 : vector<8x20xf32>
    %cst_207 = arith.constant 1.000000e+00 : f32
    %1066 = vector.broadcast %cst_207 : f32 to vector<8x20xf32>
    %1067 = arith.addf %1066, %1065 : vector<8x20xf32>
    %1068 = arith.divf %1066, %1067 : vector<8x20xf32>
    %1069 = vector.extract_strided_slice %1068 {offsets = [0, 0], sizes = [8, 10], strides = [1, 1]} : vector<8x20xf32> to vector<8x10xf32>
    %1070 = vector.extract_strided_slice %1068 {offsets = [0, 10], sizes = [8, 10], strides = [1, 1]} : vector<8x20xf32> to vector<8x10xf32>
    %1071 = vector.extract_strided_slice %1058 {offsets = [0, 20], sizes = [8, 10], strides = [1, 1]} : vector<8x30xf32> to vector<8x10xf32>
    %1072 = vector.extract_strided_slice %1060 {offsets = [0, 20], sizes = [8, 10], strides = [1, 1]} : vector<8x30xf32> to vector<8x10xf32>
    %1073 = arith.mulf %1069, %1072 : vector<8x10xf32>
    %1074 = arith.addf %1071, %1073 : vector<8x10xf32>
    %1075 = math.tanh %1074 : vector<8x10xf32>
    %cst_208 = arith.constant 1.000000e+00 : f32
    %1076 = vector.broadcast %cst_208 : f32 to vector<8x10xf32>
    %1077 = arith.subf %1076, %1070 : vector<8x10xf32>
    %1078 = arith.mulf %1077, %1075 : vector<8x10xf32>
    %1079 = arith.mulf %1070, %1057 : vector<8x10xf32>
    %1080 = arith.addf %1078, %1079 : vector<8x10xf32>
    %1081 = vector.extract_strided_slice %1080 {offsets = [0, 0], sizes = [8, 5], strides = [1, 1]} : vector<8x10xf32> to vector<8x5xf32>
    %1082 = vector.extract_strided_slice %1080 {offsets = [0, 5], sizes = [8, 5], strides = [1, 1]} : vector<8x10xf32> to vector<8x5xf32>
    %1083 = vector.extract_strided_slice %1050 {offsets = [8, 0], sizes = [8, 30], strides = [1, 1]} : vector<32x30xf32> to vector<8x30xf32>
    %cst_209 = arith.constant dense<0.000000e+00> : vector<8x30xf32>
    %1084 = tpu.matmul %1080, %1052, %cst_209 {dimension_numbers = #tpu.dot_dimension_numbers<[1], [0], [0], [1], [0, 0, 1, 1], [], []>} : vector<8x10xf32>, vector<10x30xf32>, vector<8x30xf32> -> vector<8x30xf32>
    %1085 = arith.addf %1084, %1056 : vector<8x30xf32>
    %1086 = vector.extract_strided_slice %1083 {offsets = [0, 0], sizes = [8, 20], strides = [1, 1]} : vector<8x30xf32> to vector<8x20xf32>
    %1087 = vector.extract_strided_slice %1085 {offsets = [0, 0], sizes = [8, 20], strides = [1, 1]} : vector<8x30xf32> to vector<8x20xf32>
    %1088 = arith.addf %1086, %1087 : vector<8x20xf32>
    %1089 = arith.negf %1088 : vector<8x20xf32>
    %1090 = math.exp %1089 : vector<8x20xf32>
    %cst_210 = arith.constant 1.000000e+00 : f32
    %1091 = vector.broadcast %cst_210 : f32 to vector<8x20xf32>
    %1092 = arith.addf %1091, %1090 : vector<8x20xf32>
    %1093 = arith.divf %1091, %1092 : vector<8x20xf32>
    %1094 = vector.extract_strided_slice %1093 {offsets = [0, 0], sizes = [8, 10], strides = [1, 1]} : vector<8x20xf32> to vector<8x10xf32>
    %1095 = vector.extract_strided_slice %1093 {offsets = [0, 10], sizes = [8, 10], strides = [1, 1]} : vector<8x20xf32> to vector<8x10xf32>
    %1096 = vector.extract_strided_slice %1083 {offsets = [0, 20], sizes = [8, 10], strides = [1, 1]} : vector<8x30xf32> to vector<8x10xf32>
    %1097 = vector.extract_strided_slice %1085 {offsets = [0, 20], sizes = [8, 10], strides = [1, 1]} : vector<8x30xf32> to vector<8x10xf32>
    %1098 = arith.mulf %1094, %1097 : vector<8x10xf32>
    %1099 = arith.addf %1096, %1098 : vector<8x10xf32>
    %1100 = math.tanh %1099 : vector<8x10xf32>
    %cst_211 = arith.constant 1.000000e+00 : f32
    %1101 = vector.broadcast %cst_211 : f32 to vector<8x10xf32>
    %1102 = arith.subf %1101, %1095 : vector<8x10xf32>
    %1103 = arith.mulf %1102, %1100 : vector<8x10xf32>
    %1104 = arith.mulf %1095, %1080 : vector<8x10xf32>
    %1105 = arith.addf %1103, %1104 : vector<8x10xf32>
    %1106 = vector.extract_strided_slice %1105 {offsets = [0, 0], sizes = [8, 5], strides = [1, 1]} : vector<8x10xf32> to vector<8x5xf32>
    %1107 = vector.extract_strided_slice %1105 {offsets = [0, 5], sizes = [8, 5], strides = [1, 1]} : vector<8x10xf32> to vector<8x5xf32>
    %1108 = vector.extract_strided_slice %1050 {offsets = [16, 0], sizes = [8, 30], strides = [1, 1]} : vector<32x30xf32> to vector<8x30xf32>
    %cst_212 = arith.constant dense<0.000000e+00> : vector<8x30xf32>
    %1109 = tpu.matmul %1105, %1052, %cst_212 {dimension_numbers = #tpu.dot_dimension_numbers<[1], [0], [0], [1], [0, 0, 1, 1], [], []>} : vector<8x10xf32>, vector<10x30xf32>, vector<8x30xf32> -> vector<8x30xf32>
    %1110 = arith.addf %1109, %1056 : vector<8x30xf32>
    %1111 = vector.extract_strided_slice %1108 {offsets = [0, 0], sizes = [8, 20], strides = [1, 1]} : vector<8x30xf32> to vector<8x20xf32>
    %1112 = vector.extract_strided_slice %1110 {offsets = [0, 0], sizes = [8, 20], strides = [1, 1]} : vector<8x30xf32> to vector<8x20xf32>
    %1113 = arith.addf %1111, %1112 : vector<8x20xf32>
    %1114 = arith.negf %1113 : vector<8x20xf32>
    %1115 = math.exp %1114 : vector<8x20xf32>
    %cst_213 = arith.constant 1.000000e+00 : f32
    %1116 = vector.broadcast %cst_213 : f32 to vector<8x20xf32>
    %1117 = arith.addf %1116, %1115 : vector<8x20xf32>
    %1118 = arith.divf %1116, %1117 : vector<8x20xf32>
    %1119 = vector.extract_strided_slice %1118 {offsets = [0, 0], sizes = [8, 10], strides = [1, 1]} : vector<8x20xf32> to vector<8x10xf32>
    %1120 = vector.extract_strided_slice %1118 {offsets = [0, 10], sizes = [8, 10], strides = [1, 1]} : vector<8x20xf32> to vector<8x10xf32>
    %1121 = vector.extract_strided_slice %1108 {offsets = [0, 20], sizes = [8, 10], strides = [1, 1]} : vector<8x30xf32> to vector<8x10xf32>
    %1122 = vector.extract_strided_slice %1110 {offsets = [0, 20], sizes = [8, 10], strides = [1, 1]} : vector<8x30xf32> to vector<8x10xf32>
    %1123 = arith.mulf %1119, %1122 : vector<8x10xf32>
    %1124 = arith.addf %1121, %1123 : vector<8x10xf32>
    %1125 = math.tanh %1124 : vector<8x10xf32>
    %cst_214 = arith.constant 1.000000e+00 : f32
    %1126 = vector.broadcast %cst_214 : f32 to vector<8x10xf32>
    %1127 = arith.subf %1126, %1120 : vector<8x10xf32>
    %1128 = arith.mulf %1127, %1125 : vector<8x10xf32>
    %1129 = arith.mulf %1120, %1105 : vector<8x10xf32>
    %1130 = arith.addf %1128, %1129 : vector<8x10xf32>
    %1131 = vector.extract_strided_slice %1130 {offsets = [0, 0], sizes = [8, 5], strides = [1, 1]} : vector<8x10xf32> to vector<8x5xf32>
    %1132 = vector.extract_strided_slice %1130 {offsets = [0, 5], sizes = [8, 5], strides = [1, 1]} : vector<8x10xf32> to vector<8x5xf32>
    %1133 = vector.extract_strided_slice %1050 {offsets = [24, 0], sizes = [8, 30], strides = [1, 1]} : vector<32x30xf32> to vector<8x30xf32>
    %cst_215 = arith.constant dense<0.000000e+00> : vector<8x30xf32>
    %1134 = tpu.matmul %1130, %1052, %cst_215 {dimension_numbers = #tpu.dot_dimension_numbers<[1], [0], [0], [1], [0, 0, 1, 1], [], []>} : vector<8x10xf32>, vector<10x30xf32>, vector<8x30xf32> -> vector<8x30xf32>
    %1135 = arith.addf %1134, %1056 : vector<8x30xf32>
    %1136 = vector.extract_strided_slice %1133 {offsets = [0, 0], sizes = [8, 20], strides = [1, 1]} : vector<8x30xf32> to vector<8x20xf32>
    %1137 = vector.extract_strided_slice %1135 {offsets = [0, 0], sizes = [8, 20], strides = [1, 1]} : vector<8x30xf32> to vector<8x20xf32>
    %1138 = arith.addf %1136, %1137 : vector<8x20xf32>
    %1139 = arith.negf %1138 : vector<8x20xf32>
    %1140 = math.exp %1139 : vector<8x20xf32>
    %cst_216 = arith.constant 1.000000e+00 : f32
    %1141 = vector.broadcast %cst_216 : f32 to vector<8x20xf32>
    %1142 = arith.addf %1141, %1140 : vector<8x20xf32>
    %1143 = arith.divf %1141, %1142 : vector<8x20xf32>
    %1144 = vector.extract_strided_slice %1143 {offsets = [0, 0], sizes = [8, 10], strides = [1, 1]} : vector<8x20xf32> to vector<8x10xf32>
    %1145 = vector.extract_strided_slice %1143 {offsets = [0, 10], sizes = [8, 10], strides = [1, 1]} : vector<8x20xf32> to vector<8x10xf32>
    %1146 = vector.extract_strided_slice %1133 {offsets = [0, 20], sizes = [8, 10], strides = [1, 1]} : vector<8x30xf32> to vector<8x10xf32>
    %1147 = vector.extract_strided_slice %1135 {offsets = [0, 20], sizes = [8, 10], strides = [1, 1]} : vector<8x30xf32> to vector<8x10xf32>
    %1148 = arith.mulf %1144, %1147 : vector<8x10xf32>
    %1149 = arith.addf %1146, %1148 : vector<8x10xf32>
    %1150 = math.tanh %1149 : vector<8x10xf32>
    %cst_217 = arith.constant 1.000000e+00 : f32
    %1151 = vector.broadcast %cst_217 : f32 to vector<8x10xf32>
    %1152 = arith.subf %1151, %1145 : vector<8x10xf32>
    %1153 = arith.mulf %1152, %1150 : vector<8x10xf32>
    %1154 = arith.mulf %1145, %1130 : vector<8x10xf32>
    %1155 = arith.addf %1153, %1154 : vector<8x10xf32>
    %1156 = vector.extract_strided_slice %1155 {offsets = [0, 0], sizes = [8, 5], strides = [1, 1]} : vector<8x10xf32> to vector<8x5xf32>
    %1157 = vector.extract_strided_slice %1155 {offsets = [0, 5], sizes = [8, 5], strides = [1, 1]} : vector<8x10xf32> to vector<8x5xf32>
    %1158 = tpu.concatenate %1081, %1157 in 1 : vector<8x5xf32>, vector<8x5xf32> -> vector<8x10xf32>
    %1159 = tpu.concatenate %1106, %1132 in 1 : vector<8x5xf32>, vector<8x5xf32> -> vector<8x10xf32>
    %1160 = tpu.concatenate %1131, %1107 in 1 : vector<8x5xf32>, vector<8x5xf32> -> vector<8x10xf32>
    %1161 = tpu.concatenate %1156, %1082 in 1 : vector<8x5xf32>, vector<8x5xf32> -> vector<8x10xf32>
    %1162 = tpu.concatenate %1158, %1159, %1160, %1161 in 0 : vector<8x10xf32>, vector<8x10xf32>, vector<8x10xf32>, vector<8x10xf32> -> vector<32x10xf32>
    %1163 = vector.extract_strided_slice %1162 {offsets = [24, 0], sizes = [8, 10], strides = [1, 1]} : vector<32x10xf32> to vector<8x10xf32>
    %1164 = vector.extract_strided_slice %1162 {offsets = [16, 0], sizes = [8, 10], strides = [1, 1]} : vector<32x10xf32> to vector<8x10xf32>
    %1165 = vector.extract_strided_slice %1162 {offsets = [8, 0], sizes = [8, 10], strides = [1, 1]} : vector<32x10xf32> to vector<8x10xf32>
    %1166 = vector.extract_strided_slice %1162 {offsets = [0, 0], sizes = [8, 10], strides = [1, 1]} : vector<32x10xf32> to vector<8x10xf32>
    %1167 = tpu.concatenate %1163, %1164, %1165, %1166 in 0 : vector<8x10xf32>, vector<8x10xf32>, vector<8x10xf32>, vector<8x10xf32> -> vector<32x10xf32>
    %1168 = tpu.concatenate %1162, %1167 in 1 : vector<32x10xf32>, vector<32x10xf32> -> vector<32x20xf32>
    %c7 = arith.constant 7 : index
    %c0_218 = arith.constant 0 : index
    %c0_219 = arith.constant 0 : index
    %1169 = vector.load %arg5[%c7, %c0_218, %c0_219] : memref<8x20x30xf32, #tpu.memory_space<vmem>>, vector<1x20x30xf32>
    %1170 = vector.shape_cast %1169 : vector<1x20x30xf32> to vector<20x30xf32>
    %cst_220 = arith.constant dense<0.000000e+00> : vector<32x30xf32>
    %1171 = tpu.matmul %1168, %1170, %cst_220 {dimension_numbers = #tpu.dot_dimension_numbers<[1], [0], [0], [1], [0, 0, 1, 1], [], []>} : vector<32x20xf32>, vector<20x30xf32>, vector<32x30xf32> -> vector<32x30xf32>
    %c7_221 = arith.constant 7 : index
    %c0_222 = arith.constant 0 : index
    %c0_223 = arith.constant 0 : index
    %1172 = vector.load %arg7[%c7_221, %c0_222, %c0_223] : memref<8x1x30xf32, #tpu.memory_space<vmem>>, vector<1x1x30xf32>
    %1173 = vector.shape_cast %1172 : vector<1x1x30xf32> to vector<1x30xf32>
    %1174 = vector.shape_cast %1173 : vector<1x30xf32> to vector<1x30xf32>
    %1175 = vector.broadcast %1174 : vector<1x30xf32> to vector<32x30xf32>
    %1176 = arith.addf %1171, %1175 : vector<32x30xf32>
    %c7_224 = arith.constant 7 : index
    %c0_225 = arith.constant 0 : index
    %c0_226 = arith.constant 0 : index
    %1177 = vector.load %arg6[%c7_224, %c0_225, %c0_226] : memref<8x10x30xf32, #tpu.memory_space<vmem>>, vector<1x10x30xf32>
    %1178 = vector.shape_cast %1177 : vector<1x10x30xf32> to vector<10x30xf32>
    %c7_227 = arith.constant 7 : index
    %c0_228 = arith.constant 0 : index
    %c0_229 = arith.constant 0 : index
    %1179 = vector.load %arg8[%c7_227, %c0_228, %c0_229] : memref<8x1x30xf32, #tpu.memory_space<vmem>>, vector<1x1x30xf32>
    %1180 = vector.shape_cast %1179 : vector<1x1x30xf32> to vector<1x30xf32>
    %1181 = vector.shape_cast %1180 : vector<1x30xf32> to vector<1x30xf32>
    %1182 = vector.broadcast %1181 : vector<1x30xf32> to vector<8x30xf32>
    %cst_230 = arith.constant 0.000000e+00 : f32
    %1183 = vector.broadcast %cst_230 : f32 to vector<8x10xf32>
    %1184 = vector.extract_strided_slice %1176 {offsets = [0, 0], sizes = [8, 30], strides = [1, 1]} : vector<32x30xf32> to vector<8x30xf32>
    %cst_231 = arith.constant dense<0.000000e+00> : vector<8x30xf32>
    %1185 = tpu.matmul %1183, %1178, %cst_231 {dimension_numbers = #tpu.dot_dimension_numbers<[1], [0], [0], [1], [0, 0, 1, 1], [], []>} : vector<8x10xf32>, vector<10x30xf32>, vector<8x30xf32> -> vector<8x30xf32>
    %1186 = arith.addf %1185, %1182 : vector<8x30xf32>
    %1187 = vector.extract_strided_slice %1184 {offsets = [0, 0], sizes = [8, 20], strides = [1, 1]} : vector<8x30xf32> to vector<8x20xf32>
    %1188 = vector.extract_strided_slice %1186 {offsets = [0, 0], sizes = [8, 20], strides = [1, 1]} : vector<8x30xf32> to vector<8x20xf32>
    %1189 = arith.addf %1187, %1188 : vector<8x20xf32>
    %1190 = arith.negf %1189 : vector<8x20xf32>
    %1191 = math.exp %1190 : vector<8x20xf32>
    %cst_232 = arith.constant 1.000000e+00 : f32
    %1192 = vector.broadcast %cst_232 : f32 to vector<8x20xf32>
    %1193 = arith.addf %1192, %1191 : vector<8x20xf32>
    %1194 = arith.divf %1192, %1193 : vector<8x20xf32>
    %1195 = vector.extract_strided_slice %1194 {offsets = [0, 0], sizes = [8, 10], strides = [1, 1]} : vector<8x20xf32> to vector<8x10xf32>
    %1196 = vector.extract_strided_slice %1194 {offsets = [0, 10], sizes = [8, 10], strides = [1, 1]} : vector<8x20xf32> to vector<8x10xf32>
    %1197 = vector.extract_strided_slice %1184 {offsets = [0, 20], sizes = [8, 10], strides = [1, 1]} : vector<8x30xf32> to vector<8x10xf32>
    %1198 = vector.extract_strided_slice %1186 {offsets = [0, 20], sizes = [8, 10], strides = [1, 1]} : vector<8x30xf32> to vector<8x10xf32>
    %1199 = arith.mulf %1195, %1198 : vector<8x10xf32>
    %1200 = arith.addf %1197, %1199 : vector<8x10xf32>
    %1201 = math.tanh %1200 : vector<8x10xf32>
    %cst_233 = arith.constant 1.000000e+00 : f32
    %1202 = vector.broadcast %cst_233 : f32 to vector<8x10xf32>
    %1203 = arith.subf %1202, %1196 : vector<8x10xf32>
    %1204 = arith.mulf %1203, %1201 : vector<8x10xf32>
    %1205 = arith.mulf %1196, %1183 : vector<8x10xf32>
    %1206 = arith.addf %1204, %1205 : vector<8x10xf32>
    %1207 = vector.extract_strided_slice %1206 {offsets = [0, 0], sizes = [8, 5], strides = [1, 1]} : vector<8x10xf32> to vector<8x5xf32>
    %1208 = vector.extract_strided_slice %1206 {offsets = [0, 5], sizes = [8, 5], strides = [1, 1]} : vector<8x10xf32> to vector<8x5xf32>
    %1209 = vector.extract_strided_slice %1176 {offsets = [8, 0], sizes = [8, 30], strides = [1, 1]} : vector<32x30xf32> to vector<8x30xf32>
    %cst_234 = arith.constant dense<0.000000e+00> : vector<8x30xf32>
    %1210 = tpu.matmul %1206, %1178, %cst_234 {dimension_numbers = #tpu.dot_dimension_numbers<[1], [0], [0], [1], [0, 0, 1, 1], [], []>} : vector<8x10xf32>, vector<10x30xf32>, vector<8x30xf32> -> vector<8x30xf32>
    %1211 = arith.addf %1210, %1182 : vector<8x30xf32>
    %1212 = vector.extract_strided_slice %1209 {offsets = [0, 0], sizes = [8, 20], strides = [1, 1]} : vector<8x30xf32> to vector<8x20xf32>
    %1213 = vector.extract_strided_slice %1211 {offsets = [0, 0], sizes = [8, 20], strides = [1, 1]} : vector<8x30xf32> to vector<8x20xf32>
    %1214 = arith.addf %1212, %1213 : vector<8x20xf32>
    %1215 = arith.negf %1214 : vector<8x20xf32>
    %1216 = math.exp %1215 : vector<8x20xf32>
    %cst_235 = arith.constant 1.000000e+00 : f32
    %1217 = vector.broadcast %cst_235 : f32 to vector<8x20xf32>
    %1218 = arith.addf %1217, %1216 : vector<8x20xf32>
    %1219 = arith.divf %1217, %1218 : vector<8x20xf32>
    %1220 = vector.extract_strided_slice %1219 {offsets = [0, 0], sizes = [8, 10], strides = [1, 1]} : vector<8x20xf32> to vector<8x10xf32>
    %1221 = vector.extract_strided_slice %1219 {offsets = [0, 10], sizes = [8, 10], strides = [1, 1]} : vector<8x20xf32> to vector<8x10xf32>
    %1222 = vector.extract_strided_slice %1209 {offsets = [0, 20], sizes = [8, 10], strides = [1, 1]} : vector<8x30xf32> to vector<8x10xf32>
    %1223 = vector.extract_strided_slice %1211 {offsets = [0, 20], sizes = [8, 10], strides = [1, 1]} : vector<8x30xf32> to vector<8x10xf32>
    %1224 = arith.mulf %1220, %1223 : vector<8x10xf32>
    %1225 = arith.addf %1222, %1224 : vector<8x10xf32>
    %1226 = math.tanh %1225 : vector<8x10xf32>
    %cst_236 = arith.constant 1.000000e+00 : f32
    %1227 = vector.broadcast %cst_236 : f32 to vector<8x10xf32>
    %1228 = arith.subf %1227, %1221 : vector<8x10xf32>
    %1229 = arith.mulf %1228, %1226 : vector<8x10xf32>
    %1230 = arith.mulf %1221, %1206 : vector<8x10xf32>
    %1231 = arith.addf %1229, %1230 : vector<8x10xf32>
    %1232 = vector.extract_strided_slice %1231 {offsets = [0, 0], sizes = [8, 5], strides = [1, 1]} : vector<8x10xf32> to vector<8x5xf32>
    %1233 = vector.extract_strided_slice %1231 {offsets = [0, 5], sizes = [8, 5], strides = [1, 1]} : vector<8x10xf32> to vector<8x5xf32>
    %1234 = vector.extract_strided_slice %1176 {offsets = [16, 0], sizes = [8, 30], strides = [1, 1]} : vector<32x30xf32> to vector<8x30xf32>
    %cst_237 = arith.constant dense<0.000000e+00> : vector<8x30xf32>
    %1235 = tpu.matmul %1231, %1178, %cst_237 {dimension_numbers = #tpu.dot_dimension_numbers<[1], [0], [0], [1], [0, 0, 1, 1], [], []>} : vector<8x10xf32>, vector<10x30xf32>, vector<8x30xf32> -> vector<8x30xf32>
    %1236 = arith.addf %1235, %1182 : vector<8x30xf32>
    %1237 = vector.extract_strided_slice %1234 {offsets = [0, 0], sizes = [8, 20], strides = [1, 1]} : vector<8x30xf32> to vector<8x20xf32>
    %1238 = vector.extract_strided_slice %1236 {offsets = [0, 0], sizes = [8, 20], strides = [1, 1]} : vector<8x30xf32> to vector<8x20xf32>
    %1239 = arith.addf %1237, %1238 : vector<8x20xf32>
    %1240 = arith.negf %1239 : vector<8x20xf32>
    %1241 = math.exp %1240 : vector<8x20xf32>
    %cst_238 = arith.constant 1.000000e+00 : f32
    %1242 = vector.broadcast %cst_238 : f32 to vector<8x20xf32>
    %1243 = arith.addf %1242, %1241 : vector<8x20xf32>
    %1244 = arith.divf %1242, %1243 : vector<8x20xf32>
    %1245 = vector.extract_strided_slice %1244 {offsets = [0, 0], sizes = [8, 10], strides = [1, 1]} : vector<8x20xf32> to vector<8x10xf32>
    %1246 = vector.extract_strided_slice %1244 {offsets = [0, 10], sizes = [8, 10], strides = [1, 1]} : vector<8x20xf32> to vector<8x10xf32>
    %1247 = vector.extract_strided_slice %1234 {offsets = [0, 20], sizes = [8, 10], strides = [1, 1]} : vector<8x30xf32> to vector<8x10xf32>
    %1248 = vector.extract_strided_slice %1236 {offsets = [0, 20], sizes = [8, 10], strides = [1, 1]} : vector<8x30xf32> to vector<8x10xf32>
    %1249 = arith.mulf %1245, %1248 : vector<8x10xf32>
    %1250 = arith.addf %1247, %1249 : vector<8x10xf32>
    %1251 = math.tanh %1250 : vector<8x10xf32>
    %cst_239 = arith.constant 1.000000e+00 : f32
    %1252 = vector.broadcast %cst_239 : f32 to vector<8x10xf32>
    %1253 = arith.subf %1252, %1246 : vector<8x10xf32>
    %1254 = arith.mulf %1253, %1251 : vector<8x10xf32>
    %1255 = arith.mulf %1246, %1231 : vector<8x10xf32>
    %1256 = arith.addf %1254, %1255 : vector<8x10xf32>
    %1257 = vector.extract_strided_slice %1256 {offsets = [0, 0], sizes = [8, 5], strides = [1, 1]} : vector<8x10xf32> to vector<8x5xf32>
    %1258 = vector.extract_strided_slice %1256 {offsets = [0, 5], sizes = [8, 5], strides = [1, 1]} : vector<8x10xf32> to vector<8x5xf32>
    %1259 = vector.extract_strided_slice %1176 {offsets = [24, 0], sizes = [8, 30], strides = [1, 1]} : vector<32x30xf32> to vector<8x30xf32>
    %cst_240 = arith.constant dense<0.000000e+00> : vector<8x30xf32>
    %1260 = tpu.matmul %1256, %1178, %cst_240 {dimension_numbers = #tpu.dot_dimension_numbers<[1], [0], [0], [1], [0, 0, 1, 1], [], []>} : vector<8x10xf32>, vector<10x30xf32>, vector<8x30xf32> -> vector<8x30xf32>
    %1261 = arith.addf %1260, %1182 : vector<8x30xf32>
    %1262 = vector.extract_strided_slice %1259 {offsets = [0, 0], sizes = [8, 20], strides = [1, 1]} : vector<8x30xf32> to vector<8x20xf32>
    %1263 = vector.extract_strided_slice %1261 {offsets = [0, 0], sizes = [8, 20], strides = [1, 1]} : vector<8x30xf32> to vector<8x20xf32>
    %1264 = arith.addf %1262, %1263 : vector<8x20xf32>
    %1265 = arith.negf %1264 : vector<8x20xf32>
    %1266 = math.exp %1265 : vector<8x20xf32>
    %cst_241 = arith.constant 1.000000e+00 : f32
    %1267 = vector.broadcast %cst_241 : f32 to vector<8x20xf32>
    %1268 = arith.addf %1267, %1266 : vector<8x20xf32>
    %1269 = arith.divf %1267, %1268 : vector<8x20xf32>
    %1270 = vector.extract_strided_slice %1269 {offsets = [0, 0], sizes = [8, 10], strides = [1, 1]} : vector<8x20xf32> to vector<8x10xf32>
    %1271 = vector.extract_strided_slice %1269 {offsets = [0, 10], sizes = [8, 10], strides = [1, 1]} : vector<8x20xf32> to vector<8x10xf32>
    %1272 = vector.extract_strided_slice %1259 {offsets = [0, 20], sizes = [8, 10], strides = [1, 1]} : vector<8x30xf32> to vector<8x10xf32>
    %1273 = vector.extract_strided_slice %1261 {offsets = [0, 20], sizes = [8, 10], strides = [1, 1]} : vector<8x30xf32> to vector<8x10xf32>
    %1274 = arith.mulf %1270, %1273 : vector<8x10xf32>
    %1275 = arith.addf %1272, %1274 : vector<8x10xf32>
    %1276 = math.tanh %1275 : vector<8x10xf32>
    %cst_242 = arith.constant 1.000000e+00 : f32
    %1277 = vector.broadcast %cst_242 : f32 to vector<8x10xf32>
    %1278 = arith.subf %1277, %1271 : vector<8x10xf32>
    %1279 = arith.mulf %1278, %1276 : vector<8x10xf32>
    %1280 = arith.mulf %1271, %1256 : vector<8x10xf32>
    %1281 = arith.addf %1279, %1280 : vector<8x10xf32>
    %1282 = vector.extract_strided_slice %1281 {offsets = [0, 0], sizes = [8, 5], strides = [1, 1]} : vector<8x10xf32> to vector<8x5xf32>
    %1283 = vector.extract_strided_slice %1281 {offsets = [0, 5], sizes = [8, 5], strides = [1, 1]} : vector<8x10xf32> to vector<8x5xf32>
    %1284 = tpu.concatenate %1207, %1283 in 1 : vector<8x5xf32>, vector<8x5xf32> -> vector<8x10xf32>
    %1285 = tpu.concatenate %1232, %1258 in 1 : vector<8x5xf32>, vector<8x5xf32> -> vector<8x10xf32>
    %1286 = tpu.concatenate %1257, %1233 in 1 : vector<8x5xf32>, vector<8x5xf32> -> vector<8x10xf32>
    %1287 = tpu.concatenate %1282, %1208 in 1 : vector<8x5xf32>, vector<8x5xf32> -> vector<8x10xf32>
    %1288 = tpu.concatenate %1284, %1285, %1286, %1287 in 0 : vector<8x10xf32>, vector<8x10xf32>, vector<8x10xf32>, vector<8x10xf32> -> vector<32x10xf32>
    %c0_243 = arith.constant 0 : index
    %c0_244 = arith.constant 0 : index
    %1289 = vector.load %arg9[%c0_243, %c0_244] : memref<10x4xf32, #tpu.memory_space<vmem>>, vector<10x4xf32>
    %cst_245 = arith.constant dense<0.000000e+00> : vector<32x4xf32>
    %1290 = tpu.matmul %1288, %1289, %cst_245 {dimension_numbers = #tpu.dot_dimension_numbers<[1], [0], [0], [1], [0, 0, 1, 1], [], []>} : vector<32x10xf32>, vector<10x4xf32>, vector<32x4xf32> -> vector<32x4xf32>
    %c0_246 = arith.constant 0 : index
    %c0_247 = arith.constant 0 : index
    %1291 = vector.load %arg10[%c0_246, %c0_247] : memref<1x4xf32, #tpu.memory_space<vmem>>, vector<1x4xf32>
    %1292 = vector.shape_cast %1291 : vector<1x4xf32> to vector<1x4xf32>
    %1293 = vector.broadcast %1292 : vector<1x4xf32> to vector<32x4xf32>
    %1294 = arith.addf %1290, %1293 : vector<32x4xf32>
    %c0_248 = arith.constant 0 : index
    %c0_249 = arith.constant 0 : index
    %1295 = vector.load %arg11[%c0_248, %c0_249] : memref<32x4xf32, #tpu.memory_space<vmem>>, vector<32x4xf32>
    tpu.vector_store %arg11[%c0_248, %c0_249], %1294 {strides = array<i32>} : memref<32x4xf32, #tpu.memory_space<vmem>>, vector<32x4xf32>,
    return
  }
}

</mosaic_0001>

<llo_original>
// kernel: model_forward.1
$region0: #{model_forward.1}
  #allocation0 [shape = 'u32[]', space=smem, size = 0x4, offset = 0x4, fixed_abs, tag = 'smem constant byte address 0x4 - core index']
  #allocation1 [shape = 'u32[144,128]{1,0:T(1,128)}', space=vmem, size = 0x12000, scoped, tag = 'internal scratch']
  %s0 = inlined_call_operand.vmem [shape: f32[4,8], index: 0, kind: input, shape index: {}]
  %s1 = inlined_call_operand.vmem [shape: f32[1,30], index: 1, kind: input, shape index: {}]
  %s2 = inlined_call_operand.vmem [shape: f32[10,30], index: 2, kind: input, shape index: {}]
  %s3 = inlined_call_operand.vmem [shape: f32[1,30], index: 3, kind: input, shape index: {}]
  %s4 = inlined_call_operand.vmem [shape: f32[1,30], index: 4, kind: input, shape index: {}]
  %s5 = inlined_call_operand.vmem [shape: f32[8,20,30], index: 5, kind: input, shape index: {}]
  %s6 = inlined_call_operand.vmem [shape: f32[8,10,30], index: 6, kind: input, shape index: {}]
  %s7 = inlined_call_operand.vmem [shape: f32[8,1,30], index: 7, kind: input, shape index: {}]
  %s8 = inlined_call_operand.vmem [shape: f32[8,1,30], index: 8, kind: input, shape index: {}]
  %s9 = inlined_call_operand.vmem [shape: f32[10,4], index: 9, kind: input, shape index: {}]
  %s10 = inlined_call_operand.vmem [shape: f32[1,4], index: 10, kind: input, shape index: {}]
  %s11 = inlined_call_operand.vmem [shape: f32[32,4], index: 11, kind: output, shape index: {}]
  %s12 = sld [smem:[#allocation0]]
  $region54: #{model_forward.1} parent=0
    _
  %s14 = ssub.s32 1, %s12
  %s15 = scalar_select 0, %s14, %s12
  // Predicated region
  $region2: #{model_forward.1} parent=0 // pred_check
    _
  $region3: #{model_forward.1} parent=0 // pred_check_branch
    %17 = sbr.rel (0) target = $region5
  $region4: #{model_forward.1} parent=0 // pred_region
    _
  $region5: #{model_forward.1} parent=0 // pred_fallthru
    _
  // Predicated region
  $region6: #{model_forward.1} parent=0 // pred_check
    _
  $region7: #{model_forward.1} parent=0 // pred_check_branch
    %19 = sbr.rel (0) target = $region9
  $region8: #{model_forward.1} parent=0 // pred_region
    _
  $region9: #{model_forward.1} parent=0 // pred_fallthru
    _
  // Predicated region
  $region10: #{model_forward.1} parent=0 // pred_check
    _
  $region11: #{model_forward.1} parent=0 // pred_check_branch
    %21 = sbr.rel (0) target = $region13
  $region12: #{model_forward.1} parent=0 // pred_region
    _
  $region13: #{model_forward.1} parent=0 // pred_fallthru
    _
  // Predicated region
  $region14: #{model_forward.1} parent=0 // pred_check
    _
  $region15: #{model_forward.1} parent=0 // pred_check_branch
    %23 = sbr.rel (0) target = $region17
  $region16: #{model_forward.1} parent=0 // pred_region
    _
  $region17: #{model_forward.1} parent=0 // pred_fallthru
    _
  // Predicated region
  $region18: #{model_forward.1} parent=0 // pred_check
    _
  $region19: #{model_forward.1} parent=0 // pred_check_branch
    %25 = sbr.rel (0) target = $region21
  $region20: #{model_forward.1} parent=0 // pred_region
    _
  $region21: #{model_forward.1} parent=0 // pred_fallthru
    _
  // Predicated region
  $region22: #{model_forward.1} parent=0 // pred_check
    _
  $region23: #{model_forward.1} parent=0 // pred_check_branch
    %27 = sbr.rel (0) target = $region25
  $region24: #{model_forward.1} parent=0 // pred_region
    _
  $region25: #{model_forward.1} parent=0 // pred_fallthru
    _
  // Predicated region
  $region26: #{model_forward.1} parent=0 // pred_check
    _
  $region27: #{model_forward.1} parent=0 // pred_check_branch
    %29 = sbr.rel (0) target = $region29
  $region28: #{model_forward.1} parent=0 // pred_region
    _
  $region29: #{model_forward.1} parent=0 // pred_fallthru
    _
  // Predicated region
  $region30: #{model_forward.1} parent=0 // pred_check
    _
  $region31: #{model_forward.1} parent=0 // pred_check_branch
    %31 = sbr.rel (0) target = $region33
  $region32: #{model_forward.1} parent=0 // pred_region
    _
  $region33: #{model_forward.1} parent=0 // pred_fallthru
    _
  // Predicated region
  $region34: #{model_forward.1} parent=0 // pred_check
    _
  $region35: #{model_forward.1} parent=0 // pred_check_branch
    %33 = sbr.rel (0) target = $region37
  $region36: #{model_forward.1} parent=0 // pred_region
    _
  $region37: #{model_forward.1} parent=0 // pred_fallthru
    _
  // Predicated region
  $region38: #{model_forward.1} parent=0 // pred_check
    _
  $region39: #{model_forward.1} parent=0 // pred_check_branch
    %35 = sbr.rel (0) target = $region41
  $region40: #{model_forward.1} parent=0 // pred_region
    _
  $region41: #{model_forward.1} parent=0 // pred_fallthru
    _
  // Predicated region
  $region42: #{model_forward.1} parent=0 // pred_check
    _
  $region43: #{model_forward.1} parent=0 // pred_check_branch
    %37 = sbr.rel (0) target = $region45
  $region44: #{model_forward.1} parent=0 // pred_region
    _
  $region45: #{model_forward.1} parent=0 // pred_fallthru
    _
  %v38 = vld [vmem:[%s0] sm:$0xf]
  %v39 = vld [vmem:[%s2] sm:$0xff]
  %v40 = vld [vmem:[%s2 + $0x8] sm:$0x3]
  %v41 = vld [vmem:[%s1] sm:$0x1]
  %v43 = vlaneseq
  %v44 = vshrl.u32 %v43, 7
  %v45 = vsub.s32 0, %v44
  %v46 = vrot.slane %v41, %v45
  %v48 = vld [vmem:[%s3] sm:$0x1]
  %v50 = vlaneseq
  %v51 = vshrl.u32 %v50, 7
  %v52 = vsub.s32 0, %v51
  %v53 = vrot.slane %v48, %v52
  %v55 = vld [vmem:[%s4] sm:$0x1]
  %v57 = vlaneseq
  %v58 = vshrl.u32 %v57, 7
  %v59 = vsub.s32 0, %v58
  %v60 = vrot.slane %v55, %v59
  %v62 = vlaneseq
  %v63 = vshrl.u32 %v62, 7
  %v64 = vadd.s32 %v63, 8
  %v65 = vadd.s32 %v63, 16
  %v66 = vadd.s32 %v63, 24
  %v67 = vlaneseq
  %v68 = vand.u32 %v67, 127
  %v69 = vmul.u32 %v68, 8
  %71 = vset.pattern.permute.xlu0 0
  %72 = vperm.xlu0 %71, %v38
  %v73 = vpop.permute.xlu0 %72
  %v75 = vmul.f32 %v73, %v46
  %v76 = vadd.f32 %v75, %v53
  %vm77 = vcmask 80896
  %v79 = vsel %vm77, 0.0, 0
  %vm81 = vcmask 1041408
  %v83 = vsel %vm81, %v40, 0
  %85 = vmatprep.subr.mxu0 0.0
  %86 = vmatpush1.msra.mxu0 %v39
  %87 = vmatprep.subr.mxu0 0.0
  %88 = vmatpush1.msra.mxu0 %v83
  %89 = vmatprep.subr.mxu0 0.0
  %90 = vmatpush1.msra.mxu0 0.0
  %91 = vmatprep.subr.mxu0 0.0
  %92 = vmatpush1.msra.mxu0 0.0
  %93 = vmatprep.subr.mxu0 0.0
  %94 = vmatpush1.msra.mxu0 0.0
  %95 = vmatprep.subr.mxu0 0.0
  %96 = vmatpush1.msra.mxu0 0.0
  %97 = vmatprep.subr.mxu0 0.0
  %98 = vmatpush1.msra.mxu0 0.0
  %99 = vmatprep.subr.mxu0 0.0
  %100 = vmatpush1.msra.mxu0 0.0
  %101 = vmatprep.subr.mxu0 0.0
  %102 = vmatpush1.msra.mxu0 0.0
  %103 = vmatprep.subr.mxu0 0.0
  %104 = vmatpush1.msra.mxu0 0.0
  %105 = vmatprep.subr.mxu0 0.0
  %106 = vmatpush1.msra.mxu0 0.0
  %107 = vmatprep.subr.mxu0 0.0
  %108 = vmatpush1.msra.mxu0 0.0
  %109 = vmatprep.subr.mxu0 0.0
  %110 = vmatpush1.msra.mxu0 0.0
  %111 = vmatprep.subr.mxu0 0.0
  %112 = vmatpush1.msra.mxu0 0.0
  %113 = vmatprep.subr.mxu0 0.0
  %114 = vmatpush1.msra.mxu0 0.0
  %115 = vmatprep.subr.mxu0 0.0
  %116 = vmatpush1.msra.mxu0 0.0
  %117 = vmatprep.subr.mxu0 0.0
  %118 = vmatpush1.msra.mxu0 0.0
  %119 = vmatprep.subr.mxu0 0.0
  %120 = vmatpush1.msra.mxu0 0.0
  %121 = vmatprep.subr.mxu0 0.0
  %122 = vmatpush1.msra.mxu0 0.0
  %123 = vmatprep.subr.mxu0 0.0
  %124 = vmatpush1.msra.mxu0 0.0
  %125 = vmatprep.subr.mxu0 0.0
  %126 = vmatpush1.msra.mxu0 0.0
  %127 = vmatprep.subr.mxu0 0.0
  %128 = vmatpush1.msra.mxu0 0.0
  %129 = vmatprep.subr.mxu0 0.0
  %130 = vmatpush1.msra.mxu0 0.0
  %131 = vmatprep.subr.mxu0 0.0
  %132 = vmatpush1.msra.mxu0 0.0
  %133 = vmatprep.subr.mxu0 0.0
  %134 = vmatpush1.msra.mxu0 0.0
  %135 = vmatprep.subr.mxu0 0.0
  %136 = vmatpush1.msra.mxu0 0.0
  %137 = vmatprep.subr.mxu0 0.0
  %138 = vmatpush1.msra.mxu0 0.0
  %139 = vmatprep.subr.mxu0 0.0
  %140 = vmatpush1.msra.mxu0 0.0
  %141 = vmatprep.subr.mxu0 0.0
  %142 = vmatpush1.msra.mxu0 0.0
  %143 = vmatprep.subr.mxu0 0.0
  %144 = vmatpush1.msra.mxu0 0.0
  %145 = vmatprep.subr.mxu0 0.0
  %146 = vmatpush1.msra.mxu0 0.0
  %147 = vmatprep.subr.mxu0 0.0
  %148 = vmatpush1.msra.mxu0 0.0
  %149 = vmatprep.mubr.f32.mxu0 0.0
  %150 = vmatmul.mubr.f32.gmra.mrb[0].mxu0 %v79
  %v151 = vpop.f32.mrb[0].mxu0
  %v152 = vadd.f32 %v60, %v151
  %v153 = vpop.f32.mrb[0].mxu0
  %154 = vdwg.mxu0
  %v155 = vadd.f32 %v76, %v152
  %v156 = vxor.u32 %v155, 2147483648
  %v157 = vmul.f32 %v156, 1.442695
  %v158 = vpow.pop %v157
  %v159 = vadd.f32 %v158, 1.0
  %v160 = vrcp.pop %v159
  %v161 = vmul.f32 1.0, %v160
  %163 = vrot.lane.b32.xlu0 %v152, 108
  %v164 = vpop.permute.xlu0 %163
  %v166 = vmul.f32 %v161, %v164
  %168 = vrot.lane.b32.xlu0 %v166, 20
  %v169 = vpop.permute.xlu0 %168
  %v171 = vadd.f32 %v76, %v169
  %v172 = vtanh.pop %v171
  %v173 = vsub.f32 1.0, %v161
  %175 = vrot.lane.b32.xlu0 %v172, 118
  %v176 = vpop.permute.xlu0 %175
  %v178 = vmul.f32 %v173, %v176
  %v179 = vmul.f32 %v161, 0.0
  %v180 = vadd.f32 %v178, %v179
  %vm181 = vcmp.eq.s32.totalorder %v63, %v69
  %vm182 = vcmp.eq.s32.totalorder %v64, %v69
  %vm183 = vcmp.eq.s32.totalorder %v65, %v69
  %vm184 = vcmp.eq.s32.totalorder %v66, %v69
  %v185 = vsel %vm181, 1, 0
  %v186 = vsel %vm182, 1, 0
  %v187 = vsel %vm183, 1, 0
  %v188 = vsel %vm184, 1, 0
  %v189 = vcvt.s32.f32 %v185
  %v190 = vcvt.s32.f32 %v186
  %v191 = vcvt.s32.f32 %v187
  %v192 = vcvt.s32.f32 %v188
  %193 = vset.pattern.permute.xlu0 1
  %194 = vperm.xlu0 %193, %v38
  %v195 = vpop.permute.xlu0 %194
  %v197 = vmul.f32 %v195, %v46
  %v198 = vadd.f32 %v197, %v53
  %200 = vrot.lane.b32.xlu0 %v180, 118
  %v201 = vpop.permute.xlu0 %200
  %v202 = vsel %vm77, %v201, 0
  %204 = vmatprep.subr.mxu0 0.0
  %205 = vmatpush1.msra.mxu0 %v39
  %206 = vmatprep.subr.mxu0 0.0
  %207 = vmatpush1.msra.mxu0 %v83
  %208 = vmatprep.subr.mxu0 0.0
  %209 = vmatpush1.msra.mxu0 0.0
  %210 = vmatprep.subr.mxu0 0.0
  %211 = vmatpush1.msra.mxu0 0.0
  %212 = vmatprep.subr.mxu0 0.0
  %213 = vmatpush1.msra.mxu0 0.0
  %214 = vmatprep.subr.mxu0 0.0
  %215 = vmatpush1.msra.mxu0 0.0
  %216 = vmatprep.subr.mxu0 0.0
  %217 = vmatpush1.msra.mxu0 0.0
  %218 = vmatprep.subr.mxu0 0.0
  %219 = vmatpush1.msra.mxu0 0.0
  %220 = vmatprep.subr.mxu0 0.0
  %221 = vmatpush1.msra.mxu0 0.0
  %222 = vmatprep.subr.mxu0 0.0
  %223 = vmatpush1.msra.mxu0 0.0
  %224 = vmatprep.subr.mxu0 0.0
  %225 = vmatpush1.msra.mxu0 0.0
  %226 = vmatprep.subr.mxu0 0.0
  %227 = vmatpush1.msra.mxu0 0.0
  %228 = vmatprep.subr.mxu0 0.0
  %229 = vmatpush1.msra.mxu0 0.0
  %230 = vmatprep.subr.mxu0 0.0
  %231 = vmatpush1.msra.mxu0 0.0
  %232 = vmatprep.subr.mxu0 0.0
  %233 = vmatpush1.msra.mxu0 0.0
  %234 = vmatprep.subr.mxu0 0.0
  %235 = vmatpush1.msra.mxu0 0.0
  %236 = vmatprep.subr.mxu0 0.0
  %237 = vmatpush1.msra.mxu0 0.0
  %238 = vmatprep.subr.mxu0 0.0
  %239 = vmatpush1.msra.mxu0 0.0
  %240 = vmatprep.subr.mxu0 0.0
  %241 = vmatpush1.msra.mxu0 0.0
  %242 = vmatprep.subr.mxu0 0.0
  %243 = vmatpush1.msra.mxu0 0.0
  %244 = vmatprep.subr.mxu0 0.0
  %245 = vmatpush1.msra.mxu0 0.0
  %246 = vmatprep.subr.mxu0 0.0
  %247 = vmatpush1.msra.mxu0 0.0
  %248 = vmatprep.subr.mxu0 0.0
  %249 = vmatpush1.msra.mxu0 0.0
  %250 = vmatprep.subr.mxu0 0.0
  %251 = vmatpush1.msra.mxu0 0.0
  %252 = vmatprep.subr.mxu0 0.0
  %253 = vmatpush1.msra.mxu0 0.0
  %254 = vmatprep.subr.mxu0 0.0
  %255 = vmatpush1.msra.mxu0 0.0
  %256 = vmatprep.subr.mxu0 0.0
  %257 = vmatpush1.msra.mxu0 0.0
  %258 = vmatprep.subr.mxu0 0.0
  %259 = vmatpush1.msra.mxu0 0.0
  %260 = vmatprep.subr.mxu0 0.0
  %261 = vmatpush1.msra.mxu0 0.0
  %262 = vmatprep.subr.mxu0 0.0
  %263 = vmatpush1.msra.mxu0 0.0
  %264 = vmatprep.subr.mxu0 0.0
  %265 = vmatpush1.msra.mxu0 0.0
  %266 = vmatprep.subr.mxu0 0.0
  %267 = vmatpush1.msra.mxu0 0.0
  %268 = vmatprep.mubr.f32.mxu0 0.0
  %269 = vmatmul.mubr.f32.gmra.mrb[0].mxu0 %v202
  %v270 = vpop.f32.mrb[0].mxu0
  %v271 = vadd.f32 %v60, %v270
  %v272 = vpop.f32.mrb[0].mxu0
  %273 = vdwg.mxu0
  %v274 = vadd.f32 %v198, %v271
  %v275 = vxor.u32 %v274, 2147483648
  %v276 = vmul.f32 %v275, 1.442695
  %v277 = vpow.pop %v276
  %v278 = vadd.f32 %v277, 1.0
  %v279 = vrcp.pop %v278
  %v280 = vmul.f32 1.0, %v279
  %282 = vrot.lane.b32.xlu0 %v271, 108
  %v283 = vpop.permute.xlu0 %282
  %v285 = vmul.f32 %v280, %v283
  %287 = vrot.lane.b32.xlu0 %v285, 20
  %v288 = vpop.permute.xlu0 %287
  %v290 = vadd.f32 %v198, %v288
  %v291 = vtanh.pop %v290
  %v292 = vsub.f32 1.0, %v280
  %294 = vrot.lane.b32.xlu0 %v291, 118
  %v295 = vpop.permute.xlu0 %294
  %v297 = vmul.f32 %v292, %v295
  %v298 = vmul.f32 %v280, %v180
  %v299 = vadd.f32 %v297, %v298
  %v300 = vadd.s32 %v69, 1
  %vm301 = vcmp.eq.s32.totalorder %v63, %v300
  %vm302 = vcmp.eq.s32.totalorder %v64, %v300
  %vm303 = vcmp.eq.s32.totalorder %v65, %v300
  %vm304 = vcmp.eq.s32.totalorder %v66, %v300
  %v305 = vsel %vm301, 1, 0
  %v306 = vsel %vm302, 1, 0
  %v307 = vsel %vm303, 1, 0
  %v308 = vsel %vm304, 1, 0
  %v309 = vcvt.s32.f32 %v305
  %v310 = vcvt.s32.f32 %v306
  %v311 = vcvt.s32.f32 %v307
  %v312 = vcvt.s32.f32 %v308
  %314 = vrot.lane.b32.xlu0 %v299, 118
  %v315 = vpop.permute.xlu0 %314
  %vm316 = vcmask 31744
  %v318 = vsel %vm316, %v309, 0
  %v321 = vsel %vm316, %v310, 0
  %v324 = vsel %vm316, %v311, 0
  %v327 = vsel %vm316, %v312, 0
  %vm329 = vcmask 1043456
  %v330 = vsel %vm329, %v315, 0
  %332 = vmatprep.subr.mxu0 0.0
  %333 = vmatpush1.msra.mxu0 %v330
  %334 = vmatprep.subr.mxu0 0.0
  %335 = vmatpush1.msra.mxu0 0.0
  %336 = vmatprep.subr.mxu0 0.0
  %337 = vmatpush1.msra.mxu0 0.0
  %338 = vmatprep.subr.mxu0 0.0
  %339 = vmatpush1.msra.mxu0 0.0
  %340 = vmatprep.subr.mxu0 0.0
  %341 = vmatpush1.msra.mxu0 0.0
  %342 = vmatprep.subr.mxu0 0.0
  %343 = vmatpush1.msra.mxu0 0.0
  %344 = vmatprep.subr.mxu0 0.0
  %345 = vmatpush1.msra.mxu0 0.0
  %346 = vmatprep.subr.mxu0 0.0
  %347 = vmatpush1.msra.mxu0 0.0
  %348 = vmatprep.subr.mxu0 0.0
  %349 = vmatpush1.msra.mxu0 0.0
  %350 = vmatprep.subr.mxu0 0.0
  %351 = vmatpush1.msra.mxu0 0.0
  %352 = vmatprep.subr.mxu0 0.0
  %353 = vmatpush1.msra.mxu0 0.0
  %354 = vmatprep.subr.mxu0 0.0
  %355 = vmatpush1.msra.mxu0 0.0
  %356 = vmatprep.subr.mxu0 0.0
  %357 = vmatpush1.msra.mxu0 0.0
  %358 = vmatprep.subr.mxu0 0.0
  %359 = vmatpush1.msra.mxu0 0.0
  %360 = vmatprep.subr.mxu0 0.0
  %361 = vmatpush1.msra.mxu0 0.0
  %362 = vmatprep.subr.mxu0 0.0
  %363 = vmatpush1.msra.mxu0 0.0
  %364 = vmatprep.subr.mxu0 0.0
  %365 = vmatpush1.msra.mxu0 0.0
  %366 = vmatprep.subr.mxu0 0.0
  %367 = vmatpush1.msra.mxu0 0.0
  %368 = vmatprep.subr.mxu0 0.0
  %369 = vmatpush1.msra.mxu0 0.0
  %370 = vmatprep.subr.mxu0 0.0
  %371 = vmatpush1.msra.mxu0 0.0
  %372 = vmatprep.subr.mxu0 0.0
  %373 = vmatpush1.msra.mxu0 0.0
  %374 = vmatprep.subr.mxu0 0.0
  %375 = vmatpush1.msra.mxu0 0.0
  %376 = vmatprep.subr.mxu0 0.0
  %377 = vmatpush1.msra.mxu0 0.0
  %378 = vmatprep.subr.mxu0 0.0
  %379 = vmatpush1.msra.mxu0 0.0
  %380 = vmatprep.subr.mxu0 0.0
  %381 = vmatpush1.msra.mxu0 0.0
  %382 = vmatprep.subr.mxu0 0.0
  %383 = vmatpush1.msra.mxu0 0.0
  %384 = vmatprep.subr.mxu0 0.0
  %385 = vmatpush1.msra.mxu0 0.0
  %386 = vmatprep.subr.mxu0 0.0
  %387 = vmatpush1.msra.mxu0 0.0
  %388 = vmatprep.subr.mxu0 0.0
  %389 = vmatpush1.msra.mxu0 0.0
  %390 = vmatprep.subr.mxu0 0.0
  %391 = vmatpush1.msra.mxu0 0.0
  %392 = vmatprep.subr.mxu0 0.0
  %393 = vmatpush1.msra.mxu0 0.0
  %394 = vmatprep.subr.mxu0 0.0
  %395 = vmatpush1.msra.mxu0 0.0
  %396 = vmatprep.mubr.f32.mxu0 0.0
  %397 = vmatmul.mubr.f32.gmra.mrb[0].mxu0 %v318
  %v398 = vpop.f32.mrb[0].mxu0
  %v399 = vadd.f32 0.0, %v398
  %v400 = vpop.f32.mrb[0].mxu0
  %401 = vmatprep.mubr.f32.mxu0 0.0
  %402 = vmatmul.mubr.f32.gmra.mrb[0].mxu0 %v321
  %v403 = vpop.f32.mrb[0].mxu0
  %v404 = vadd.f32 0.0, %v403
  %v405 = vpop.f32.mrb[0].mxu0
  %406 = vmatprep.mubr.f32.mxu0 0.0
  %407 = vmatmul.mubr.f32.gmra.mrb[0].mxu0 %v324
  %v408 = vpop.f32.mrb[0].mxu0
  %v409 = vadd.f32 0.0, %v408
  %v410 = vpop.f32.mrb[0].mxu0
  %411 = vmatprep.mubr.f32.mxu0 0.0
  %412 = vmatmul.mubr.f32.gmra.mrb[0].mxu0 %v327
  %v413 = vpop.f32.mrb[0].mxu0
  %v414 = vadd.f32 0.0, %v413
  %v415 = vpop.f32.mrb[0].mxu0
  %416 = vdwg.mxu0
  %v418 = vsel %vm316, %v189, 0
  %v421 = vsel %vm316, %v190, 0
  %v424 = vsel %vm316, %v191, 0
  %v427 = vsel %vm316, %v192, 0
  %v429 = vsel %vm329, %v201, 0
  %431 = vmatprep.subr.mxu0 0.0
  %432 = vmatpush1.msra.mxu0 %v429
  %433 = vmatprep.subr.mxu0 0.0
  %434 = vmatpush1.msra.mxu0 0.0
  %435 = vmatprep.subr.mxu0 0.0
  %436 = vmatpush1.msra.mxu0 0.0
  %437 = vmatprep.subr.mxu0 0.0
  %438 = vmatpush1.msra.mxu0 0.0
  %439 = vmatprep.subr.mxu0 0.0
  %440 = vmatpush1.msra.mxu0 0.0
  %441 = vmatprep.subr.mxu0 0.0
  %442 = vmatpush1.msra.mxu0 0.0
  %443 = vmatprep.subr.mxu0 0.0
  %444 = vmatpush1.msra.mxu0 0.0
  %445 = vmatprep.subr.mxu0 0.0
  %446 = vmatpush1.msra.mxu0 0.0
  %447 = vmatprep.subr.mxu0 0.0
  %448 = vmatpush1.msra.mxu0 0.0
  %449 = vmatprep.subr.mxu0 0.0
  %450 = vmatpush1.msra.mxu0 0.0
  %451 = vmatprep.subr.mxu0 0.0
  %452 = vmatpush1.msra.mxu0 0.0
  %453 = vmatprep.subr.mxu0 0.0
  %454 = vmatpush1.msra.mxu0 0.0
  %455 = vmatprep.subr.mxu0 0.0
  %456 = vmatpush1.msra.mxu0 0.0
  %457 = vmatprep.subr.mxu0 0.0
  %458 = vmatpush1.msra.mxu0 0.0
  %459 = vmatprep.subr.mxu0 0.0
  %460 = vmatpush1.msra.mxu0 0.0
  %461 = vmatprep.subr.mxu0 0.0
  %462 = vmatpush1.msra.mxu0 0.0
  %463 = vmatprep.subr.mxu0 0.0
  %464 = vmatpush1.msra.mxu0 0.0
  %465 = vmatprep.subr.mxu0 0.0
  %466 = vmatpush1.msra.mxu0 0.0
  %467 = vmatprep.subr.mxu0 0.0
  %468 = vmatpush1.msra.mxu0 0.0
  %469 = vmatprep.subr.mxu0 0.0
  %470 = vmatpush1.msra.mxu0 0.0
  %471 = vmatprep.subr.mxu0 0.0
  %472 = vmatpush1.msra.mxu0 0.0
  %473 = vmatprep.subr.mxu0 0.0
  %474 = vmatpush1.msra.mxu0 0.0
  %475 = vmatprep.subr.mxu0 0.0
  %476 = vmatpush1.msra.mxu0 0.0
  %477 = vmatprep.subr.mxu0 0.0
  %478 = vmatpush1.msra.mxu0 0.0
  %479 = vmatprep.subr.mxu0 0.0
  %480 = vmatpush1.msra.mxu0 0.0
  %481 = vmatprep.subr.mxu0 0.0
  %482 = vmatpush1.msra.mxu0 0.0
  %483 = vmatprep.subr.mxu0 0.0
  %484 = vmatpush1.msra.mxu0 0.0
  %485 = vmatprep.subr.mxu0 0.0
  %486 = vmatpush1.msra.mxu0 0.0
  %487 = vmatprep.subr.mxu0 0.0
  %488 = vmatpush1.msra.mxu0 0.0
  %489 = vmatprep.subr.mxu0 0.0
  %490 = vmatpush1.msra.mxu0 0.0
  %491 = vmatprep.subr.mxu0 0.0
  %492 = vmatpush1.msra.mxu0 0.0
  %493 = vmatprep.subr.mxu0 0.0
  %494 = vmatpush1.msra.mxu0 0.0
  %495 = vmatprep.mubr.f32.mxu0 0.0
  %496 = vmatmul.mubr.f32.gmra.mrb[0].mxu0 %v418
  %v497 = vpop.f32.mrb[0].mxu0
  %v498 = vadd.f32 %v399, %v497
  %v499 = vpop.f32.mrb[0].mxu0
  %500 = vmatprep.mubr.f32.mxu0 0.0
  %501 = vmatmul.mubr.f32.gmra.mrb[0].mxu0 %v421
  %v502 = vpop.f32.mrb[0].mxu0
  %v503 = vadd.f32 %v404, %v502
  %v504 = vpop.f32.mrb[0].mxu0
  %505 = vmatprep.mubr.f32.mxu0 0.0
  %506 = vmatmul.mubr.f32.gmra.mrb[0].mxu0 %v424
  %v507 = vpop.f32.mrb[0].mxu0
  %v508 = vadd.f32 %v409, %v507
  %v509 = vpop.f32.mrb[0].mxu0
  %510 = vmatprep.mubr.f32.mxu0 0.0
  %511 = vmatmul.mubr.f32.gmra.mrb[0].mxu0 %v427
  %v512 = vpop.f32.mrb[0].mxu0
  %v513 = vadd.f32 %v414, %v512
  %v514 = vpop.f32.mrb[0].mxu0
  %515 = vdwg.mxu0
  %516 = vset.pattern.permute.xlu0 2
  %517 = vperm.xlu0 %516, %v38
  %v518 = vpop.permute.xlu0 %517
  %v520 = vmul.f32 %v518, %v46
  %v521 = vadd.f32 %v520, %v53
  %v522 = vsel %vm77, %v315, 0
  %524 = vmatprep.subr.mxu0 0.0
  %525 = vmatpush1.msra.mxu0 %v39
  %526 = vmatprep.subr.mxu0 0.0
  %527 = vmatpush1.msra.mxu0 %v83
  %528 = vmatprep.subr.mxu0 0.0
  %529 = vmatpush1.msra.mxu0 0.0
  %530 = vmatprep.subr.mxu0 0.0
  %531 = vmatpush1.msra.mxu0 0.0
  %532 = vmatprep.subr.mxu0 0.0
  %533 = vmatpush1.msra.mxu0 0.0
  %534 = vmatprep.subr.mxu0 0.0
  %535 = vmatpush1.msra.mxu0 0.0
  %536 = vmatprep.subr.mxu0 0.0
  %537 = vmatpush1.msra.mxu0 0.0
  %538 = vmatprep.subr.mxu0 0.0
  %539 = vmatpush1.msra.mxu0 0.0
  %540 = vmatprep.subr.mxu0 0.0
  %541 = vmatpush1.msra.mxu0 0.0
  %542 = vmatprep.subr.mxu0 0.0
  %543 = vmatpush1.msra.mxu0 0.0
  %544 = vmatprep.subr.mxu0 0.0
  %545 = vmatpush1.msra.mxu0 0.0
  %546 = vmatprep.subr.mxu0 0.0
  %547 = vmatpush1.msra.mxu0 0.0
  %548 = vmatprep.subr.mxu0 0.0
  %549 = vmatpush1.msra.mxu0 0.0
  %550 = vmatprep.subr.mxu0 0.0
  %551 = vmatpush1.msra.mxu0 0.0
  %552 = vmatprep.subr.mxu0 0.0
  %553 = vmatpush1.msra.mxu0 0.0
  %554 = vmatprep.subr.mxu0 0.0
  %555 = vmatpush1.msra.mxu0 0.0
  %556 = vmatprep.subr.mxu0 0.0
  %557 = vmatpush1.msra.mxu0 0.0
  %558 = vmatprep.subr.mxu0 0.0
  %559 = vmatpush1.msra.mxu0 0.0
  %560 = vmatprep.subr.mxu0 0.0
  %561 = vmatpush1.msra.mxu0 0.0
  %562 = vmatprep.subr.mxu0 0.0
  %563 = vmatpush1.msra.mxu0 0.0
  %564 = vmatprep.subr.mxu0 0.0
  %565 = vmatpush1.msra.mxu0 0.0
  %566 = vmatprep.subr.mxu0 0.0
  %567 = vmatpush1.msra.mxu0 0.0
  %568 = vmatprep.subr.mxu0 0.0
  %569 = vmatpush1.msra.mxu0 0.0
  %570 = vmatprep.subr.mxu0 0.0
  %571 = vmatpush1.msra.mxu0 0.0
  %572 = vmatprep.subr.mxu0 0.0
  %573 = vmatpush1.msra.mxu0 0.0
  %574 = vmatprep.subr.mxu0 0.0
  %575 = vmatpush1.msra.mxu0 0.0
  %576 = vmatprep.subr.mxu0 0.0
  %577 = vmatpush1.msra.mxu0 0.0
  %578 = vmatprep.subr.mxu0 0.0
  %579 = vmatpush1.msra.mxu0 0.0
  %580 = vmatprep.subr.mxu0 0.0
  %581 = vmatpush1.msra.mxu0 0.0
  %582 = vmatprep.subr.mxu0 0.0
  %583 = vmatpush1.msra.mxu0 0.0
  %584 = vmatprep.subr.mxu0 0.0
  %585 = vmatpush1.msra.mxu0 0.0
  %586 = vmatprep.subr.mxu0 0.0
  %587 = vmatpush1.msra.mxu0 0.0
  %588 = vmatprep.mubr.f32.mxu0 0.0
  %589 = vmatmul.mubr.f32.gmra.mrb[0].mxu0 %v522
  %v590 = vpop.f32.mrb[0].mxu0
  %v591 = vadd.f32 %v60, %v590
  %v592 = vpop.f32.mrb[0].mxu0
  %593 = vdwg.mxu0
  %v594 = vadd.f32 %v521, %v591
  %v595 = vxor.u32 %v594, 2147483648
  %v596 = vmul.f32 %v595, 1.442695
  %v597 = vpow.pop %v596
  %v598 = vadd.f32 %v597, 1.0
  %v599 = vrcp.pop %v598
  %v600 = vmul.f32 1.0, %v599
  %602 = vrot.lane.b32.xlu0 %v591, 108
  %v603 = vpop.permute.xlu0 %602
  %v605 = vmul.f32 %v600, %v603
  %607 = vrot.lane.b32.xlu0 %v605, 20
  %v608 = vpop.permute.xlu0 %607
  %v610 = vadd.f32 %v521, %v608
  %v611 = vtanh.pop %v610
  %v612 = vsub.f32 1.0, %v600
  %614 = vrot.lane.b32.xlu0 %v611, 118
  %v615 = vpop.permute.xlu0 %614
  %v617 = vmul.f32 %v612, %v615
  %v618 = vmul.f32 %v600, %v299
  %v619 = vadd.f32 %v617, %v618
  %v620 = vadd.s32 %v69, 2
  %vm621 = vcmp.eq.s32.totalorder %v63, %v620
  %vm622 = vcmp.eq.s32.totalorder %v64, %v620
  %vm623 = vcmp.eq.s32.totalorder %v65, %v620
  %vm624 = vcmp.eq.s32.totalorder %v66, %v620
  %v625 = vsel %vm621, 1, 0
  %v626 = vsel %vm622, 1, 0
  %v627 = vsel %vm623, 1, 0
  %v628 = vsel %vm624, 1, 0
  %v629 = vcvt.s32.f32 %v625
  %v630 = vcvt.s32.f32 %v626
  %v631 = vcvt.s32.f32 %v627
  %v632 = vcvt.s32.f32 %v628
  %634 = vrot.lane.b32.xlu0 %v619, 118
  %v635 = vpop.permute.xlu0 %634
  %v637 = vsel %vm316, %v629, 0
  %v640 = vsel %vm316, %v630, 0
  %v643 = vsel %vm316, %v631, 0
  %v646 = vsel %vm316, %v632, 0
  %v648 = vsel %vm329, %v635, 0
  %650 = vmatprep.subr.mxu0 0.0
  %651 = vmatpush1.msra.mxu0 %v648
  %652 = vmatprep.subr.mxu0 0.0
  %653 = vmatpush1.msra.mxu0 0.0
  %654 = vmatprep.subr.mxu0 0.0
  %655 = vmatpush1.msra.mxu0 0.0
  %656 = vmatprep.subr.mxu0 0.0
  %657 = vmatpush1.msra.mxu0 0.0
  %658 = vmatprep.subr.mxu0 0.0
  %659 = vmatpush1.msra.mxu0 0.0
  %660 = vmatprep.subr.mxu0 0.0
  %661 = vmatpush1.msra.mxu0 0.0
  %662 = vmatprep.subr.mxu0 0.0
  %663 = vmatpush1.msra.mxu0 0.0
  %664 = vmatprep.subr.mxu0 0.0
  %665 = vmatpush1.msra.mxu0 0.0
  %666 = vmatprep.subr.mxu0 0.0
  %667 = vmatpush1.msra.mxu0 0.0
  %668 = vmatprep.subr.mxu0 0.0
  %669 = vmatpush1.msra.mxu0 0.0
  %670 = vmatprep.subr.mxu0 0.0
  %671 = vmatpush1.msra.mxu0 0.0
  %672 = vmatprep.subr.mxu0 0.0
  %673 = vmatpush1.msra.mxu0 0.0
  %674 = vmatprep.subr.mxu0 0.0
  %675 = vmatpush1.msra.mxu0 0.0
  %676 = vmatprep.subr.mxu0 0.0
  %677 = vmatpush1.msra.mxu0 0.0
  %678 = vmatprep.subr.mxu0 0.0
  %679 = vmatpush1.msra.mxu0 0.0
  %680 = vmatprep.subr.mxu0 0.0
  %681 = vmatpush1.msra.mxu0 0.0
  %682 = vmatprep.subr.mxu0 0.0
  %683 = vmatpush1.msra.mxu0 0.0
  %684 = vmatprep.subr.mxu0 0.0
  %685 = vmatpush1.msra.mxu0 0.0
  %686 = vmatprep.subr.mxu0 0.0
  %687 = vmatpush1.msra.mxu0 0.0
  %688 = vmatprep.subr.mxu0 0.0
  %689 = vmatpush1.msra.mxu0 0.0
  %690 = vmatprep.subr.mxu0 0.0
  %691 = vmatpush1.msra.mxu0 0.0
  %692 = vmatprep.subr.mxu0 0.0
  %693 = vmatpush1.msra.mxu0 0.0
  %694 = vmatprep.subr.mxu0 0.0
  %695 = vmatpush1.msra.mxu0 0.0
  %696 = vmatprep.subr.mxu0 0.0
  %697 = vmatpush1.msra.mxu0 0.0
  %698 = vmatprep.subr.mxu0 0.0
  %699 = vmatpush1.msra.mxu0 0.0
  %700 = vmatprep.subr.mxu0 0.0
  %701 = vmatpush1.msra.mxu0 0.0
  %702 = vmatprep.subr.mxu0 0.0
  %703 = vmatpush1.msra.mxu0 0.0
  %704 = vmatprep.subr.mxu0 0.0
  %705 = vmatpush1.msra.mxu0 0.0
  %706 = vmatprep.subr.mxu0 0.0
  %707 = vmatpush1.msra.mxu0 0.0
  %708 = vmatprep.subr.mxu0 0.0
  %709 = vmatpush1.msra.mxu0 0.0
  %710 = vmatprep.subr.mxu0 0.0
  %711 = vmatpush1.msra.mxu0 0.0
  %712 = vmatprep.subr.mxu0 0.0
  %713 = vmatpush1.msra.mxu0 0.0
  %714 = vmatprep.mubr.f32.mxu0 0.0
  %715 = vmatmul.mubr.f32.gmra.mrb[0].mxu0 %v637
  %v716 = vpop.f32.mrb[0].mxu0
  %v717 = vadd.f32 0.0, %v716
  %v718 = vpop.f32.mrb[0].mxu0
  %719 = vmatprep.mubr.f32.mxu0 0.0
  %720 = vmatmul.mubr.f32.gmra.mrb[0].mxu0 %v640
  %v721 = vpop.f32.mrb[0].mxu0
  %v722 = vadd.f32 0.0, %v721
  %v723 = vpop.f32.mrb[0].mxu0
  %724 = vmatprep.mubr.f32.mxu0 0.0
  %725 = vmatmul.mubr.f32.gmra.mrb[0].mxu0 %v643
  %v726 = vpop.f32.mrb[0].mxu0
  %v727 = vadd.f32 0.0, %v726
  %v728 = vpop.f32.mrb[0].mxu0
  %729 = vmatprep.mubr.f32.mxu0 0.0
  %730 = vmatmul.mubr.f32.gmra.mrb[0].mxu0 %v646
  %v731 = vpop.f32.mrb[0].mxu0
  %v732 = vadd.f32 0.0, %v731
  %v733 = vpop.f32.mrb[0].mxu0
  %734 = vdwg.mxu0
  %v735 = vadd.f32 %v498, %v717
  %v736 = vadd.f32 %v503, %v722
  %v737 = vadd.f32 %v508, %v727
  %v738 = vadd.f32 %v513, %v732
  %739 = vset.pattern.permute.xlu0 3
  %740 = vperm.xlu0 %739, %v38
  %v741 = vpop.permute.xlu0 %740
  %v743 = vmul.f32 %v741, %v46
  %v744 = vadd.f32 %v743, %v53
  %v745 = vsel %vm77, %v635, 0
  %747 = vmatprep.subr.mxu0 0.0
  %748 = vmatpush1.msra.mxu0 %v39
  %749 = vmatprep.subr.mxu0 0.0
  %750 = vmatpush1.msra.mxu0 %v83
  %751 = vmatprep.subr.mxu0 0.0
  %752 = vmatpush1.msra.mxu0 0.0
  %753 = vmatprep.subr.mxu0 0.0
  %754 = vmatpush1.msra.mxu0 0.0
  %755 = vmatprep.subr.mxu0 0.0
  %756 = vmatpush1.msra.mxu0 0.0
  %757 = vmatprep.subr.mxu0 0.0
  %758 = vmatpush1.msra.mxu0 0.0
  %759 = vmatprep.subr.mxu0 0.0
  %760 = vmatpush1.msra.mxu0 0.0
  %761 = vmatprep.subr.mxu0 0.0
  %762 = vmatpush1.msra.mxu0 0.0
  %763 = vmatprep.subr.mxu0 0.0
  %764 = vmatpush1.msra.mxu0 0.0
  %765 = vmatprep.subr.mxu0 0.0
  %766 = vmatpush1.msra.mxu0 0.0
  %767 = vmatprep.subr.mxu0 0.0
  %768 = vmatpush1.msra.mxu0 0.0
  %769 = vmatprep.subr.mxu0 0.0
  %770 = vmatpush1.msra.mxu0 0.0
  %771 = vmatprep.subr.mxu0 0.0
  %772 = vmatpush1.msra.mxu0 0.0
  %773 = vmatprep.subr.mxu0 0.0
  %774 = vmatpush1.msra.mxu0 0.0
  %775 = vmatprep.subr.mxu0 0.0
  %776 = vmatpush1.msra.mxu0 0.0
  %777 = vmatprep.subr.mxu0 0.0
  %778 = vmatpush1.msra.mxu0 0.0
  %779 = vmatprep.subr.mxu0 0.0
  %780 = vmatpush1.msra.mxu0 0.0
  %781 = vmatprep.subr.mxu0 0.0
  %782 = vmatpush1.msra.mxu0 0.0
  %783 = vmatprep.subr.mxu0 0.0
  %784 = vmatpush1.msra.mxu0 0.0
  %785 = vmatprep.subr.mxu0 0.0
  %786 = vmatpush1.msra.mxu0 0.0
  %787 = vmatprep.subr.mxu0 0.0
  %788 = vmatpush1.msra.mxu0 0.0
  %789 = vmatprep.subr.mxu0 0.0
  %790 = vmatpush1.msra.mxu0 0.0
  %791 = vmatprep.subr.mxu0 0.0
  %792 = vmatpush1.msra.mxu0 0.0
  %793 = vmatprep.subr.mxu0 0.0
  %794 = vmatpush1.msra.mxu0 0.0
  %795 = vmatprep.subr.mxu0 0.0
  %796 = vmatpush1.msra.mxu0 0.0
  %797 = vmatprep.subr.mxu0 0.0
  %798 = vmatpush1.msra.mxu0 0.0
  %799 = vmatprep.subr.mxu0 0.0
  %800 = vmatpush1.msra.mxu0 0.0
  %801 = vmatprep.subr.mxu0 0.0
  %802 = vmatpush1.msra.mxu0 0.0
  %803 = vmatprep.subr.mxu0 0.0
  %804 = vmatpush1.msra.mxu0 0.0
  %805 = vmatprep.subr.mxu0 0.0
  %806 = vmatpush1.msra.mxu0 0.0
  %807 = vmatprep.subr.mxu0 0.0
  %808 = vmatpush1.msra.mxu0 0.0
  %809 = vmatprep.subr.mxu0 0.0
  %810 = vmatpush1.msra.mxu0 0.0
  %811 = vmatprep.mubr.f32.mxu0 0.0
  %812 = vmatmul.mubr.f32.gmra.mrb[0].mxu0 %v745
  %v813 = vpop.f32.mrb[0].mxu0
  %v814 = vadd.f32 %v60, %v813
  %v815 = vpop.f32.mrb[0].mxu0
  %816 = vdwg.mxu0
  %v817 = vadd.f32 %v744, %v814
  %v818 = vxor.u32 %v817, 2147483648
  %v819 = vmul.f32 %v818, 1.442695
  %v820 = vpow.pop %v819
  %v821 = vadd.f32 %v820, 1.0
  %v822 = vrcp.pop %v821
  %v823 = vmul.f32 1.0, %v822
  %825 = vrot.lane.b32.xlu0 %v814, 108
  %v826 = vpop.permute.xlu0 %825
  %v828 = vmul.f32 %v823, %v826
  %830 = vrot.lane.b32.xlu0 %v828, 20
  %v831 = vpop.permute.xlu0 %830
  %v833 = vadd.f32 %v744, %v831
  %v834 = vtanh.pop %v833
  %v835 = vsub.f32 1.0, %v823
  %837 = vrot.lane.b32.xlu0 %v834, 118
  %v838 = vpop.permute.xlu0 %837
  %v840 = vmul.f32 %v835, %v838
  %v841 = vmul.f32 %v823, %v619
  %v842 = vadd.f32 %v840, %v841
  %v843 = vadd.s32 %v69, 3
  %vm844 = vcmp.eq.s32.totalorder %v63, %v843
  %vm845 = vcmp.eq.s32.totalorder %v64, %v843
  %vm846 = vcmp.eq.s32.totalorder %v65, %v843
  %vm847 = vcmp.eq.s32.totalorder %v66, %v843
  %v848 = vsel %vm844, 1, 0
  %v849 = vsel %vm845, 1, 0
  %v850 = vsel %vm846, 1, 0
  %v851 = vsel %vm847, 1, 0
  %v852 = vcvt.s32.f32 %v848
  %v853 = vcvt.s32.f32 %v849
  %v854 = vcvt.s32.f32 %v850
  %v855 = vcvt.s32.f32 %v851
  %857 = vrot.lane.b32.xlu0 %v842, 118
  %v858 = vpop.permute.xlu0 %857
  %v860 = vsel %vm316, %v852, 0
  %v863 = vsel %vm316, %v853, 0
  %v866 = vsel %vm316, %v854, 0
  %v869 = vsel %vm316, %v855, 0
  %v871 = vsel %vm329, %v858, 0
  %873 = vmatprep.subr.mxu0 0.0
  %874 = vmatpush1.msra.mxu0 %v871
  %875 = vmatprep.subr.mxu0 0.0
  %876 = vmatpush1.msra.mxu0 0.0
  %877 = vmatprep.subr.mxu0 0.0
  %878 = vmatpush1.msra.mxu0 0.0
  %879 = vmatprep.subr.mxu0 0.0
  %880 = vmatpush1.msra.mxu0 0.0
  %881 = vmatprep.subr.mxu0 0.0
  %882 = vmatpush1.msra.mxu0 0.0
  %883 = vmatprep.subr.mxu0 0.0
  %884 = vmatpush1.msra.mxu0 0.0
  %885 = vmatprep.subr.mxu0 0.0
  %886 = vmatpush1.msra.mxu0 0.0
  %887 = vmatprep.subr.mxu0 0.0
  %888 = vmatpush1.msra.mxu0 0.0
  %889 = vmatprep.subr.mxu0 0.0
  %890 = vmatpush1.msra.mxu0 0.0
  %891 = vmatprep.subr.mxu0 0.0
  %892 = vmatpush1.msra.mxu0 0.0
  %893 = vmatprep.subr.mxu0 0.0
  %894 = vmatpush1.msra.mxu0 0.0
  %895 = vmatprep.subr.mxu0 0.0
  %896 = vmatpush1.msra.mxu0 0.0
  %897 = vmatprep.subr.mxu0 0.0
  %898 = vmatpush1.msra.mxu0 0.0
  %899 = vmatprep.subr.mxu0 0.0
  %900 = vmatpush1.msra.mxu0 0.0
  %901 = vmatprep.subr.mxu0 0.0
  %902 = vmatpush1.msra.mxu0 0.0
  %903 = vmatprep.subr.mxu0 0.0
  %904 = vmatpush1.msra.mxu0 0.0
  %905 = vmatprep.subr.mxu0 0.0
  %906 = vmatpush1.msra.mxu0 0.0
  %907 = vmatprep.subr.mxu0 0.0
  %908 = vmatpush1.msra.mxu0 0.0
  %909 = vmatprep.subr.mxu0 0.0
  %910 = vmatpush1.msra.mxu0 0.0
  %911 = vmatprep.subr.mxu0 0.0
  %912 = vmatpush1.msra.mxu0 0.0
  %913 = vmatprep.subr.mxu0 0.0
  %914 = vmatpush1.msra.mxu0 0.0
  %915 = vmatprep.subr.mxu0 0.0
  %916 = vmatpush1.msra.mxu0 0.0
  %917 = vmatprep.subr.mxu0 0.0
  %918 = vmatpush1.msra.mxu0 0.0
  %919 = vmatprep.subr.mxu0 0.0
  %920 = vmatpush1.msra.mxu0 0.0
  %921 = vmatprep.subr.mxu0 0.0
  %922 = vmatpush1.msra.mxu0 0.0
  %923 = vmatprep.subr.mxu0 0.0
  %924 = vmatpush1.msra.mxu0 0.0
  %925 = vmatprep.subr.mxu0 0.0
  %926 = vmatpush1.msra.mxu0 0.0
  %927 = vmatprep.subr.mxu0 0.0
  %928 = vmatpush1.msra.mxu0 0.0
  %929 = vmatprep.subr.mxu0 0.0
  %930 = vmatpush1.msra.mxu0 0.0
  %931 = vmatprep.subr.mxu0 0.0
  %932 = vmatpush1.msra.mxu0 0.0
  %933 = vmatprep.subr.mxu0 0.0
  %934 = vmatpush1.msra.mxu0 0.0
  %935 = vmatprep.subr.mxu0 0.0
  %936 = vmatpush1.msra.mxu0 0.0
  %937 = vmatprep.mubr.f32.mxu0 0.0
  %938 = vmatmul.mubr.f32.gmra.mrb[0].mxu0 %v860
  %v939 = vpop.f32.mrb[0].mxu0
  %v940 = vadd.f32 0.0, %v939
  %v941 = vpop.f32.mrb[0].mxu0
  %942 = vmatprep.mubr.f32.mxu0 0.0
  %943 = vmatmul.mubr.f32.gmra.mrb[0].mxu0 %v863
  %v944 = vpop.f32.mrb[0].mxu0
  %v945 = vadd.f32 0.0, %v944
  %v946 = vpop.f32.mrb[0].mxu0
  %947 = vmatprep.mubr.f32.mxu0 0.0
  %948 = vmatmul.mubr.f32.gmra.mrb[0].mxu0 %v866
  %v949 = vpop.f32.mrb[0].mxu0
  %v950 = vadd.f32 0.0, %v949
  %v951 = vpop.f32.mrb[0].mxu0
  %952 = vmatprep.mubr.f32.mxu0 0.0
  %953 = vmatmul.mubr.f32.gmra.mrb[0].mxu0 %v869
  %v954 = vpop.f32.mrb[0].mxu0
  %v955 = vadd.f32 0.0, %v954
  %v956 = vpop.f32.mrb[0].mxu0
  %957 = vdwg.mxu0
  %v958 = vadd.f32 %v735, %v940
  %v959 = vadd.f32 %v736, %v945
  %v960 = vadd.f32 %v737, %v950
  %v961 = vadd.f32 %v738, %v955
  %962 = vset.pattern.permute.xlu0 4
  %963 = vperm.xlu0 %962, %v38
  %v964 = vpop.permute.xlu0 %963
  %v966 = vmul.f32 %v964, %v46
  %v967 = vadd.f32 %v966, %v53
  %v968 = vsel %vm77, %v858, 0
  %970 = vmatprep.subr.mxu0 0.0
  %971 = vmatpush1.msra.mxu0 %v39
  %972 = vmatprep.subr.mxu0 0.0
  %973 = vmatpush1.msra.mxu0 %v83
  %974 = vmatprep.subr.mxu0 0.0
  %975 = vmatpush1.msra.mxu0 0.0
  %976 = vmatprep.subr.mxu0 0.0
  %977 = vmatpush1.msra.mxu0 0.0
  %978 = vmatprep.subr.mxu0 0.0
  %979 = vmatpush1.msra.mxu0 0.0
  %980 = vmatprep.subr.mxu0 0.0
  %981 = vmatpush1.msra.mxu0 0.0
  %982 = vmatprep.subr.mxu0 0.0
  %983 = vmatpush1.msra.mxu0 0.0
  %984 = vmatprep.subr.mxu0 0.0
  %985 = vmatpush1.msra.mxu0 0.0
  %986 = vmatprep.subr.mxu0 0.0
  %987 = vmatpush1.msra.mxu0 0.0
  %988 = vmatprep.subr.mxu0 0.0
  %989 = vmatpush1.msra.mxu0 0.0
  %990 = vmatprep.subr.mxu0 0.0
  %991 = vmatpush1.msra.mxu0 0.0
  %992 = vmatprep.subr.mxu0 0.0
  %993 = vmatpush1.msra.mxu0 0.0
  %994 = vmatprep.subr.mxu0 0.0
  %995 = vmatpush1.msra.mxu0 0.0
  %996 = vmatprep.subr.mxu0 0.0
  %997 = vmatpush1.msra.mxu0 0.0
  %998 = vmatprep.subr.mxu0 0.0
  %999 = vmatpush1.msra.mxu0 0.0
  %1000 = vmatprep.subr.mxu0 0.0
  %1001 = vmatpush1.msra.mxu0 0.0
  %1002 = vmatprep.subr.mxu0 0.0
  %1003 = vmatpush1.msra.mxu0 0.0
  %1004 = vmatprep.subr.mxu0 0.0
  %1005 = vmatpush1.msra.mxu0 0.0
  %1006 = vmatprep.subr.mxu0 0.0
  %1007 = vmatpush1.msra.mxu0 0.0
  %1008 = vmatprep.subr.mxu0 0.0
  %1009 = vmatpush1.msra.mxu0 0.0
  %1010 = vmatprep.subr.mxu0 0.0
  %1011 = vmatpush1.msra.mxu0 0.0
  %1012 = vmatprep.subr.mxu0 0.0
  %1013 = vmatpush1.msra.mxu0 0.0
  %1014 = vmatprep.subr.mxu0 0.0
  %1015 = vmatpush1.msra.mxu0 0.0
  %1016 = vmatprep.subr.mxu0 0.0
  %1017 = vmatpush1.msra.mxu0 0.0
  %1018 = vmatprep.subr.mxu0 0.0
  %1019 = vmatpush1.msra.mxu0 0.0
  %1020 = vmatprep.subr.mxu0 0.0
  %1021 = vmatpush1.msra.mxu0 0.0
  %1022 = vmatprep.subr.mxu0 0.0
  %1023 = vmatpush1.msra.mxu0 0.0
  %1024 = vmatprep.subr.mxu0 0.0
  %1025 = vmatpush1.msra.mxu0 0.0
  %1026 = vmatprep.subr.mxu0 0.0
  %1027 = vmatpush1.msra.mxu0 0.0
  %1028 = vmatprep.subr.mxu0 0.0
  %1029 = vmatpush1.msra.mxu0 0.0
  %1030 = vmatprep.subr.mxu0 0.0
  %1031 = vmatpush1.msra.mxu0 0.0
  %1032 = vmatprep.subr.mxu0 0.0
  %1033 = vmatpush1.msra.mxu0 0.0
  %1034 = vmatprep.mubr.f32.mxu0 0.0
  %1035 = vmatmul.mubr.f32.gmra.mrb[0].mxu0 %v968
  %v1036 = vpop.f32.mrb[0].mxu0
  %v1037 = vadd.f32 %v60, %v1036
  %v1038 = vpop.f32.mrb[0].mxu0
  %1039 = vdwg.mxu0
  %v1040 = vadd.f32 %v967, %v1037
  %v1041 = vxor.u32 %v1040, 2147483648
  %v1042 = vmul.f32 %v1041, 1.442695
  %v1043 = vpow.pop %v1042
  %v1044 = vadd.f32 %v1043, 1.0
  %v1045 = vrcp.pop %v1044
  %v1046 = vmul.f32 1.0, %v1045
  %1048 = vrot.lane.b32.xlu0 %v1037, 108
  %v1049 = vpop.permute.xlu0 %1048
  %v1051 = vmul.f32 %v1046, %v1049
  %1053 = vrot.lane.b32.xlu0 %v1051, 20
  %v1054 = vpop.permute.xlu0 %1053
  %v1056 = vadd.f32 %v967, %v1054
  %v1057 = vtanh.pop %v1056
  %v1058 = vsub.f32 1.0, %v1046
  %1060 = vrot.lane.b32.xlu0 %v1057, 118
  %v1061 = vpop.permute.xlu0 %1060
  %v1063 = vmul.f32 %v1058, %v1061
  %v1064 = vmul.f32 %v1046, %v842
  %v1065 = vadd.f32 %v1063, %v1064
  %v1066 = vadd.s32 %v69, 4
  %vm1067 = vcmp.eq.s32.totalorder %v63, %v1066
  %vm1068 = vcmp.eq.s32.totalorder %v64, %v1066
  %vm1069 = vcmp.eq.s32.totalorder %v65, %v1066
  %vm1070 = vcmp.eq.s32.totalorder %v66, %v1066
  %v1071 = vsel %vm1067, 1, 0
  %v1072 = vsel %vm1068, 1, 0
  %v1073 = vsel %vm1069, 1, 0
  %v1074 = vsel %vm1070, 1, 0
  %v1075 = vcvt.s32.f32 %v1071
  %v1076 = vcvt.s32.f32 %v1072
  %v1077 = vcvt.s32.f32 %v1073
  %v1078 = vcvt.s32.f32 %v1074
  %1080 = vrot.lane.b32.xlu0 %v1065, 118
  %v1081 = vpop.permute.xlu0 %1080
  %v1083 = vsel %vm316, %v1075, 0
  %v1086 = vsel %vm316, %v1076, 0
  %v1089 = vsel %vm316, %v1077, 0
  %v1092 = vsel %vm316, %v1078, 0
  %v1094 = vsel %vm329, %v1081, 0
  %1096 = vmatprep.subr.mxu0 0.0
  %1097 = vmatpush1.msra.mxu0 %v1094
  %1098 = vmatprep.subr.mxu0 0.0
  %1099 = vmatpush1.msra.mxu0 0.0
  %1100 = vmatprep.subr.mxu0 0.0
  %1101 = vmatpush1.msra.mxu0 0.0
  %1102 = vmatprep.subr.mxu0 0.0
  %1103 = vmatpush1.msra.mxu0 0.0
  %1104 = vmatprep.subr.mxu0 0.0
  %1105 = vmatpush1.msra.mxu0 0.0
  %1106 = vmatprep.subr.mxu0 0.0
  %1107 = vmatpush1.msra.mxu0 0.0
  %1108 = vmatprep.subr.mxu0 0.0
  %1109 = vmatpush1.msra.mxu0 0.0
  %1110 = vmatprep.subr.mxu0 0.0
  %1111 = vmatpush1.msra.mxu0 0.0
  %1112 = vmatprep.subr.mxu0 0.0
  %1113 = vmatpush1.msra.mxu0 0.0
  %1114 = vmatprep.subr.mxu0 0.0
  %1115 = vmatpush1.msra.mxu0 0.0
  %1116 = vmatprep.subr.mxu0 0.0
  %1117 = vmatpush1.msra.mxu0 0.0
  %1118 = vmatprep.subr.mxu0 0.0
  %1119 = vmatpush1.msra.mxu0 0.0
  %1120 = vmatprep.subr.mxu0 0.0
  %1121 = vmatpush1.msra.mxu0 0.0
  %1122 = vmatprep.subr.mxu0 0.0
  %1123 = vmatpush1.msra.mxu0 0.0
  %1124 = vmatprep.subr.mxu0 0.0
  %1125 = vmatpush1.msra.mxu0 0.0
  %1126 = vmatprep.subr.mxu0 0.0
  %1127 = vmatpush1.msra.mxu0 0.0
  %1128 = vmatprep.subr.mxu0 0.0
  %1129 = vmatpush1.msra.mxu0 0.0
  %1130 = vmatprep.subr.mxu0 0.0
  %1131 = vmatpush1.msra.mxu0 0.0
  %1132 = vmatprep.subr.mxu0 0.0
  %1133 = vmatpush1.msra.mxu0 0.0
  %1134 = vmatprep.subr.mxu0 0.0
  %1135 = vmatpush1.msra.mxu0 0.0
  %1136 = vmatprep.subr.mxu0 0.0
  %1137 = vmatpush1.msra.mxu0 0.0
  %1138 = vmatprep.subr.mxu0 0.0
  %1139 = vmatpush1.msra.mxu0 0.0
  %1140 = vmatprep.subr.mxu0 0.0
  %1141 = vmatpush1.msra.mxu0 0.0
  %1142 = vmatprep.subr.mxu0 0.0
  %1143 = vmatpush1.msra.mxu0 0.0
  %1144 = vmatprep.subr.mxu0 0.0
  %1145 = vmatpush1.msra.mxu0 0.0
  %1146 = vmatprep.subr.mxu0 0.0
  %1147 = vmatpush1.msra.mxu0 0.0
  %1148 = vmatprep.subr.mxu0 0.0
  %1149 = vmatpush1.msra.mxu0 0.0
  %1150 = vmatprep.subr.mxu0 0.0
  %1151 = vmatpush1.msra.mxu0 0.0
  %1152 = vmatprep.subr.mxu0 0.0
  %1153 = vmatpush1.msra.mxu0 0.0
  %1154 = vmatprep.subr.mxu0 0.0
  %1155 = vmatpush1.msra.mxu0 0.0
  %1156 = vmatprep.subr.mxu0 0.0
  %1157 = vmatpush1.msra.mxu0 0.0
  %1158 = vmatprep.subr.mxu0 0.0
  %1159 = vmatpush1.msra.mxu0 0.0
  %1160 = vmatprep.mubr.f32.mxu0 0.0
  %1161 = vmatmul.mubr.f32.gmra.mrb[0].mxu0 %v1083
  %v1162 = vpop.f32.mrb[0].mxu0
  %v1163 = vadd.f32 0.0, %v1162
  %v1164 = vpop.f32.mrb[0].mxu0
  %1165 = vmatprep.mubr.f32.mxu0 0.0
  %1166 = vmatmul.mubr.f32.gmra.mrb[0].mxu0 %v1086
  %v1167 = vpop.f32.mrb[0].mxu0
  %v1168 = vadd.f32 0.0, %v1167
  %v1169 = vpop.f32.mrb[0].mxu0
  %1170 = vmatprep.mubr.f32.mxu0 0.0
  %1171 = vmatmul.mubr.f32.gmra.mrb[0].mxu0 %v1089
  %v1172 = vpop.f32.mrb[0].mxu0
  %v1173 = vadd.f32 0.0, %v1172
  %v1174 = vpop.f32.mrb[0].mxu0
  %1175 = vmatprep.mubr.f32.mxu0 0.0
  %1176 = vmatmul.mubr.f32.gmra.mrb[0].mxu0 %v1092
  %v1177 = vpop.f32.mrb[0].mxu0
  %v1178 = vadd.f32 0.0, %v1177
  %v1179 = vpop.f32.mrb[0].mxu0
  %1180 = vdwg.mxu0
  %v1181 = vadd.f32 %v958, %v1163
  %v1182 = vadd.f32 %v959, %v1168
  %v1183 = vadd.f32 %v960, %v1173
  %v1184 = vadd.f32 %v961, %v1178
  %1185 = vset.pattern.permute.xlu0 5
  %1186 = vperm.xlu0 %1185, %v38
  %v1187 = vpop.permute.xlu0 %1186
  %v1189 = vmul.f32 %v1187, %v46
  %v1190 = vadd.f32 %v1189, %v53
  %v1191 = vsel %vm77, %v1081, 0
  %1193 = vmatprep.subr.mxu0 0.0
  %1194 = vmatpush1.msra.mxu0 %v39
  %1195 = vmatprep.subr.mxu0 0.0
  %1196 = vmatpush1.msra.mxu0 %v83
  %1197 = vmatprep.subr.mxu0 0.0
  %1198 = vmatpush1.msra.mxu0 0.0
  %1199 = vmatprep.subr.mxu0 0.0
  %1200 = vmatpush1.msra.mxu0 0.0
  %1201 = vmatprep.subr.mxu0 0.0
  %1202 = vmatpush1.msra.mxu0 0.0
  %1203 = vmatprep.subr.mxu0 0.0
  %1204 = vmatpush1.msra.mxu0 0.0
  %1205 = vmatprep.subr.mxu0 0.0
  %1206 = vmatpush1.msra.mxu0 0.0
  %1207 = vmatprep.subr.mxu0 0.0
  %1208 = vmatpush1.msra.mxu0 0.0
  %1209 = vmatprep.subr.mxu0 0.0
  %1210 = vmatpush1.msra.mxu0 0.0
  %1211 = vmatprep.subr.mxu0 0.0
  %1212 = vmatpush1.msra.mxu0 0.0
  %1213 = vmatprep.subr.mxu0 0.0
  %1214 = vmatpush1.msra.mxu0 0.0
  %1215 = vmatprep.subr.mxu0 0.0
  %1216 = vmatpush1.msra.mxu0 0.0
  %1217 = vmatprep.subr.mxu0 0.0
  %1218 = vmatpush1.msra.mxu0 0.0
  %1219 = vmatprep.subr.mxu0 0.0
  %1220 = vmatpush1.msra.mxu0 0.0
  %1221 = vmatprep.subr.mxu0 0.0
  %1222 = vmatpush1.msra.mxu0 0.0
  %1223 = vmatprep.subr.mxu0 0.0
  %1224 = vmatpush1.msra.mxu0 0.0
  %1225 = vmatprep.subr.mxu0 0.0
  %1226 = vmatpush1.msra.mxu0 0.0
  %1227 = vmatprep.subr.mxu0 0.0
  %1228 = vmatpush1.msra.mxu0 0.0
  %1229 = vmatprep.subr.mxu0 0.0
  %1230 = vmatpush1.msra.mxu0 0.0
  %1231 = vmatprep.subr.mxu0 0.0
  %1232 = vmatpush1.msra.mxu0 0.0
  %1233 = vmatprep.subr.mxu0 0.0
  %1234 = vmatpush1.msra.mxu0 0.0
  %1235 = vmatprep.subr.mxu0 0.0
  %1236 = vmatpush1.msra.mxu0 0.0
  %1237 = vmatprep.subr.mxu0 0.0
  %1238 = vmatpush1.msra.mxu0 0.0
  %1239 = vmatprep.subr.mxu0 0.0
  %1240 = vmatpush1.msra.mxu0 0.0
  %1241 = vmatprep.subr.mxu0 0.0
  %1242 = vmatpush1.msra.mxu0 0.0
  %1243 = vmatprep.subr.mxu0 0.0
  %1244 = vmatpush1.msra.mxu0 0.0
  %1245 = vmatprep.subr.mxu0 0.0
  %1246 = vmatpush1.msra.mxu0 0.0
  %1247 = vmatprep.subr.mxu0 0.0
  %1248 = vmatpush1.msra.mxu0 0.0
  %1249 = vmatprep.subr.mxu0 0.0
  %1250 = vmatpush1.msra.mxu0 0.0
  %1251 = vmatprep.subr.mxu0 0.0
  %1252 = vmatpush1.msra.mxu0 0.0
  %1253 = vmatprep.subr.mxu0 0.0
  %1254 = vmatpush1.msra.mxu0 0.0
  %1255 = vmatprep.subr.mxu0 0.0
  %1256 = vmatpush1.msra.mxu0 0.0
  %1257 = vmatprep.mubr.f32.mxu0 0.0
  %1258 = vmatmul.mubr.f32.gmra.mrb[0].mxu0 %v1191
  %v1259 = vpop.f32.mrb[0].mxu0
  %v1260 = vadd.f32 %v60, %v1259
  %v1261 = vpop.f32.mrb[0].mxu0
  %1262 = vdwg.mxu0
  %v1263 = vadd.f32 %v1190, %v1260
  %v1264 = vxor.u32 %v1263, 2147483648
  %v1265 = vmul.f32 %v1264, 1.442695
  %v1266 = vpow.pop %v1265
  %v1267 = vadd.f32 %v1266, 1.0
  %v1268 = vrcp.pop %v1267
  %v1269 = vmul.f32 1.0, %v1268
  %1271 = vrot.lane.b32.xlu0 %v1260, 108
  %v1272 = vpop.permute.xlu0 %1271
  %v1274 = vmul.f32 %v1269, %v1272
  %1276 = vrot.lane.b32.xlu0 %v1274, 20
  %v1277 = vpop.permute.xlu0 %1276
  %v1279 = vadd.f32 %v1190, %v1277
  %v1280 = vtanh.pop %v1279
  %v1281 = vsub.f32 1.0, %v1269
  %1283 = vrot.lane.b32.xlu0 %v1280, 118
  %v1284 = vpop.permute.xlu0 %1283
  %v1286 = vmul.f32 %v1281, %v1284
  %v1287 = vmul.f32 %v1269, %v1065
  %v1288 = vadd.f32 %v1286, %v1287
  %v1289 = vadd.s32 %v69, 5
  %vm1290 = vcmp.eq.s32.totalorder %v63, %v1289
  %vm1291 = vcmp.eq.s32.totalorder %v64, %v1289
  %vm1292 = vcmp.eq.s32.totalorder %v65, %v1289
  %vm1293 = vcmp.eq.s32.totalorder %v66, %v1289
  %v1294 = vsel %vm1290, 1, 0
  %v1295 = vsel %vm1291, 1, 0
  %v1296 = vsel %vm1292, 1, 0
  %v1297 = vsel %vm1293, 1, 0
  %v1298 = vcvt.s32.f32 %v1294
  %v1299 = vcvt.s32.f32 %v1295
  %v1300 = vcvt.s32.f32 %v1296
  %v1301 = vcvt.s32.f32 %v1297
  %1303 = vrot.lane.b32.xlu0 %v1288, 118
  %v1304 = vpop.permute.xlu0 %1303
  %v1306 = vsel %vm316, %v1298, 0
  %v1309 = vsel %vm316, %v1299, 0
  %v1312 = vsel %vm316, %v1300, 0
  %v1315 = vsel %vm316, %v1301, 0
  %v1317 = vsel %vm329, %v1304, 0
  %1319 = vmatprep.subr.mxu0 0.0
  %1320 = vmatpush1.msra.mxu0 %v1317
  %1321 = vmatprep.subr.mxu0 0.0
  %1322 = vmatpush1.msra.mxu0 0.0
  %1323 = vmatprep.subr.mxu0 0.0
  %1324 = vmatpush1.msra.mxu0 0.0
  %1325 = vmatprep.subr.mxu0 0.0
  %1326 = vmatpush1.msra.mxu0 0.0
  %1327 = vmatprep.subr.mxu0 0.0
  %1328 = vmatpush1.msra.mxu0 0.0
  %1329 = vmatprep.subr.mxu0 0.0
  %1330 = vmatpush1.msra.mxu0 0.0
  %1331 = vmatprep.subr.mxu0 0.0
  %1332 = vmatpush1.msra.mxu0 0.0
  %1333 = vmatprep.subr.mxu0 0.0
  %1334 = vmatpush1.msra.mxu0 0.0
  %1335 = vmatprep.subr.mxu0 0.0
  %1336 = vmatpush1.msra.mxu0 0.0
  %1337 = vmatprep.subr.mxu0 0.0
  %1338 = vmatpush1.msra.mxu0 0.0
  %1339 = vmatprep.subr.mxu0 0.0
  %1340 = vmatpush1.msra.mxu0 0.0
  %1341 = vmatprep.subr.mxu0 0.0
  %1342 = vmatpush1.msra.mxu0 0.0
  %1343 = vmatprep.subr.mxu0 0.0
  %1344 = vmatpush1.msra.mxu0 0.0
  %1345 = vmatprep.subr.mxu0 0.0
  %1346 = vmatpush1.msra.mxu0 0.0
  %1347 = vmatprep.subr.mxu0 0.0
  %1348 = vmatpush1.msra.mxu0 0.0
  %1349 = vmatprep.subr.mxu0 0.0
  %1350 = vmatpush1.msra.mxu0 0.0
  %1351 = vmatprep.subr.mxu0 0.0
  %1352 = vmatpush1.msra.mxu0 0.0
  %1353 = vmatprep.subr.mxu0 0.0
  %1354 = vmatpush1.msra.mxu0 0.0
  %1355 = vmatprep.subr.mxu0 0.0
  %1356 = vmatpush1.msra.mxu0 0.0
  %1357 = vmatprep.subr.mxu0 0.0
  %1358 = vmatpush1.msra.mxu0 0.0
  %1359 = vmatprep.subr.mxu0 0.0
  %1360 = vmatpush1.msra.mxu0 0.0
  %1361 = vmatprep.subr.mxu0 0.0
  %1362 = vmatpush1.msra.mxu0 0.0
  %1363 = vmatprep.subr.mxu0 0.0
  %1364 = vmatpush1.msra.mxu0 0.0
  %1365 = vmatprep.subr.mxu0 0.0
  %1366 = vmatpush1.msra.mxu0 0.0
  %1367 = vmatprep.subr.mxu0 0.0
  %1368 = vmatpush1.msra.mxu0 0.0
  %1369 = vmatprep.subr.mxu0 0.0
  %1370 = vmatpush1.msra.mxu0 0.0
  %1371 = vmatprep.subr.mxu0 0.0
  %1372 = vmatpush1.msra.mxu0 0.0
  %1373 = vmatprep.subr.mxu0 0.0
  %1374 = vmatpush1.msra.mxu0 0.0
  %1375 = vmatprep.subr.mxu0 0.0
  %1376 = vmatpush1.msra.mxu0 0.0
  %1377 = vmatprep.subr.mxu0 0.0
  %1378 = vmatpush1.msra.mxu0 0.0
  %1379 = vmatprep.subr.mxu0 0.0
  %1380 = vmatpush1.msra.mxu0 0.0
  %1381 = vmatprep.subr.mxu0 0.0
  %1382 = vmatpush1.msra.mxu0 0.0
  %1383 = vmatprep.mubr.f32.mxu0 0.0
  %1384 = vmatmul.mubr.f32.gmra.mrb[0].mxu0 %v1306
  %v1385 = vpop.f32.mrb[0].mxu0
  %v1386 = vadd.f32 0.0, %v1385
  %v1387 = vpop.f32.mrb[0].mxu0
  %1388 = vmatprep.mubr.f32.mxu0 0.0
  %1389 = vmatmul.mubr.f32.gmra.mrb[0].mxu0 %v1309
  %v1390 = vpop.f32.mrb[0].mxu0
  %v1391 = vadd.f32 0.0, %v1390
  %v1392 = vpop.f32.mrb[0].mxu0
  %1393 = vmatprep.mubr.f32.mxu0 0.0
  %1394 = vmatmul.mubr.f32.gmra.mrb[0].mxu0 %v1312
  %v1395 = vpop.f32.mrb[0].mxu0
  %v1396 = vadd.f32 0.0, %v1395
  %v1397 = vpop.f32.mrb[0].mxu0
  %1398 = vmatprep.mubr.f32.mxu0 0.0
  %1399 = vmatmul.mubr.f32.gmra.mrb[0].mxu0 %v1315
  %v1400 = vpop.f32.mrb[0].mxu0
  %v1401 = vadd.f32 0.0, %v1400
  %v1402 = vpop.f32.mrb[0].mxu0
  %1403 = vdwg.mxu0
  %v1404 = vadd.f32 %v1181, %v1386
  %v1405 = vadd.f32 %v1182, %v1391
  %v1406 = vadd.f32 %v1183, %v1396
  %v1407 = vadd.f32 %v1184, %v1401
  %1408 = vset.pattern.permute.xlu0 6
  %1409 = vperm.xlu0 %1408, %v38
  %v1410 = vpop.permute.xlu0 %1409
  %v1412 = vmul.f32 %v1410, %v46
  %v1413 = vadd.f32 %v1412, %v53
  %v1414 = vsel %vm77, %v1304, 0
  %1416 = vmatprep.subr.mxu0 0.0
  %1417 = vmatpush1.msra.mxu0 %v39
  %1418 = vmatprep.subr.mxu0 0.0
  %1419 = vmatpush1.msra.mxu0 %v83
  %1420 = vmatprep.subr.mxu0 0.0
  %1421 = vmatpush1.msra.mxu0 0.0
  %1422 = vmatprep.subr.mxu0 0.0
  %1423 = vmatpush1.msra.mxu0 0.0
  %1424 = vmatprep.subr.mxu0 0.0
  %1425 = vmatpush1.msra.mxu0 0.0
  %1426 = vmatprep.subr.mxu0 0.0
  %1427 = vmatpush1.msra.mxu0 0.0
  %1428 = vmatprep.subr.mxu0 0.0
  %1429 = vmatpush1.msra.mxu0 0.0
  %1430 = vmatprep.subr.mxu0 0.0
  %1431 = vmatpush1.msra.mxu0 0.0
  %1432 = vmatprep.subr.mxu0 0.0
  %1433 = vmatpush1.msra.mxu0 0.0
  %1434 = vmatprep.subr.mxu0 0.0
  %1435 = vmatpush1.msra.mxu0 0.0
  %1436 = vmatprep.subr.mxu0 0.0
  %1437 = vmatpush1.msra.mxu0 0.0
  %1438 = vmatprep.subr.mxu0 0.0
  %1439 = vmatpush1.msra.mxu0 0.0
  %1440 = vmatprep.subr.mxu0 0.0
  %1441 = vmatpush1.msra.mxu0 0.0
  %1442 = vmatprep.subr.mxu0 0.0
  %1443 = vmatpush1.msra.mxu0 0.0
  %1444 = vmatprep.subr.mxu0 0.0
  %1445 = vmatpush1.msra.mxu0 0.0
  %1446 = vmatprep.subr.mxu0 0.0
  %1447 = vmatpush1.msra.mxu0 0.0
  %1448 = vmatprep.subr.mxu0 0.0
  %1449 = vmatpush1.msra.mxu0 0.0
  %1450 = vmatprep.subr.mxu0 0.0
  %1451 = vmatpush1.msra.mxu0 0.0
  %1452 = vmatprep.subr.mxu0 0.0
  %1453 = vmatpush1.msra.mxu0 0.0
  %1454 = vmatprep.subr.mxu0 0.0
  %1455 = vmatpush1.msra.mxu0 0.0
  %1456 = vmatprep.subr.mxu0 0.0
  %1457 = vmatpush1.msra.mxu0 0.0
  %1458 = vmatprep.subr.mxu0 0.0
  %1459 = vmatpush1.msra.mxu0 0.0
  %1460 = vmatprep.subr.mxu0 0.0
  %1461 = vmatpush1.msra.mxu0 0.0
  %1462 = vmatprep.subr.mxu0 0.0
  %1463 = vmatpush1.msra.mxu0 0.0
  %1464 = vmatprep.subr.mxu0 0.0
  %1465 = vmatpush1.msra.mxu0 0.0
  %1466 = vmatprep.subr.mxu0 0.0
  %1467 = vmatpush1.msra.mxu0 0.0
  %1468 = vmatprep.subr.mxu0 0.0
  %1469 = vmatpush1.msra.mxu0 0.0
  %1470 = vmatprep.subr.mxu0 0.0
  %1471 = vmatpush1.msra.mxu0 0.0
  %1472 = vmatprep.subr.mxu0 0.0
  %1473 = vmatpush1.msra.mxu0 0.0
  %1474 = vmatprep.subr.mxu0 0.0
  %1475 = vmatpush1.msra.mxu0 0.0
  %1476 = vmatprep.subr.mxu0 0.0
  %1477 = vmatpush1.msra.mxu0 0.0
  %1478 = vmatprep.subr.mxu0 0.0
  %1479 = vmatpush1.msra.mxu0 0.0
  %1480 = vmatprep.mubr.f32.mxu0 0.0
  %1481 = vmatmul.mubr.f32.gmra.mrb[0].mxu0 %v1414
  %v1482 = vpop.f32.mrb[0].mxu0
  %v1483 = vadd.f32 %v60, %v1482
  %v1484 = vpop.f32.mrb[0].mxu0
  %1485 = vdwg.mxu0
  %v1486 = vadd.f32 %v1413, %v1483
  %v1487 = vxor.u32 %v1486, 2147483648
  %v1488 = vmul.f32 %v1487, 1.442695
  %v1489 = vpow.pop %v1488
  %v1490 = vadd.f32 %v1489, 1.0
  %v1491 = vrcp.pop %v1490
  %v1492 = vmul.f32 1.0, %v1491
  %1494 = vrot.lane.b32.xlu0 %v1483, 108
  %v1495 = vpop.permute.xlu0 %1494
  %v1497 = vmul.f32 %v1492, %v1495
  %1499 = vrot.lane.b32.xlu0 %v1497, 20
  %v1500 = vpop.permute.xlu0 %1499
  %v1502 = vadd.f32 %v1413, %v1500
  %v1503 = vtanh.pop %v1502
  %v1504 = vsub.f32 1.0, %v1492
  %1506 = vrot.lane.b32.xlu0 %v1503, 118
  %v1507 = vpop.permute.xlu0 %1506
  %v1509 = vmul.f32 %v1504, %v1507
  %v1510 = vmul.f32 %v1492, %v1288
  %v1511 = vadd.f32 %v1509, %v1510
  %v1512 = vadd.s32 %v69, 6
  %vm1513 = vcmp.eq.s32.totalorder %v63, %v1512
  %vm1514 = vcmp.eq.s32.totalorder %v64, %v1512
  %vm1515 = vcmp.eq.s32.totalorder %v65, %v1512
  %vm1516 = vcmp.eq.s32.totalorder %v66, %v1512
  %v1517 = vsel %vm1513, 1, 0
  %v1518 = vsel %vm1514, 1, 0
  %v1519 = vsel %vm1515, 1, 0
  %v1520 = vsel %vm1516, 1, 0
  %v1521 = vcvt.s32.f32 %v1517
  %v1522 = vcvt.s32.f32 %v1518
  %v1523 = vcvt.s32.f32 %v1519
  %v1524 = vcvt.s32.f32 %v1520
  %1526 = vrot.lane.b32.xlu0 %v1511, 118
  %v1527 = vpop.permute.xlu0 %1526
  %v1529 = vsel %vm316, %v1521, 0
  %v1532 = vsel %vm316, %v1522, 0
  %v1535 = vsel %vm316, %v1523, 0
  %v1538 = vsel %vm316, %v1524, 0
  %v1540 = vsel %vm329, %v1527, 0
  %1542 = vmatprep.subr.mxu0 0.0
  %1543 = vmatpush1.msra.mxu0 %v1540
  %1544 = vmatprep.subr.mxu0 0.0
  %1545 = vmatpush1.msra.mxu0 0.0
  %1546 = vmatprep.subr.mxu0 0.0
  %1547 = vmatpush1.msra.mxu0 0.0
  %1548 = vmatprep.subr.mxu0 0.0
  %1549 = vmatpush1.msra.mxu0 0.0
  %1550 = vmatprep.subr.mxu0 0.0
  %1551 = vmatpush1.msra.mxu0 0.0
  %1552 = vmatprep.subr.mxu0 0.0
  %1553 = vmatpush1.msra.mxu0 0.0
  %1554 = vmatprep.subr.mxu0 0.0
  %1555 = vmatpush1.msra.mxu0 0.0
  %1556 = vmatprep.subr.mxu0 0.0
  %1557 = vmatpush1.msra.mxu0 0.0
  %1558 = vmatprep.subr.mxu0 0.0
  %1559 = vmatpush1.msra.mxu0 0.0
  %1560 = vmatprep.subr.mxu0 0.0
  %1561 = vmatpush1.msra.mxu0 0.0
  %1562 = vmatprep.subr.mxu0 0.0
  %1563 = vmatpush1.msra.mxu0 0.0
  %1564 = vmatprep.subr.mxu0 0.0
  %1565 = vmatpush1.msra.mxu0 0.0
  %1566 = vmatprep.subr.mxu0 0.0
  %1567 = vmatpush1.msra.mxu0 0.0
  %1568 = vmatprep.subr.mxu0 0.0
  %1569 = vmatpush1.msra.mxu0 0.0
  %1570 = vmatprep.subr.mxu0 0.0
  %1571 = vmatpush1.msra.mxu0 0.0
  %1572 = vmatprep.subr.mxu0 0.0
  %1573 = vmatpush1.msra.mxu0 0.0
  %1574 = vmatprep.subr.mxu0 0.0
  %1575 = vmatpush1.msra.mxu0 0.0
  %1576 = vmatprep.subr.mxu0 0.0
  %1577 = vmatpush1.msra.mxu0 0.0
  %1578 = vmatprep.subr.mxu0 0.0
  %1579 = vmatpush1.msra.mxu0 0.0
  %1580 = vmatprep.subr.mxu0 0.0
  %1581 = vmatpush1.msra.mxu0 0.0
  %1582 = vmatprep.subr.mxu0 0.0
  %1583 = vmatpush1.msra.mxu0 0.0
  %1584 = vmatprep.subr.mxu0 0.0
  %1585 = vmatpush1.msra.mxu0 0.0
  %1586 = vmatprep.subr.mxu0 0.0
  %1587 = vmatpush1.msra.mxu0 0.0
  %1588 = vmatprep.subr.mxu0 0.0
  %1589 = vmatpush1.msra.mxu0 0.0
  %1590 = vmatprep.subr.mxu0 0.0
  %1591 = vmatpush1.msra.mxu0 0.0
  %1592 = vmatprep.subr.mxu0 0.0
  %1593 = vmatpush1.msra.mxu0 0.0
  %1594 = vmatprep.subr.mxu0 0.0
  %1595 = vmatpush1.msra.mxu0 0.0
  %1596 = vmatprep.subr.mxu0 0.0
  %1597 = vmatpush1.msra.mxu0 0.0
  %1598 = vmatprep.subr.mxu0 0.0
  %1599 = vmatpush1.msra.mxu0 0.0
  %1600 = vmatprep.subr.mxu0 0.0
  %1601 = vmatpush1.msra.mxu0 0.0
  %1602 = vmatprep.subr.mxu0 0.0
  %1603 = vmatpush1.msra.mxu0 0.0
  %1604 = vmatprep.subr.mxu0 0.0
  %1605 = vmatpush1.msra.mxu0 0.0
  %1606 = vmatprep.mubr.f32.mxu0 0.0
  %1607 = vmatmul.mubr.f32.gmra.mrb[0].mxu0 %v1529
  %v1608 = vpop.f32.mrb[0].mxu0
  %v1609 = vadd.f32 0.0, %v1608
  %v1610 = vpop.f32.mrb[0].mxu0
  %1611 = vmatprep.mubr.f32.mxu0 0.0
  %1612 = vmatmul.mubr.f32.gmra.mrb[0].mxu0 %v1532
  %v1613 = vpop.f32.mrb[0].mxu0
  %v1614 = vadd.f32 0.0, %v1613
  %v1615 = vpop.f32.mrb[0].mxu0
  %1616 = vmatprep.mubr.f32.mxu0 0.0
  %1617 = vmatmul.mubr.f32.gmra.mrb[0].mxu0 %v1535
  %v1618 = vpop.f32.mrb[0].mxu0
  %v1619 = vadd.f32 0.0, %v1618
  %v1620 = vpop.f32.mrb[0].mxu0
  %1621 = vmatprep.mubr.f32.mxu0 0.0
  %1622 = vmatmul.mubr.f32.gmra.mrb[0].mxu0 %v1538
  %v1623 = vpop.f32.mrb[0].mxu0
  %v1624 = vadd.f32 0.0, %v1623
  %v1625 = vpop.f32.mrb[0].mxu0
  %1626 = vdwg.mxu0
  %v1627 = vadd.f32 %v1404, %v1609
  %v1628 = vadd.f32 %v1405, %v1614
  %v1629 = vadd.f32 %v1406, %v1619
  %v1630 = vadd.f32 %v1407, %v1624
  %1631 = vset.pattern.permute.xlu0 7
  %1632 = vperm.xlu0 %1631, %v38
  %v1633 = vpop.permute.xlu0 %1632
  %v1635 = vmul.f32 %v1633, %v46
  %v1636 = vadd.f32 %v1635, %v53
  %v1637 = vsel %vm77, %v1527, 0
  %1639 = vmatprep.subr.mxu0 0.0
  %1640 = vmatpush1.msra.mxu0 %v39
  %1641 = vmatprep.subr.mxu0 0.0
  %1642 = vmatpush1.msra.mxu0 %v83
  %1643 = vmatprep.subr.mxu0 0.0
  %1644 = vmatpush1.msra.mxu0 0.0
  %1645 = vmatprep.subr.mxu0 0.0
  %1646 = vmatpush1.msra.mxu0 0.0
  %1647 = vmatprep.subr.mxu0 0.0
  %1648 = vmatpush1.msra.mxu0 0.0
  %1649 = vmatprep.subr.mxu0 0.0
  %1650 = vmatpush1.msra.mxu0 0.0
  %1651 = vmatprep.subr.mxu0 0.0
  %1652 = vmatpush1.msra.mxu0 0.0
  %1653 = vmatprep.subr.mxu0 0.0
  %1654 = vmatpush1.msra.mxu0 0.0
  %1655 = vmatprep.subr.mxu0 0.0
  %1656 = vmatpush1.msra.mxu0 0.0
  %1657 = vmatprep.subr.mxu0 0.0
  %1658 = vmatpush1.msra.mxu0 0.0
  %1659 = vmatprep.subr.mxu0 0.0
  %1660 = vmatpush1.msra.mxu0 0.0
  %1661 = vmatprep.subr.mxu0 0.0
  %1662 = vmatpush1.msra.mxu0 0.0
  %1663 = vmatprep.subr.mxu0 0.0
  %1664 = vmatpush1.msra.mxu0 0.0
  %1665 = vmatprep.subr.mxu0 0.0
  %1666 = vmatpush1.msra.mxu0 0.0
  %1667 = vmatprep.subr.mxu0 0.0
  %1668 = vmatpush1.msra.mxu0 0.0
  %1669 = vmatprep.subr.mxu0 0.0
  %1670 = vmatpush1.msra.mxu0 0.0
  %1671 = vmatprep.subr.mxu0 0.0
  %1672 = vmatpush1.msra.mxu0 0.0
  %1673 = vmatprep.subr.mxu0 0.0
  %1674 = vmatpush1.msra.mxu0 0.0
  %1675 = vmatprep.subr.mxu0 0.0
  %1676 = vmatpush1.msra.mxu0 0.0
  %1677 = vmatprep.subr.mxu0 0.0
  %1678 = vmatpush1.msra.mxu0 0.0
  %1679 = vmatprep.subr.mxu0 0.0
  %1680 = vmatpush1.msra.mxu0 0.0
  %1681 = vmatprep.subr.mxu0 0.0
  %1682 = vmatpush1.msra.mxu0 0.0
  %1683 = vmatprep.subr.mxu0 0.0
  %1684 = vmatpush1.msra.mxu0 0.0
  %1685 = vmatprep.subr.mxu0 0.0
  %1686 = vmatpush1.msra.mxu0 0.0
  %1687 = vmatprep.subr.mxu0 0.0
  %1688 = vmatpush1.msra.mxu0 0.0
  %1689 = vmatprep.subr.mxu0 0.0
  %1690 = vmatpush1.msra.mxu0 0.0
  %1691 = vmatprep.subr.mxu0 0.0
  %1692 = vmatpush1.msra.mxu0 0.0
  %1693 = vmatprep.subr.mxu0 0.0
  %1694 = vmatpush1.msra.mxu0 0.0
  %1695 = vmatprep.subr.mxu0 0.0
  %1696 = vmatpush1.msra.mxu0 0.0
  %1697 = vmatprep.subr.mxu0 0.0
  %1698 = vmatpush1.msra.mxu0 0.0
  %1699 = vmatprep.subr.mxu0 0.0
  %1700 = vmatpush1.msra.mxu0 0.0
  %1701 = vmatprep.subr.mxu0 0.0
  %1702 = vmatpush1.msra.mxu0 0.0
  %1703 = vmatprep.mubr.f32.mxu0 0.0
  %1704 = vmatmul.mubr.f32.gmra.mrb[0].mxu0 %v1637
  %v1705 = vpop.f32.mrb[0].mxu0
  %v1706 = vadd.f32 %v60, %v1705
  %v1707 = vpop.f32.mrb[0].mxu0
  %1708 = vdwg.mxu0
  %v1709 = vadd.f32 %v1636, %v1706
  %v1710 = vxor.u32 %v1709, 2147483648
  %v1711 = vmul.f32 %v1710, 1.442695
  %v1712 = vpow.pop %v1711
  %v1713 = vadd.f32 %v1712, 1.0
  %v1714 = vrcp.pop %v1713
  %v1715 = vmul.f32 1.0, %v1714
  %1717 = vrot.lane.b32.xlu0 %v1706, 108
  %v1718 = vpop.permute.xlu0 %1717
  %v1720 = vmul.f32 %v1715, %v1718
  %1722 = vrot.lane.b32.xlu0 %v1720, 20
  %v1723 = vpop.permute.xlu0 %1722
  %v1725 = vadd.f32 %v1636, %v1723
  %v1726 = vtanh.pop %v1725
  %v1727 = vsub.f32 1.0, %v1715
  %1729 = vrot.lane.b32.xlu0 %v1726, 118
  %v1730 = vpop.permute.xlu0 %1729
  %v1732 = vmul.f32 %v1727, %v1730
  %v1733 = vmul.f32 %v1715, %v1511
  %v1734 = vadd.f32 %v1732, %v1733
  %v1735 = vadd.s32 %v69, 7
  %vm1736 = vcmp.eq.s32.totalorder %v63, %v1735
  %vm1737 = vcmp.eq.s32.totalorder %v64, %v1735
  %vm1738 = vcmp.eq.s32.totalorder %v65, %v1735
  %vm1739 = vcmp.eq.s32.totalorder %v66, %v1735
  %v1740 = vsel %vm1736, 1, 0
  %v1741 = vsel %vm1737, 1, 0
  %v1742 = vsel %vm1738, 1, 0
  %v1743 = vsel %vm1739, 1, 0
  %v1744 = vcvt.s32.f32 %v1740
  %v1745 = vcvt.s32.f32 %v1741
  %v1746 = vcvt.s32.f32 %v1742
  %v1747 = vcvt.s32.f32 %v1743
  %1749 = vrot.lane.b32.xlu0 %v1734, 118
  %v1750 = vpop.permute.xlu0 %1749
  %v1752 = vsel %vm316, %v1744, 0
  %v1755 = vsel %vm316, %v1745, 0
  %v1758 = vsel %vm316, %v1746, 0
  %v1761 = vsel %vm316, %v1747, 0
  %v1763 = vsel %vm329, %v1750, 0
  %1765 = vmatprep.subr.mxu0 0.0
  %1766 = vmatpush1.msra.mxu0 %v1763
  %1767 = vmatprep.subr.mxu0 0.0
  %1768 = vmatpush1.msra.mxu0 0.0
  %1769 = vmatprep.subr.mxu0 0.0
  %1770 = vmatpush1.msra.mxu0 0.0
  %1771 = vmatprep.subr.mxu0 0.0
  %1772 = vmatpush1.msra.mxu0 0.0
  %1773 = vmatprep.subr.mxu0 0.0
  %1774 = vmatpush1.msra.mxu0 0.0
  %1775 = vmatprep.subr.mxu0 0.0
  %1776 = vmatpush1.msra.mxu0 0.0
  %1777 = vmatprep.subr.mxu0 0.0
  %1778 = vmatpush1.msra.mxu0 0.0
  %1779 = vmatprep.subr.mxu0 0.0
  %1780 = vmatpush1.msra.mxu0 0.0
  %1781 = vmatprep.subr.mxu0 0.0
  %1782 = vmatpush1.msra.mxu0 0.0
  %1783 = vmatprep.subr.mxu0 0.0
  %1784 = vmatpush1.msra.mxu0 0.0
  %1785 = vmatprep.subr.mxu0 0.0
  %1786 = vmatpush1.msra.mxu0 0.0
  %1787 = vmatprep.subr.mxu0 0.0
  %1788 = vmatpush1.msra.mxu0 0.0
  %1789 = vmatprep.subr.mxu0 0.0
  %1790 = vmatpush1.msra.mxu0 0.0
  %1791 = vmatprep.subr.mxu0 0.0
  %1792 = vmatpush1.msra.mxu0 0.0
  %1793 = vmatprep.subr.mxu0 0.0
  %1794 = vmatpush1.msra.mxu0 0.0
  %1795 = vmatprep.subr.mxu0 0.0
  %1796 = vmatpush1.msra.mxu0 0.0
  %1797 = vmatprep.subr.mxu0 0.0
  %1798 = vmatpush1.msra.mxu0 0.0
  %1799 = vmatprep.subr.mxu0 0.0
  %1800 = vmatpush1.msra.mxu0 0.0
  %1801 = vmatprep.subr.mxu0 0.0
  %1802 = vmatpush1.msra.mxu0 0.0
  %1803 = vmatprep.subr.mxu0 0.0
  %1804 = vmatpush1.msra.mxu0 0.0
  %1805 = vmatprep.subr.mxu0 0.0
  %1806 = vmatpush1.msra.mxu0 0.0
  %1807 = vmatprep.subr.mxu0 0.0
  %1808 = vmatpush1.msra.mxu0 0.0
  %1809 = vmatprep.subr.mxu0 0.0
  %1810 = vmatpush1.msra.mxu0 0.0
  %1811 = vmatprep.subr.mxu0 0.0
  %1812 = vmatpush1.msra.mxu0 0.0
  %1813 = vmatprep.subr.mxu0 0.0
  %1814 = vmatpush1.msra.mxu0 0.0
  %1815 = vmatprep.subr.mxu0 0.0
  %1816 = vmatpush1.msra.mxu0 0.0
  %1817 = vmatprep.subr.mxu0 0.0
  %1818 = vmatpush1.msra.mxu0 0.0
  %1819 = vmatprep.subr.mxu0 0.0
  %1820 = vmatpush1.msra.mxu0 0.0
  %1821 = vmatprep.subr.mxu0 0.0
  %1822 = vmatpush1.msra.mxu0 0.0
  %1823 = vmatprep.subr.mxu0 0.0
  %1824 = vmatpush1.msra.mxu0 0.0
  %1825 = vmatprep.subr.mxu0 0.0
  %1826 = vmatpush1.msra.mxu0 0.0
  %1827 = vmatprep.subr.mxu0 0.0
  %1828 = vmatpush1.msra.mxu0 0.0
  %1829 = vmatprep.mubr.f32.mxu0 0.0
  %1830 = vmatmul.mubr.f32.gmra.mrb[0].mxu0 %v1752
  %v1831 = vpop.f32.mrb[0].mxu0
  %v1832 = vadd.f32 0.0, %v1831
  %v1833 = vpop.f32.mrb[0].mxu0
  %1834 = vmatprep.mubr.f32.mxu0 0.0
  %1835 = vmatmul.mubr.f32.gmra.mrb[0].mxu0 %v1755
  %v1836 = vpop.f32.mrb[0].mxu0
  %v1837 = vadd.f32 0.0, %v1836
  %v1838 = vpop.f32.mrb[0].mxu0
  %1839 = vmatprep.mubr.f32.mxu0 0.0
  %1840 = vmatmul.mubr.f32.gmra.mrb[0].mxu0 %v1758
  %v1841 = vpop.f32.mrb[0].mxu0
  %v1842 = vadd.f32 0.0, %v1841
  %v1843 = vpop.f32.mrb[0].mxu0
  %1844 = vmatprep.mubr.f32.mxu0 0.0
  %1845 = vmatmul.mubr.f32.gmra.mrb[0].mxu0 %v1761
  %v1846 = vpop.f32.mrb[0].mxu0
  %v1847 = vadd.f32 0.0, %v1846
  %v1848 = vpop.f32.mrb[0].mxu0
  %1849 = vdwg.mxu0
  %v1850 = vadd.f32 %v1627, %v1832
  %v1851 = vadd.f32 %v1628, %v1837
  %v1852 = vadd.f32 %v1629, %v1842
  %v1853 = vadd.f32 %v1630, %v1847
  %1858 = vrot.lane.b32.xlu0 %v1853, 10
  %v1859 = vpop.permute.xlu0 %1858
  %1860 = vrot.lane.b32.xlu0 %v1852, 10
  %v1861 = vpop.permute.xlu0 %1860
  %1862 = vrot.lane.b32.xlu0 %v1851, 10
  %v1863 = vpop.permute.xlu0 %1862
  %1864 = vrot.lane.b32.xlu0 %v1850, 10
  %v1865 = vpop.permute.xlu0 %1864
  %v1870 = vsel %vm77, %v1850, %v1859
  %v1871 = vsel %vm77, %v1851, %v1861
  %v1872 = vsel %vm77, %v1852, %v1863
  %v1873 = vsel %vm77, %v1853, %v1865
  %v1874 = vld [vmem:[%s5] sm:$0xff]
  %v1875 = vld [vmem:[%s5 + $0x8] sm:$0xff]
  %v1876 = vld [vmem:[%s5 + $0x10] sm:$0xf]
  %v1877 = vld [vmem:[%s7] sm:$0x1]
  %v1879 = vlaneseq
  %v1880 = vshrl.u32 %v1879, 7
  %v1881 = vsub.s32 0, %v1880
  %v1882 = vrot.slane %v1877, %v1881
  %vm1884 = vcmask 162816
  %v1886 = vsel %vm1884, %v1870, 0
  %v1889 = vsel %vm1884, %v1871, 0
  %v1892 = vsel %vm1884, %v1872, 0
  %v1895 = vsel %vm1884, %v1873, 0
  %v1898 = vsel %vm329, %v1876, 0
  %1900 = vmatprep.subr.mxu0 0.0
  %1901 = vmatpush1.msra.mxu0 %v1874
  %1902 = vmatprep.subr.mxu0 0.0
  %1903 = vmatpush1.msra.mxu0 %v1875
  %1904 = vmatprep.subr.mxu0 0.0
  %1905 = vmatpush1.msra.mxu0 %v1898
  %1906 = vmatprep.subr.mxu0 0.0
  %1907 = vmatpush1.msra.mxu0 0.0
  %1908 = vmatprep.subr.mxu0 0.0
  %1909 = vmatpush1.msra.mxu0 0.0
  %1910 = vmatprep.subr.mxu0 0.0
  %1911 = vmatpush1.msra.mxu0 0.0
  %1912 = vmatprep.subr.mxu0 0.0
  %1913 = vmatpush1.msra.mxu0 0.0
  %1914 = vmatprep.subr.mxu0 0.0
  %1915 = vmatpush1.msra.mxu0 0.0
  %1916 = vmatprep.subr.mxu0 0.0
  %1917 = vmatpush1.msra.mxu0 0.0
  %1918 = vmatprep.subr.mxu0 0.0
  %1919 = vmatpush1.msra.mxu0 0.0
  %1920 = vmatprep.subr.mxu0 0.0
  %1921 = vmatpush1.msra.mxu0 0.0
  %1922 = vmatprep.subr.mxu0 0.0
  %1923 = vmatpush1.msra.mxu0 0.0
  %1924 = vmatprep.subr.mxu0 0.0
  %1925 = vmatpush1.msra.mxu0 0.0
  %1926 = vmatprep.subr.mxu0 0.0
  %1927 = vmatpush1.msra.mxu0 0.0
  %1928 = vmatprep.subr.mxu0 0.0
  %1929 = vmatpush1.msra.mxu0 0.0
  %1930 = vmatprep.subr.mxu0 0.0
  %1931 = vmatpush1.msra.mxu0 0.0
  %1932 = vmatprep.subr.mxu0 0.0
  %1933 = vmatpush1.msra.mxu0 0.0
  %1934 = vmatprep.subr.mxu0 0.0
  %1935 = vmatpush1.msra.mxu0 0.0
  %1936 = vmatprep.subr.mxu0 0.0
  %1937 = vmatpush1.msra.mxu0 0.0
  %1938 = vmatprep.subr.mxu0 0.0
  %1939 = vmatpush1.msra.mxu0 0.0
  %1940 = vmatprep.subr.mxu0 0.0
  %1941 = vmatpush1.msra.mxu0 0.0
  %1942 = vmatprep.subr.mxu0 0.0
  %1943 = vmatpush1.msra.mxu0 0.0
  %1944 = vmatprep.subr.mxu0 0.0
  %1945 = vmatpush1.msra.mxu0 0.0
  %1946 = vmatprep.subr.mxu0 0.0
  %1947 = vmatpush1.msra.mxu0 0.0
  %1948 = vmatprep.subr.mxu0 0.0
  %1949 = vmatpush1.msra.mxu0 0.0
  %1950 = vmatprep.subr.mxu0 0.0
  %1951 = vmatpush1.msra.mxu0 0.0
  %1952 = vmatprep.subr.mxu0 0.0
  %1953 = vmatpush1.msra.mxu0 0.0
  %1954 = vmatprep.subr.mxu0 0.0
  %1955 = vmatpush1.msra.mxu0 0.0
  %1956 = vmatprep.subr.mxu0 0.0
  %1957 = vmatpush1.msra.mxu0 0.0
  %1958 = vmatprep.subr.mxu0 0.0
  %1959 = vmatpush1.msra.mxu0 0.0
  %1960 = vmatprep.subr.mxu0 0.0
  %1961 = vmatpush1.msra.mxu0 0.0
  %1962 = vmatprep.subr.mxu0 0.0
  %1963 = vmatpush1.msra.mxu0 0.0
  %1964 = vmatprep.mubr.f32.mxu0 0.0
  %1965 = vmatmul.mubr.f32.gmra.mrb[0].mxu0 %v1886
  %v1966 = vpop.f32.mrb[0].mxu0
  %v1967 = vadd.f32 %v1882, %v1966
  %v1968 = vpop.f32.mrb[0].mxu0
  %1969 = vmatprep.mubr.f32.mxu0 0.0
  %1970 = vmatmul.mubr.f32.gmra.mrb[0].mxu0 %v1889
  %v1971 = vpop.f32.mrb[0].mxu0
  %v1972 = vadd.f32 %v1882, %v1971
  %v1973 = vpop.f32.mrb[0].mxu0
  %1974 = vmatprep.mubr.f32.mxu0 0.0
  %1975 = vmatmul.mubr.f32.gmra.mrb[0].mxu0 %v1892
  %v1976 = vpop.f32.mrb[0].mxu0
  %v1977 = vadd.f32 %v1882, %v1976
  %v1978 = vpop.f32.mrb[0].mxu0
  %1979 = vmatprep.mubr.f32.mxu0 0.0
  %1980 = vmatmul.mubr.f32.gmra.mrb[0].mxu0 %v1895
  %v1981 = vpop.f32.mrb[0].mxu0
  %v1982 = vadd.f32 %v1882, %v1981
  %v1983 = vpop.f32.mrb[0].mxu0
  %1984 = vdwg.mxu0
  %v1985 = vld [vmem:[%s6] sm:$0xff]
  %v1986 = vld [vmem:[%s6 + $0x8] sm:$0x3]
  %v1987 = vld [vmem:[%s8] sm:$0x1]
  %v1989 = vlaneseq
  %v1990 = vshrl.u32 %v1989, 7
  %v1991 = vsub.s32 0, %v1990
  %v1992 = vrot.slane %v1987, %v1991
  %v1995 = vsel %vm81, %v1986, 0
  %1997 = vmatprep.subr.mxu0 0.0
  %1998 = vmatpush1.msra.mxu0 %v1985
  %1999 = vmatprep.subr.mxu0 0.0
  %2000 = vmatpush1.msra.mxu0 %v1995
  %2001 = vmatprep.subr.mxu0 0.0
  %2002 = vmatpush1.msra.mxu0 0.0
  %2003 = vmatprep.subr.mxu0 0.0
  %2004 = vmatpush1.msra.mxu0 0.0
  %2005 = vmatprep.subr.mxu0 0.0
  %2006 = vmatpush1.msra.mxu0 0.0
  %2007 = vmatprep.subr.mxu0 0.0
  %2008 = vmatpush1.msra.mxu0 0.0
  %2009 = vmatprep.subr.mxu0 0.0
  %2010 = vmatpush1.msra.mxu0 0.0
  %2011 = vmatprep.subr.mxu0 0.0
  %2012 = vmatpush1.msra.mxu0 0.0
  %2013 = vmatprep.subr.mxu0 0.0
  %2014 = vmatpush1.msra.mxu0 0.0
  %2015 = vmatprep.subr.mxu0 0.0
  %2016 = vmatpush1.msra.mxu0 0.0
  %2017 = vmatprep.subr.mxu0 0.0
  %2018 = vmatpush1.msra.mxu0 0.0
  %2019 = vmatprep.subr.mxu0 0.0
  %2020 = vmatpush1.msra.mxu0 0.0
  %2021 = vmatprep.subr.mxu0 0.0
  %2022 = vmatpush1.msra.mxu0 0.0
  %2023 = vmatprep.subr.mxu0 0.0
  %2024 = vmatpush1.msra.mxu0 0.0
  %2025 = vmatprep.subr.mxu0 0.0
  %2026 = vmatpush1.msra.mxu0 0.0
  %2027 = vmatprep.subr.mxu0 0.0
  %2028 = vmatpush1.msra.mxu0 0.0
  %2029 = vmatprep.subr.mxu0 0.0
  %2030 = vmatpush1.msra.mxu0 0.0
  %2031 = vmatprep.subr.mxu0 0.0
  %2032 = vmatpush1.msra.mxu0 0.0
  %2033 = vmatprep.subr.mxu0 0.0
  %2034 = vmatpush1.msra.mxu0 0.0
  %2035 = vmatprep.subr.mxu0 0.0
  %2036 = vmatpush1.msra.mxu0 0.0
  %2037 = vmatprep.subr.mxu0 0.0
  %2038 = vmatpush1.msra.mxu0 0.0
  %2039 = vmatprep.subr.mxu0 0.0
  %2040 = vmatpush1.msra.mxu0 0.0
  %2041 = vmatprep.subr.mxu0 0.0
  %2042 = vmatpush1.msra.mxu0 0.0
  %2043 = vmatprep.subr.mxu0 0.0
  %2044 = vmatpush1.msra.mxu0 0.0
  %2045 = vmatprep.subr.mxu0 0.0
  %2046 = vmatpush1.msra.mxu0 0.0
  %2047 = vmatprep.subr.mxu0 0.0
  %2048 = vmatpush1.msra.mxu0 0.0
  %2049 = vmatprep.subr.mxu0 0.0
  %2050 = vmatpush1.msra.mxu0 0.0
  %2051 = vmatprep.subr.mxu0 0.0
  %2052 = vmatpush1.msra.mxu0 0.0
  %2053 = vmatprep.subr.mxu0 0.0
  %2054 = vmatpush1.msra.mxu0 0.0
  %2055 = vmatprep.subr.mxu0 0.0
  %2056 = vmatpush1.msra.mxu0 0.0
  %2057 = vmatprep.subr.mxu0 0.0
  %2058 = vmatpush1.msra.mxu0 0.0
  %2059 = vmatprep.subr.mxu0 0.0
  %2060 = vmatpush1.msra.mxu0 0.0
  %2061 = vmatprep.mubr.f32.mxu0 0.0
  %2062 = vmatmul.mubr.f32.gmra.mrb[0].mxu0 %v79
  %v2063 = vpop.f32.mrb[0].mxu0
  %v2064 = vadd.f32 %v1992, %v2063
  %v2065 = vpop.f32.mrb[0].mxu0
  %2066 = vdwg.mxu0
  %v2067 = vadd.f32 %v1967, %v2064
  %v2068 = vxor.u32 %v2067, 2147483648
  %v2069 = vmul.f32 %v2068, 1.442695
  %v2070 = vpow.pop %v2069
  %v2071 = vadd.f32 %v2070, 1.0
  %v2072 = vrcp.pop %v2071
  %v2073 = vmul.f32 1.0, %v2072
  %2075 = vrot.lane.b32.xlu0 %v2064, 108
  %v2076 = vpop.permute.xlu0 %2075
  %v2078 = vmul.f32 %v2073, %v2076
  %2080 = vrot.lane.b32.xlu0 %v2078, 20
  %v2081 = vpop.permute.xlu0 %2080
  %v2083 = vadd.f32 %v1967, %v2081
  %v2084 = vtanh.pop %v2083
  %v2085 = vsub.f32 1.0, %v2073
  %2087 = vrot.lane.b32.xlu0 %v2084, 118
  %v2088 = vpop.permute.xlu0 %2087
  %v2090 = vmul.f32 %v2085, %v2088
  %v2091 = vmul.f32 %v2073, 0.0
  %v2092 = vadd.f32 %v2090, %v2091
  %2094 = vrot.lane.b32.xlu0 %v2092, 118
  %v2095 = vpop.permute.xlu0 %2094
  %v2096 = vsel %vm77, %v2095, 0
  %2098 = vmatprep.subr.mxu0 0.0
  %2099 = vmatpush1.msra.mxu0 %v1985
  %2100 = vmatprep.subr.mxu0 0.0
  %2101 = vmatpush1.msra.mxu0 %v1995
  %2102 = vmatprep.subr.mxu0 0.0
  %2103 = vmatpush1.msra.mxu0 0.0
  %2104 = vmatprep.subr.mxu0 0.0
  %2105 = vmatpush1.msra.mxu0 0.0
  %2106 = vmatprep.subr.mxu0 0.0
  %2107 = vmatpush1.msra.mxu0 0.0
  %2108 = vmatprep.subr.mxu0 0.0
  %2109 = vmatpush1.msra.mxu0 0.0
  %2110 = vmatprep.subr.mxu0 0.0
  %2111 = vmatpush1.msra.mxu0 0.0
  %2112 = vmatprep.subr.mxu0 0.0
  %2113 = vmatpush1.msra.mxu0 0.0
  %2114 = vmatprep.subr.mxu0 0.0
  %2115 = vmatpush1.msra.mxu0 0.0
  %2116 = vmatprep.subr.mxu0 0.0
  %2117 = vmatpush1.msra.mxu0 0.0
  %2118 = vmatprep.subr.mxu0 0.0
  %2119 = vmatpush1.msra.mxu0 0.0
  %2120 = vmatprep.subr.mxu0 0.0
  %2121 = vmatpush1.msra.mxu0 0.0
  %2122 = vmatprep.subr.mxu0 0.0
  %2123 = vmatpush1.msra.mxu0 0.0
  %2124 = vmatprep.subr.mxu0 0.0
  %2125 = vmatpush1.msra.mxu0 0.0
  %2126 = vmatprep.subr.mxu0 0.0
  %2127 = vmatpush1.msra.mxu0 0.0
  %2128 = vmatprep.subr.mxu0 0.0
  %2129 = vmatpush1.msra.mxu0 0.0
  %2130 = vmatprep.subr.mxu0 0.0
  %2131 = vmatpush1.msra.mxu0 0.0
  %2132 = vmatprep.subr.mxu0 0.0
  %2133 = vmatpush1.msra.mxu0 0.0
  %2134 = vmatprep.subr.mxu0 0.0
  %2135 = vmatpush1.msra.mxu0 0.0
  %2136 = vmatprep.subr.mxu0 0.0
  %2137 = vmatpush1.msra.mxu0 0.0
  %2138 = vmatprep.subr.mxu0 0.0
  %2139 = vmatpush1.msra.mxu0 0.0
  %2140 = vmatprep.subr.mxu0 0.0
  %2141 = vmatpush1.msra.mxu0 0.0
  %2142 = vmatprep.subr.mxu0 0.0
  %2143 = vmatpush1.msra.mxu0 0.0
  %2144 = vmatprep.subr.mxu0 0.0
  %2145 = vmatpush1.msra.mxu0 0.0
  %2146 = vmatprep.subr.mxu0 0.0
  %2147 = vmatpush1.msra.mxu0 0.0
  %2148 = vmatprep.subr.mxu0 0.0
  %2149 = vmatpush1.msra.mxu0 0.0
  %2150 = vmatprep.subr.mxu0 0.0
  %2151 = vmatpush1.msra.mxu0 0.0
  %2152 = vmatprep.subr.mxu0 0.0
  %2153 = vmatpush1.msra.mxu0 0.0
  %2154 = vmatprep.subr.mxu0 0.0
  %2155 = vmatpush1.msra.mxu0 0.0
  %2156 = vmatprep.subr.mxu0 0.0
  %2157 = vmatpush1.msra.mxu0 0.0
  %2158 = vmatprep.subr.mxu0 0.0
  %2159 = vmatpush1.msra.mxu0 0.0
  %2160 = vmatprep.subr.mxu0 0.0
  %2161 = vmatpush1.msra.mxu0 0.0
  %2162 = vmatprep.mubr.f32.mxu0 0.0
  %2163 = vmatmul.mubr.f32.gmra.mrb[0].mxu0 %v2096
  %v2164 = vpop.f32.mrb[0].mxu0
  %v2165 = vadd.f32 %v1992, %v2164
  %v2166 = vpop.f32.mrb[0].mxu0
  %2167 = vdwg.mxu0
  %v2168 = vadd.f32 %v1972, %v2165
  %v2169 = vxor.u32 %v2168, 2147483648
  %v2170 = vmul.f32 %v2169, 1.442695
  %v2171 = vpow.pop %v2170
  %v2172 = vadd.f32 %v2171, 1.0
  %v2173 = vrcp.pop %v2172
  %v2174 = vmul.f32 1.0, %v2173
  %2176 = vrot.lane.b32.xlu0 %v2165, 108
  %v2177 = vpop.permute.xlu0 %2176
  %v2179 = vmul.f32 %v2174, %v2177
  %2181 = vrot.lane.b32.xlu0 %v2179, 20
  %v2182 = vpop.permute.xlu0 %2181
  %v2184 = vadd.f32 %v1972, %v2182
  %v2185 = vtanh.pop %v2184
  %v2186 = vsub.f32 1.0, %v2174
  %2188 = vrot.lane.b32.xlu0 %v2185, 118
  %v2189 = vpop.permute.xlu0 %2188
  %v2191 = vmul.f32 %v2186, %v2189
  %v2192 = vmul.f32 %v2174, %v2092
  %v2193 = vadd.f32 %v2191, %v2192
  %2195 = vrot.lane.b32.xlu0 %v2193, 118
  %v2196 = vpop.permute.xlu0 %2195
  %v2197 = vsel %vm77, %v2196, 0
  %2199 = vmatprep.subr.mxu0 0.0
  %2200 = vmatpush1.msra.mxu0 %v1985
  %2201 = vmatprep.subr.mxu0 0.0
  %2202 = vmatpush1.msra.mxu0 %v1995
  %2203 = vmatprep.subr.mxu0 0.0
  %2204 = vmatpush1.msra.mxu0 0.0
  %2205 = vmatprep.subr.mxu0 0.0
  %2206 = vmatpush1.msra.mxu0 0.0
  %2207 = vmatprep.subr.mxu0 0.0
  %2208 = vmatpush1.msra.mxu0 0.0
  %2209 = vmatprep.subr.mxu0 0.0
  %2210 = vmatpush1.msra.mxu0 0.0
  %2211 = vmatprep.subr.mxu0 0.0
  %2212 = vmatpush1.msra.mxu0 0.0
  %2213 = vmatprep.subr.mxu0 0.0
  %2214 = vmatpush1.msra.mxu0 0.0
  %2215 = vmatprep.subr.mxu0 0.0
  %2216 = vmatpush1.msra.mxu0 0.0
  %2217 = vmatprep.subr.mxu0 0.0
  %2218 = vmatpush1.msra.mxu0 0.0
  %2219 = vmatprep.subr.mxu0 0.0
  %2220 = vmatpush1.msra.mxu0 0.0
  %2221 = vmatprep.subr.mxu0 0.0
  %2222 = vmatpush1.msra.mxu0 0.0
  %2223 = vmatprep.subr.mxu0 0.0
  %2224 = vmatpush1.msra.mxu0 0.0
  %2225 = vmatprep.subr.mxu0 0.0
  %2226 = vmatpush1.msra.mxu0 0.0
  %2227 = vmatprep.subr.mxu0 0.0
  %2228 = vmatpush1.msra.mxu0 0.0
  %2229 = vmatprep.subr.mxu0 0.0
  %2230 = vmatpush1.msra.mxu0 0.0
  %2231 = vmatprep.subr.mxu0 0.0
  %2232 = vmatpush1.msra.mxu0 0.0
  %2233 = vmatprep.subr.mxu0 0.0
  %2234 = vmatpush1.msra.mxu0 0.0
  %2235 = vmatprep.subr.mxu0 0.0
  %2236 = vmatpush1.msra.mxu0 0.0
  %2237 = vmatprep.subr.mxu0 0.0
  %2238 = vmatpush1.msra.mxu0 0.0
  %2239 = vmatprep.subr.mxu0 0.0
  %2240 = vmatpush1.msra.mxu0 0.0
  %2241 = vmatprep.subr.mxu0 0.0
  %2242 = vmatpush1.msra.mxu0 0.0
  %2243 = vmatprep.subr.mxu0 0.0
  %2244 = vmatpush1.msra.mxu0 0.0
  %2245 = vmatprep.subr.mxu0 0.0
  %2246 = vmatpush1.msra.mxu0 0.0
  %2247 = vmatprep.subr.mxu0 0.0
  %2248 = vmatpush1.msra.mxu0 0.0
  %2249 = vmatprep.subr.mxu0 0.0
  %2250 = vmatpush1.msra.mxu0 0.0
  %2251 = vmatprep.subr.mxu0 0.0
  %2252 = vmatpush1.msra.mxu0 0.0
  %2253 = vmatprep.subr.mxu0 0.0
  %2254 = vmatpush1.msra.mxu0 0.0
  %2255 = vmatprep.subr.mxu0 0.0
  %2256 = vmatpush1.msra.mxu0 0.0
  %2257 = vmatprep.subr.mxu0 0.0
  %2258 = vmatpush1.msra.mxu0 0.0
  %2259 = vmatprep.subr.mxu0 0.0
  %2260 = vmatpush1.msra.mxu0 0.0
  %2261 = vmatprep.subr.mxu0 0.0
  %2262 = vmatpush1.msra.mxu0 0.0
  %2263 = vmatprep.mubr.f32.mxu0 0.0
  %2264 = vmatmul.mubr.f32.gmra.mrb[0].mxu0 %v2197
  %v2265 = vpop.f32.mrb[0].mxu0
  %v2266 = vadd.f32 %v1992, %v2265
  %v2267 = vpop.f32.mrb[0].mxu0
  %2268 = vdwg.mxu0
  %v2269 = vadd.f32 %v1977, %v2266
  %v2270 = vxor.u32 %v2269, 2147483648
  %v2271 = vmul.f32 %v2270, 1.442695
  %v2272 = vpow.pop %v2271
  %v2273 = vadd.f32 %v2272, 1.0
  %v2274 = vrcp.pop %v2273
  %v2275 = vmul.f32 1.0, %v2274
  %2277 = vrot.lane.b32.xlu0 %v2266, 108
  %v2278 = vpop.permute.xlu0 %2277
  %v2280 = vmul.f32 %v2275, %v2278
  %2282 = vrot.lane.b32.xlu0 %v2280, 20
  %v2283 = vpop.permute.xlu0 %2282
  %v2285 = vadd.f32 %v1977, %v2283
  %v2286 = vtanh.pop %v2285
  %v2287 = vsub.f32 1.0, %v2275
  %2289 = vrot.lane.b32.xlu0 %v2286, 118
  %v2290 = vpop.permute.xlu0 %2289
  %v2292 = vmul.f32 %v2287, %v2290
  %v2293 = vmul.f32 %v2275, %v2193
  %v2294 = vadd.f32 %v2292, %v2293
  %2296 = vrot.lane.b32.xlu0 %v2294, 118
  %v2297 = vpop.permute.xlu0 %2296
  %v2298 = vsel %vm77, %v2297, 0
  %2300 = vmatprep.subr.mxu0 0.0
  %2301 = vmatpush1.msra.mxu0 %v1985
  %2302 = vmatprep.subr.mxu0 0.0
  %2303 = vmatpush1.msra.mxu0 %v1995
  %2304 = vmatprep.subr.mxu0 0.0
  %2305 = vmatpush1.msra.mxu0 0.0
  %2306 = vmatprep.subr.mxu0 0.0
  %2307 = vmatpush1.msra.mxu0 0.0
  %2308 = vmatprep.subr.mxu0 0.0
  %2309 = vmatpush1.msra.mxu0 0.0
  %2310 = vmatprep.subr.mxu0 0.0
  %2311 = vmatpush1.msra.mxu0 0.0
  %2312 = vmatprep.subr.mxu0 0.0
  %2313 = vmatpush1.msra.mxu0 0.0
  %2314 = vmatprep.subr.mxu0 0.0
  %2315 = vmatpush1.msra.mxu0 0.0
  %2316 = vmatprep.subr.mxu0 0.0
  %2317 = vmatpush1.msra.mxu0 0.0
  %2318 = vmatprep.subr.mxu0 0.0
  %2319 = vmatpush1.msra.mxu0 0.0
  %2320 = vmatprep.subr.mxu0 0.0
  %2321 = vmatpush1.msra.mxu0 0.0
  %2322 = vmatprep.subr.mxu0 0.0
  %2323 = vmatpush1.msra.mxu0 0.0
  %2324 = vmatprep.subr.mxu0 0.0
  %2325 = vmatpush1.msra.mxu0 0.0
  %2326 = vmatprep.subr.mxu0 0.0
  %2327 = vmatpush1.msra.mxu0 0.0
  %2328 = vmatprep.subr.mxu0 0.0
  %2329 = vmatpush1.msra.mxu0 0.0
  %2330 = vmatprep.subr.mxu0 0.0
  %2331 = vmatpush1.msra.mxu0 0.0
  %2332 = vmatprep.subr.mxu0 0.0
  %2333 = vmatpush1.msra.mxu0 0.0
  %2334 = vmatprep.subr.mxu0 0.0
  %2335 = vmatpush1.msra.mxu0 0.0
  %2336 = vmatprep.subr.mxu0 0.0
  %2337 = vmatpush1.msra.mxu0 0.0
  %2338 = vmatprep.subr.mxu0 0.0
  %2339 = vmatpush1.msra.mxu0 0.0
  %2340 = vmatprep.subr.mxu0 0.0
  %2341 = vmatpush1.msra.mxu0 0.0
  %2342 = vmatprep.subr.mxu0 0.0
  %2343 = vmatpush1.msra.mxu0 0.0
  %2344 = vmatprep.subr.mxu0 0.0
  %2345 = vmatpush1.msra.mxu0 0.0
  %2346 = vmatprep.subr.mxu0 0.0
  %2347 = vmatpush1.msra.mxu0 0.0
  %2348 = vmatprep.subr.mxu0 0.0
  %2349 = vmatpush1.msra.mxu0 0.0
  %2350 = vmatprep.subr.mxu0 0.0
  %2351 = vmatpush1.msra.mxu0 0.0
  %2352 = vmatprep.subr.mxu0 0.0
  %2353 = vmatpush1.msra.mxu0 0.0
  %2354 = vmatprep.subr.mxu0 0.0
  %2355 = vmatpush1.msra.mxu0 0.0
  %2356 = vmatprep.subr.mxu0 0.0
  %2357 = vmatpush1.msra.mxu0 0.0
  %2358 = vmatprep.subr.mxu0 0.0
  %2359 = vmatpush1.msra.mxu0 0.0
  %2360 = vmatprep.subr.mxu0 0.0
  %2361 = vmatpush1.msra.mxu0 0.0
  %2362 = vmatprep.subr.mxu0 0.0
  %2363 = vmatpush1.msra.mxu0 0.0
  %2364 = vmatprep.mubr.f32.mxu0 0.0
  %2365 = vmatmul.mubr.f32.gmra.mrb[0].mxu0 %v2298
  %v2366 = vpop.f32.mrb[0].mxu0
  %v2367 = vadd.f32 %v1992, %v2366
  %v2368 = vpop.f32.mrb[0].mxu0
  %2369 = vdwg.mxu0
  %v2370 = vadd.f32 %v1982, %v2367
  %v2371 = vxor.u32 %v2370, 2147483648
  %v2372 = vmul.f32 %v2371, 1.442695
  %v2373 = vpow.pop %v2372
  %v2374 = vadd.f32 %v2373, 1.0
  %v2375 = vrcp.pop %v2374
  %v2376 = vmul.f32 1.0, %v2375
  %2378 = vrot.lane.b32.xlu0 %v2367, 108
  %v2379 = vpop.permute.xlu0 %2378
  %v2381 = vmul.f32 %v2376, %v2379
  %2383 = vrot.lane.b32.xlu0 %v2381, 20
  %v2384 = vpop.permute.xlu0 %2383
  %v2386 = vadd.f32 %v1982, %v2384
  %v2387 = vtanh.pop %v2386
  %v2388 = vsub.f32 1.0, %v2376
  %2390 = vrot.lane.b32.xlu0 %v2387, 118
  %v2391 = vpop.permute.xlu0 %2390
  %v2393 = vmul.f32 %v2388, %v2391
  %v2394 = vmul.f32 %v2376, %v2294
  %v2395 = vadd.f32 %v2393, %v2394
  %2398 = vrot.lane.b32.xlu0 %v2395, 118
  %v2399 = vpop.permute.xlu0 %2398
  %vm2401 = vcmask 39936
  %v2402 = vsel %vm2401, %v2095, %v2399
  %v2405 = vsel %vm2401, %v2196, %v2297
  %v2406 = vsel %vm2401, %v2297, %v2196
  %v2407 = vsel %vm2401, %v2399, %v2095
  %2412 = vrot.lane.b32.xlu0 %v2407, 10
  %v2413 = vpop.permute.xlu0 %2412
  %2414 = vrot.lane.b32.xlu0 %v2406, 10
  %v2415 = vpop.permute.xlu0 %2414
  %2416 = vrot.lane.b32.xlu0 %v2405, 10
  %v2417 = vpop.permute.xlu0 %2416
  %2418 = vrot.lane.b32.xlu0 %v2402, 10
  %v2419 = vpop.permute.xlu0 %2418
  %v2424 = vsel %vm77, %v2402, %v2413
  %v2425 = vsel %vm77, %v2405, %v2415
  %v2426 = vsel %vm77, %v2406, %v2417
  %v2427 = vsel %vm77, %v2407, %v2419
  %s2428 = scalar_lea.vmem %s5, 24
  %v2429 = vld [vmem:[%s2428] sm:$0xff]
  %v2430 = vld [vmem:[%s2428 + $0x8] sm:$0xff]
  %v2431 = vld [vmem:[%s2428 + $0x10] sm:$0xf]
  %s2432 = scalar_lea.vmem %s7, 1
  %v2433 = vld [vmem:[%s2432] sm:$0x1]
  %v2435 = vlaneseq
  %v2436 = vshrl.u32 %v2435, 7
  %v2437 = vsub.s32 0, %v2436
  %v2438 = vrot.slane %v2433, %v2437
  %v2441 = vsel %vm1884, %v2424, 0
  %v2444 = vsel %vm1884, %v2425, 0
  %v2447 = vsel %vm1884, %v2426, 0
  %v2450 = vsel %vm1884, %v2427, 0
  %v2453 = vsel %vm329, %v2431, 0
  %2455 = vmatprep.subr.mxu0 0.0
  %2456 = vmatpush1.msra.mxu0 %v2429
  %2457 = vmatprep.subr.mxu0 0.0
  %2458 = vmatpush1.msra.mxu0 %v2430
  %2459 = vmatprep.subr.mxu0 0.0
  %2460 = vmatpush1.msra.mxu0 %v2453
  %2461 = vmatprep.subr.mxu0 0.0
  %2462 = vmatpush1.msra.mxu0 0.0
  %2463 = vmatprep.subr.mxu0 0.0
  %2464 = vmatpush1.msra.mxu0 0.0
  %2465 = vmatprep.subr.mxu0 0.0
  %2466 = vmatpush1.msra.mxu0 0.0
  %2467 = vmatprep.subr.mxu0 0.0
  %2468 = vmatpush1.msra.mxu0 0.0
  %2469 = vmatprep.subr.mxu0 0.0
  %2470 = vmatpush1.msra.mxu0 0.0
  %2471 = vmatprep.subr.mxu0 0.0
  %2472 = vmatpush1.msra.mxu0 0.0
  %2473 = vmatprep.subr.mxu0 0.0
  %2474 = vmatpush1.msra.mxu0 0.0
  %2475 = vmatprep.subr.mxu0 0.0
  %2476 = vmatpush1.msra.mxu0 0.0
  %2477 = vmatprep.subr.mxu0 0.0
  %2478 = vmatpush1.msra.mxu0 0.0
  %2479 = vmatprep.subr.mxu0 0.0
  %2480 = vmatpush1.msra.mxu0 0.0
  %2481 = vmatprep.subr.mxu0 0.0
  %2482 = vmatpush1.msra.mxu0 0.0
  %2483 = vmatprep.subr.mxu0 0.0
  %2484 = vmatpush1.msra.mxu0 0.0
  %2485 = vmatprep.subr.mxu0 0.0
  %2486 = vmatpush1.msra.mxu0 0.0
  %2487 = vmatprep.subr.mxu0 0.0
  %2488 = vmatpush1.msra.mxu0 0.0
  %2489 = vmatprep.subr.mxu0 0.0
  %2490 = vmatpush1.msra.mxu0 0.0
  %2491 = vmatprep.subr.mxu0 0.0
  %2492 = vmatpush1.msra.mxu0 0.0
  %2493 = vmatprep.subr.mxu0 0.0
  %2494 = vmatpush1.msra.mxu0 0.0
  %2495 = vmatprep.subr.mxu0 0.0
  %2496 = vmatpush1.msra.mxu0 0.0
  %2497 = vmatprep.subr.mxu0 0.0
  %2498 = vmatpush1.msra.mxu0 0.0
  %2499 = vmatprep.subr.mxu0 0.0
  %2500 = vmatpush1.msra.mxu0 0.0
  %2501 = vmatprep.subr.mxu0 0.0
  %2502 = vmatpush1.msra.mxu0 0.0
  %2503 = vmatprep.subr.mxu0 0.0
  %2504 = vmatpush1.msra.mxu0 0.0
  %2505 = vmatprep.subr.mxu0 0.0
  %2506 = vmatpush1.msra.mxu0 0.0
  %2507 = vmatprep.subr.mxu0 0.0
  %2508 = vmatpush1.msra.mxu0 0.0
  %2509 = vmatprep.subr.mxu0 0.0
  %2510 = vmatpush1.msra.mxu0 0.0
  %2511 = vmatprep.subr.mxu0 0.0
  %2512 = vmatpush1.msra.mxu0 0.0
  %2513 = vmatprep.subr.mxu0 0.0
  %2514 = vmatpush1.msra.mxu0 0.0
  %2515 = vmatprep.subr.mxu0 0.0
  %2516 = vmatpush1.msra.mxu0 0.0
  %2517 = vmatprep.subr.mxu0 0.0
  %2518 = vmatpush1.msra.mxu0 0.0
  %2519 = vmatprep.mubr.f32.mxu0 0.0
  %2520 = vmatmul.mubr.f32.gmra.mrb[0].mxu0 %v2441
  %v2521 = vpop.f32.mrb[0].mxu0
  %v2522 = vadd.f32 %v2438, %v2521
  %v2523 = vpop.f32.mrb[0].mxu0
  %2524 = vmatprep.mubr.f32.mxu0 0.0
  %2525 = vmatmul.mubr.f32.gmra.mrb[0].mxu0 %v2444
  %v2526 = vpop.f32.mrb[0].mxu0
  %v2527 = vadd.f32 %v2438, %v2526
  %v2528 = vpop.f32.mrb[0].mxu0
  %2529 = vmatprep.mubr.f32.mxu0 0.0
  %2530 = vmatmul.mubr.f32.gmra.mrb[0].mxu0 %v2447
  %v2531 = vpop.f32.mrb[0].mxu0
  %v2532 = vadd.f32 %v2438, %v2531
  %v2533 = vpop.f32.mrb[0].mxu0
  %2534 = vmatprep.mubr.f32.mxu0 0.0
  %2535 = vmatmul.mubr.f32.gmra.mrb[0].mxu0 %v2450
  %v2536 = vpop.f32.mrb[0].mxu0
  %v2537 = vadd.f32 %v2438, %v2536
  %v2538 = vpop.f32.mrb[0].mxu0
  %2539 = vdwg.mxu0
  %s2540 = scalar_lea.vmem %s6, 16
  %v2541 = vld [vmem:[%s2540] sm:$0xff]
  %v2542 = vld [vmem:[%s2540 + $0x8] sm:$0x3]
  %s2543 = scalar_lea.vmem %s8, 1
  %v2544 = vld [vmem:[%s2543] sm:$0x1]
  %v2546 = vlaneseq
  %v2547 = vshrl.u32 %v2546, 7
  %v2548 = vsub.s32 0, %v2547
  %v2549 = vrot.slane %v2544, %v2548
  %v2552 = vsel %vm81, %v2542, 0
  %2554 = vmatprep.subr.mxu0 0.0
  %2555 = vmatpush1.msra.mxu0 %v2541
  %2556 = vmatprep.subr.mxu0 0.0
  %2557 = vmatpush1.msra.mxu0 %v2552
  %2558 = vmatprep.subr.mxu0 0.0
  %2559 = vmatpush1.msra.mxu0 0.0
  %2560 = vmatprep.subr.mxu0 0.0
  %2561 = vmatpush1.msra.mxu0 0.0
  %2562 = vmatprep.subr.mxu0 0.0
  %2563 = vmatpush1.msra.mxu0 0.0
  %2564 = vmatprep.subr.mxu0 0.0
  %2565 = vmatpush1.msra.mxu0 0.0
  %2566 = vmatprep.subr.mxu0 0.0
  %2567 = vmatpush1.msra.mxu0 0.0
  %2568 = vmatprep.subr.mxu0 0.0
  %2569 = vmatpush1.msra.mxu0 0.0
  %2570 = vmatprep.subr.mxu0 0.0
  %2571 = vmatpush1.msra.mxu0 0.0
  %2572 = vmatprep.subr.mxu0 0.0
  %2573 = vmatpush1.msra.mxu0 0.0
  %2574 = vmatprep.subr.mxu0 0.0
  %2575 = vmatpush1.msra.mxu0 0.0
  %2576 = vmatprep.subr.mxu0 0.0
  %2577 = vmatpush1.msra.mxu0 0.0
  %2578 = vmatprep.subr.mxu0 0.0
  %2579 = vmatpush1.msra.mxu0 0.0
  %2580 = vmatprep.subr.mxu0 0.0
  %2581 = vmatpush1.msra.mxu0 0.0
  %2582 = vmatprep.subr.mxu0 0.0
  %2583 = vmatpush1.msra.mxu0 0.0
  %2584 = vmatprep.subr.mxu0 0.0
  %2585 = vmatpush1.msra.mxu0 0.0
  %2586 = vmatprep.subr.mxu0 0.0
  %2587 = vmatpush1.msra.mxu0 0.0
  %2588 = vmatprep.subr.mxu0 0.0
  %2589 = vmatpush1.msra.mxu0 0.0
  %2590 = vmatprep.subr.mxu0 0.0
  %2591 = vmatpush1.msra.mxu0 0.0
  %2592 = vmatprep.subr.mxu0 0.0
  %2593 = vmatpush1.msra.mxu0 0.0
  %2594 = vmatprep.subr.mxu0 0.0
  %2595 = vmatpush1.msra.mxu0 0.0
  %2596 = vmatprep.subr.mxu0 0.0
  %2597 = vmatpush1.msra.mxu0 0.0
  %2598 = vmatprep.subr.mxu0 0.0
  %2599 = vmatpush1.msra.mxu0 0.0
  %2600 = vmatprep.subr.mxu0 0.0
  %2601 = vmatpush1.msra.mxu0 0.0
  %2602 = vmatprep.subr.mxu0 0.0
  %2603 = vmatpush1.msra.mxu0 0.0
  %2604 = vmatprep.subr.mxu0 0.0
  %2605 = vmatpush1.msra.mxu0 0.0
  %2606 = vmatprep.subr.mxu0 0.0
  %2607 = vmatpush1.msra.mxu0 0.0
  %2608 = vmatprep.subr.mxu0 0.0
  %2609 = vmatpush1.msra.mxu0 0.0
  %2610 = vmatprep.subr.mxu0 0.0
  %2611 = vmatpush1.msra.mxu0 0.0
  %2612 = vmatprep.subr.mxu0 0.0
  %2613 = vmatpush1.msra.mxu0 0.0
  %2614 = vmatprep.subr.mxu0 0.0
  %2615 = vmatpush1.msra.mxu0 0.0
  %2616 = vmatprep.subr.mxu0 0.0
  %2617 = vmatpush1.msra.mxu0 0.0
  %2618 = vmatprep.mubr.f32.mxu0 0.0
  %2619 = vmatmul.mubr.f32.gmra.mrb[0].mxu0 %v79
  %v2620 = vpop.f32.mrb[0].mxu0
  %v2621 = vadd.f32 %v2549, %v2620
  %v2622 = vpop.f32.mrb[0].mxu0
  %2623 = vdwg.mxu0
  %v2624 = vadd.f32 %v2522, %v2621
  %v2625 = vxor.u32 %v2624, 2147483648
  %v2626 = vmul.f32 %v2625, 1.442695
  %v2627 = vpow.pop %v2626
  %v2628 = vadd.f32 %v2627, 1.0
  %v2629 = vrcp.pop %v2628
  %v2630 = vmul.f32 1.0, %v2629
  %2632 = vrot.lane.b32.xlu0 %v2621, 108
  %v2633 = vpop.permute.xlu0 %2632
  %v2635 = vmul.f32 %v2630, %v2633
  %2637 = vrot.lane.b32.xlu0 %v2635, 20
  %v2638 = vpop.permute.xlu0 %2637
  %v2640 = vadd.f32 %v2522, %v2638
  %v2641 = vtanh.pop %v2640
  %v2642 = vsub.f32 1.0, %v2630
  %2644 = vrot.lane.b32.xlu0 %v2641, 118
  %v2645 = vpop.permute.xlu0 %2644
  %v2647 = vmul.f32 %v2642, %v2645
  %v2648 = vmul.f32 %v2630, 0.0
  %v2649 = vadd.f32 %v2647, %v2648
  %2651 = vrot.lane.b32.xlu0 %v2649, 118
  %v2652 = vpop.permute.xlu0 %2651
  %v2653 = vsel %vm77, %v2652, 0
  %2655 = vmatprep.subr.mxu0 0.0
  %2656 = vmatpush1.msra.mxu0 %v2541
  %2657 = vmatprep.subr.mxu0 0.0
  %2658 = vmatpush1.msra.mxu0 %v2552
  %2659 = vmatprep.subr.mxu0 0.0
  %2660 = vmatpush1.msra.mxu0 0.0
  %2661 = vmatprep.subr.mxu0 0.0
  %2662 = vmatpush1.msra.mxu0 0.0
  %2663 = vmatprep.subr.mxu0 0.0
  %2664 = vmatpush1.msra.mxu0 0.0
  %2665 = vmatprep.subr.mxu0 0.0
  %2666 = vmatpush1.msra.mxu0 0.0
  %2667 = vmatprep.subr.mxu0 0.0
  %2668 = vmatpush1.msra.mxu0 0.0
  %2669 = vmatprep.subr.mxu0 0.0
  %2670 = vmatpush1.msra.mxu0 0.0
  %2671 = vmatprep.subr.mxu0 0.0
  %2672 = vmatpush1.msra.mxu0 0.0
  %2673 = vmatprep.subr.mxu0 0.0
  %2674 = vmatpush1.msra.mxu0 0.0
  %2675 = vmatprep.subr.mxu0 0.0
  %2676 = vmatpush1.msra.mxu0 0.0
  %2677 = vmatprep.subr.mxu0 0.0
  %2678 = vmatpush1.msra.mxu0 0.0
  %2679 = vmatprep.subr.mxu0 0.0
  %2680 = vmatpush1.msra.mxu0 0.0
  %2681 = vmatprep.subr.mxu0 0.0
  %2682 = vmatpush1.msra.mxu0 0.0
  %2683 = vmatprep.subr.mxu0 0.0
  %2684 = vmatpush1.msra.mxu0 0.0
  %2685 = vmatprep.subr.mxu0 0.0
  %2686 = vmatpush1.msra.mxu0 0.0
  %2687 = vmatprep.subr.mxu0 0.0
  %2688 = vmatpush1.msra.mxu0 0.0
  %2689 = vmatprep.subr.mxu0 0.0
  %2690 = vmatpush1.msra.mxu0 0.0
  %2691 = vmatprep.subr.mxu0 0.0
  %2692 = vmatpush1.msra.mxu0 0.0
  %2693 = vmatprep.subr.mxu0 0.0
  %2694 = vmatpush1.msra.mxu0 0.0
  %2695 = vmatprep.subr.mxu0 0.0
  %2696 = vmatpush1.msra.mxu0 0.0
  %2697 = vmatprep.subr.mxu0 0.0
  %2698 = vmatpush1.msra.mxu0 0.0
  %2699 = vmatprep.subr.mxu0 0.0
  %2700 = vmatpush1.msra.mxu0 0.0
  %2701 = vmatprep.subr.mxu0 0.0
  %2702 = vmatpush1.msra.mxu0 0.0
  %2703 = vmatprep.subr.mxu0 0.0
  %2704 = vmatpush1.msra.mxu0 0.0
  %2705 = vmatprep.subr.mxu0 0.0
  %2706 = vmatpush1.msra.mxu0 0.0
  %2707 = vmatprep.subr.mxu0 0.0
  %2708 = vmatpush1.msra.mxu0 0.0
  %2709 = vmatprep.subr.mxu0 0.0
  %2710 = vmatpush1.msra.mxu0 0.0
  %2711 = vmatprep.subr.mxu0 0.0
  %2712 = vmatpush1.msra.mxu0 0.0
  %2713 = vmatprep.subr.mxu0 0.0
  %2714 = vmatpush1.msra.mxu0 0.0
  %2715 = vmatprep.subr.mxu0 0.0
  %2716 = vmatpush1.msra.mxu0 0.0
  %2717 = vmatprep.subr.mxu0 0.0
  %2718 = vmatpush1.msra.mxu0 0.0
  %2719 = vmatprep.mubr.f32.mxu0 0.0
  %2720 = vmatmul.mubr.f32.gmra.mrb[0].mxu0 %v2653
  %v2721 = vpop.f32.mrb[0].mxu0
  %v2722 = vadd.f32 %v2549, %v2721
  %v2723 = vpop.f32.mrb[0].mxu0
  %2724 = vdwg.mxu0
  %v2725 = vadd.f32 %v2527, %v2722
  %v2726 = vxor.u32 %v2725, 2147483648
  %v2727 = vmul.f32 %v2726, 1.442695
  %v2728 = vpow.pop %v2727
  %v2729 = vadd.f32 %v2728, 1.0
  %v2730 = vrcp.pop %v2729
  %v2731 = vmul.f32 1.0, %v2730
  %2733 = vrot.lane.b32.xlu0 %v2722, 108
  %v2734 = vpop.permute.xlu0 %2733
  %v2736 = vmul.f32 %v2731, %v2734
  %2738 = vrot.lane.b32.xlu0 %v2736, 20
  %v2739 = vpop.permute.xlu0 %2738
  %v2741 = vadd.f32 %v2527, %v2739
  %v2742 = vtanh.pop %v2741
  %v2743 = vsub.f32 1.0, %v2731
  %2745 = vrot.lane.b32.xlu0 %v2742, 118
  %v2746 = vpop.permute.xlu0 %2745
  %v2748 = vmul.f32 %v2743, %v2746
  %v2749 = vmul.f32 %v2731, %v2649
  %v2750 = vadd.f32 %v2748, %v2749
  %2752 = vrot.lane.b32.xlu0 %v2750, 118
  %v2753 = vpop.permute.xlu0 %2752
  %v2754 = vsel %vm77, %v2753, 0
  %2756 = vmatprep.subr.mxu0 0.0
  %2757 = vmatpush1.msra.mxu0 %v2541
  %2758 = vmatprep.subr.mxu0 0.0
  %2759 = vmatpush1.msra.mxu0 %v2552
  %2760 = vmatprep.subr.mxu0 0.0
  %2761 = vmatpush1.msra.mxu0 0.0
  %2762 = vmatprep.subr.mxu0 0.0
  %2763 = vmatpush1.msra.mxu0 0.0
  %2764 = vmatprep.subr.mxu0 0.0
  %2765 = vmatpush1.msra.mxu0 0.0
  %2766 = vmatprep.subr.mxu0 0.0
  %2767 = vmatpush1.msra.mxu0 0.0
  %2768 = vmatprep.subr.mxu0 0.0
  %2769 = vmatpush1.msra.mxu0 0.0
  %2770 = vmatprep.subr.mxu0 0.0
  %2771 = vmatpush1.msra.mxu0 0.0
  %2772 = vmatprep.subr.mxu0 0.0
  %2773 = vmatpush1.msra.mxu0 0.0
  %2774 = vmatprep.subr.mxu0 0.0
  %2775 = vmatpush1.msra.mxu0 0.0
  %2776 = vmatprep.subr.mxu0 0.0
  %2777 = vmatpush1.msra.mxu0 0.0
  %2778 = vmatprep.subr.mxu0 0.0
  %2779 = vmatpush1.msra.mxu0 0.0
  %2780 = vmatprep.subr.mxu0 0.0
  %2781 = vmatpush1.msra.mxu0 0.0
  %2782 = vmatprep.subr.mxu0 0.0
  %2783 = vmatpush1.msra.mxu0 0.0
  %2784 = vmatprep.subr.mxu0 0.0
  %2785 = vmatpush1.msra.mxu0 0.0
  %2786 = vmatprep.subr.mxu0 0.0
  %2787 = vmatpush1.msra.mxu0 0.0
  %2788 = vmatprep.subr.mxu0 0.0
  %2789 = vmatpush1.msra.mxu0 0.0
  %2790 = vmatprep.subr.mxu0 0.0
  %2791 = vmatpush1.msra.mxu0 0.0
  %2792 = vmatprep.subr.mxu0 0.0
  %2793 = vmatpush1.msra.mxu0 0.0
  %2794 = vmatprep.subr.mxu0 0.0
  %2795 = vmatpush1.msra.mxu0 0.0
  %2796 = vmatprep.subr.mxu0 0.0
  %2797 = vmatpush1.msra.mxu0 0.0
  %2798 = vmatprep.subr.mxu0 0.0
  %2799 = vmatpush1.msra.mxu0 0.0
  %2800 = vmatprep.subr.mxu0 0.0
  %2801 = vmatpush1.msra.mxu0 0.0
  %2802 = vmatprep.subr.mxu0 0.0
  %2803 = vmatpush1.msra.mxu0 0.0
  %2804 = vmatprep.subr.mxu0 0.0
  %2805 = vmatpush1.msra.mxu0 0.0
  %2806 = vmatprep.subr.mxu0 0.0
  %2807 = vmatpush1.msra.mxu0 0.0
  %2808 = vmatprep.subr.mxu0 0.0
  %2809 = vmatpush1.msra.mxu0 0.0
  %2810 = vmatprep.subr.mxu0 0.0
  %2811 = vmatpush1.msra.mxu0 0.0
  %2812 = vmatprep.subr.mxu0 0.0
  %2813 = vmatpush1.msra.mxu0 0.0
  %2814 = vmatprep.subr.mxu0 0.0
  %2815 = vmatpush1.msra.mxu0 0.0
  %2816 = vmatprep.subr.mxu0 0.0
  %2817 = vmatpush1.msra.mxu0 0.0
  %2818 = vmatprep.subr.mxu0 0.0
  %2819 = vmatpush1.msra.mxu0 0.0
  %2820 = vmatprep.mubr.f32.mxu0 0.0
  %2821 = vmatmul.mubr.f32.gmra.mrb[0].mxu0 %v2754
  %v2822 = vpop.f32.mrb[0].mxu0
  %v2823 = vadd.f32 %v2549, %v2822
  %v2824 = vpop.f32.mrb[0].mxu0
  %2825 = vdwg.mxu0
  %v2826 = vadd.f32 %v2532, %v2823
  %v2827 = vxor.u32 %v2826, 2147483648
  %v2828 = vmul.f32 %v2827, 1.442695
  %v2829 = vpow.pop %v2828
  %v2830 = vadd.f32 %v2829, 1.0
  %v2831 = vrcp.pop %v2830
  %v2832 = vmul.f32 1.0, %v2831
  %2834 = vrot.lane.b32.xlu0 %v2823, 108
  %v2835 = vpop.permute.xlu0 %2834
  %v2837 = vmul.f32 %v2832, %v2835
  %2839 = vrot.lane.b32.xlu0 %v2837, 20
  %v2840 = vpop.permute.xlu0 %2839
  %v2842 = vadd.f32 %v2532, %v2840
  %v2843 = vtanh.pop %v2842
  %v2844 = vsub.f32 1.0, %v2832
  %2846 = vrot.lane.b32.xlu0 %v2843, 118
  %v2847 = vpop.permute.xlu0 %2846
  %v2849 = vmul.f32 %v2844, %v2847
  %v2850 = vmul.f32 %v2832, %v2750
  %v2851 = vadd.f32 %v2849, %v2850
  %2853 = vrot.lane.b32.xlu0 %v2851, 118
  %v2854 = vpop.permute.xlu0 %2853
  %v2855 = vsel %vm77, %v2854, 0
  %2857 = vmatprep.subr.mxu0 0.0
  %2858 = vmatpush1.msra.mxu0 %v2541
  %2859 = vmatprep.subr.mxu0 0.0
  %2860 = vmatpush1.msra.mxu0 %v2552
  %2861 = vmatprep.subr.mxu0 0.0
  %2862 = vmatpush1.msra.mxu0 0.0
  %2863 = vmatprep.subr.mxu0 0.0
  %2864 = vmatpush1.msra.mxu0 0.0
  %2865 = vmatprep.subr.mxu0 0.0
  %2866 = vmatpush1.msra.mxu0 0.0
  %2867 = vmatprep.subr.mxu0 0.0
  %2868 = vmatpush1.msra.mxu0 0.0
  %2869 = vmatprep.subr.mxu0 0.0
  %2870 = vmatpush1.msra.mxu0 0.0
  %2871 = vmatprep.subr.mxu0 0.0
  %2872 = vmatpush1.msra.mxu0 0.0
  %2873 = vmatprep.subr.mxu0 0.0
  %2874 = vmatpush1.msra.mxu0 0.0
  %2875 = vmatprep.subr.mxu0 0.0
  %2876 = vmatpush1.msra.mxu0 0.0
  %2877 = vmatprep.subr.mxu0 0.0
  %2878 = vmatpush1.msra.mxu0 0.0
  %2879 = vmatprep.subr.mxu0 0.0
  %2880 = vmatpush1.msra.mxu0 0.0
  %2881 = vmatprep.subr.mxu0 0.0
  %2882 = vmatpush1.msra.mxu0 0.0
  %2883 = vmatprep.subr.mxu0 0.0
  %2884 = vmatpush1.msra.mxu0 0.0
  %2885 = vmatprep.subr.mxu0 0.0
  %2886 = vmatpush1.msra.mxu0 0.0
  %2887 = vmatprep.subr.mxu0 0.0
  %2888 = vmatpush1.msra.mxu0 0.0
  %2889 = vmatprep.subr.mxu0 0.0
  %2890 = vmatpush1.msra.mxu0 0.0
  %2891 = vmatprep.subr.mxu0 0.0
  %2892 = vmatpush1.msra.mxu0 0.0
  %2893 = vmatprep.subr.mxu0 0.0
  %2894 = vmatpush1.msra.mxu0 0.0
  %2895 = vmatprep.subr.mxu0 0.0
  %2896 = vmatpush1.msra.mxu0 0.0
  %2897 = vmatprep.subr.mxu0 0.0
  %2898 = vmatpush1.msra.mxu0 0.0
  %2899 = vmatprep.subr.mxu0 0.0
  %2900 = vmatpush1.msra.mxu0 0.0
  %2901 = vmatprep.subr.mxu0 0.0
  %2902 = vmatpush1.msra.mxu0 0.0
  %2903 = vmatprep.subr.mxu0 0.0
  %2904 = vmatpush1.msra.mxu0 0.0
  %2905 = vmatprep.subr.mxu0 0.0
  %2906 = vmatpush1.msra.mxu0 0.0
  %2907 = vmatprep.subr.mxu0 0.0
  %2908 = vmatpush1.msra.mxu0 0.0
  %2909 = vmatprep.subr.mxu0 0.0
  %2910 = vmatpush1.msra.mxu0 0.0
  %2911 = vmatprep.subr.mxu0 0.0
  %2912 = vmatpush1.msra.mxu0 0.0
  %2913 = vmatprep.subr.mxu0 0.0
  %2914 = vmatpush1.msra.mxu0 0.0
  %2915 = vmatprep.subr.mxu0 0.0
  %2916 = vmatpush1.msra.mxu0 0.0
  %2917 = vmatprep.subr.mxu0 0.0
  %2918 = vmatpush1.msra.mxu0 0.0
  %2919 = vmatprep.subr.mxu0 0.0
  %2920 = vmatpush1.msra.mxu0 0.0
  %2921 = vmatprep.mubr.f32.mxu0 0.0
  %2922 = vmatmul.mubr.f32.gmra.mrb[0].mxu0 %v2855
  %v2923 = vpop.f32.mrb[0].mxu0
  %v2924 = vadd.f32 %v2549, %v2923
  %v2925 = vpop.f32.mrb[0].mxu0
  %2926 = vdwg.mxu0
  %v2927 = vadd.f32 %v2537, %v2924
  %v2928 = vxor.u32 %v2927, 2147483648
  %v2929 = vmul.f32 %v2928, 1.442695
  %v2930 = vpow.pop %v2929
  %v2931 = vadd.f32 %v2930, 1.0
  %v2932 = vrcp.pop %v2931
  %v2933 = vmul.f32 1.0, %v2932
  %2935 = vrot.lane.b32.xlu0 %v2924, 108
  %v2936 = vpop.permute.xlu0 %2935
  %v2938 = vmul.f32 %v2933, %v2936
  %2940 = vrot.lane.b32.xlu0 %v2938, 20
  %v2941 = vpop.permute.xlu0 %2940
  %v2943 = vadd.f32 %v2537, %v2941
  %v2944 = vtanh.pop %v2943
  %v2945 = vsub.f32 1.0, %v2933
  %2947 = vrot.lane.b32.xlu0 %v2944, 118
  %v2948 = vpop.permute.xlu0 %2947
  %v2950 = vmul.f32 %v2945, %v2948
  %v2951 = vmul.f32 %v2933, %v2851
  %v2952 = vadd.f32 %v2950, %v2951
  %2955 = vrot.lane.b32.xlu0 %v2952, 118
  %v2956 = vpop.permute.xlu0 %2955
  %v2958 = vsel %vm2401, %v2652, %v2956
  %v2961 = vsel %vm2401, %v2753, %v2854
  %v2962 = vsel %vm2401, %v2854, %v2753
  %v2963 = vsel %vm2401, %v2956, %v2652
  %2968 = vrot.lane.b32.xlu0 %v2963, 10
  %v2969 = vpop.permute.xlu0 %2968
  %2970 = vrot.lane.b32.xlu0 %v2962, 10
  %v2971 = vpop.permute.xlu0 %2970
  %2972 = vrot.lane.b32.xlu0 %v2961, 10
  %v2973 = vpop.permute.xlu0 %2972
  %2974 = vrot.lane.b32.xlu0 %v2958, 10
  %v2975 = vpop.permute.xlu0 %2974
  %v2980 = vsel %vm77, %v2958, %v2969
  %v2981 = vsel %vm77, %v2961, %v2971
  %v2982 = vsel %vm77, %v2962, %v2973
  %v2983 = vsel %vm77, %v2963, %v2975
  %s2984 = scalar_lea.vmem %s5, 48
  %v2985 = vld [vmem:[%s2984] sm:$0xff]
  %v2986 = vld [vmem:[%s2984 + $0x8] sm:$0xff]
  %v2987 = vld [vmem:[%s2984 + $0x10] sm:$0xf]
  %s2988 = scalar_lea.vmem %s7, 2
  %v2989 = vld [vmem:[%s2988] sm:$0x1]
  %v2991 = vlaneseq
  %v2992 = vshrl.u32 %v2991, 7
  %v2993 = vsub.s32 0, %v2992
  %v2994 = vrot.slane %v2989, %v2993
  %v2997 = vsel %vm1884, %v2980, 0
  %v3000 = vsel %vm1884, %v2981, 0
  %v3003 = vsel %vm1884, %v2982, 0
  %v3006 = vsel %vm1884, %v2983, 0
  %v3009 = vsel %vm329, %v2987, 0
  %3011 = vmatprep.subr.mxu0 0.0
  %3012 = vmatpush1.msra.mxu0 %v2985
  %3013 = vmatprep.subr.mxu0 0.0
  %3014 = vmatpush1.msra.mxu0 %v2986
  %3015 = vmatprep.subr.mxu0 0.0
  %3016 = vmatpush1.msra.mxu0 %v3009
  %3017 = vmatprep.subr.mxu0 0.0
  %3018 = vmatpush1.msra.mxu0 0.0
  %3019 = vmatprep.subr.mxu0 0.0
  %3020 = vmatpush1.msra.mxu0 0.0
  %3021 = vmatprep.subr.mxu0 0.0
  %3022 = vmatpush1.msra.mxu0 0.0
  %3023 = vmatprep.subr.mxu0 0.0
  %3024 = vmatpush1.msra.mxu0 0.0
  %3025 = vmatprep.subr.mxu0 0.0
  %3026 = vmatpush1.msra.mxu0 0.0
  %3027 = vmatprep.subr.mxu0 0.0
  %3028 = vmatpush1.msra.mxu0 0.0
  %3029 = vmatprep.subr.mxu0 0.0
  %3030 = vmatpush1.msra.mxu0 0.0
  %3031 = vmatprep.subr.mxu0 0.0
  %3032 = vmatpush1.msra.mxu0 0.0
  %3033 = vmatprep.subr.mxu0 0.0
  %3034 = vmatpush1.msra.mxu0 0.0
  %3035 = vmatprep.subr.mxu0 0.0
  %3036 = vmatpush1.msra.mxu0 0.0
  %3037 = vmatprep.subr.mxu0 0.0
  %3038 = vmatpush1.msra.mxu0 0.0
  %3039 = vmatprep.subr.mxu0 0.0
  %3040 = vmatpush1.msra.mxu0 0.0
  %3041 = vmatprep.subr.mxu0 0.0
  %3042 = vmatpush1.msra.mxu0 0.0
  %3043 = vmatprep.subr.mxu0 0.0
  %3044 = vmatpush1.msra.mxu0 0.0
  %3045 = vmatprep.subr.mxu0 0.0
  %3046 = vmatpush1.msra.mxu0 0.0
  %3047 = vmatprep.subr.mxu0 0.0
  %3048 = vmatpush1.msra.mxu0 0.0
  %3049 = vmatprep.subr.mxu0 0.0
  %3050 = vmatpush1.msra.mxu0 0.0
  %3051 = vmatprep.subr.mxu0 0.0
  %3052 = vmatpush1.msra.mxu0 0.0
  %3053 = vmatprep.subr.mxu0 0.0
  %3054 = vmatpush1.msra.mxu0 0.0
  %3055 = vmatprep.subr.mxu0 0.0
  %3056 = vmatpush1.msra.mxu0 0.0
  %3057 = vmatprep.subr.mxu0 0.0
  %3058 = vmatpush1.msra.mxu0 0.0
  %3059 = vmatprep.subr.mxu0 0.0
  %3060 = vmatpush1.msra.mxu0 0.0
  %3061 = vmatprep.subr.mxu0 0.0
  %3062 = vmatpush1.msra.mxu0 0.0
  %3063 = vmatprep.subr.mxu0 0.0
  %3064 = vmatpush1.msra.mxu0 0.0
  %3065 = vmatprep.subr.mxu0 0.0
  %3066 = vmatpush1.msra.mxu0 0.0
  %3067 = vmatprep.subr.mxu0 0.0
  %3068 = vmatpush1.msra.mxu0 0.0
  %3069 = vmatprep.subr.mxu0 0.0
  %3070 = vmatpush1.msra.mxu0 0.0
  %3071 = vmatprep.subr.mxu0 0.0
  %3072 = vmatpush1.msra.mxu0 0.0
  %3073 = vmatprep.subr.mxu0 0.0
  %3074 = vmatpush1.msra.mxu0 0.0
  %3075 = vmatprep.mubr.f32.mxu0 0.0
  %3076 = vmatmul.mubr.f32.gmra.mrb[0].mxu0 %v2997
  %v3077 = vpop.f32.mrb[0].mxu0
  %v3078 = vadd.f32 %v2994, %v3077
  %v3079 = vpop.f32.mrb[0].mxu0
  %3080 = vmatprep.mubr.f32.mxu0 0.0
  %3081 = vmatmul.mubr.f32.gmra.mrb[0].mxu0 %v3000
  %v3082 = vpop.f32.mrb[0].mxu0
  %v3083 = vadd.f32 %v2994, %v3082
  %v3084 = vpop.f32.mrb[0].mxu0
  %3085 = vmatprep.mubr.f32.mxu0 0.0
  %3086 = vmatmul.mubr.f32.gmra.mrb[0].mxu0 %v3003
  %v3087 = vpop.f32.mrb[0].mxu0
  %v3088 = vadd.f32 %v2994, %v3087
  %v3089 = vpop.f32.mrb[0].mxu0
  %3090 = vmatprep.mubr.f32.mxu0 0.0
  %3091 = vmatmul.mubr.f32.gmra.mrb[0].mxu0 %v3006
  %v3092 = vpop.f32.mrb[0].mxu0
  %v3093 = vadd.f32 %v2994, %v3092
  %v3094 = vpop.f32.mrb[0].mxu0
  %3095 = vdwg.mxu0
  %s3096 = scalar_lea.vmem %s6, 32
  %v3097 = vld [vmem:[%s3096] sm:$0xff]
  %v3098 = vld [vmem:[%s3096 + $0x8] sm:$0x3]
  %s3099 = scalar_lea.vmem %s8, 2
  %v3100 = vld [vmem:[%s3099] sm:$0x1]
  %v3102 = vlaneseq
  %v3103 = vshrl.u32 %v3102, 7
  %v3104 = vsub.s32 0, %v3103
  %v3105 = vrot.slane %v3100, %v3104
  %v3108 = vsel %vm81, %v3098, 0
  %3110 = vmatprep.subr.mxu0 0.0
  %3111 = vmatpush1.msra.mxu0 %v3097
  %3112 = vmatprep.subr.mxu0 0.0
  %3113 = vmatpush1.msra.mxu0 %v3108
  %3114 = vmatprep.subr.mxu0 0.0
  %3115 = vmatpush1.msra.mxu0 0.0
  %3116 = vmatprep.subr.mxu0 0.0
  %3117 = vmatpush1.msra.mxu0 0.0
  %3118 = vmatprep.subr.mxu0 0.0
  %3119 = vmatpush1.msra.mxu0 0.0
  %3120 = vmatprep.subr.mxu0 0.0
  %3121 = vmatpush1.msra.mxu0 0.0
  %3122 = vmatprep.subr.mxu0 0.0
  %3123 = vmatpush1.msra.mxu0 0.0
  %3124 = vmatprep.subr.mxu0 0.0
  %3125 = vmatpush1.msra.mxu0 0.0
  %3126 = vmatprep.subr.mxu0 0.0
  %3127 = vmatpush1.msra.mxu0 0.0
  %3128 = vmatprep.subr.mxu0 0.0
  %3129 = vmatpush1.msra.mxu0 0.0
  %3130 = vmatprep.subr.mxu0 0.0
  %3131 = vmatpush1.msra.mxu0 0.0
  %3132 = vmatprep.subr.mxu0 0.0
  %3133 = vmatpush1.msra.mxu0 0.0
  %3134 = vmatprep.subr.mxu0 0.0
  %3135 = vmatpush1.msra.mxu0 0.0
  %3136 = vmatprep.subr.mxu0 0.0
  %3137 = vmatpush1.msra.mxu0 0.0
  %3138 = vmatprep.subr.mxu0 0.0
  %3139 = vmatpush1.msra.mxu0 0.0
  %3140 = vmatprep.subr.mxu0 0.0
  %3141 = vmatpush1.msra.mxu0 0.0
  %3142 = vmatprep.subr.mxu0 0.0
  %3143 = vmatpush1.msra.mxu0 0.0
  %3144 = vmatprep.subr.mxu0 0.0
  %3145 = vmatpush1.msra.mxu0 0.0
  %3146 = vmatprep.subr.mxu0 0.0
  %3147 = vmatpush1.msra.mxu0 0.0
  %3148 = vmatprep.subr.mxu0 0.0
  %3149 = vmatpush1.msra.mxu0 0.0
  %3150 = vmatprep.subr.mxu0 0.0
  %3151 = vmatpush1.msra.mxu0 0.0
  %3152 = vmatprep.subr.mxu0 0.0
  %3153 = vmatpush1.msra.mxu0 0.0
  %3154 = vmatprep.subr.mxu0 0.0
  %3155 = vmatpush1.msra.mxu0 0.0
  %3156 = vmatprep.subr.mxu0 0.0
  %3157 = vmatpush1.msra.mxu0 0.0
  %3158 = vmatprep.subr.mxu0 0.0
  %3159 = vmatpush1.msra.mxu0 0.0
  %3160 = vmatprep.subr.mxu0 0.0
  %3161 = vmatpush1.msra.mxu0 0.0
  %3162 = vmatprep.subr.mxu0 0.0
  %3163 = vmatpush1.msra.mxu0 0.0
  %3164 = vmatprep.subr.mxu0 0.0
  %3165 = vmatpush1.msra.mxu0 0.0
  %3166 = vmatprep.subr.mxu0 0.0
  %3167 = vmatpush1.msra.mxu0 0.0
  %3168 = vmatprep.subr.mxu0 0.0
  %3169 = vmatpush1.msra.mxu0 0.0
  %3170 = vmatprep.subr.mxu0 0.0
  %3171 = vmatpush1.msra.mxu0 0.0
  %3172 = vmatprep.subr.mxu0 0.0
  %3173 = vmatpush1.msra.mxu0 0.0
  %3174 = vmatprep.mubr.f32.mxu0 0.0
  %3175 = vmatmul.mubr.f32.gmra.mrb[0].mxu0 %v79
  %v3176 = vpop.f32.mrb[0].mxu0
  %v3177 = vadd.f32 %v3105, %v3176
  %v3178 = vpop.f32.mrb[0].mxu0
  %3179 = vdwg.mxu0
  %v3180 = vadd.f32 %v3078, %v3177
  %v3181 = vxor.u32 %v3180, 2147483648
  %v3182 = vmul.f32 %v3181, 1.442695
  %v3183 = vpow.pop %v3182
  %v3184 = vadd.f32 %v3183, 1.0
  %v3185 = vrcp.pop %v3184
  %v3186 = vmul.f32 1.0, %v3185
  %3188 = vrot.lane.b32.xlu0 %v3177, 108
  %v3189 = vpop.permute.xlu0 %3188
  %v3191 = vmul.f32 %v3186, %v3189
  %3193 = vrot.lane.b32.xlu0 %v3191, 20
  %v3194 = vpop.permute.xlu0 %3193
  %v3196 = vadd.f32 %v3078, %v3194
  %v3197 = vtanh.pop %v3196
  %v3198 = vsub.f32 1.0, %v3186
  %3200 = vrot.lane.b32.xlu0 %v3197, 118
  %v3201 = vpop.permute.xlu0 %3200
  %v3203 = vmul.f32 %v3198, %v3201
  %v3204 = vmul.f32 %v3186, 0.0
  %v3205 = vadd.f32 %v3203, %v3204
  %3207 = vrot.lane.b32.xlu0 %v3205, 118
  %v3208 = vpop.permute.xlu0 %3207
  %v3209 = vsel %vm77, %v3208, 0
  %3211 = vmatprep.subr.mxu0 0.0
  %3212 = vmatpush1.msra.mxu0 %v3097
  %3213 = vmatprep.subr.mxu0 0.0
  %3214 = vmatpush1.msra.mxu0 %v3108
  %3215 = vmatprep.subr.mxu0 0.0
  %3216 = vmatpush1.msra.mxu0 0.0
  %3217 = vmatprep.subr.mxu0 0.0
  %3218 = vmatpush1.msra.mxu0 0.0
  %3219 = vmatprep.subr.mxu0 0.0
  %3220 = vmatpush1.msra.mxu0 0.0
  %3221 = vmatprep.subr.mxu0 0.0
  %3222 = vmatpush1.msra.mxu0 0.0
  %3223 = vmatprep.subr.mxu0 0.0
  %3224 = vmatpush1.msra.mxu0 0.0
  %3225 = vmatprep.subr.mxu0 0.0
  %3226 = vmatpush1.msra.mxu0 0.0
  %3227 = vmatprep.subr.mxu0 0.0
  %3228 = vmatpush1.msra.mxu0 0.0
  %3229 = vmatprep.subr.mxu0 0.0
  %3230 = vmatpush1.msra.mxu0 0.0
  %3231 = vmatprep.subr.mxu0 0.0
  %3232 = vmatpush1.msra.mxu0 0.0
  %3233 = vmatprep.subr.mxu0 0.0
  %3234 = vmatpush1.msra.mxu0 0.0
  %3235 = vmatprep.subr.mxu0 0.0
  %3236 = vmatpush1.msra.mxu0 0.0
  %3237 = vmatprep.subr.mxu0 0.0
  %3238 = vmatpush1.msra.mxu0 0.0
  %3239 = vmatprep.subr.mxu0 0.0
  %3240 = vmatpush1.msra.mxu0 0.0
  %3241 = vmatprep.subr.mxu0 0.0
  %3242 = vmatpush1.msra.mxu0 0.0
  %3243 = vmatprep.subr.mxu0 0.0
  %3244 = vmatpush1.msra.mxu0 0.0
  %3245 = vmatprep.subr.mxu0 0.0
  %3246 = vmatpush1.msra.mxu0 0.0
  %3247 = vmatprep.subr.mxu0 0.0
  %3248 = vmatpush1.msra.mxu0 0.0
  %3249 = vmatprep.subr.mxu0 0.0
  %3250 = vmatpush1.msra.mxu0 0.0
  %3251 = vmatprep.subr.mxu0 0.0
  %3252 = vmatpush1.msra.mxu0 0.0
  %3253 = vmatprep.subr.mxu0 0.0
  %3254 = vmatpush1.msra.mxu0 0.0
  %3255 = vmatprep.subr.mxu0 0.0
  %3256 = vmatpush1.msra.mxu0 0.0
  %3257 = vmatprep.subr.mxu0 0.0
  %3258 = vmatpush1.msra.mxu0 0.0
  %3259 = vmatprep.subr.mxu0 0.0
  %3260 = vmatpush1.msra.mxu0 0.0
  %3261 = vmatprep.subr.mxu0 0.0
  %3262 = vmatpush1.msra.mxu0 0.0
  %3263 = vmatprep.subr.mxu0 0.0
  %3264 = vmatpush1.msra.mxu0 0.0
  %3265 = vmatprep.subr.mxu0 0.0
  %3266 = vmatpush1.msra.mxu0 0.0
  %3267 = vmatprep.subr.mxu0 0.0
  %3268 = vmatpush1.msra.mxu0 0.0
  %3269 = vmatprep.subr.mxu0 0.0
  %3270 = vmatpush1.msra.mxu0 0.0
  %3271 = vmatprep.subr.mxu0 0.0
  %3272 = vmatpush1.msra.mxu0 0.0
  %3273 = vmatprep.subr.mxu0 0.0
  %3274 = vmatpush1.msra.mxu0 0.0
  %3275 = vmatprep.mubr.f32.mxu0 0.0
  %3276 = vmatmul.mubr.f32.gmra.mrb[0].mxu0 %v3209
  %v3277 = vpop.f32.mrb[0].mxu0
  %v3278 = vadd.f32 %v3105, %v3277
  %v3279 = vpop.f32.mrb[0].mxu0
  %3280 = vdwg.mxu0
  %v3281 = vadd.f32 %v3083, %v3278
  %v3282 = vxor.u32 %v3281, 2147483648
  %v3283 = vmul.f32 %v3282, 1.442695
  %v3284 = vpow.pop %v3283
  %v3285 = vadd.f32 %v3284, 1.0
  %v3286 = vrcp.pop %v3285
  %v3287 = vmul.f32 1.0, %v3286
  %3289 = vrot.lane.b32.xlu0 %v3278, 108
  %v3290 = vpop.permute.xlu0 %3289
  %v3292 = vmul.f32 %v3287, %v3290
  %3294 = vrot.lane.b32.xlu0 %v3292, 20
  %v3295 = vpop.permute.xlu0 %3294
  %v3297 = vadd.f32 %v3083, %v3295
  %v3298 = vtanh.pop %v3297
  %v3299 = vsub.f32 1.0, %v3287
  %3301 = vrot.lane.b32.xlu0 %v3298, 118
  %v3302 = vpop.permute.xlu0 %3301
  %v3304 = vmul.f32 %v3299, %v3302
  %v3305 = vmul.f32 %v3287, %v3205
  %v3306 = vadd.f32 %v3304, %v3305
  %3308 = vrot.lane.b32.xlu0 %v3306, 118
  %v3309 = vpop.permute.xlu0 %3308
  %v3310 = vsel %vm77, %v3309, 0
  %3312 = vmatprep.subr.mxu0 0.0
  %3313 = vmatpush1.msra.mxu0 %v3097
  %3314 = vmatprep.subr.mxu0 0.0
  %3315 = vmatpush1.msra.mxu0 %v3108
  %3316 = vmatprep.subr.mxu0 0.0
  %3317 = vmatpush1.msra.mxu0 0.0
  %3318 = vmatprep.subr.mxu0 0.0
  %3319 = vmatpush1.msra.mxu0 0.0
  %3320 = vmatprep.subr.mxu0 0.0
  %3321 = vmatpush1.msra.mxu0 0.0
  %3322 = vmatprep.subr.mxu0 0.0
  %3323 = vmatpush1.msra.mxu0 0.0
  %3324 = vmatprep.subr.mxu0 0.0
  %3325 = vmatpush1.msra.mxu0 0.0
  %3326 = vmatprep.subr.mxu0 0.0
  %3327 = vmatpush1.msra.mxu0 0.0
  %3328 = vmatprep.subr.mxu0 0.0
  %3329 = vmatpush1.msra.mxu0 0.0
  %3330 = vmatprep.subr.mxu0 0.0
  %3331 = vmatpush1.msra.mxu0 0.0
  %3332 = vmatprep.subr.mxu0 0.0
  %3333 = vmatpush1.msra.mxu0 0.0
  %3334 = vmatprep.subr.mxu0 0.0
  %3335 = vmatpush1.msra.mxu0 0.0
  %3336 = vmatprep.subr.mxu0 0.0
  %3337 = vmatpush1.msra.mxu0 0.0
  %3338 = vmatprep.subr.mxu0 0.0
  %3339 = vmatpush1.msra.mxu0 0.0
  %3340 = vmatprep.subr.mxu0 0.0
  %3341 = vmatpush1.msra.mxu0 0.0
  %3342 = vmatprep.subr.mxu0 0.0
  %3343 = vmatpush1.msra.mxu0 0.0
  %3344 = vmatprep.subr.mxu0 0.0
  %3345 = vmatpush1.msra.mxu0 0.0
  %3346 = vmatprep.subr.mxu0 0.0
  %3347 = vmatpush1.msra.mxu0 0.0
  %3348 = vmatprep.subr.mxu0 0.0
  %3349 = vmatpush1.msra.mxu0 0.0
  %3350 = vmatprep.subr.mxu0 0.0
  %3351 = vmatpush1.msra.mxu0 0.0
  %3352 = vmatprep.subr.mxu0 0.0
  %3353 = vmatpush1.msra.mxu0 0.0
  %3354 = vmatprep.subr.mxu0 0.0
  %3355 = vmatpush1.msra.mxu0 0.0
  %3356 = vmatprep.subr.mxu0 0.0
  %3357 = vmatpush1.msra.mxu0 0.0
  %3358 = vmatprep.subr.mxu0 0.0
  %3359 = vmatpush1.msra.mxu0 0.0
  %3360 = vmatprep.subr.mxu0 0.0
  %3361 = vmatpush1.msra.mxu0 0.0
  %3362 = vmatprep.subr.mxu0 0.0
  %3363 = vmatpush1.msra.mxu0 0.0
  %3364 = vmatprep.subr.mxu0 0.0
  %3365 = vmatpush1.msra.mxu0 0.0
  %3366 = vmatprep.subr.mxu0 0.0
  %3367 = vmatpush1.msra.mxu0 0.0
  %3368 = vmatprep.subr.mxu0 0.0
  %3369 = vmatpush1.msra.mxu0 0.0
  %3370 = vmatprep.subr.mxu0 0.0
  %3371 = vmatpush1.msra.mxu0 0.0
  %3372 = vmatprep.subr.mxu0 0.0
  %3373 = vmatpush1.msra.mxu0 0.0
  %3374 = vmatprep.subr.mxu0 0.0
  %3375 = vmatpush1.msra.mxu0 0.0
  %3376 = vmatprep.mubr.f32.mxu0 0.0
  %3377 = vmatmul.mubr.f32.gmra.mrb[0].mxu0 %v3310
  %v3378 = vpop.f32.mrb[0].mxu0
  %v3379 = vadd.f32 %v3105, %v3378
  %v3380 = vpop.f32.mrb[0].mxu0
  %3381 = vdwg.mxu0
  %v3382 = vadd.f32 %v3088, %v3379
  %v3383 = vxor.u32 %v3382, 2147483648
  %v3384 = vmul.f32 %v3383, 1.442695
  %v3385 = vpow.pop %v3384
  %v3386 = vadd.f32 %v3385, 1.0
  %v3387 = vrcp.pop %v3386
  %v3388 = vmul.f32 1.0, %v3387
  %3390 = vrot.lane.b32.xlu0 %v3379, 108
  %v3391 = vpop.permute.xlu0 %3390
  %v3393 = vmul.f32 %v3388, %v3391
  %3395 = vrot.lane.b32.xlu0 %v3393, 20
  %v3396 = vpop.permute.xlu0 %3395
  %v3398 = vadd.f32 %v3088, %v3396
  %v3399 = vtanh.pop %v3398
  %v3400 = vsub.f32 1.0, %v3388
  %3402 = vrot.lane.b32.xlu0 %v3399, 118
  %v3403 = vpop.permute.xlu0 %3402
  %v3405 = vmul.f32 %v3400, %v3403
  %v3406 = vmul.f32 %v3388, %v3306
  %v3407 = vadd.f32 %v3405, %v3406
  %3409 = vrot.lane.b32.xlu0 %v3407, 118
  %v3410 = vpop.permute.xlu0 %3409
  %v3411 = vsel %vm77, %v3410, 0
  %3413 = vmatprep.subr.mxu0 0.0
  %3414 = vmatpush1.msra.mxu0 %v3097
  %3415 = vmatprep.subr.mxu0 0.0
  %3416 = vmatpush1.msra.mxu0 %v3108
  %3417 = vmatprep.subr.mxu0 0.0
  %3418 = vmatpush1.msra.mxu0 0.0
  %3419 = vmatprep.subr.mxu0 0.0
  %3420 = vmatpush1.msra.mxu0 0.0
  %3421 = vmatprep.subr.mxu0 0.0
  %3422 = vmatpush1.msra.mxu0 0.0
  %3423 = vmatprep.subr.mxu0 0.0
  %3424 = vmatpush1.msra.mxu0 0.0
  %3425 = vmatprep.subr.mxu0 0.0
  %3426 = vmatpush1.msra.mxu0 0.0
  %3427 = vmatprep.subr.mxu0 0.0
  %3428 = vmatpush1.msra.mxu0 0.0
  %3429 = vmatprep.subr.mxu0 0.0
  %3430 = vmatpush1.msra.mxu0 0.0
  %3431 = vmatprep.subr.mxu0 0.0
  %3432 = vmatpush1.msra.mxu0 0.0
  %3433 = vmatprep.subr.mxu0 0.0
  %3434 = vmatpush1.msra.mxu0 0.0
  %3435 = vmatprep.subr.mxu0 0.0
  %3436 = vmatpush1.msra.mxu0 0.0
  %3437 = vmatprep.subr.mxu0 0.0
  %3438 = vmatpush1.msra.mxu0 0.0
  %3439 = vmatprep.subr.mxu0 0.0
  %3440 = vmatpush1.msra.mxu0 0.0
  %3441 = vmatprep.subr.mxu0 0.0
  %3442 = vmatpush1.msra.mxu0 0.0
  %3443 = vmatprep.subr.mxu0 0.0
  %3444 = vmatpush1.msra.mxu0 0.0
  %3445 = vmatprep.subr.mxu0 0.0
  %3446 = vmatpush1.msra.mxu0 0.0
  %3447 = vmatprep.subr.mxu0 0.0
  %3448 = vmatpush1.msra.mxu0 0.0
  %3449 = vmatprep.subr.mxu0 0.0
  %3450 = vmatpush1.msra.mxu0 0.0
  %3451 = vmatprep.subr.mxu0 0.0
  %3452 = vmatpush1.msra.mxu0 0.0
  %3453 = vmatprep.subr.mxu0 0.0
  %3454 = vmatpush1.msra.mxu0 0.0
  %3455 = vmatprep.subr.mxu0 0.0
  %3456 = vmatpush1.msra.mxu0 0.0
  %3457 = vmatprep.subr.mxu0 0.0
  %3458 = vmatpush1.msra.mxu0 0.0
  %3459 = vmatprep.subr.mxu0 0.0
  %3460 = vmatpush1.msra.mxu0 0.0
  %3461 = vmatprep.subr.mxu0 0.0
  %3462 = vmatpush1.msra.mxu0 0.0
  %3463 = vmatprep.subr.mxu0 0.0
  %3464 = vmatpush1.msra.mxu0 0.0
  %3465 = vmatprep.subr.mxu0 0.0
  %3466 = vmatpush1.msra.mxu0 0.0
  %3467 = vmatprep.subr.mxu0 0.0
  %3468 = vmatpush1.msra.mxu0 0.0
  %3469 = vmatprep.subr.mxu0 0.0
  %3470 = vmatpush1.msra.mxu0 0.0
  %3471 = vmatprep.subr.mxu0 0.0
  %3472 = vmatpush1.msra.mxu0 0.0
  %3473 = vmatprep.subr.mxu0 0.0
  %3474 = vmatpush1.msra.mxu0 0.0
  %3475 = vmatprep.subr.mxu0 0.0
  %3476 = vmatpush1.msra.mxu0 0.0
  %3477 = vmatprep.mubr.f32.mxu0 0.0
  %3478 = vmatmul.mubr.f32.gmra.mrb[0].mxu0 %v3411
  %v3479 = vpop.f32.mrb[0].mxu0
  %v3480 = vadd.f32 %v3105, %v3479
  %v3481 = vpop.f32.mrb[0].mxu0
  %3482 = vdwg.mxu0
  %v3483 = vadd.f32 %v3093, %v3480
  %v3484 = vxor.u32 %v3483, 2147483648
  %v3485 = vmul.f32 %v3484, 1.442695
  %v3486 = vpow.pop %v3485
  %v3487 = vadd.f32 %v3486, 1.0
  %v3488 = vrcp.pop %v3487
  %v3489 = vmul.f32 1.0, %v3488
  %3491 = vrot.lane.b32.xlu0 %v3480, 108
  %v3492 = vpop.permute.xlu0 %3491
  %v3494 = vmul.f32 %v3489, %v3492
  %3496 = vrot.lane.b32.xlu0 %v3494, 20
  %v3497 = vpop.permute.xlu0 %3496
  %v3499 = vadd.f32 %v3093, %v3497
  %v3500 = vtanh.pop %v3499
  %v3501 = vsub.f32 1.0, %v3489
  %3503 = vrot.lane.b32.xlu0 %v3500, 118
  %v3504 = vpop.permute.xlu0 %3503
  %v3506 = vmul.f32 %v3501, %v3504
  %v3507 = vmul.f32 %v3489, %v3407
  %v3508 = vadd.f32 %v3506, %v3507
  %3511 = vrot.lane.b32.xlu0 %v3508, 118
  %v3512 = vpop.permute.xlu0 %3511
  %v3514 = vsel %vm2401, %v3208, %v3512
  %v3517 = vsel %vm2401, %v3309, %v3410
  %v3518 = vsel %vm2401, %v3410, %v3309
  %v3519 = vsel %vm2401, %v3512, %v3208
  %3524 = vrot.lane.b32.xlu0 %v3519, 10
  %v3525 = vpop.permute.xlu0 %3524
  %3526 = vrot.lane.b32.xlu0 %v3518, 10
  %v3527 = vpop.permute.xlu0 %3526
  %3528 = vrot.lane.b32.xlu0 %v3517, 10
  %v3529 = vpop.permute.xlu0 %3528
  %3530 = vrot.lane.b32.xlu0 %v3514, 10
  %v3531 = vpop.permute.xlu0 %3530
  %v3536 = vsel %vm77, %v3514, %v3525
  %v3537 = vsel %vm77, %v3517, %v3527
  %v3538 = vsel %vm77, %v3518, %v3529
  %v3539 = vsel %vm77, %v3519, %v3531
  %s3540 = scalar_lea.vmem %s5, 72
  %v3541 = vld [vmem:[%s3540] sm:$0xff]
  %v3542 = vld [vmem:[%s3540 + $0x8] sm:$0xff]
  %v3543 = vld [vmem:[%s3540 + $0x10] sm:$0xf]
  %s3544 = scalar_lea.vmem %s7, 3
  %v3545 = vld [vmem:[%s3544] sm:$0x1]
  %v3547 = vlaneseq
  %v3548 = vshrl.u32 %v3547, 7
  %v3549 = vsub.s32 0, %v3548
  %v3550 = vrot.slane %v3545, %v3549
  %v3553 = vsel %vm1884, %v3536, 0
  %v3556 = vsel %vm1884, %v3537, 0
  %v3559 = vsel %vm1884, %v3538, 0
  %v3562 = vsel %vm1884, %v3539, 0
  %v3565 = vsel %vm329, %v3543, 0
  %3567 = vmatprep.subr.mxu0 0.0
  %3568 = vmatpush1.msra.mxu0 %v3541
  %3569 = vmatprep.subr.mxu0 0.0
  %3570 = vmatpush1.msra.mxu0 %v3542
  %3571 = vmatprep.subr.mxu0 0.0
  %3572 = vmatpush1.msra.mxu0 %v3565
  %3573 = vmatprep.subr.mxu0 0.0
  %3574 = vmatpush1.msra.mxu0 0.0
  %3575 = vmatprep.subr.mxu0 0.0
  %3576 = vmatpush1.msra.mxu0 0.0
  %3577 = vmatprep.subr.mxu0 0.0
  %3578 = vmatpush1.msra.mxu0 0.0
  %3579 = vmatprep.subr.mxu0 0.0
  %3580 = vmatpush1.msra.mxu0 0.0
  %3581 = vmatprep.subr.mxu0 0.0
  %3582 = vmatpush1.msra.mxu0 0.0
  %3583 = vmatprep.subr.mxu0 0.0
  %3584 = vmatpush1.msra.mxu0 0.0
  %3585 = vmatprep.subr.mxu0 0.0
  %3586 = vmatpush1.msra.mxu0 0.0
  %3587 = vmatprep.subr.mxu0 0.0
  %3588 = vmatpush1.msra.mxu0 0.0
  %3589 = vmatprep.subr.mxu0 0.0
  %3590 = vmatpush1.msra.mxu0 0.0
  %3591 = vmatprep.subr.mxu0 0.0
  %3592 = vmatpush1.msra.mxu0 0.0
  %3593 = vmatprep.subr.mxu0 0.0
  %3594 = vmatpush1.msra.mxu0 0.0
  %3595 = vmatprep.subr.mxu0 0.0
  %3596 = vmatpush1.msra.mxu0 0.0
  %3597 = vmatprep.subr.mxu0 0.0
  %3598 = vmatpush1.msra.mxu0 0.0
  %3599 = vmatprep.subr.mxu0 0.0
  %3600 = vmatpush1.msra.mxu0 0.0
  %3601 = vmatprep.subr.mxu0 0.0
  %3602 = vmatpush1.msra.mxu0 0.0
  %3603 = vmatprep.subr.mxu0 0.0
  %3604 = vmatpush1.msra.mxu0 0.0
  %3605 = vmatprep.subr.mxu0 0.0
  %3606 = vmatpush1.msra.mxu0 0.0
  %3607 = vmatprep.subr.mxu0 0.0
  %3608 = vmatpush1.msra.mxu0 0.0
  %3609 = vmatprep.subr.mxu0 0.0
  %3610 = vmatpush1.msra.mxu0 0.0
  %3611 = vmatprep.subr.mxu0 0.0
  %3612 = vmatpush1.msra.mxu0 0.0
  %3613 = vmatprep.subr.mxu0 0.0
  %3614 = vmatpush1.msra.mxu0 0.0
  %3615 = vmatprep.subr.mxu0 0.0
  %3616 = vmatpush1.msra.mxu0 0.0
  %3617 = vmatprep.subr.mxu0 0.0
  %3618 = vmatpush1.msra.mxu0 0.0
  %3619 = vmatprep.subr.mxu0 0.0
  %3620 = vmatpush1.msra.mxu0 0.0
  %3621 = vmatprep.subr.mxu0 0.0
  %3622 = vmatpush1.msra.mxu0 0.0
  %3623 = vmatprep.subr.mxu0 0.0
  %3624 = vmatpush1.msra.mxu0 0.0
  %3625 = vmatprep.subr.mxu0 0.0
  %3626 = vmatpush1.msra.mxu0 0.0
  %3627 = vmatprep.subr.mxu0 0.0
  %3628 = vmatpush1.msra.mxu0 0.0
  %3629 = vmatprep.subr.mxu0 0.0
  %3630 = vmatpush1.msra.mxu0 0.0
  %3631 = vmatprep.mubr.f32.mxu0 0.0
  %3632 = vmatmul.mubr.f32.gmra.mrb[0].mxu0 %v3553
  %v3633 = vpop.f32.mrb[0].mxu0
  %v3634 = vadd.f32 %v3550, %v3633
  %v3635 = vpop.f32.mrb[0].mxu0
  %3636 = vmatprep.mubr.f32.mxu0 0.0
  %3637 = vmatmul.mubr.f32.gmra.mrb[0].mxu0 %v3556
  %v3638 = vpop.f32.mrb[0].mxu0
  %v3639 = vadd.f32 %v3550, %v3638
  %v3640 = vpop.f32.mrb[0].mxu0
  %3641 = vmatprep.mubr.f32.mxu0 0.0
  %3642 = vmatmul.mubr.f32.gmra.mrb[0].mxu0 %v3559
  %v3643 = vpop.f32.mrb[0].mxu0
  %v3644 = vadd.f32 %v3550, %v3643
  %v3645 = vpop.f32.mrb[0].mxu0
  %3646 = vmatprep.mubr.f32.mxu0 0.0
  %3647 = vmatmul.mubr.f32.gmra.mrb[0].mxu0 %v3562
  %v3648 = vpop.f32.mrb[0].mxu0
  %v3649 = vadd.f32 %v3550, %v3648
  %v3650 = vpop.f32.mrb[0].mxu0
  %3651 = vdwg.mxu0
  %s3652 = scalar_lea.vmem %s6, 48
  %v3653 = vld [vmem:[%s3652] sm:$0xff]
  %v3654 = vld [vmem:[%s3652 + $0x8] sm:$0x3]
  %s3655 = scalar_lea.vmem %s8, 3
  %v3656 = vld [vmem:[%s3655] sm:$0x1]
  %v3658 = vlaneseq
  %v3659 = vshrl.u32 %v3658, 7
  %v3660 = vsub.s32 0, %v3659
  %v3661 = vrot.slane %v3656, %v3660
  %v3664 = vsel %vm81, %v3654, 0
  %3666 = vmatprep.subr.mxu0 0.0
  %3667 = vmatpush1.msra.mxu0 %v3653
  %3668 = vmatprep.subr.mxu0 0.0
  %3669 = vmatpush1.msra.mxu0 %v3664
  %3670 = vmatprep.subr.mxu0 0.0
  %3671 = vmatpush1.msra.mxu0 0.0
  %3672 = vmatprep.subr.mxu0 0.0
  %3673 = vmatpush1.msra.mxu0 0.0
  %3674 = vmatprep.subr.mxu0 0.0
  %3675 = vmatpush1.msra.mxu0 0.0
  %3676 = vmatprep.subr.mxu0 0.0
  %3677 = vmatpush1.msra.mxu0 0.0
  %3678 = vmatprep.subr.mxu0 0.0
  %3679 = vmatpush1.msra.mxu0 0.0
  %3680 = vmatprep.subr.mxu0 0.0
  %3681 = vmatpush1.msra.mxu0 0.0
  %3682 = vmatprep.subr.mxu0 0.0
  %3683 = vmatpush1.msra.mxu0 0.0
  %3684 = vmatprep.subr.mxu0 0.0
  %3685 = vmatpush1.msra.mxu0 0.0
  %3686 = vmatprep.subr.mxu0 0.0
  %3687 = vmatpush1.msra.mxu0 0.0
  %3688 = vmatprep.subr.mxu0 0.0
  %3689 = vmatpush1.msra.mxu0 0.0
  %3690 = vmatprep.subr.mxu0 0.0
  %3691 = vmatpush1.msra.mxu0 0.0
  %3692 = vmatprep.subr.mxu0 0.0
  %3693 = vmatpush1.msra.mxu0 0.0
  %3694 = vmatprep.subr.mxu0 0.0
  %3695 = vmatpush1.msra.mxu0 0.0
  %3696 = vmatprep.subr.mxu0 0.0
  %3697 = vmatpush1.msra.mxu0 0.0
  %3698 = vmatprep.subr.mxu0 0.0
  %3699 = vmatpush1.msra.mxu0 0.0
  %3700 = vmatprep.subr.mxu0 0.0
  %3701 = vmatpush1.msra.mxu0 0.0
  %3702 = vmatprep.subr.mxu0 0.0
  %3703 = vmatpush1.msra.mxu0 0.0
  %3704 = vmatprep.subr.mxu0 0.0
  %3705 = vmatpush1.msra.mxu0 0.0
  %3706 = vmatprep.subr.mxu0 0.0
  %3707 = vmatpush1.msra.mxu0 0.0
  %3708 = vmatprep.subr.mxu0 0.0
  %3709 = vmatpush1.msra.mxu0 0.0
  %3710 = vmatprep.subr.mxu0 0.0
  %3711 = vmatpush1.msra.mxu0 0.0
  %3712 = vmatprep.subr.mxu0 0.0
  %3713 = vmatpush1.msra.mxu0 0.0
  %3714 = vmatprep.subr.mxu0 0.0
  %3715 = vmatpush1.msra.mxu0 0.0
  %3716 = vmatprep.subr.mxu0 0.0
  %3717 = vmatpush1.msra.mxu0 0.0
  %3718 = vmatprep.subr.mxu0 0.0
  %3719 = vmatpush1.msra.mxu0 0.0
  %3720 = vmatprep.subr.mxu0 0.0
  %3721 = vmatpush1.msra.mxu0 0.0
  %3722 = vmatprep.subr.mxu0 0.0
  %3723 = vmatpush1.msra.mxu0 0.0
  %3724 = vmatprep.subr.mxu0 0.0
  %3725 = vmatpush1.msra.mxu0 0.0
  %3726 = vmatprep.subr.mxu0 0.0
  %3727 = vmatpush1.msra.mxu0 0.0
  %3728 = vmatprep.subr.mxu0 0.0
  %3729 = vmatpush1.msra.mxu0 0.0
  %3730 = vmatprep.mubr.f32.mxu0 0.0
  %3731 = vmatmul.mubr.f32.gmra.mrb[0].mxu0 %v79
  %v3732 = vpop.f32.mrb[0].mxu0
  %v3733 = vadd.f32 %v3661, %v3732
  %v3734 = vpop.f32.mrb[0].mxu0
  %3735 = vdwg.mxu0
  %v3736 = vadd.f32 %v3634, %v3733
  %v3737 = vxor.u32 %v3736, 2147483648
  %v3738 = vmul.f32 %v3737, 1.442695
  %v3739 = vpow.pop %v3738
  %v3740 = vadd.f32 %v3739, 1.0
  %v3741 = vrcp.pop %v3740
  %v3742 = vmul.f32 1.0, %v3741
  %3744 = vrot.lane.b32.xlu0 %v3733, 108
  %v3745 = vpop.permute.xlu0 %3744
  %v3747 = vmul.f32 %v3742, %v3745
  %3749 = vrot.lane.b32.xlu0 %v3747, 20
  %v3750 = vpop.permute.xlu0 %3749
  %v3752 = vadd.f32 %v3634, %v3750
  %v3753 = vtanh.pop %v3752
  %v3754 = vsub.f32 1.0, %v3742
  %3756 = vrot.lane.b32.xlu0 %v3753, 118
  %v3757 = vpop.permute.xlu0 %3756
  %v3759 = vmul.f32 %v3754, %v3757
  %v3760 = vmul.f32 %v3742, 0.0
  %v3761 = vadd.f32 %v3759, %v3760
  %3763 = vrot.lane.b32.xlu0 %v3761, 118
  %v3764 = vpop.permute.xlu0 %3763
  %v3765 = vsel %vm77, %v3764, 0
  %3767 = vmatprep.subr.mxu0 0.0
  %3768 = vmatpush1.msra.mxu0 %v3653
  %3769 = vmatprep.subr.mxu0 0.0
  %3770 = vmatpush1.msra.mxu0 %v3664
  %3771 = vmatprep.subr.mxu0 0.0
  %3772 = vmatpush1.msra.mxu0 0.0
  %3773 = vmatprep.subr.mxu0 0.0
  %3774 = vmatpush1.msra.mxu0 0.0
  %3775 = vmatprep.subr.mxu0 0.0
  %3776 = vmatpush1.msra.mxu0 0.0
  %3777 = vmatprep.subr.mxu0 0.0
  %3778 = vmatpush1.msra.mxu0 0.0
  %3779 = vmatprep.subr.mxu0 0.0
  %3780 = vmatpush1.msra.mxu0 0.0
  %3781 = vmatprep.subr.mxu0 0.0
  %3782 = vmatpush1.msra.mxu0 0.0
  %3783 = vmatprep.subr.mxu0 0.0
  %3784 = vmatpush1.msra.mxu0 0.0
  %3785 = vmatprep.subr.mxu0 0.0
  %3786 = vmatpush1.msra.mxu0 0.0
  %3787 = vmatprep.subr.mxu0 0.0
  %3788 = vmatpush1.msra.mxu0 0.0
  %3789 = vmatprep.subr.mxu0 0.0
  %3790 = vmatpush1.msra.mxu0 0.0
  %3791 = vmatprep.subr.mxu0 0.0
  %3792 = vmatpush1.msra.mxu0 0.0
  %3793 = vmatprep.subr.mxu0 0.0
  %3794 = vmatpush1.msra.mxu0 0.0
  %3795 = vmatprep.subr.mxu0 0.0
  %3796 = vmatpush1.msra.mxu0 0.0
  %3797 = vmatprep.subr.mxu0 0.0
  %3798 = vmatpush1.msra.mxu0 0.0
  %3799 = vmatprep.subr.mxu0 0.0
  %3800 = vmatpush1.msra.mxu0 0.0
  %3801 = vmatprep.subr.mxu0 0.0
  %3802 = vmatpush1.msra.mxu0 0.0
  %3803 = vmatprep.subr.mxu0 0.0
  %3804 = vmatpush1.msra.mxu0 0.0
  %3805 = vmatprep.subr.mxu0 0.0
  %3806 = vmatpush1.msra.mxu0 0.0
  %3807 = vmatprep.subr.mxu0 0.0
  %3808 = vmatpush1.msra.mxu0 0.0
  %3809 = vmatprep.subr.mxu0 0.0
  %3810 = vmatpush1.msra.mxu0 0.0
  %3811 = vmatprep.subr.mxu0 0.0
  %3812 = vmatpush1.msra.mxu0 0.0
  %3813 = vmatprep.subr.mxu0 0.0
  %3814 = vmatpush1.msra.mxu0 0.0
  %3815 = vmatprep.subr.mxu0 0.0
  %3816 = vmatpush1.msra.mxu0 0.0
  %3817 = vmatprep.subr.mxu0 0.0
  %3818 = vmatpush1.msra.mxu0 0.0
  %3819 = vmatprep.subr.mxu0 0.0
  %3820 = vmatpush1.msra.mxu0 0.0
  %3821 = vmatprep.subr.mxu0 0.0
  %3822 = vmatpush1.msra.mxu0 0.0
  %3823 = vmatprep.subr.mxu0 0.0
  %3824 = vmatpush1.msra.mxu0 0.0
  %3825 = vmatprep.subr.mxu0 0.0
  %3826 = vmatpush1.msra.mxu0 0.0
  %3827 = vmatprep.subr.mxu0 0.0
  %3828 = vmatpush1.msra.mxu0 0.0
  %3829 = vmatprep.subr.mxu0 0.0
  %3830 = vmatpush1.msra.mxu0 0.0
  %3831 = vmatprep.mubr.f32.mxu0 0.0
  %3832 = vmatmul.mubr.f32.gmra.mrb[0].mxu0 %v3765
  %v3833 = vpop.f32.mrb[0].mxu0
  %v3834 = vadd.f32 %v3661, %v3833
  %v3835 = vpop.f32.mrb[0].mxu0
  %3836 = vdwg.mxu0
  %v3837 = vadd.f32 %v3639, %v3834
  %v3838 = vxor.u32 %v3837, 2147483648
  %v3839 = vmul.f32 %v3838, 1.442695
  %v3840 = vpow.pop %v3839
  %v3841 = vadd.f32 %v3840, 1.0
  %v3842 = vrcp.pop %v3841
  %v3843 = vmul.f32 1.0, %v3842
  %3845 = vrot.lane.b32.xlu0 %v3834, 108
  %v3846 = vpop.permute.xlu0 %3845
  %v3848 = vmul.f32 %v3843, %v3846
  %3850 = vrot.lane.b32.xlu0 %v3848, 20
  %v3851 = vpop.permute.xlu0 %3850
  %v3853 = vadd.f32 %v3639, %v3851
  %v3854 = vtanh.pop %v3853
  %v3855 = vsub.f32 1.0, %v3843
  %3857 = vrot.lane.b32.xlu0 %v3854, 118
  %v3858 = vpop.permute.xlu0 %3857
  %v3860 = vmul.f32 %v3855, %v3858
  %v3861 = vmul.f32 %v3843, %v3761
  %v3862 = vadd.f32 %v3860, %v3861
  %3864 = vrot.lane.b32.xlu0 %v3862, 118
  %v3865 = vpop.permute.xlu0 %3864
  %v3866 = vsel %vm77, %v3865, 0
  %3868 = vmatprep.subr.mxu0 0.0
  %3869 = vmatpush1.msra.mxu0 %v3653
  %3870 = vmatprep.subr.mxu0 0.0
  %3871 = vmatpush1.msra.mxu0 %v3664
  %3872 = vmatprep.subr.mxu0 0.0
  %3873 = vmatpush1.msra.mxu0 0.0
  %3874 = vmatprep.subr.mxu0 0.0
  %3875 = vmatpush1.msra.mxu0 0.0
  %3876 = vmatprep.subr.mxu0 0.0
  %3877 = vmatpush1.msra.mxu0 0.0
  %3878 = vmatprep.subr.mxu0 0.0
  %3879 = vmatpush1.msra.mxu0 0.0
  %3880 = vmatprep.subr.mxu0 0.0
  %3881 = vmatpush1.msra.mxu0 0.0
  %3882 = vmatprep.subr.mxu0 0.0
  %3883 = vmatpush1.msra.mxu0 0.0
  %3884 = vmatprep.subr.mxu0 0.0
  %3885 = vmatpush1.msra.mxu0 0.0
  %3886 = vmatprep.subr.mxu0 0.0
  %3887 = vmatpush1.msra.mxu0 0.0
  %3888 = vmatprep.subr.mxu0 0.0
  %3889 = vmatpush1.msra.mxu0 0.0
  %3890 = vmatprep.subr.mxu0 0.0
  %3891 = vmatpush1.msra.mxu0 0.0
  %3892 = vmatprep.subr.mxu0 0.0
  %3893 = vmatpush1.msra.mxu0 0.0
  %3894 = vmatprep.subr.mxu0 0.0
  %3895 = vmatpush1.msra.mxu0 0.0
  %3896 = vmatprep.subr.mxu0 0.0
  %3897 = vmatpush1.msra.mxu0 0.0
  %3898 = vmatprep.subr.mxu0 0.0
  %3899 = vmatpush1.msra.mxu0 0.0
  %3900 = vmatprep.subr.mxu0 0.0
  %3901 = vmatpush1.msra.mxu0 0.0
  %3902 = vmatprep.subr.mxu0 0.0
  %3903 = vmatpush1.msra.mxu0 0.0
  %3904 = vmatprep.subr.mxu0 0.0
  %3905 = vmatpush1.msra.mxu0 0.0
  %3906 = vmatprep.subr.mxu0 0.0
  %3907 = vmatpush1.msra.mxu0 0.0
  %3908 = vmatprep.subr.mxu0 0.0
  %3909 = vmatpush1.msra.mxu0 0.0
  %3910 = vmatprep.subr.mxu0 0.0
  %3911 = vmatpush1.msra.mxu0 0.0
  %3912 = vmatprep.subr.mxu0 0.0
  %3913 = vmatpush1.msra.mxu0 0.0
  %3914 = vmatprep.subr.mxu0 0.0
  %3915 = vmatpush1.msra.mxu0 0.0
  %3916 = vmatprep.subr.mxu0 0.0
  %3917 = vmatpush1.msra.mxu0 0.0
  %3918 = vmatprep.subr.mxu0 0.0
  %3919 = vmatpush1.msra.mxu0 0.0
  %3920 = vmatprep.subr.mxu0 0.0
  %3921 = vmatpush1.msra.mxu0 0.0
  %3922 = vmatprep.subr.mxu0 0.0
  %3923 = vmatpush1.msra.mxu0 0.0
  %3924 = vmatprep.subr.mxu0 0.0
  %3925 = vmatpush1.msra.mxu0 0.0
  %3926 = vmatprep.subr.mxu0 0.0
  %3927 = vmatpush1.msra.mxu0 0.0
  %3928 = vmatprep.subr.mxu0 0.0
  %3929 = vmatpush1.msra.mxu0 0.0
  %3930 = vmatprep.subr.mxu0 0.0
  %3931 = vmatpush1.msra.mxu0 0.0
  %3932 = vmatprep.mubr.f32.mxu0 0.0
  %3933 = vmatmul.mubr.f32.gmra.mrb[0].mxu0 %v3866
  %v3934 = vpop.f32.mrb[0].mxu0
  %v3935 = vadd.f32 %v3661, %v3934
  %v3936 = vpop.f32.mrb[0].mxu0
  %3937 = vdwg.mxu0
  %v3938 = vadd.f32 %v3644, %v3935
  %v3939 = vxor.u32 %v3938, 2147483648
  %v3940 = vmul.f32 %v3939, 1.442695
  %v3941 = vpow.pop %v3940
  %v3942 = vadd.f32 %v3941, 1.0
  %v3943 = vrcp.pop %v3942
  %v3944 = vmul.f32 1.0, %v3943
  %3946 = vrot.lane.b32.xlu0 %v3935, 108
  %v3947 = vpop.permute.xlu0 %3946
  %v3949 = vmul.f32 %v3944, %v3947
  %3951 = vrot.lane.b32.xlu0 %v3949, 20
  %v3952 = vpop.permute.xlu0 %3951
  %v3954 = vadd.f32 %v3644, %v3952
  %v3955 = vtanh.pop %v3954
  %v3956 = vsub.f32 1.0, %v3944
  %3958 = vrot.lane.b32.xlu0 %v3955, 118
  %v3959 = vpop.permute.xlu0 %3958
  %v3961 = vmul.f32 %v3956, %v3959
  %v3962 = vmul.f32 %v3944, %v3862
  %v3963 = vadd.f32 %v3961, %v3962
  %3965 = vrot.lane.b32.xlu0 %v3963, 118
  %v3966 = vpop.permute.xlu0 %3965
  %v3967 = vsel %vm77, %v3966, 0
  %3969 = vmatprep.subr.mxu0 0.0
  %3970 = vmatpush1.msra.mxu0 %v3653
  %3971 = vmatprep.subr.mxu0 0.0
  %3972 = vmatpush1.msra.mxu0 %v3664
  %3973 = vmatprep.subr.mxu0 0.0
  %3974 = vmatpush1.msra.mxu0 0.0
  %3975 = vmatprep.subr.mxu0 0.0
  %3976 = vmatpush1.msra.mxu0 0.0
  %3977 = vmatprep.subr.mxu0 0.0
  %3978 = vmatpush1.msra.mxu0 0.0
  %3979 = vmatprep.subr.mxu0 0.0
  %3980 = vmatpush1.msra.mxu0 0.0
  %3981 = vmatprep.subr.mxu0 0.0
  %3982 = vmatpush1.msra.mxu0 0.0
  %3983 = vmatprep.subr.mxu0 0.0
  %3984 = vmatpush1.msra.mxu0 0.0
  %3985 = vmatprep.subr.mxu0 0.0
  %3986 = vmatpush1.msra.mxu0 0.0
  %3987 = vmatprep.subr.mxu0 0.0
  %3988 = vmatpush1.msra.mxu0 0.0
  %3989 = vmatprep.subr.mxu0 0.0
  %3990 = vmatpush1.msra.mxu0 0.0
  %3991 = vmatprep.subr.mxu0 0.0
  %3992 = vmatpush1.msra.mxu0 0.0
  %3993 = vmatprep.subr.mxu0 0.0
  %3994 = vmatpush1.msra.mxu0 0.0
  %3995 = vmatprep.subr.mxu0 0.0
  %3996 = vmatpush1.msra.mxu0 0.0
  %3997 = vmatprep.subr.mxu0 0.0
  %3998 = vmatpush1.msra.mxu0 0.0
  %3999 = vmatprep.subr.mxu0 0.0
  %4000 = vmatpush1.msra.mxu0 0.0
  %4001 = vmatprep.subr.mxu0 0.0
  %4002 = vmatpush1.msra.mxu0 0.0
  %4003 = vmatprep.subr.mxu0 0.0
  %4004 = vmatpush1.msra.mxu0 0.0
  %4005 = vmatprep.subr.mxu0 0.0
  %4006 = vmatpush1.msra.mxu0 0.0
  %4007 = vmatprep.subr.mxu0 0.0
  %4008 = vmatpush1.msra.mxu0 0.0
  %4009 = vmatprep.subr.mxu0 0.0
  %4010 = vmatpush1.msra.mxu0 0.0
  %4011 = vmatprep.subr.mxu0 0.0
  %4012 = vmatpush1.msra.mxu0 0.0
  %4013 = vmatprep.subr.mxu0 0.0
  %4014 = vmatpush1.msra.mxu0 0.0
  %4015 = vmatprep.subr.mxu0 0.0
  %4016 = vmatpush1.msra.mxu0 0.0
  %4017 = vmatprep.subr.mxu0 0.0
  %4018 = vmatpush1.msra.mxu0 0.0
  %4019 = vmatprep.subr.mxu0 0.0
  %4020 = vmatpush1.msra.mxu0 0.0
  %4021 = vmatprep.subr.mxu0 0.0
  %4022 = vmatpush1.msra.mxu0 0.0
  %4023 = vmatprep.subr.mxu0 0.0
  %4024 = vmatpush1.msra.mxu0 0.0
  %4025 = vmatprep.subr.mxu0 0.0
  %4026 = vmatpush1.msra.mxu0 0.0
  %4027 = vmatprep.subr.mxu0 0.0
  %4028 = vmatpush1.msra.mxu0 0.0
  %4029 = vmatprep.subr.mxu0 0.0
  %4030 = vmatpush1.msra.mxu0 0.0
  %4031 = vmatprep.subr.mxu0 0.0
  %4032 = vmatpush1.msra.mxu0 0.0
  %4033 = vmatprep.mubr.f32.mxu0 0.0
  %4034 = vmatmul.mubr.f32.gmra.mrb[0].mxu0 %v3967
  %v4035 = vpop.f32.mrb[0].mxu0
  %v4036 = vadd.f32 %v3661, %v4035
  %v4037 = vpop.f32.mrb[0].mxu0
  %4038 = vdwg.mxu0
  %v4039 = vadd.f32 %v3649, %v4036
  %v4040 = vxor.u32 %v4039, 2147483648
  %v4041 = vmul.f32 %v4040, 1.442695
  %v4042 = vpow.pop %v4041
  %v4043 = vadd.f32 %v4042, 1.0
  %v4044 = vrcp.pop %v4043
  %v4045 = vmul.f32 1.0, %v4044
  %4047 = vrot.lane.b32.xlu0 %v4036, 108
  %v4048 = vpop.permute.xlu0 %4047
  %v4050 = vmul.f32 %v4045, %v4048
  %4052 = vrot.lane.b32.xlu0 %v4050, 20
  %v4053 = vpop.permute.xlu0 %4052
  %v4055 = vadd.f32 %v3649, %v4053
  %v4056 = vtanh.pop %v4055
  %v4057 = vsub.f32 1.0, %v4045
  %4059 = vrot.lane.b32.xlu0 %v4056, 118
  %v4060 = vpop.permute.xlu0 %4059
  %v4062 = vmul.f32 %v4057, %v4060
  %v4063 = vmul.f32 %v4045, %v3963
  %v4064 = vadd.f32 %v4062, %v4063
  %4067 = vrot.lane.b32.xlu0 %v4064, 118
  %v4068 = vpop.permute.xlu0 %4067
  %v4070 = vsel %vm2401, %v3764, %v4068
  %v4073 = vsel %vm2401, %v3865, %v3966
  %v4074 = vsel %vm2401, %v3966, %v3865
  %v4075 = vsel %vm2401, %v4068, %v3764
  %4080 = vrot.lane.b32.xlu0 %v4075, 10
  %v4081 = vpop.permute.xlu0 %4080
  %4082 = vrot.lane.b32.xlu0 %v4074, 10
  %v4083 = vpop.permute.xlu0 %4082
  %4084 = vrot.lane.b32.xlu0 %v4073, 10
  %v4085 = vpop.permute.xlu0 %4084
  %4086 = vrot.lane.b32.xlu0 %v4070, 10
  %v4087 = vpop.permute.xlu0 %4086
  %v4092 = vsel %vm77, %v4070, %v4081
  %v4093 = vsel %vm77, %v4073, %v4083
  %v4094 = vsel %vm77, %v4074, %v4085
  %v4095 = vsel %vm77, %v4075, %v4087
  %s4096 = scalar_lea.vmem %s5, 96
  %v4097 = vld [vmem:[%s4096] sm:$0xff]
  %v4098 = vld [vmem:[%s4096 + $0x8] sm:$0xff]
  %v4099 = vld [vmem:[%s4096 + $0x10] sm:$0xf]
  %s4100 = scalar_lea.vmem %s7, 4
  %v4101 = vld [vmem:[%s4100] sm:$0x1]
  %v4103 = vlaneseq
  %v4104 = vshrl.u32 %v4103, 7
  %v4105 = vsub.s32 0, %v4104
  %v4106 = vrot.slane %v4101, %v4105
  %v4109 = vsel %vm1884, %v4092, 0
  %v4112 = vsel %vm1884, %v4093, 0
  %v4115 = vsel %vm1884, %v4094, 0
  %v4118 = vsel %vm1884, %v4095, 0
  %v4121 = vsel %vm329, %v4099, 0
  %4123 = vmatprep.subr.mxu0 0.0
  %4124 = vmatpush1.msra.mxu0 %v4097
  %4125 = vmatprep.subr.mxu0 0.0
  %4126 = vmatpush1.msra.mxu0 %v4098
  %4127 = vmatprep.subr.mxu0 0.0
  %4128 = vmatpush1.msra.mxu0 %v4121
  %4129 = vmatprep.subr.mxu0 0.0
  %4130 = vmatpush1.msra.mxu0 0.0
  %4131 = vmatprep.subr.mxu0 0.0
  %4132 = vmatpush1.msra.mxu0 0.0
  %4133 = vmatprep.subr.mxu0 0.0
  %4134 = vmatpush1.msra.mxu0 0.0
  %4135 = vmatprep.subr.mxu0 0.0
  %4136 = vmatpush1.msra.mxu0 0.0
  %4137 = vmatprep.subr.mxu0 0.0
  %4138 = vmatpush1.msra.mxu0 0.0
  %4139 = vmatprep.subr.mxu0 0.0
  %4140 = vmatpush1.msra.mxu0 0.0
  %4141 = vmatprep.subr.mxu0 0.0
  %4142 = vmatpush1.msra.mxu0 0.0
  %4143 = vmatprep.subr.mxu0 0.0
  %4144 = vmatpush1.msra.mxu0 0.0
  %4145 = vmatprep.subr.mxu0 0.0
  %4146 = vmatpush1.msra.mxu0 0.0
  %4147 = vmatprep.subr.mxu0 0.0
  %4148 = vmatpush1.msra.mxu0 0.0
  %4149 = vmatprep.subr.mxu0 0.0
  %4150 = vmatpush1.msra.mxu0 0.0
  %4151 = vmatprep.subr.mxu0 0.0
  %4152 = vmatpush1.msra.mxu0 0.0
  %4153 = vmatprep.subr.mxu0 0.0
  %4154 = vmatpush1.msra.mxu0 0.0
  %4155 = vmatprep.subr.mxu0 0.0
  %4156 = vmatpush1.msra.mxu0 0.0
  %4157 = vmatprep.subr.mxu0 0.0
  %4158 = vmatpush1.msra.mxu0 0.0
  %4159 = vmatprep.subr.mxu0 0.0
  %4160 = vmatpush1.msra.mxu0 0.0
  %4161 = vmatprep.subr.mxu0 0.0
  %4162 = vmatpush1.msra.mxu0 0.0
  %4163 = vmatprep.subr.mxu0 0.0
  %4164 = vmatpush1.msra.mxu0 0.0
  %4165 = vmatprep.subr.mxu0 0.0
  %4166 = vmatpush1.msra.mxu0 0.0
  %4167 = vmatprep.subr.mxu0 0.0
  %4168 = vmatpush1.msra.mxu0 0.0
  %4169 = vmatprep.subr.mxu0 0.0
  %4170 = vmatpush1.msra.mxu0 0.0
  %4171 = vmatprep.subr.mxu0 0.0
  %4172 = vmatpush1.msra.mxu0 0.0
  %4173 = vmatprep.subr.mxu0 0.0
  %4174 = vmatpush1.msra.mxu0 0.0
  %4175 = vmatprep.subr.mxu0 0.0
  %4176 = vmatpush1.msra.mxu0 0.0
  %4177 = vmatprep.subr.mxu0 0.0
  %4178 = vmatpush1.msra.mxu0 0.0
  %4179 = vmatprep.subr.mxu0 0.0
  %4180 = vmatpush1.msra.mxu0 0.0
  %4181 = vmatprep.subr.mxu0 0.0
  %4182 = vmatpush1.msra.mxu0 0.0
  %4183 = vmatprep.subr.mxu0 0.0
  %4184 = vmatpush1.msra.mxu0 0.0
  %4185 = vmatprep.subr.mxu0 0.0
  %4186 = vmatpush1.msra.mxu0 0.0
  %4187 = vmatprep.mubr.f32.mxu0 0.0
  %4188 = vmatmul.mubr.f32.gmra.mrb[0].mxu0 %v4109
  %v4189 = vpop.f32.mrb[0].mxu0
  %v4190 = vadd.f32 %v4106, %v4189
  %v4191 = vpop.f32.mrb[0].mxu0
  %4192 = vmatprep.mubr.f32.mxu0 0.0
  %4193 = vmatmul.mubr.f32.gmra.mrb[0].mxu0 %v4112
  %v4194 = vpop.f32.mrb[0].mxu0
  %v4195 = vadd.f32 %v4106, %v4194
  %v4196 = vpop.f32.mrb[0].mxu0
  %4197 = vmatprep.mubr.f32.mxu0 0.0
  %4198 = vmatmul.mubr.f32.gmra.mrb[0].mxu0 %v4115
  %v4199 = vpop.f32.mrb[0].mxu0
  %v4200 = vadd.f32 %v4106, %v4199
  %v4201 = vpop.f32.mrb[0].mxu0
  %4202 = vmatprep.mubr.f32.mxu0 0.0
  %4203 = vmatmul.mubr.f32.gmra.mrb[0].mxu0 %v4118
  %v4204 = vpop.f32.mrb[0].mxu0
  %v4205 = vadd.f32 %v4106, %v4204
  %v4206 = vpop.f32.mrb[0].mxu0
  %4207 = vdwg.mxu0
  %s4208 = scalar_lea.vmem %s6, 64
  %v4209 = vld [vmem:[%s4208] sm:$0xff]
  %v4210 = vld [vmem:[%s4208 + $0x8] sm:$0x3]
  %s4211 = scalar_lea.vmem %s8, 4
  %v4212 = vld [vmem:[%s4211] sm:$0x1]
  %v4214 = vlaneseq
  %v4215 = vshrl.u32 %v4214, 7
  %v4216 = vsub.s32 0, %v4215
  %v4217 = vrot.slane %v4212, %v4216
  %v4220 = vsel %vm81, %v4210, 0
  %4222 = vmatprep.subr.mxu0 0.0
  %4223 = vmatpush1.msra.mxu0 %v4209
  %4224 = vmatprep.subr.mxu0 0.0
  %4225 = vmatpush1.msra.mxu0 %v4220
  %4226 = vmatprep.subr.mxu0 0.0
  %4227 = vmatpush1.msra.mxu0 0.0
  %4228 = vmatprep.subr.mxu0 0.0
  %4229 = vmatpush1.msra.mxu0 0.0
  %4230 = vmatprep.subr.mxu0 0.0
  %4231 = vmatpush1.msra.mxu0 0.0
  %4232 = vmatprep.subr.mxu0 0.0
  %4233 = vmatpush1.msra.mxu0 0.0
  %4234 = vmatprep.subr.mxu0 0.0
  %4235 = vmatpush1.msra.mxu0 0.0
  %4236 = vmatprep.subr.mxu0 0.0
  %4237 = vmatpush1.msra.mxu0 0.0
  %4238 = vmatprep.subr.mxu0 0.0
  %4239 = vmatpush1.msra.mxu0 0.0
  %4240 = vmatprep.subr.mxu0 0.0
  %4241 = vmatpush1.msra.mxu0 0.0
  %4242 = vmatprep.subr.mxu0 0.0
  %4243 = vmatpush1.msra.mxu0 0.0
  %4244 = vmatprep.subr.mxu0 0.0
  %4245 = vmatpush1.msra.mxu0 0.0
  %4246 = vmatprep.subr.mxu0 0.0
  %4247 = vmatpush1.msra.mxu0 0.0
  %4248 = vmatprep.subr.mxu0 0.0
  %4249 = vmatpush1.msra.mxu0 0.0
  %4250 = vmatprep.subr.mxu0 0.0
  %4251 = vmatpush1.msra.mxu0 0.0
  %4252 = vmatprep.subr.mxu0 0.0
  %4253 = vmatpush1.msra.mxu0 0.0
  %4254 = vmatprep.subr.mxu0 0.0
  %4255 = vmatpush1.msra.mxu0 0.0
  %4256 = vmatprep.subr.mxu0 0.0
  %4257 = vmatpush1.msra.mxu0 0.0
  %4258 = vmatprep.subr.mxu0 0.0
  %4259 = vmatpush1.msra.mxu0 0.0
  %4260 = vmatprep.subr.mxu0 0.0
  %4261 = vmatpush1.msra.mxu0 0.0
  %4262 = vmatprep.subr.mxu0 0.0
  %4263 = vmatpush1.msra.mxu0 0.0
  %4264 = vmatprep.subr.mxu0 0.0
  %4265 = vmatpush1.msra.mxu0 0.0
  %4266 = vmatprep.subr.mxu0 0.0
  %4267 = vmatpush1.msra.mxu0 0.0
  %4268 = vmatprep.subr.mxu0 0.0
  %4269 = vmatpush1.msra.mxu0 0.0
  %4270 = vmatprep.subr.mxu0 0.0
  %4271 = vmatpush1.msra.mxu0 0.0
  %4272 = vmatprep.subr.mxu0 0.0
  %4273 = vmatpush1.msra.mxu0 0.0
  %4274 = vmatprep.subr.mxu0 0.0
  %4275 = vmatpush1.msra.mxu0 0.0
  %4276 = vmatprep.subr.mxu0 0.0
  %4277 = vmatpush1.msra.mxu0 0.0
  %4278 = vmatprep.subr.mxu0 0.0
  %4279 = vmatpush1.msra.mxu0 0.0
  %4280 = vmatprep.subr.mxu0 0.0
  %4281 = vmatpush1.msra.mxu0 0.0
  %4282 = vmatprep.subr.mxu0 0.0
  %4283 = vmatpush1.msra.mxu0 0.0
  %4284 = vmatprep.subr.mxu0 0.0
  %4285 = vmatpush1.msra.mxu0 0.0
  %4286 = vmatprep.mubr.f32.mxu0 0.0
  %4287 = vmatmul.mubr.f32.gmra.mrb[0].mxu0 %v79
  %v4288 = vpop.f32.mrb[0].mxu0
  %v4289 = vadd.f32 %v4217, %v4288
  %v4290 = vpop.f32.mrb[0].mxu0
  %4291 = vdwg.mxu0
  %v4292 = vadd.f32 %v4190, %v4289
  %v4293 = vxor.u32 %v4292, 2147483648
  %v4294 = vmul.f32 %v4293, 1.442695
  %v4295 = vpow.pop %v4294
  %v4296 = vadd.f32 %v4295, 1.0
  %v4297 = vrcp.pop %v4296
  %v4298 = vmul.f32 1.0, %v4297
  %4300 = vrot.lane.b32.xlu0 %v4289, 108
  %v4301 = vpop.permute.xlu0 %4300
  %v4303 = vmul.f32 %v4298, %v4301
  %4305 = vrot.lane.b32.xlu0 %v4303, 20
  %v4306 = vpop.permute.xlu0 %4305
  %v4308 = vadd.f32 %v4190, %v4306
  %v4309 = vtanh.pop %v4308
  %v4310 = vsub.f32 1.0, %v4298
  %4312 = vrot.lane.b32.xlu0 %v4309, 118
  %v4313 = vpop.permute.xlu0 %4312
  %v4315 = vmul.f32 %v4310, %v4313
  %v4316 = vmul.f32 %v4298, 0.0
  %v4317 = vadd.f32 %v4315, %v4316
  %4319 = vrot.lane.b32.xlu0 %v4317, 118
  %v4320 = vpop.permute.xlu0 %4319
  %v4321 = vsel %vm77, %v4320, 0
  %4323 = vmatprep.subr.mxu0 0.0
  %4324 = vmatpush1.msra.mxu0 %v4209
  %4325 = vmatprep.subr.mxu0 0.0
  %4326 = vmatpush1.msra.mxu0 %v4220
  %4327 = vmatprep.subr.mxu0 0.0
  %4328 = vmatpush1.msra.mxu0 0.0
  %4329 = vmatprep.subr.mxu0 0.0
  %4330 = vmatpush1.msra.mxu0 0.0
  %4331 = vmatprep.subr.mxu0 0.0
  %4332 = vmatpush1.msra.mxu0 0.0
  %4333 = vmatprep.subr.mxu0 0.0
  %4334 = vmatpush1.msra.mxu0 0.0
  %4335 = vmatprep.subr.mxu0 0.0
  %4336 = vmatpush1.msra.mxu0 0.0
  %4337 = vmatprep.subr.mxu0 0.0
  %4338 = vmatpush1.msra.mxu0 0.0
  %4339 = vmatprep.subr.mxu0 0.0
  %4340 = vmatpush1.msra.mxu0 0.0
  %4341 = vmatprep.subr.mxu0 0.0
  %4342 = vmatpush1.msra.mxu0 0.0
  %4343 = vmatprep.subr.mxu0 0.0
  %4344 = vmatpush1.msra.mxu0 0.0
  %4345 = vmatprep.subr.mxu0 0.0
  %4346 = vmatpush1.msra.mxu0 0.0
  %4347 = vmatprep.subr.mxu0 0.0
  %4348 = vmatpush1.msra.mxu0 0.0
  %4349 = vmatprep.subr.mxu0 0.0
  %4350 = vmatpush1.msra.mxu0 0.0
  %4351 = vmatprep.subr.mxu0 0.0
  %4352 = vmatpush1.msra.mxu0 0.0
  %4353 = vmatprep.subr.mxu0 0.0
  %4354 = vmatpush1.msra.mxu0 0.0
  %4355 = vmatprep.subr.mxu0 0.0
  %4356 = vmatpush1.msra.mxu0 0.0
  %4357 = vmatprep.subr.mxu0 0.0
  %4358 = vmatpush1.msra.mxu0 0.0
  %4359 = vmatprep.subr.mxu0 0.0
  %4360 = vmatpush1.msra.mxu0 0.0
  %4361 = vmatprep.subr.mxu0 0.0
  %4362 = vmatpush1.msra.mxu0 0.0
  %4363 = vmatprep.subr.mxu0 0.0
  %4364 = vmatpush1.msra.mxu0 0.0
  %4365 = vmatprep.subr.mxu0 0.0
  %4366 = vmatpush1.msra.mxu0 0.0
  %4367 = vmatprep.subr.mxu0 0.0
  %4368 = vmatpush1.msra.mxu0 0.0
  %4369 = vmatprep.subr.mxu0 0.0
  %4370 = vmatpush1.msra.mxu0 0.0
  %4371 = vmatprep.subr.mxu0 0.0
  %4372 = vmatpush1.msra.mxu0 0.0
  %4373 = vmatprep.subr.mxu0 0.0
  %4374 = vmatpush1.msra.mxu0 0.0
  %4375 = vmatprep.subr.mxu0 0.0
  %4376 = vmatpush1.msra.mxu0 0.0
  %4377 = vmatprep.subr.mxu0 0.0
  %4378 = vmatpush1.msra.mxu0 0.0
  %4379 = vmatprep.subr.mxu0 0.0
  %4380 = vmatpush1.msra.mxu0 0.0
  %4381 = vmatprep.subr.mxu0 0.0
  %4382 = vmatpush1.msra.mxu0 0.0
  %4383 = vmatprep.subr.mxu0 0.0
  %4384 = vmatpush1.msra.mxu0 0.0
  %4385 = vmatprep.subr.mxu0 0.0
  %4386 = vmatpush1.msra.mxu0 0.0
  %4387 = vmatprep.mubr.f32.mxu0 0.0
  %4388 = vmatmul.mubr.f32.gmra.mrb[0].mxu0 %v4321
  %v4389 = vpop.f32.mrb[0].mxu0
  %v4390 = vadd.f32 %v4217, %v4389
  %v4391 = vpop.f32.mrb[0].mxu0
  %4392 = vdwg.mxu0
  %v4393 = vadd.f32 %v4195, %v4390
  %v4394 = vxor.u32 %v4393, 2147483648
  %v4395 = vmul.f32 %v4394, 1.442695
  %v4396 = vpow.pop %v4395
  %v4397 = vadd.f32 %v4396, 1.0
  %v4398 = vrcp.pop %v4397
  %v4399 = vmul.f32 1.0, %v4398
  %4401 = vrot.lane.b32.xlu0 %v4390, 108
  %v4402 = vpop.permute.xlu0 %4401
  %v4404 = vmul.f32 %v4399, %v4402
  %4406 = vrot.lane.b32.xlu0 %v4404, 20
  %v4407 = vpop.permute.xlu0 %4406
  %v4409 = vadd.f32 %v4195, %v4407
  %v4410 = vtanh.pop %v4409
  %v4411 = vsub.f32 1.0, %v4399
  %4413 = vrot.lane.b32.xlu0 %v4410, 118
  %v4414 = vpop.permute.xlu0 %4413
  %v4416 = vmul.f32 %v4411, %v4414
  %v4417 = vmul.f32 %v4399, %v4317
  %v4418 = vadd.f32 %v4416, %v4417
  %4420 = vrot.lane.b32.xlu0 %v4418, 118
  %v4421 = vpop.permute.xlu0 %4420
  %v4422 = vsel %vm77, %v4421, 0
  %4424 = vmatprep.subr.mxu0 0.0
  %4425 = vmatpush1.msra.mxu0 %v4209
  %4426 = vmatprep.subr.mxu0 0.0
  %4427 = vmatpush1.msra.mxu0 %v4220
  %4428 = vmatprep.subr.mxu0 0.0
  %4429 = vmatpush1.msra.mxu0 0.0
  %4430 = vmatprep.subr.mxu0 0.0
  %4431 = vmatpush1.msra.mxu0 0.0
  %4432 = vmatprep.subr.mxu0 0.0
  %4433 = vmatpush1.msra.mxu0 0.0
  %4434 = vmatprep.subr.mxu0 0.0
  %4435 = vmatpush1.msra.mxu0 0.0
  %4436 = vmatprep.subr.mxu0 0.0
  %4437 = vmatpush1.msra.mxu0 0.0
  %4438 = vmatprep.subr.mxu0 0.0
  %4439 = vmatpush1.msra.mxu0 0.0
  %4440 = vmatprep.subr.mxu0 0.0
  %4441 = vmatpush1.msra.mxu0 0.0
  %4442 = vmatprep.subr.mxu0 0.0
  %4443 = vmatpush1.msra.mxu0 0.0
  %4444 = vmatprep.subr.mxu0 0.0
  %4445 = vmatpush1.msra.mxu0 0.0
  %4446 = vmatprep.subr.mxu0 0.0
  %4447 = vmatpush1.msra.mxu0 0.0
  %4448 = vmatprep.subr.mxu0 0.0
  %4449 = vmatpush1.msra.mxu0 0.0
  %4450 = vmatprep.subr.mxu0 0.0
  %4451 = vmatpush1.msra.mxu0 0.0
  %4452 = vmatprep.subr.mxu0 0.0
  %4453 = vmatpush1.msra.mxu0 0.0
  %4454 = vmatprep.subr.mxu0 0.0
  %4455 = vmatpush1.msra.mxu0 0.0
  %4456 = vmatprep.subr.mxu0 0.0
  %4457 = vmatpush1.msra.mxu0 0.0
  %4458 = vmatprep.subr.mxu0 0.0
  %4459 = vmatpush1.msra.mxu0 0.0
  %4460 = vmatprep.subr.mxu0 0.0
  %4461 = vmatpush1.msra.mxu0 0.0
  %4462 = vmatprep.subr.mxu0 0.0
  %4463 = vmatpush1.msra.mxu0 0.0
  %4464 = vmatprep.subr.mxu0 0.0
  %4465 = vmatpush1.msra.mxu0 0.0
  %4466 = vmatprep.subr.mxu0 0.0
  %4467 = vmatpush1.msra.mxu0 0.0
  %4468 = vmatprep.subr.mxu0 0.0
  %4469 = vmatpush1.msra.mxu0 0.0
  %4470 = vmatprep.subr.mxu0 0.0
  %4471 = vmatpush1.msra.mxu0 0.0
  %4472 = vmatprep.subr.mxu0 0.0
  %4473 = vmatpush1.msra.mxu0 0.0
  %4474 = vmatprep.subr.mxu0 0.0
  %4475 = vmatpush1.msra.mxu0 0.0
  %4476 = vmatprep.subr.mxu0 0.0
  %4477 = vmatpush1.msra.mxu0 0.0
  %4478 = vmatprep.subr.mxu0 0.0
  %4479 = vmatpush1.msra.mxu0 0.0
  %4480 = vmatprep.subr.mxu0 0.0
  %4481 = vmatpush1.msra.mxu0 0.0
  %4482 = vmatprep.subr.mxu0 0.0
  %4483 = vmatpush1.msra.mxu0 0.0
  %4484 = vmatprep.subr.mxu0 0.0
  %4485 = vmatpush1.msra.mxu0 0.0
  %4486 = vmatprep.subr.mxu0 0.0
  %4487 = vmatpush1.msra.mxu0 0.0
  %4488 = vmatprep.mubr.f32.mxu0 0.0
  %4489 = vmatmul.mubr.f32.gmra.mrb[0].mxu0 %v4422
  %v4490 = vpop.f32.mrb[0].mxu0
  %v4491 = vadd.f32 %v4217, %v4490
  %v4492 = vpop.f32.mrb[0].mxu0
  %4493 = vdwg.mxu0
  %v4494 = vadd.f32 %v4200, %v4491
  %v4495 = vxor.u32 %v4494, 2147483648
  %v4496 = vmul.f32 %v4495, 1.442695
  %v4497 = vpow.pop %v4496
  %v4498 = vadd.f32 %v4497, 1.0
  %v4499 = vrcp.pop %v4498
  %v4500 = vmul.f32 1.0, %v4499
  %4502 = vrot.lane.b32.xlu0 %v4491, 108
  %v4503 = vpop.permute.xlu0 %4502
  %v4505 = vmul.f32 %v4500, %v4503
  %4507 = vrot.lane.b32.xlu0 %v4505, 20
  %v4508 = vpop.permute.xlu0 %4507
  %v4510 = vadd.f32 %v4200, %v4508
  %v4511 = vtanh.pop %v4510
  %v4512 = vsub.f32 1.0, %v4500
  %4514 = vrot.lane.b32.xlu0 %v4511, 118
  %v4515 = vpop.permute.xlu0 %4514
  %v4517 = vmul.f32 %v4512, %v4515
  %v4518 = vmul.f32 %v4500, %v4418
  %v4519 = vadd.f32 %v4517, %v4518
  %4521 = vrot.lane.b32.xlu0 %v4519, 118
  %v4522 = vpop.permute.xlu0 %4521
  %v4523 = vsel %vm77, %v4522, 0
  %4525 = vmatprep.subr.mxu0 0.0
  %4526 = vmatpush1.msra.mxu0 %v4209
  %4527 = vmatprep.subr.mxu0 0.0
  %4528 = vmatpush1.msra.mxu0 %v4220
  %4529 = vmatprep.subr.mxu0 0.0
  %4530 = vmatpush1.msra.mxu0 0.0
  %4531 = vmatprep.subr.mxu0 0.0
  %4532 = vmatpush1.msra.mxu0 0.0
  %4533 = vmatprep.subr.mxu0 0.0
  %4534 = vmatpush1.msra.mxu0 0.0
  %4535 = vmatprep.subr.mxu0 0.0
  %4536 = vmatpush1.msra.mxu0 0.0
  %4537 = vmatprep.subr.mxu0 0.0
  %4538 = vmatpush1.msra.mxu0 0.0
  %4539 = vmatprep.subr.mxu0 0.0
  %4540 = vmatpush1.msra.mxu0 0.0
  %4541 = vmatprep.subr.mxu0 0.0
  %4542 = vmatpush1.msra.mxu0 0.0
  %4543 = vmatprep.subr.mxu0 0.0
  %4544 = vmatpush1.msra.mxu0 0.0
  %4545 = vmatprep.subr.mxu0 0.0
  %4546 = vmatpush1.msra.mxu0 0.0
  %4547 = vmatprep.subr.mxu0 0.0
  %4548 = vmatpush1.msra.mxu0 0.0
  %4549 = vmatprep.subr.mxu0 0.0
  %4550 = vmatpush1.msra.mxu0 0.0
  %4551 = vmatprep.subr.mxu0 0.0
  %4552 = vmatpush1.msra.mxu0 0.0
  %4553 = vmatprep.subr.mxu0 0.0
  %4554 = vmatpush1.msra.mxu0 0.0
  %4555 = vmatprep.subr.mxu0 0.0
  %4556 = vmatpush1.msra.mxu0 0.0
  %4557 = vmatprep.subr.mxu0 0.0
  %4558 = vmatpush1.msra.mxu0 0.0
  %4559 = vmatprep.subr.mxu0 0.0
  %4560 = vmatpush1.msra.mxu0 0.0
  %4561 = vmatprep.subr.mxu0 0.0
  %4562 = vmatpush1.msra.mxu0 0.0
  %4563 = vmatprep.subr.mxu0 0.0
  %4564 = vmatpush1.msra.mxu0 0.0
  %4565 = vmatprep.subr.mxu0 0.0
  %4566 = vmatpush1.msra.mxu0 0.0
  %4567 = vmatprep.subr.mxu0 0.0
  %4568 = vmatpush1.msra.mxu0 0.0
  %4569 = vmatprep.subr.mxu0 0.0
  %4570 = vmatpush1.msra.mxu0 0.0
  %4571 = vmatprep.subr.mxu0 0.0
  %4572 = vmatpush1.msra.mxu0 0.0
  %4573 = vmatprep.subr.mxu0 0.0
  %4574 = vmatpush1.msra.mxu0 0.0
  %4575 = vmatprep.subr.mxu0 0.0
  %4576 = vmatpush1.msra.mxu0 0.0
  %4577 = vmatprep.subr.mxu0 0.0
  %4578 = vmatpush1.msra.mxu0 0.0
  %4579 = vmatprep.subr.mxu0 0.0
  %4580 = vmatpush1.msra.mxu0 0.0
  %4581 = vmatprep.subr.mxu0 0.0
  %4582 = vmatpush1.msra.mxu0 0.0
  %4583 = vmatprep.subr.mxu0 0.0
  %4584 = vmatpush1.msra.mxu0 0.0
  %4585 = vmatprep.subr.mxu0 0.0
  %4586 = vmatpush1.msra.mxu0 0.0
  %4587 = vmatprep.subr.mxu0 0.0
  %4588 = vmatpush1.msra.mxu0 0.0
  %4589 = vmatprep.mubr.f32.mxu0 0.0
  %4590 = vmatmul.mubr.f32.gmra.mrb[0].mxu0 %v4523
  %v4591 = vpop.f32.mrb[0].mxu0
  %v4592 = vadd.f32 %v4217, %v4591
  %v4593 = vpop.f32.mrb[0].mxu0
  %4594 = vdwg.mxu0
  %v4595 = vadd.f32 %v4205, %v4592
  %v4596 = vxor.u32 %v4595, 2147483648
  %v4597 = vmul.f32 %v4596, 1.442695
  %v4598 = vpow.pop %v4597
  %v4599 = vadd.f32 %v4598, 1.0
  %v4600 = vrcp.pop %v4599
  %v4601 = vmul.f32 1.0, %v4600
  %4603 = vrot.lane.b32.xlu0 %v4592, 108
  %v4604 = vpop.permute.xlu0 %4603
  %v4606 = vmul.f32 %v4601, %v4604
  %4608 = vrot.lane.b32.xlu0 %v4606, 20
  %v4609 = vpop.permute.xlu0 %4608
  %v4611 = vadd.f32 %v4205, %v4609
  %v4612 = vtanh.pop %v4611
  %v4613 = vsub.f32 1.0, %v4601
  %4615 = vrot.lane.b32.xlu0 %v4612, 118
  %v4616 = vpop.permute.xlu0 %4615
  %v4618 = vmul.f32 %v4613, %v4616
  %v4619 = vmul.f32 %v4601, %v4519
  %v4620 = vadd.f32 %v4618, %v4619
  %4623 = vrot.lane.b32.xlu0 %v4620, 118
  %v4624 = vpop.permute.xlu0 %4623
  %v4626 = vsel %vm2401, %v4320, %v4624
  %v4629 = vsel %vm2401, %v4421, %v4522
  %v4630 = vsel %vm2401, %v4522, %v4421
  %v4631 = vsel %vm2401, %v4624, %v4320
  %4636 = vrot.lane.b32.xlu0 %v4631, 10
  %v4637 = vpop.permute.xlu0 %4636
  %4638 = vrot.lane.b32.xlu0 %v4630, 10
  %v4639 = vpop.permute.xlu0 %4638
  %4640 = vrot.lane.b32.xlu0 %v4629, 10
  %v4641 = vpop.permute.xlu0 %4640
  %4642 = vrot.lane.b32.xlu0 %v4626, 10
  %v4643 = vpop.permute.xlu0 %4642
  %v4648 = vsel %vm77, %v4626, %v4637
  %v4649 = vsel %vm77, %v4629, %v4639
  %v4650 = vsel %vm77, %v4630, %v4641
  %v4651 = vsel %vm77, %v4631, %v4643
  %s4652 = scalar_lea.vmem %s5, 120
  %v4653 = vld [vmem:[%s4652] sm:$0xff]
  %v4654 = vld [vmem:[%s4652 + $0x8] sm:$0xff]
  %v4655 = vld [vmem:[%s4652 + $0x10] sm:$0xf]
  %s4656 = scalar_lea.vmem %s7, 5
  %v4657 = vld [vmem:[%s4656] sm:$0x1]
  %v4659 = vlaneseq
  %v4660 = vshrl.u32 %v4659, 7
  %v4661 = vsub.s32 0, %v4660
  %v4662 = vrot.slane %v4657, %v4661
  %v4665 = vsel %vm1884, %v4648, 0
  %v4668 = vsel %vm1884, %v4649, 0
  %v4671 = vsel %vm1884, %v4650, 0
  %v4674 = vsel %vm1884, %v4651, 0
  %v4677 = vsel %vm329, %v4655, 0
  %4679 = vmatprep.subr.mxu0 0.0
  %4680 = vmatpush1.msra.mxu0 %v4653
  %4681 = vmatprep.subr.mxu0 0.0
  %4682 = vmatpush1.msra.mxu0 %v4654
  %4683 = vmatprep.subr.mxu0 0.0
  %4684 = vmatpush1.msra.mxu0 %v4677
  %4685 = vmatprep.subr.mxu0 0.0
  %4686 = vmatpush1.msra.mxu0 0.0
  %4687 = vmatprep.subr.mxu0 0.0
  %4688 = vmatpush1.msra.mxu0 0.0
  %4689 = vmatprep.subr.mxu0 0.0
  %4690 = vmatpush1.msra.mxu0 0.0
  %4691 = vmatprep.subr.mxu0 0.0
  %4692 = vmatpush1.msra.mxu0 0.0
  %4693 = vmatprep.subr.mxu0 0.0
  %4694 = vmatpush1.msra.mxu0 0.0
  %4695 = vmatprep.subr.mxu0 0.0
  %4696 = vmatpush1.msra.mxu0 0.0
  %4697 = vmatprep.subr.mxu0 0.0
  %4698 = vmatpush1.msra.mxu0 0.0
  %4699 = vmatprep.subr.mxu0 0.0
  %4700 = vmatpush1.msra.mxu0 0.0
  %4701 = vmatprep.subr.mxu0 0.0
  %4702 = vmatpush1.msra.mxu0 0.0
  %4703 = vmatprep.subr.mxu0 0.0
  %4704 = vmatpush1.msra.mxu0 0.0
  %4705 = vmatprep.subr.mxu0 0.0
  %4706 = vmatpush1.msra.mxu0 0.0
  %4707 = vmatprep.subr.mxu0 0.0
  %4708 = vmatpush1.msra.mxu0 0.0
  %4709 = vmatprep.subr.mxu0 0.0
  %4710 = vmatpush1.msra.mxu0 0.0
  %4711 = vmatprep.subr.mxu0 0.0
  %4712 = vmatpush1.msra.mxu0 0.0
  %4713 = vmatprep.subr.mxu0 0.0
  %4714 = vmatpush1.msra.mxu0 0.0
  %4715 = vmatprep.subr.mxu0 0.0
  %4716 = vmatpush1.msra.mxu0 0.0
  %4717 = vmatprep.subr.mxu0 0.0
  %4718 = vmatpush1.msra.mxu0 0.0
  %4719 = vmatprep.subr.mxu0 0.0
  %4720 = vmatpush1.msra.mxu0 0.0
  %4721 = vmatprep.subr.mxu0 0.0
  %4722 = vmatpush1.msra.mxu0 0.0
  %4723 = vmatprep.subr.mxu0 0.0
  %4724 = vmatpush1.msra.mxu0 0.0
  %4725 = vmatprep.subr.mxu0 0.0
  %4726 = vmatpush1.msra.mxu0 0.0
  %4727 = vmatprep.subr.mxu0 0.0
  %4728 = vmatpush1.msra.mxu0 0.0
  %4729 = vmatprep.subr.mxu0 0.0
  %4730 = vmatpush1.msra.mxu0 0.0
  %4731 = vmatprep.subr.mxu0 0.0
  %4732 = vmatpush1.msra.mxu0 0.0
  %4733 = vmatprep.subr.mxu0 0.0
  %4734 = vmatpush1.msra.mxu0 0.0
  %4735 = vmatprep.subr.mxu0 0.0
  %4736 = vmatpush1.msra.mxu0 0.0
  %4737 = vmatprep.subr.mxu0 0.0
  %4738 = vmatpush1.msra.mxu0 0.0
  %4739 = vmatprep.subr.mxu0 0.0
  %4740 = vmatpush1.msra.mxu0 0.0
  %4741 = vmatprep.subr.mxu0 0.0
  %4742 = vmatpush1.msra.mxu0 0.0
  %4743 = vmatprep.mubr.f32.mxu0 0.0
  %4744 = vmatmul.mubr.f32.gmra.mrb[0].mxu0 %v4665
  %v4745 = vpop.f32.mrb[0].mxu0
  %v4746 = vadd.f32 %v4662, %v4745
  %v4747 = vpop.f32.mrb[0].mxu0
  %4748 = vmatprep.mubr.f32.mxu0 0.0
  %4749 = vmatmul.mubr.f32.gmra.mrb[0].mxu0 %v4668
  %v4750 = vpop.f32.mrb[0].mxu0
  %v4751 = vadd.f32 %v4662, %v4750
  %v4752 = vpop.f32.mrb[0].mxu0
  %4753 = vmatprep.mubr.f32.mxu0 0.0
  %4754 = vmatmul.mubr.f32.gmra.mrb[0].mxu0 %v4671
  %v4755 = vpop.f32.mrb[0].mxu0
  %v4756 = vadd.f32 %v4662, %v4755
  %v4757 = vpop.f32.mrb[0].mxu0
  %4758 = vmatprep.mubr.f32.mxu0 0.0
  %4759 = vmatmul.mubr.f32.gmra.mrb[0].mxu0 %v4674
  %v4760 = vpop.f32.mrb[0].mxu0
  %v4761 = vadd.f32 %v4662, %v4760
  %v4762 = vpop.f32.mrb[0].mxu0
  %4763 = vdwg.mxu0
  %s4764 = scalar_lea.vmem %s6, 80
  %v4765 = vld [vmem:[%s4764] sm:$0xff]
  %v4766 = vld [vmem:[%s4764 + $0x8] sm:$0x3]
  %s4767 = scalar_lea.vmem %s8, 5
  %v4768 = vld [vmem:[%s4767] sm:$0x1]
  %v4770 = vlaneseq
  %v4771 = vshrl.u32 %v4770, 7
  %v4772 = vsub.s32 0, %v4771
  %v4773 = vrot.slane %v4768, %v4772
  %v4776 = vsel %vm81, %v4766, 0
  %4778 = vmatprep.subr.mxu0 0.0
  %4779 = vmatpush1.msra.mxu0 %v4765
  %4780 = vmatprep.subr.mxu0 0.0
  %4781 = vmatpush1.msra.mxu0 %v4776
  %4782 = vmatprep.subr.mxu0 0.0
  %4783 = vmatpush1.msra.mxu0 0.0
  %4784 = vmatprep.subr.mxu0 0.0
  %4785 = vmatpush1.msra.mxu0 0.0
  %4786 = vmatprep.subr.mxu0 0.0
  %4787 = vmatpush1.msra.mxu0 0.0
  %4788 = vmatprep.subr.mxu0 0.0
  %4789 = vmatpush1.msra.mxu0 0.0
  %4790 = vmatprep.subr.mxu0 0.0
  %4791 = vmatpush1.msra.mxu0 0.0
  %4792 = vmatprep.subr.mxu0 0.0
  %4793 = vmatpush1.msra.mxu0 0.0
  %4794 = vmatprep.subr.mxu0 0.0
  %4795 = vmatpush1.msra.mxu0 0.0
  %4796 = vmatprep.subr.mxu0 0.0
  %4797 = vmatpush1.msra.mxu0 0.0
  %4798 = vmatprep.subr.mxu0 0.0
  %4799 = vmatpush1.msra.mxu0 0.0
  %4800 = vmatprep.subr.mxu0 0.0
  %4801 = vmatpush1.msra.mxu0 0.0
  %4802 = vmatprep.subr.mxu0 0.0
  %4803 = vmatpush1.msra.mxu0 0.0
  %4804 = vmatprep.subr.mxu0 0.0
  %4805 = vmatpush1.msra.mxu0 0.0
  %4806 = vmatprep.subr.mxu0 0.0
  %4807 = vmatpush1.msra.mxu0 0.0
  %4808 = vmatprep.subr.mxu0 0.0
  %4809 = vmatpush1.msra.mxu0 0.0
  %4810 = vmatprep.subr.mxu0 0.0
  %4811 = vmatpush1.msra.mxu0 0.0
  %4812 = vmatprep.subr.mxu0 0.0
  %4813 = vmatpush1.msra.mxu0 0.0
  %4814 = vmatprep.subr.mxu0 0.0
  %4815 = vmatpush1.msra.mxu0 0.0
  %4816 = vmatprep.subr.mxu0 0.0
  %4817 = vmatpush1.msra.mxu0 0.0
  %4818 = vmatprep.subr.mxu0 0.0
  %4819 = vmatpush1.msra.mxu0 0.0
  %4820 = vmatprep.subr.mxu0 0.0
  %4821 = vmatpush1.msra.mxu0 0.0
  %4822 = vmatprep.subr.mxu0 0.0
  %4823 = vmatpush1.msra.mxu0 0.0
  %4824 = vmatprep.subr.mxu0 0.0
  %4825 = vmatpush1.msra.mxu0 0.0
  %4826 = vmatprep.subr.mxu0 0.0
  %4827 = vmatpush1.msra.mxu0 0.0
  %4828 = vmatprep.subr.mxu0 0.0
  %4829 = vmatpush1.msra.mxu0 0.0
  %4830 = vmatprep.subr.mxu0 0.0
  %4831 = vmatpush1.msra.mxu0 0.0
  %4832 = vmatprep.subr.mxu0 0.0
  %4833 = vmatpush1.msra.mxu0 0.0
  %4834 = vmatprep.subr.mxu0 0.0
  %4835 = vmatpush1.msra.mxu0 0.0
  %4836 = vmatprep.subr.mxu0 0.0
  %4837 = vmatpush1.msra.mxu0 0.0
  %4838 = vmatprep.subr.mxu0 0.0
  %4839 = vmatpush1.msra.mxu0 0.0
  %4840 = vmatprep.subr.mxu0 0.0
  %4841 = vmatpush1.msra.mxu0 0.0
  %4842 = vmatprep.mubr.f32.mxu0 0.0
  %4843 = vmatmul.mubr.f32.gmra.mrb[0].mxu0 %v79
  %v4844 = vpop.f32.mrb[0].mxu0
  %v4845 = vadd.f32 %v4773, %v4844
  %v4846 = vpop.f32.mrb[0].mxu0
  %4847 = vdwg.mxu0
  %v4848 = vadd.f32 %v4746, %v4845
  %v4849 = vxor.u32 %v4848, 2147483648
  %v4850 = vmul.f32 %v4849, 1.442695
  %v4851 = vpow.pop %v4850
  %v4852 = vadd.f32 %v4851, 1.0
  %v4853 = vrcp.pop %v4852
  %v4854 = vmul.f32 1.0, %v4853
  %4856 = vrot.lane.b32.xlu0 %v4845, 108
  %v4857 = vpop.permute.xlu0 %4856
  %v4859 = vmul.f32 %v4854, %v4857
  %4861 = vrot.lane.b32.xlu0 %v4859, 20
  %v4862 = vpop.permute.xlu0 %4861
  %v4864 = vadd.f32 %v4746, %v4862
  %v4865 = vtanh.pop %v4864
  %v4866 = vsub.f32 1.0, %v4854
  %4868 = vrot.lane.b32.xlu0 %v4865, 118
  %v4869 = vpop.permute.xlu0 %4868
  %v4871 = vmul.f32 %v4866, %v4869
  %v4872 = vmul.f32 %v4854, 0.0
  %v4873 = vadd.f32 %v4871, %v4872
  %4875 = vrot.lane.b32.xlu0 %v4873, 118
  %v4876 = vpop.permute.xlu0 %4875
  %v4877 = vsel %vm77, %v4876, 0
  %4879 = vmatprep.subr.mxu0 0.0
  %4880 = vmatpush1.msra.mxu0 %v4765
  %4881 = vmatprep.subr.mxu0 0.0
  %4882 = vmatpush1.msra.mxu0 %v4776
  %4883 = vmatprep.subr.mxu0 0.0
  %4884 = vmatpush1.msra.mxu0 0.0
  %4885 = vmatprep.subr.mxu0 0.0
  %4886 = vmatpush1.msra.mxu0 0.0
  %4887 = vmatprep.subr.mxu0 0.0
  %4888 = vmatpush1.msra.mxu0 0.0
  %4889 = vmatprep.subr.mxu0 0.0
  %4890 = vmatpush1.msra.mxu0 0.0
  %4891 = vmatprep.subr.mxu0 0.0
  %4892 = vmatpush1.msra.mxu0 0.0
  %4893 = vmatprep.subr.mxu0 0.0
  %4894 = vmatpush1.msra.mxu0 0.0
  %4895 = vmatprep.subr.mxu0 0.0
  %4896 = vmatpush1.msra.mxu0 0.0
  %4897 = vmatprep.subr.mxu0 0.0
  %4898 = vmatpush1.msra.mxu0 0.0
  %4899 = vmatprep.subr.mxu0 0.0
  %4900 = vmatpush1.msra.mxu0 0.0
  %4901 = vmatprep.subr.mxu0 0.0
  %4902 = vmatpush1.msra.mxu0 0.0
  %4903 = vmatprep.subr.mxu0 0.0
  %4904 = vmatpush1.msra.mxu0 0.0
  %4905 = vmatprep.subr.mxu0 0.0
  %4906 = vmatpush1.msra.mxu0 0.0
  %4907 = vmatprep.subr.mxu0 0.0
  %4908 = vmatpush1.msra.mxu0 0.0
  %4909 = vmatprep.subr.mxu0 0.0
  %4910 = vmatpush1.msra.mxu0 0.0
  %4911 = vmatprep.subr.mxu0 0.0
  %4912 = vmatpush1.msra.mxu0 0.0
  %4913 = vmatprep.subr.mxu0 0.0
  %4914 = vmatpush1.msra.mxu0 0.0
  %4915 = vmatprep.subr.mxu0 0.0
  %4916 = vmatpush1.msra.mxu0 0.0
  %4917 = vmatprep.subr.mxu0 0.0
  %4918 = vmatpush1.msra.mxu0 0.0
  %4919 = vmatprep.subr.mxu0 0.0
  %4920 = vmatpush1.msra.mxu0 0.0
  %4921 = vmatprep.subr.mxu0 0.0
  %4922 = vmatpush1.msra.mxu0 0.0
  %4923 = vmatprep.subr.mxu0 0.0
  %4924 = vmatpush1.msra.mxu0 0.0
  %4925 = vmatprep.subr.mxu0 0.0
  %4926 = vmatpush1.msra.mxu0 0.0
  %4927 = vmatprep.subr.mxu0 0.0
  %4928 = vmatpush1.msra.mxu0 0.0
  %4929 = vmatprep.subr.mxu0 0.0
  %4930 = vmatpush1.msra.mxu0 0.0
  %4931 = vmatprep.subr.mxu0 0.0
  %4932 = vmatpush1.msra.mxu0 0.0
  %4933 = vmatprep.subr.mxu0 0.0
  %4934 = vmatpush1.msra.mxu0 0.0
  %4935 = vmatprep.subr.mxu0 0.0
  %4936 = vmatpush1.msra.mxu0 0.0
  %4937 = vmatprep.subr.mxu0 0.0
  %4938 = vmatpush1.msra.mxu0 0.0
  %4939 = vmatprep.subr.mxu0 0.0
  %4940 = vmatpush1.msra.mxu0 0.0
  %4941 = vmatprep.subr.mxu0 0.0
  %4942 = vmatpush1.msra.mxu0 0.0
  %4943 = vmatprep.mubr.f32.mxu0 0.0
  %4944 = vmatmul.mubr.f32.gmra.mrb[0].mxu0 %v4877
  %v4945 = vpop.f32.mrb[0].mxu0
  %v4946 = vadd.f32 %v4773, %v4945
  %v4947 = vpop.f32.mrb[0].mxu0
  %4948 = vdwg.mxu0
  %v4949 = vadd.f32 %v4751, %v4946
  %v4950 = vxor.u32 %v4949, 2147483648
  %v4951 = vmul.f32 %v4950, 1.442695
  %v4952 = vpow.pop %v4951
  %v4953 = vadd.f32 %v4952, 1.0
  %v4954 = vrcp.pop %v4953
  %v4955 = vmul.f32 1.0, %v4954
  %4957 = vrot.lane.b32.xlu0 %v4946, 108
  %v4958 = vpop.permute.xlu0 %4957
  %v4960 = vmul.f32 %v4955, %v4958
  %4962 = vrot.lane.b32.xlu0 %v4960, 20
  %v4963 = vpop.permute.xlu0 %4962
  %v4965 = vadd.f32 %v4751, %v4963
  %v4966 = vtanh.pop %v4965
  %v4967 = vsub.f32 1.0, %v4955
  %4969 = vrot.lane.b32.xlu0 %v4966, 118
  %v4970 = vpop.permute.xlu0 %4969
  %v4972 = vmul.f32 %v4967, %v4970
  %v4973 = vmul.f32 %v4955, %v4873
  %v4974 = vadd.f32 %v4972, %v4973
  %4976 = vrot.lane.b32.xlu0 %v4974, 118
  %v4977 = vpop.permute.xlu0 %4976
  %v4978 = vsel %vm77, %v4977, 0
  %4980 = vmatprep.subr.mxu0 0.0
  %4981 = vmatpush1.msra.mxu0 %v4765
  %4982 = vmatprep.subr.mxu0 0.0
  %4983 = vmatpush1.msra.mxu0 %v4776
  %4984 = vmatprep.subr.mxu0 0.0
  %4985 = vmatpush1.msra.mxu0 0.0
  %4986 = vmatprep.subr.mxu0 0.0
  %4987 = vmatpush1.msra.mxu0 0.0
  %4988 = vmatprep.subr.mxu0 0.0
  %4989 = vmatpush1.msra.mxu0 0.0
  %4990 = vmatprep.subr.mxu0 0.0
  %4991 = vmatpush1.msra.mxu0 0.0
  %4992 = vmatprep.subr.mxu0 0.0
  %4993 = vmatpush1.msra.mxu0 0.0
  %4994 = vmatprep.subr.mxu0 0.0
  %4995 = vmatpush1.msra.mxu0 0.0
  %4996 = vmatprep.subr.mxu0 0.0
  %4997 = vmatpush1.msra.mxu0 0.0
  %4998 = vmatprep.subr.mxu0 0.0
  %4999 = vmatpush1.msra.mxu0 0.0
  %5000 = vmatprep.subr.mxu0 0.0
  %5001 = vmatpush1.msra.mxu0 0.0
  %5002 = vmatprep.subr.mxu0 0.0
  %5003 = vmatpush1.msra.mxu0 0.0
  %5004 = vmatprep.subr.mxu0 0.0
  %5005 = vmatpush1.msra.mxu0 0.0
  %5006 = vmatprep.subr.mxu0 0.0
  %5007 = vmatpush1.msra.mxu0 0.0
  %5008 = vmatprep.subr.mxu0 0.0
  %5009 = vmatpush1.msra.mxu0 0.0
  %5010 = vmatprep.subr.mxu0 0.0
  %5011 = vmatpush1.msra.mxu0 0.0
  %5012 = vmatprep.subr.mxu0 0.0
  %5013 = vmatpush1.msra.mxu0 0.0
  %5014 = vmatprep.subr.mxu0 0.0
  %5015 = vmatpush1.msra.mxu0 0.0
  %5016 = vmatprep.subr.mxu0 0.0
  %5017 = vmatpush1.msra.mxu0 0.0
  %5018 = vmatprep.subr.mxu0 0.0
  %5019 = vmatpush1.msra.mxu0 0.0
  %5020 = vmatprep.subr.mxu0 0.0
  %5021 = vmatpush1.msra.mxu0 0.0
  %5022 = vmatprep.subr.mxu0 0.0
  %5023 = vmatpush1.msra.mxu0 0.0
  %5024 = vmatprep.subr.mxu0 0.0
  %5025 = vmatpush1.msra.mxu0 0.0
  %5026 = vmatprep.subr.mxu0 0.0
  %5027 = vmatpush1.msra.mxu0 0.0
  %5028 = vmatprep.subr.mxu0 0.0
  %5029 = vmatpush1.msra.mxu0 0.0
  %5030 = vmatprep.subr.mxu0 0.0
  %5031 = vmatpush1.msra.mxu0 0.0
  %5032 = vmatprep.subr.mxu0 0.0
  %5033 = vmatpush1.msra.mxu0 0.0
  %5034 = vmatprep.subr.mxu0 0.0
  %5035 = vmatpush1.msra.mxu0 0.0
  %5036 = vmatprep.subr.mxu0 0.0
  %5037 = vmatpush1.msra.mxu0 0.0
  %5038 = vmatprep.subr.mxu0 0.0
  %5039 = vmatpush1.msra.mxu0 0.0
  %5040 = vmatprep.subr.mxu0 0.0
  %5041 = vmatpush1.msra.mxu0 0.0
  %5042 = vmatprep.subr.mxu0 0.0
  %5043 = vmatpush1.msra.mxu0 0.0
  %5044 = vmatprep.mubr.f32.mxu0 0.0
  %5045 = vmatmul.mubr.f32.gmra.mrb[0].mxu0 %v4978
  %v5046 = vpop.f32.mrb[0].mxu0
  %v5047 = vadd.f32 %v4773, %v5046
  %v5048 = vpop.f32.mrb[0].mxu0
  %5049 = vdwg.mxu0
  %v5050 = vadd.f32 %v4756, %v5047
  %v5051 = vxor.u32 %v5050, 2147483648
  %v5052 = vmul.f32 %v5051, 1.442695
  %v5053 = vpow.pop %v5052
  %v5054 = vadd.f32 %v5053, 1.0
  %v5055 = vrcp.pop %v5054
  %v5056 = vmul.f32 1.0, %v5055
  %5058 = vrot.lane.b32.xlu0 %v5047, 108
  %v5059 = vpop.permute.xlu0 %5058
  %v5061 = vmul.f32 %v5056, %v5059
  %5063 = vrot.lane.b32.xlu0 %v5061, 20
  %v5064 = vpop.permute.xlu0 %5063
  %v5066 = vadd.f32 %v4756, %v5064
  %v5067 = vtanh.pop %v5066
  %v5068 = vsub.f32 1.0, %v5056
  %5070 = vrot.lane.b32.xlu0 %v5067, 118
  %v5071 = vpop.permute.xlu0 %5070
  %v5073 = vmul.f32 %v5068, %v5071
  %v5074 = vmul.f32 %v5056, %v4974
  %v5075 = vadd.f32 %v5073, %v5074
  %5077 = vrot.lane.b32.xlu0 %v5075, 118
  %v5078 = vpop.permute.xlu0 %5077
  %v5079 = vsel %vm77, %v5078, 0
  %5081 = vmatprep.subr.mxu0 0.0
  %5082 = vmatpush1.msra.mxu0 %v4765
  %5083 = vmatprep.subr.mxu0 0.0
  %5084 = vmatpush1.msra.mxu0 %v4776
  %5085 = vmatprep.subr.mxu0 0.0
  %5086 = vmatpush1.msra.mxu0 0.0
  %5087 = vmatprep.subr.mxu0 0.0
  %5088 = vmatpush1.msra.mxu0 0.0
  %5089 = vmatprep.subr.mxu0 0.0
  %5090 = vmatpush1.msra.mxu0 0.0
  %5091 = vmatprep.subr.mxu0 0.0
  %5092 = vmatpush1.msra.mxu0 0.0
  %5093 = vmatprep.subr.mxu0 0.0
  %5094 = vmatpush1.msra.mxu0 0.0
  %5095 = vmatprep.subr.mxu0 0.0
  %5096 = vmatpush1.msra.mxu0 0.0
  %5097 = vmatprep.subr.mxu0 0.0
  %5098 = vmatpush1.msra.mxu0 0.0
  %5099 = vmatprep.subr.mxu0 0.0
  %5100 = vmatpush1.msra.mxu0 0.0
  %5101 = vmatprep.subr.mxu0 0.0
  %5102 = vmatpush1.msra.mxu0 0.0
  %5103 = vmatprep.subr.mxu0 0.0
  %5104 = vmatpush1.msra.mxu0 0.0
  %5105 = vmatprep.subr.mxu0 0.0
  %5106 = vmatpush1.msra.mxu0 0.0
  %5107 = vmatprep.subr.mxu0 0.0
  %5108 = vmatpush1.msra.mxu0 0.0
  %5109 = vmatprep.subr.mxu0 0.0
  %5110 = vmatpush1.msra.mxu0 0.0
  %5111 = vmatprep.subr.mxu0 0.0
  %5112 = vmatpush1.msra.mxu0 0.0
  %5113 = vmatprep.subr.mxu0 0.0
  %5114 = vmatpush1.msra.mxu0 0.0
  %5115 = vmatprep.subr.mxu0 0.0
  %5116 = vmatpush1.msra.mxu0 0.0
  %5117 = vmatprep.subr.mxu0 0.0
  %5118 = vmatpush1.msra.mxu0 0.0
  %5119 = vmatprep.subr.mxu0 0.0
  %5120 = vmatpush1.msra.mxu0 0.0
  %5121 = vmatprep.subr.mxu0 0.0
  %5122 = vmatpush1.msra.mxu0 0.0
  %5123 = vmatprep.subr.mxu0 0.0
  %5124 = vmatpush1.msra.mxu0 0.0
  %5125 = vmatprep.subr.mxu0 0.0
  %5126 = vmatpush1.msra.mxu0 0.0
  %5127 = vmatprep.subr.mxu0 0.0
  %5128 = vmatpush1.msra.mxu0 0.0
  %5129 = vmatprep.subr.mxu0 0.0
  %5130 = vmatpush1.msra.mxu0 0.0
  %5131 = vmatprep.subr.mxu0 0.0
  %5132 = vmatpush1.msra.mxu0 0.0
  %5133 = vmatprep.subr.mxu0 0.0
  %5134 = vmatpush1.msra.mxu0 0.0
  %5135 = vmatprep.subr.mxu0 0.0
  %5136 = vmatpush1.msra.mxu0 0.0
  %5137 = vmatprep.subr.mxu0 0.0
  %5138 = vmatpush1.msra.mxu0 0.0
  %5139 = vmatprep.subr.mxu0 0.0
  %5140 = vmatpush1.msra.mxu0 0.0
  %5141 = vmatprep.subr.mxu0 0.0
  %5142 = vmatpush1.msra.mxu0 0.0
  %5143 = vmatprep.subr.mxu0 0.0
  %5144 = vmatpush1.msra.mxu0 0.0
  %5145 = vmatprep.mubr.f32.mxu0 0.0
  %5146 = vmatmul.mubr.f32.gmra.mrb[0].mxu0 %v5079
  %v5147 = vpop.f32.mrb[0].mxu0
  %v5148 = vadd.f32 %v4773, %v5147
  %v5149 = vpop.f32.mrb[0].mxu0
  %5150 = vdwg.mxu0
  %v5151 = vadd.f32 %v4761, %v5148
  %v5152 = vxor.u32 %v5151, 2147483648
  %v5153 = vmul.f32 %v5152, 1.442695
  %v5154 = vpow.pop %v5153
  %v5155 = vadd.f32 %v5154, 1.0
  %v5156 = vrcp.pop %v5155
  %v5157 = vmul.f32 1.0, %v5156
  %5159 = vrot.lane.b32.xlu0 %v5148, 108
  %v5160 = vpop.permute.xlu0 %5159
  %v5162 = vmul.f32 %v5157, %v5160
  %5164 = vrot.lane.b32.xlu0 %v5162, 20
  %v5165 = vpop.permute.xlu0 %5164
  %v5167 = vadd.f32 %v4761, %v5165
  %v5168 = vtanh.pop %v5167
  %v5169 = vsub.f32 1.0, %v5157
  %5171 = vrot.lane.b32.xlu0 %v5168, 118
  %v5172 = vpop.permute.xlu0 %5171
  %v5174 = vmul.f32 %v5169, %v5172
  %v5175 = vmul.f32 %v5157, %v5075
  %v5176 = vadd.f32 %v5174, %v5175
  %5179 = vrot.lane.b32.xlu0 %v5176, 118
  %v5180 = vpop.permute.xlu0 %5179
  %v5182 = vsel %vm2401, %v4876, %v5180
  %v5185 = vsel %vm2401, %v4977, %v5078
  %v5186 = vsel %vm2401, %v5078, %v4977
  %v5187 = vsel %vm2401, %v5180, %v4876
  %5192 = vrot.lane.b32.xlu0 %v5187, 10
  %v5193 = vpop.permute.xlu0 %5192
  %5194 = vrot.lane.b32.xlu0 %v5186, 10
  %v5195 = vpop.permute.xlu0 %5194
  %5196 = vrot.lane.b32.xlu0 %v5185, 10
  %v5197 = vpop.permute.xlu0 %5196
  %5198 = vrot.lane.b32.xlu0 %v5182, 10
  %v5199 = vpop.permute.xlu0 %5198
  %v5204 = vsel %vm77, %v5182, %v5193
  %v5205 = vsel %vm77, %v5185, %v5195
  %v5206 = vsel %vm77, %v5186, %v5197
  %v5207 = vsel %vm77, %v5187, %v5199
  %s5208 = scalar_lea.vmem %s5, 144
  %v5209 = vld [vmem:[%s5208] sm:$0xff]
  %v5210 = vld [vmem:[%s5208 + $0x8] sm:$0xff]
  %v5211 = vld [vmem:[%s5208 + $0x10] sm:$0xf]
  %s5212 = scalar_lea.vmem %s7, 6
  %v5213 = vld [vmem:[%s5212] sm:$0x1]
  %v5215 = vlaneseq
  %v5216 = vshrl.u32 %v5215, 7
  %v5217 = vsub.s32 0, %v5216
  %v5218 = vrot.slane %v5213, %v5217
  %v5221 = vsel %vm1884, %v5204, 0
  %v5224 = vsel %vm1884, %v5205, 0
  %v5227 = vsel %vm1884, %v5206, 0
  %v5230 = vsel %vm1884, %v5207, 0
  %v5233 = vsel %vm329, %v5211, 0
  %5235 = vmatprep.subr.mxu0 0.0
  %5236 = vmatpush1.msra.mxu0 %v5209
  %5237 = vmatprep.subr.mxu0 0.0
  %5238 = vmatpush1.msra.mxu0 %v5210
  %5239 = vmatprep.subr.mxu0 0.0
  %5240 = vmatpush1.msra.mxu0 %v5233
  %5241 = vmatprep.subr.mxu0 0.0
  %5242 = vmatpush1.msra.mxu0 0.0
  %5243 = vmatprep.subr.mxu0 0.0
  %5244 = vmatpush1.msra.mxu0 0.0
  %5245 = vmatprep.subr.mxu0 0.0
  %5246 = vmatpush1.msra.mxu0 0.0
  %5247 = vmatprep.subr.mxu0 0.0
  %5248 = vmatpush1.msra.mxu0 0.0
  %5249 = vmatprep.subr.mxu0 0.0
  %5250 = vmatpush1.msra.mxu0 0.0
  %5251 = vmatprep.subr.mxu0 0.0
  %5252 = vmatpush1.msra.mxu0 0.0
  %5253 = vmatprep.subr.mxu0 0.0
  %5254 = vmatpush1.msra.mxu0 0.0
  %5255 = vmatprep.subr.mxu0 0.0
  %5256 = vmatpush1.msra.mxu0 0.0
  %5257 = vmatprep.subr.mxu0 0.0
  %5258 = vmatpush1.msra.mxu0 0.0
  %5259 = vmatprep.subr.mxu0 0.0
  %5260 = vmatpush1.msra.mxu0 0.0
  %5261 = vmatprep.subr.mxu0 0.0
  %5262 = vmatpush1.msra.mxu0 0.0
  %5263 = vmatprep.subr.mxu0 0.0
  %5264 = vmatpush1.msra.mxu0 0.0
  %5265 = vmatprep.subr.mxu0 0.0
  %5266 = vmatpush1.msra.mxu0 0.0
  %5267 = vmatprep.subr.mxu0 0.0
  %5268 = vmatpush1.msra.mxu0 0.0
  %5269 = vmatprep.subr.mxu0 0.0
  %5270 = vmatpush1.msra.mxu0 0.0
  %5271 = vmatprep.subr.mxu0 0.0
  %5272 = vmatpush1.msra.mxu0 0.0
  %5273 = vmatprep.subr.mxu0 0.0
  %5274 = vmatpush1.msra.mxu0 0.0
  %5275 = vmatprep.subr.mxu0 0.0
  %5276 = vmatpush1.msra.mxu0 0.0
  %5277 = vmatprep.subr.mxu0 0.0
  %5278 = vmatpush1.msra.mxu0 0.0
  %5279 = vmatprep.subr.mxu0 0.0
  %5280 = vmatpush1.msra.mxu0 0.0
  %5281 = vmatprep.subr.mxu0 0.0
  %5282 = vmatpush1.msra.mxu0 0.0
  %5283 = vmatprep.subr.mxu0 0.0
  %5284 = vmatpush1.msra.mxu0 0.0
  %5285 = vmatprep.subr.mxu0 0.0
  %5286 = vmatpush1.msra.mxu0 0.0
  %5287 = vmatprep.subr.mxu0 0.0
  %5288 = vmatpush1.msra.mxu0 0.0
  %5289 = vmatprep.subr.mxu0 0.0
  %5290 = vmatpush1.msra.mxu0 0.0
  %5291 = vmatprep.subr.mxu0 0.0
  %5292 = vmatpush1.msra.mxu0 0.0
  %5293 = vmatprep.subr.mxu0 0.0
  %5294 = vmatpush1.msra.mxu0 0.0
  %5295 = vmatprep.subr.mxu0 0.0
  %5296 = vmatpush1.msra.mxu0 0.0
  %5297 = vmatprep.subr.mxu0 0.0
  %5298 = vmatpush1.msra.mxu0 0.0
  %5299 = vmatprep.mubr.f32.mxu0 0.0
  %5300 = vmatmul.mubr.f32.gmra.mrb[0].mxu0 %v5221
  %v5301 = vpop.f32.mrb[0].mxu0
  %v5302 = vadd.f32 %v5218, %v5301
  %v5303 = vpop.f32.mrb[0].mxu0
  %5304 = vmatprep.mubr.f32.mxu0 0.0
  %5305 = vmatmul.mubr.f32.gmra.mrb[0].mxu0 %v5224
  %v5306 = vpop.f32.mrb[0].mxu0
  %v5307 = vadd.f32 %v5218, %v5306
  %v5308 = vpop.f32.mrb[0].mxu0
  %5309 = vmatprep.mubr.f32.mxu0 0.0
  %5310 = vmatmul.mubr.f32.gmra.mrb[0].mxu0 %v5227
  %v5311 = vpop.f32.mrb[0].mxu0
  %v5312 = vadd.f32 %v5218, %v5311
  %v5313 = vpop.f32.mrb[0].mxu0
  %5314 = vmatprep.mubr.f32.mxu0 0.0
  %5315 = vmatmul.mubr.f32.gmra.mrb[0].mxu0 %v5230
  %v5316 = vpop.f32.mrb[0].mxu0
  %v5317 = vadd.f32 %v5218, %v5316
  %v5318 = vpop.f32.mrb[0].mxu0
  %5319 = vdwg.mxu0
  %s5320 = scalar_lea.vmem %s6, 96
  %v5321 = vld [vmem:[%s5320] sm:$0xff]
  %v5322 = vld [vmem:[%s5320 + $0x8] sm:$0x3]
  %s5323 = scalar_lea.vmem %s8, 6
  %v5324 = vld [vmem:[%s5323] sm:$0x1]
  %v5326 = vlaneseq
  %v5327 = vshrl.u32 %v5326, 7
  %v5328 = vsub.s32 0, %v5327
  %v5329 = vrot.slane %v5324, %v5328
  %v5332 = vsel %vm81, %v5322, 0
  %5334 = vmatprep.subr.mxu0 0.0
  %5335 = vmatpush1.msra.mxu0 %v5321
  %5336 = vmatprep.subr.mxu0 0.0
  %5337 = vmatpush1.msra.mxu0 %v5332
  %5338 = vmatprep.subr.mxu0 0.0
  %5339 = vmatpush1.msra.mxu0 0.0
  %5340 = vmatprep.subr.mxu0 0.0
  %5341 = vmatpush1.msra.mxu0 0.0
  %5342 = vmatprep.subr.mxu0 0.0
  %5343 = vmatpush1.msra.mxu0 0.0
  %5344 = vmatprep.subr.mxu0 0.0
  %5345 = vmatpush1.msra.mxu0 0.0
  %5346 = vmatprep.subr.mxu0 0.0
  %5347 = vmatpush1.msra.mxu0 0.0
  %5348 = vmatprep.subr.mxu0 0.0
  %5349 = vmatpush1.msra.mxu0 0.0
  %5350 = vmatprep.subr.mxu0 0.0
  %5351 = vmatpush1.msra.mxu0 0.0
  %5352 = vmatprep.subr.mxu0 0.0
  %5353 = vmatpush1.msra.mxu0 0.0
  %5354 = vmatprep.subr.mxu0 0.0
  %5355 = vmatpush1.msra.mxu0 0.0
  %5356 = vmatprep.subr.mxu0 0.0
  %5357 = vmatpush1.msra.mxu0 0.0
  %5358 = vmatprep.subr.mxu0 0.0
  %5359 = vmatpush1.msra.mxu0 0.0
  %5360 = vmatprep.subr.mxu0 0.0
  %5361 = vmatpush1.msra.mxu0 0.0
  %5362 = vmatprep.subr.mxu0 0.0
  %5363 = vmatpush1.msra.mxu0 0.0
  %5364 = vmatprep.subr.mxu0 0.0
  %5365 = vmatpush1.msra.mxu0 0.0
  %5366 = vmatprep.subr.mxu0 0.0
  %5367 = vmatpush1.msra.mxu0 0.0
  %5368 = vmatprep.subr.mxu0 0.0
  %5369 = vmatpush1.msra.mxu0 0.0
  %5370 = vmatprep.subr.mxu0 0.0
  %5371 = vmatpush1.msra.mxu0 0.0
  %5372 = vmatprep.subr.mxu0 0.0
  %5373 = vmatpush1.msra.mxu0 0.0
  %5374 = vmatprep.subr.mxu0 0.0
  %5375 = vmatpush1.msra.mxu0 0.0
  %5376 = vmatprep.subr.mxu0 0.0
  %5377 = vmatpush1.msra.mxu0 0.0
  %5378 = vmatprep.subr.mxu0 0.0
  %5379 = vmatpush1.msra.mxu0 0.0
  %5380 = vmatprep.subr.mxu0 0.0
  %5381 = vmatpush1.msra.mxu0 0.0
  %5382 = vmatprep.subr.mxu0 0.0
  %5383 = vmatpush1.msra.mxu0 0.0
  %5384 = vmatprep.subr.mxu0 0.0
  %5385 = vmatpush1.msra.mxu0 0.0
  %5386 = vmatprep.subr.mxu0 0.0
  %5387 = vmatpush1.msra.mxu0 0.0
  %5388 = vmatprep.subr.mxu0 0.0
  %5389 = vmatpush1.msra.mxu0 0.0
  %5390 = vmatprep.subr.mxu0 0.0
  %5391 = vmatpush1.msra.mxu0 0.0
  %5392 = vmatprep.subr.mxu0 0.0
  %5393 = vmatpush1.msra.mxu0 0.0
  %5394 = vmatprep.subr.mxu0 0.0
  %5395 = vmatpush1.msra.mxu0 0.0
  %5396 = vmatprep.subr.mxu0 0.0
  %5397 = vmatpush1.msra.mxu0 0.0
  %5398 = vmatprep.mubr.f32.mxu0 0.0
  %5399 = vmatmul.mubr.f32.gmra.mrb[0].mxu0 %v79
  %v5400 = vpop.f32.mrb[0].mxu0
  %v5401 = vadd.f32 %v5329, %v5400
  %v5402 = vpop.f32.mrb[0].mxu0
  %5403 = vdwg.mxu0
  %v5404 = vadd.f32 %v5302, %v5401
  %v5405 = vxor.u32 %v5404, 2147483648
  %v5406 = vmul.f32 %v5405, 1.442695
  %v5407 = vpow.pop %v5406
  %v5408 = vadd.f32 %v5407, 1.0
  %v5409 = vrcp.pop %v5408
  %v5410 = vmul.f32 1.0, %v5409
  %5412 = vrot.lane.b32.xlu0 %v5401, 108
  %v5413 = vpop.permute.xlu0 %5412
  %v5415 = vmul.f32 %v5410, %v5413
  %5417 = vrot.lane.b32.xlu0 %v5415, 20
  %v5418 = vpop.permute.xlu0 %5417
  %v5420 = vadd.f32 %v5302, %v5418
  %v5421 = vtanh.pop %v5420
  %v5422 = vsub.f32 1.0, %v5410
  %5424 = vrot.lane.b32.xlu0 %v5421, 118
  %v5425 = vpop.permute.xlu0 %5424
  %v5427 = vmul.f32 %v5422, %v5425
  %v5428 = vmul.f32 %v5410, 0.0
  %v5429 = vadd.f32 %v5427, %v5428
  %5431 = vrot.lane.b32.xlu0 %v5429, 118
  %v5432 = vpop.permute.xlu0 %5431
  %v5433 = vsel %vm77, %v5432, 0
  %5435 = vmatprep.subr.mxu0 0.0
  %5436 = vmatpush1.msra.mxu0 %v5321
  %5437 = vmatprep.subr.mxu0 0.0
  %5438 = vmatpush1.msra.mxu0 %v5332
  %5439 = vmatprep.subr.mxu0 0.0
  %5440 = vmatpush1.msra.mxu0 0.0
  %5441 = vmatprep.subr.mxu0 0.0
  %5442 = vmatpush1.msra.mxu0 0.0
  %5443 = vmatprep.subr.mxu0 0.0
  %5444 = vmatpush1.msra.mxu0 0.0
  %5445 = vmatprep.subr.mxu0 0.0
  %5446 = vmatpush1.msra.mxu0 0.0
  %5447 = vmatprep.subr.mxu0 0.0
  %5448 = vmatpush1.msra.mxu0 0.0
  %5449 = vmatprep.subr.mxu0 0.0
  %5450 = vmatpush1.msra.mxu0 0.0
  %5451 = vmatprep.subr.mxu0 0.0
  %5452 = vmatpush1.msra.mxu0 0.0
  %5453 = vmatprep.subr.mxu0 0.0
  %5454 = vmatpush1.msra.mxu0 0.0
  %5455 = vmatprep.subr.mxu0 0.0
  %5456 = vmatpush1.msra.mxu0 0.0
  %5457 = vmatprep.subr.mxu0 0.0
  %5458 = vmatpush1.msra.mxu0 0.0
  %5459 = vmatprep.subr.mxu0 0.0
  %5460 = vmatpush1.msra.mxu0 0.0
  %5461 = vmatprep.subr.mxu0 0.0
  %5462 = vmatpush1.msra.mxu0 0.0
  %5463 = vmatprep.subr.mxu0 0.0
  %5464 = vmatpush1.msra.mxu0 0.0
  %5465 = vmatprep.subr.mxu0 0.0
  %5466 = vmatpush1.msra.mxu0 0.0
  %5467 = vmatprep.subr.mxu0 0.0
  %5468 = vmatpush1.msra.mxu0 0.0
  %5469 = vmatprep.subr.mxu0 0.0
  %5470 = vmatpush1.msra.mxu0 0.0
  %5471 = vmatprep.subr.mxu0 0.0
  %5472 = vmatpush1.msra.mxu0 0.0
  %5473 = vmatprep.subr.mxu0 0.0
  %5474 = vmatpush1.msra.mxu0 0.0
  %5475 = vmatprep.subr.mxu0 0.0
  %5476 = vmatpush1.msra.mxu0 0.0
  %5477 = vmatprep.subr.mxu0 0.0
  %5478 = vmatpush1.msra.mxu0 0.0
  %5479 = vmatprep.subr.mxu0 0.0
  %5480 = vmatpush1.msra.mxu0 0.0
  %5481 = vmatprep.subr.mxu0 0.0
  %5482 = vmatpush1.msra.mxu0 0.0
  %5483 = vmatprep.subr.mxu0 0.0
  %5484 = vmatpush1.msra.mxu0 0.0
  %5485 = vmatprep.subr.mxu0 0.0
  %5486 = vmatpush1.msra.mxu0 0.0
  %5487 = vmatprep.subr.mxu0 0.0
  %5488 = vmatpush1.msra.mxu0 0.0
  %5489 = vmatprep.subr.mxu0 0.0
  %5490 = vmatpush1.msra.mxu0 0.0
  %5491 = vmatprep.subr.mxu0 0.0
  %5492 = vmatpush1.msra.mxu0 0.0
  %5493 = vmatprep.subr.mxu0 0.0
  %5494 = vmatpush1.msra.mxu0 0.0
  %5495 = vmatprep.subr.mxu0 0.0
  %5496 = vmatpush1.msra.mxu0 0.0
  %5497 = vmatprep.subr.mxu0 0.0
  %5498 = vmatpush1.msra.mxu0 0.0
  %5499 = vmatprep.mubr.f32.mxu0 0.0
  %5500 = vmatmul.mubr.f32.gmra.mrb[0].mxu0 %v5433
  %v5501 = vpop.f32.mrb[0].mxu0
  %v5502 = vadd.f32 %v5329, %v5501
  %v5503 = vpop.f32.mrb[0].mxu0
  %5504 = vdwg.mxu0
  %v5505 = vadd.f32 %v5307, %v5502
  %v5506 = vxor.u32 %v5505, 2147483648
  %v5507 = vmul.f32 %v5506, 1.442695
  %v5508 = vpow.pop %v5507
  %v5509 = vadd.f32 %v5508, 1.0
  %v5510 = vrcp.pop %v5509
  %v5511 = vmul.f32 1.0, %v5510
  %5513 = vrot.lane.b32.xlu0 %v5502, 108
  %v5514 = vpop.permute.xlu0 %5513
  %v5516 = vmul.f32 %v5511, %v5514
  %5518 = vrot.lane.b32.xlu0 %v5516, 20
  %v5519 = vpop.permute.xlu0 %5518
  %v5521 = vadd.f32 %v5307, %v5519
  %v5522 = vtanh.pop %v5521
  %v5523 = vsub.f32 1.0, %v5511
  %5525 = vrot.lane.b32.xlu0 %v5522, 118
  %v5526 = vpop.permute.xlu0 %5525
  %v5528 = vmul.f32 %v5523, %v5526
  %v5529 = vmul.f32 %v5511, %v5429
  %v5530 = vadd.f32 %v5528, %v5529
  %5532 = vrot.lane.b32.xlu0 %v5530, 118
  %v5533 = vpop.permute.xlu0 %5532
  %v5534 = vsel %vm77, %v5533, 0
  %5536 = vmatprep.subr.mxu0 0.0
  %5537 = vmatpush1.msra.mxu0 %v5321
  %5538 = vmatprep.subr.mxu0 0.0
  %5539 = vmatpush1.msra.mxu0 %v5332
  %5540 = vmatprep.subr.mxu0 0.0
  %5541 = vmatpush1.msra.mxu0 0.0
  %5542 = vmatprep.subr.mxu0 0.0
  %5543 = vmatpush1.msra.mxu0 0.0
  %5544 = vmatprep.subr.mxu0 0.0
  %5545 = vmatpush1.msra.mxu0 0.0
  %5546 = vmatprep.subr.mxu0 0.0
  %5547 = vmatpush1.msra.mxu0 0.0
  %5548 = vmatprep.subr.mxu0 0.0
  %5549 = vmatpush1.msra.mxu0 0.0
  %5550 = vmatprep.subr.mxu0 0.0
  %5551 = vmatpush1.msra.mxu0 0.0
  %5552 = vmatprep.subr.mxu0 0.0
  %5553 = vmatpush1.msra.mxu0 0.0
  %5554 = vmatprep.subr.mxu0 0.0
  %5555 = vmatpush1.msra.mxu0 0.0
  %5556 = vmatprep.subr.mxu0 0.0
  %5557 = vmatpush1.msra.mxu0 0.0
  %5558 = vmatprep.subr.mxu0 0.0
  %5559 = vmatpush1.msra.mxu0 0.0
  %5560 = vmatprep.subr.mxu0 0.0
  %5561 = vmatpush1.msra.mxu0 0.0
  %5562 = vmatprep.subr.mxu0 0.0
  %5563 = vmatpush1.msra.mxu0 0.0
  %5564 = vmatprep.subr.mxu0 0.0
  %5565 = vmatpush1.msra.mxu0 0.0
  %5566 = vmatprep.subr.mxu0 0.0
  %5567 = vmatpush1.msra.mxu0 0.0
  %5568 = vmatprep.subr.mxu0 0.0
  %5569 = vmatpush1.msra.mxu0 0.0
  %5570 = vmatprep.subr.mxu0 0.0
  %5571 = vmatpush1.msra.mxu0 0.0
  %5572 = vmatprep.subr.mxu0 0.0
  %5573 = vmatpush1.msra.mxu0 0.0
  %5574 = vmatprep.subr.mxu0 0.0
  %5575 = vmatpush1.msra.mxu0 0.0
  %5576 = vmatprep.subr.mxu0 0.0
  %5577 = vmatpush1.msra.mxu0 0.0
  %5578 = vmatprep.subr.mxu0 0.0
  %5579 = vmatpush1.msra.mxu0 0.0
  %5580 = vmatprep.subr.mxu0 0.0
  %5581 = vmatpush1.msra.mxu0 0.0
  %5582 = vmatprep.subr.mxu0 0.0
  %5583 = vmatpush1.msra.mxu0 0.0
  %5584 = vmatprep.subr.mxu0 0.0
  %5585 = vmatpush1.msra.mxu0 0.0
  %5586 = vmatprep.subr.mxu0 0.0
  %5587 = vmatpush1.msra.mxu0 0.0
  %5588 = vmatprep.subr.mxu0 0.0
  %5589 = vmatpush1.msra.mxu0 0.0
  %5590 = vmatprep.subr.mxu0 0.0
  %5591 = vmatpush1.msra.mxu0 0.0
  %5592 = vmatprep.subr.mxu0 0.0
  %5593 = vmatpush1.msra.mxu0 0.0
  %5594 = vmatprep.subr.mxu0 0.0
  %5595 = vmatpush1.msra.mxu0 0.0
  %5596 = vmatprep.subr.mxu0 0.0
  %5597 = vmatpush1.msra.mxu0 0.0
  %5598 = vmatprep.subr.mxu0 0.0
  %5599 = vmatpush1.msra.mxu0 0.0
  %5600 = vmatprep.mubr.f32.mxu0 0.0
  %5601 = vmatmul.mubr.f32.gmra.mrb[0].mxu0 %v5534
  %v5602 = vpop.f32.mrb[0].mxu0
  %v5603 = vadd.f32 %v5329, %v5602
  %v5604 = vpop.f32.mrb[0].mxu0
  %5605 = vdwg.mxu0
  %v5606 = vadd.f32 %v5312, %v5603
  %v5607 = vxor.u32 %v5606, 2147483648
  %v5608 = vmul.f32 %v5607, 1.442695
  %v5609 = vpow.pop %v5608
  %v5610 = vadd.f32 %v5609, 1.0
  %v5611 = vrcp.pop %v5610
  %v5612 = vmul.f32 1.0, %v5611
  %5614 = vrot.lane.b32.xlu0 %v5603, 108
  %v5615 = vpop.permute.xlu0 %5614
  %v5617 = vmul.f32 %v5612, %v5615
  %5619 = vrot.lane.b32.xlu0 %v5617, 20
  %v5620 = vpop.permute.xlu0 %5619
  %v5622 = vadd.f32 %v5312, %v5620
  %v5623 = vtanh.pop %v5622
  %v5624 = vsub.f32 1.0, %v5612
  %5626 = vrot.lane.b32.xlu0 %v5623, 118
  %v5627 = vpop.permute.xlu0 %5626
  %v5629 = vmul.f32 %v5624, %v5627
  %v5630 = vmul.f32 %v5612, %v5530
  %v5631 = vadd.f32 %v5629, %v5630
  %5633 = vrot.lane.b32.xlu0 %v5631, 118
  %v5634 = vpop.permute.xlu0 %5633
  %v5635 = vsel %vm77, %v5634, 0
  %5637 = vmatprep.subr.mxu0 0.0
  %5638 = vmatpush1.msra.mxu0 %v5321
  %5639 = vmatprep.subr.mxu0 0.0
  %5640 = vmatpush1.msra.mxu0 %v5332
  %5641 = vmatprep.subr.mxu0 0.0
  %5642 = vmatpush1.msra.mxu0 0.0
  %5643 = vmatprep.subr.mxu0 0.0
  %5644 = vmatpush1.msra.mxu0 0.0
  %5645 = vmatprep.subr.mxu0 0.0
  %5646 = vmatpush1.msra.mxu0 0.0
  %5647 = vmatprep.subr.mxu0 0.0
  %5648 = vmatpush1.msra.mxu0 0.0
  %5649 = vmatprep.subr.mxu0 0.0
  %5650 = vmatpush1.msra.mxu0 0.0
  %5651 = vmatprep.subr.mxu0 0.0
  %5652 = vmatpush1.msra.mxu0 0.0
  %5653 = vmatprep.subr.mxu0 0.0
  %5654 = vmatpush1.msra.mxu0 0.0
  %5655 = vmatprep.subr.mxu0 0.0
  %5656 = vmatpush1.msra.mxu0 0.0
  %5657 = vmatprep.subr.mxu0 0.0
  %5658 = vmatpush1.msra.mxu0 0.0
  %5659 = vmatprep.subr.mxu0 0.0
  %5660 = vmatpush1.msra.mxu0 0.0
  %5661 = vmatprep.subr.mxu0 0.0
  %5662 = vmatpush1.msra.mxu0 0.0
  %5663 = vmatprep.subr.mxu0 0.0
  %5664 = vmatpush1.msra.mxu0 0.0
  %5665 = vmatprep.subr.mxu0 0.0
  %5666 = vmatpush1.msra.mxu0 0.0
  %5667 = vmatprep.subr.mxu0 0.0
  %5668 = vmatpush1.msra.mxu0 0.0
  %5669 = vmatprep.subr.mxu0 0.0
  %5670 = vmatpush1.msra.mxu0 0.0
  %5671 = vmatprep.subr.mxu0 0.0
  %5672 = vmatpush1.msra.mxu0 0.0
  %5673 = vmatprep.subr.mxu0 0.0
  %5674 = vmatpush1.msra.mxu0 0.0
  %5675 = vmatprep.subr.mxu0 0.0
  %5676 = vmatpush1.msra.mxu0 0.0
  %5677 = vmatprep.subr.mxu0 0.0
  %5678 = vmatpush1.msra.mxu0 0.0
  %5679 = vmatprep.subr.mxu0 0.0
  %5680 = vmatpush1.msra.mxu0 0.0
  %5681 = vmatprep.subr.mxu0 0.0
  %5682 = vmatpush1.msra.mxu0 0.0
  %5683 = vmatprep.subr.mxu0 0.0
  %5684 = vmatpush1.msra.mxu0 0.0
  %5685 = vmatprep.subr.mxu0 0.0
  %5686 = vmatpush1.msra.mxu0 0.0
  %5687 = vmatprep.subr.mxu0 0.0
  %5688 = vmatpush1.msra.mxu0 0.0
  %5689 = vmatprep.subr.mxu0 0.0
  %5690 = vmatpush1.msra.mxu0 0.0
  %5691 = vmatprep.subr.mxu0 0.0
  %5692 = vmatpush1.msra.mxu0 0.0
  %5693 = vmatprep.subr.mxu0 0.0
  %5694 = vmatpush1.msra.mxu0 0.0
  %5695 = vmatprep.subr.mxu0 0.0
  %5696 = vmatpush1.msra.mxu0 0.0
  %5697 = vmatprep.subr.mxu0 0.0
  %5698 = vmatpush1.msra.mxu0 0.0
  %5699 = vmatprep.subr.mxu0 0.0
  %5700 = vmatpush1.msra.mxu0 0.0
  %5701 = vmatprep.mubr.f32.mxu0 0.0
  %5702 = vmatmul.mubr.f32.gmra.mrb[0].mxu0 %v5635
  %v5703 = vpop.f32.mrb[0].mxu0
  %v5704 = vadd.f32 %v5329, %v5703
  %v5705 = vpop.f32.mrb[0].mxu0
  %5706 = vdwg.mxu0
  %v5707 = vadd.f32 %v5317, %v5704
  %v5708 = vxor.u32 %v5707, 2147483648
  %v5709 = vmul.f32 %v5708, 1.442695
  %v5710 = vpow.pop %v5709
  %v5711 = vadd.f32 %v5710, 1.0
  %v5712 = vrcp.pop %v5711
  %v5713 = vmul.f32 1.0, %v5712
  %5715 = vrot.lane.b32.xlu0 %v5704, 108
  %v5716 = vpop.permute.xlu0 %5715
  %v5718 = vmul.f32 %v5713, %v5716
  %5720 = vrot.lane.b32.xlu0 %v5718, 20
  %v5721 = vpop.permute.xlu0 %5720
  %v5723 = vadd.f32 %v5317, %v5721
  %v5724 = vtanh.pop %v5723
  %v5725 = vsub.f32 1.0, %v5713
  %5727 = vrot.lane.b32.xlu0 %v5724, 118
  %v5728 = vpop.permute.xlu0 %5727
  %v5730 = vmul.f32 %v5725, %v5728
  %v5731 = vmul.f32 %v5713, %v5631
  %v5732 = vadd.f32 %v5730, %v5731
  %5735 = vrot.lane.b32.xlu0 %v5732, 118
  %v5736 = vpop.permute.xlu0 %5735
  %v5738 = vsel %vm2401, %v5432, %v5736
  %v5741 = vsel %vm2401, %v5533, %v5634
  %v5742 = vsel %vm2401, %v5634, %v5533
  %v5743 = vsel %vm2401, %v5736, %v5432
  %5748 = vrot.lane.b32.xlu0 %v5743, 10
  %v5749 = vpop.permute.xlu0 %5748
  %5750 = vrot.lane.b32.xlu0 %v5742, 10
  %v5751 = vpop.permute.xlu0 %5750
  %5752 = vrot.lane.b32.xlu0 %v5741, 10
  %v5753 = vpop.permute.xlu0 %5752
  %5754 = vrot.lane.b32.xlu0 %v5738, 10
  %v5755 = vpop.permute.xlu0 %5754
  %v5760 = vsel %vm77, %v5738, %v5749
  %v5761 = vsel %vm77, %v5741, %v5751
  %v5762 = vsel %vm77, %v5742, %v5753
  %v5763 = vsel %vm77, %v5743, %v5755
  %s5764 = scalar_lea.vmem %s5, 168
  %v5765 = vld [vmem:[%s5764] sm:$0xff]
  %v5766 = vld [vmem:[%s5764 + $0x8] sm:$0xff]
  %v5767 = vld [vmem:[%s5764 + $0x10] sm:$0xf]
  %s5768 = scalar_lea.vmem %s7, 7
  %v5769 = vld [vmem:[%s5768] sm:$0x1]
  %v5771 = vlaneseq
  %v5772 = vshrl.u32 %v5771, 7
  %v5773 = vsub.s32 0, %v5772
  %v5774 = vrot.slane %v5769, %v5773
  %v5777 = vsel %vm1884, %v5760, 0
  %v5780 = vsel %vm1884, %v5761, 0
  %v5783 = vsel %vm1884, %v5762, 0
  %v5786 = vsel %vm1884, %v5763, 0
  %v5789 = vsel %vm329, %v5767, 0
  %5791 = vmatprep.subr.mxu0 0.0
  %5792 = vmatpush1.msra.mxu0 %v5765
  %5793 = vmatprep.subr.mxu0 0.0
  %5794 = vmatpush1.msra.mxu0 %v5766
  %5795 = vmatprep.subr.mxu0 0.0
  %5796 = vmatpush1.msra.mxu0 %v5789
  %5797 = vmatprep.subr.mxu0 0.0
  %5798 = vmatpush1.msra.mxu0 0.0
  %5799 = vmatprep.subr.mxu0 0.0
  %5800 = vmatpush1.msra.mxu0 0.0
  %5801 = vmatprep.subr.mxu0 0.0
  %5802 = vmatpush1.msra.mxu0 0.0
  %5803 = vmatprep.subr.mxu0 0.0
  %5804 = vmatpush1.msra.mxu0 0.0
  %5805 = vmatprep.subr.mxu0 0.0
  %5806 = vmatpush1.msra.mxu0 0.0
  %5807 = vmatprep.subr.mxu0 0.0
  %5808 = vmatpush1.msra.mxu0 0.0
  %5809 = vmatprep.subr.mxu0 0.0
  %5810 = vmatpush1.msra.mxu0 0.0
  %5811 = vmatprep.subr.mxu0 0.0
  %5812 = vmatpush1.msra.mxu0 0.0
  %5813 = vmatprep.subr.mxu0 0.0
  %5814 = vmatpush1.msra.mxu0 0.0
  %5815 = vmatprep.subr.mxu0 0.0
  %5816 = vmatpush1.msra.mxu0 0.0
  %5817 = vmatprep.subr.mxu0 0.0
  %5818 = vmatpush1.msra.mxu0 0.0
  %5819 = vmatprep.subr.mxu0 0.0
  %5820 = vmatpush1.msra.mxu0 0.0
  %5821 = vmatprep.subr.mxu0 0.0
  %5822 = vmatpush1.msra.mxu0 0.0
  %5823 = vmatprep.subr.mxu0 0.0
  %5824 = vmatpush1.msra.mxu0 0.0
  %5825 = vmatprep.subr.mxu0 0.0
  %5826 = vmatpush1.msra.mxu0 0.0
  %5827 = vmatprep.subr.mxu0 0.0
  %5828 = vmatpush1.msra.mxu0 0.0
  %5829 = vmatprep.subr.mxu0 0.0
  %5830 = vmatpush1.msra.mxu0 0.0
  %5831 = vmatprep.subr.mxu0 0.0
  %5832 = vmatpush1.msra.mxu0 0.0
  %5833 = vmatprep.subr.mxu0 0.0
  %5834 = vmatpush1.msra.mxu0 0.0
  %5835 = vmatprep.subr.mxu0 0.0
  %5836 = vmatpush1.msra.mxu0 0.0
  %5837 = vmatprep.subr.mxu0 0.0
  %5838 = vmatpush1.msra.mxu0 0.0
  %5839 = vmatprep.subr.mxu0 0.0
  %5840 = vmatpush1.msra.mxu0 0.0
  %5841 = vmatprep.subr.mxu0 0.0
  %5842 = vmatpush1.msra.mxu0 0.0
  %5843 = vmatprep.subr.mxu0 0.0
  %5844 = vmatpush1.msra.mxu0 0.0
  %5845 = vmatprep.subr.mxu0 0.0
  %5846 = vmatpush1.msra.mxu0 0.0
  %5847 = vmatprep.subr.mxu0 0.0
  %5848 = vmatpush1.msra.mxu0 0.0
  %5849 = vmatprep.subr.mxu0 0.0
  %5850 = vmatpush1.msra.mxu0 0.0
  %5851 = vmatprep.subr.mxu0 0.0
  %5852 = vmatpush1.msra.mxu0 0.0
  %5853 = vmatprep.subr.mxu0 0.0
  %5854 = vmatpush1.msra.mxu0 0.0
  %5855 = vmatprep.mubr.f32.mxu0 0.0
  %5856 = vmatmul.mubr.f32.gmra.mrb[0].mxu0 %v5777
  %v5857 = vpop.f32.mrb[0].mxu0
  %v5858 = vadd.f32 %v5774, %v5857
  %v5859 = vpop.f32.mrb[0].mxu0
  %5860 = vmatprep.mubr.f32.mxu0 0.0
  %5861 = vmatmul.mubr.f32.gmra.mrb[0].mxu0 %v5780
  %v5862 = vpop.f32.mrb[0].mxu0
  %v5863 = vadd.f32 %v5774, %v5862
  %v5864 = vpop.f32.mrb[0].mxu0
  %5865 = vmatprep.mubr.f32.mxu0 0.0
  %5866 = vmatmul.mubr.f32.gmra.mrb[0].mxu0 %v5783
  %v5867 = vpop.f32.mrb[0].mxu0
  %v5868 = vadd.f32 %v5774, %v5867
  %v5869 = vpop.f32.mrb[0].mxu0
  %5870 = vmatprep.mubr.f32.mxu0 0.0
  %5871 = vmatmul.mubr.f32.gmra.mrb[0].mxu0 %v5786
  %v5872 = vpop.f32.mrb[0].mxu0
  %v5873 = vadd.f32 %v5774, %v5872
  %v5874 = vpop.f32.mrb[0].mxu0
  %5875 = vdwg.mxu0
  %s5876 = scalar_lea.vmem %s6, 112
  %v5877 = vld [vmem:[%s5876] sm:$0xff]
  %v5878 = vld [vmem:[%s5876 + $0x8] sm:$0x3]
  %s5879 = scalar_lea.vmem %s8, 7
  %v5880 = vld [vmem:[%s5879] sm:$0x1]
  %v5882 = vlaneseq
  %v5883 = vshrl.u32 %v5882, 7
  %v5884 = vsub.s32 0, %v5883
  %v5885 = vrot.slane %v5880, %v5884
  %v5888 = vsel %vm81, %v5878, 0
  %5890 = vmatprep.subr.mxu0 0.0
  %5891 = vmatpush1.msra.mxu0 %v5877
  %5892 = vmatprep.subr.mxu0 0.0
  %5893 = vmatpush1.msra.mxu0 %v5888
  %5894 = vmatprep.subr.mxu0 0.0
  %5895 = vmatpush1.msra.mxu0 0.0
  %5896 = vmatprep.subr.mxu0 0.0
  %5897 = vmatpush1.msra.mxu0 0.0
  %5898 = vmatprep.subr.mxu0 0.0
  %5899 = vmatpush1.msra.mxu0 0.0
  %5900 = vmatprep.subr.mxu0 0.0
  %5901 = vmatpush1.msra.mxu0 0.0
  %5902 = vmatprep.subr.mxu0 0.0
  %5903 = vmatpush1.msra.mxu0 0.0
  %5904 = vmatprep.subr.mxu0 0.0
  %5905 = vmatpush1.msra.mxu0 0.0
  %5906 = vmatprep.subr.mxu0 0.0
  %5907 = vmatpush1.msra.mxu0 0.0
  %5908 = vmatprep.subr.mxu0 0.0
  %5909 = vmatpush1.msra.mxu0 0.0
  %5910 = vmatprep.subr.mxu0 0.0
  %5911 = vmatpush1.msra.mxu0 0.0
  %5912 = vmatprep.subr.mxu0 0.0
  %5913 = vmatpush1.msra.mxu0 0.0
  %5914 = vmatprep.subr.mxu0 0.0
  %5915 = vmatpush1.msra.mxu0 0.0
  %5916 = vmatprep.subr.mxu0 0.0
  %5917 = vmatpush1.msra.mxu0 0.0
  %5918 = vmatprep.subr.mxu0 0.0
  %5919 = vmatpush1.msra.mxu0 0.0
  %5920 = vmatprep.subr.mxu0 0.0
  %5921 = vmatpush1.msra.mxu0 0.0
  %5922 = vmatprep.subr.mxu0 0.0
  %5923 = vmatpush1.msra.mxu0 0.0
  %5924 = vmatprep.subr.mxu0 0.0
  %5925 = vmatpush1.msra.mxu0 0.0
  %5926 = vmatprep.subr.mxu0 0.0
  %5927 = vmatpush1.msra.mxu0 0.0
  %5928 = vmatprep.subr.mxu0 0.0
  %5929 = vmatpush1.msra.mxu0 0.0
  %5930 = vmatprep.subr.mxu0 0.0
  %5931 = vmatpush1.msra.mxu0 0.0
  %5932 = vmatprep.subr.mxu0 0.0
  %5933 = vmatpush1.msra.mxu0 0.0
  %5934 = vmatprep.subr.mxu0 0.0
  %5935 = vmatpush1.msra.mxu0 0.0
  %5936 = vmatprep.subr.mxu0 0.0
  %5937 = vmatpush1.msra.mxu0 0.0
  %5938 = vmatprep.subr.mxu0 0.0
  %5939 = vmatpush1.msra.mxu0 0.0
  %5940 = vmatprep.subr.mxu0 0.0
  %5941 = vmatpush1.msra.mxu0 0.0
  %5942 = vmatprep.subr.mxu0 0.0
  %5943 = vmatpush1.msra.mxu0 0.0
  %5944 = vmatprep.subr.mxu0 0.0
  %5945 = vmatpush1.msra.mxu0 0.0
  %5946 = vmatprep.subr.mxu0 0.0
  %5947 = vmatpush1.msra.mxu0 0.0
  %5948 = vmatprep.subr.mxu0 0.0
  %5949 = vmatpush1.msra.mxu0 0.0
  %5950 = vmatprep.subr.mxu0 0.0
  %5951 = vmatpush1.msra.mxu0 0.0
  %5952 = vmatprep.subr.mxu0 0.0
  %5953 = vmatpush1.msra.mxu0 0.0
  %5954 = vmatprep.mubr.f32.mxu0 0.0
  %5955 = vmatmul.mubr.f32.gmra.mrb[0].mxu0 %v79
  %v5956 = vpop.f32.mrb[0].mxu0
  %v5957 = vadd.f32 %v5885, %v5956
  %v5958 = vpop.f32.mrb[0].mxu0
  %5959 = vdwg.mxu0
  %v5960 = vadd.f32 %v5858, %v5957
  %v5961 = vxor.u32 %v5960, 2147483648
  %v5962 = vmul.f32 %v5961, 1.442695
  %v5963 = vpow.pop %v5962
  %v5964 = vadd.f32 %v5963, 1.0
  %v5965 = vrcp.pop %v5964
  %v5966 = vmul.f32 1.0, %v5965
  %5968 = vrot.lane.b32.xlu0 %v5957, 108
  %v5969 = vpop.permute.xlu0 %5968
  %v5971 = vmul.f32 %v5966, %v5969
  %5973 = vrot.lane.b32.xlu0 %v5971, 20
  %v5974 = vpop.permute.xlu0 %5973
  %v5976 = vadd.f32 %v5858, %v5974
  %v5977 = vtanh.pop %v5976
  %v5978 = vsub.f32 1.0, %v5966
  %5980 = vrot.lane.b32.xlu0 %v5977, 118
  %v5981 = vpop.permute.xlu0 %5980
  %v5983 = vmul.f32 %v5978, %v5981
  %v5984 = vmul.f32 %v5966, 0.0
  %v5985 = vadd.f32 %v5983, %v5984
  %5987 = vrot.lane.b32.xlu0 %v5985, 118
  %v5988 = vpop.permute.xlu0 %5987
  %v5989 = vsel %vm77, %v5988, 0
  %5991 = vmatprep.subr.mxu0 0.0
  %5992 = vmatpush1.msra.mxu0 %v5877
  %5993 = vmatprep.subr.mxu0 0.0
  %5994 = vmatpush1.msra.mxu0 %v5888
  %5995 = vmatprep.subr.mxu0 0.0
  %5996 = vmatpush1.msra.mxu0 0.0
  %5997 = vmatprep.subr.mxu0 0.0
  %5998 = vmatpush1.msra.mxu0 0.0
  %5999 = vmatprep.subr.mxu0 0.0
  %6000 = vmatpush1.msra.mxu0 0.0
  %6001 = vmatprep.subr.mxu0 0.0
  %6002 = vmatpush1.msra.mxu0 0.0
  %6003 = vmatprep.subr.mxu0 0.0
  %6004 = vmatpush1.msra.mxu0 0.0
  %6005 = vmatprep.subr.mxu0 0.0
  %6006 = vmatpush1.msra.mxu0 0.0
  %6007 = vmatprep.subr.mxu0 0.0
  %6008 = vmatpush1.msra.mxu0 0.0
  %6009 = vmatprep.subr.mxu0 0.0
  %6010 = vmatpush1.msra.mxu0 0.0
  %6011 = vmatprep.subr.mxu0 0.0
  %6012 = vmatpush1.msra.mxu0 0.0
  %6013 = vmatprep.subr.mxu0 0.0
  %6014 = vmatpush1.msra.mxu0 0.0
  %6015 = vmatprep.subr.mxu0 0.0
  %6016 = vmatpush1.msra.mxu0 0.0
  %6017 = vmatprep.subr.mxu0 0.0
  %6018 = vmatpush1.msra.mxu0 0.0
  %6019 = vmatprep.subr.mxu0 0.0
  %6020 = vmatpush1.msra.mxu0 0.0
  %6021 = vmatprep.subr.mxu0 0.0
  %6022 = vmatpush1.msra.mxu0 0.0
  %6023 = vmatprep.subr.mxu0 0.0
  %6024 = vmatpush1.msra.mxu0 0.0
  %6025 = vmatprep.subr.mxu0 0.0
  %6026 = vmatpush1.msra.mxu0 0.0
  %6027 = vmatprep.subr.mxu0 0.0
  %6028 = vmatpush1.msra.mxu0 0.0
  %6029 = vmatprep.subr.mxu0 0.0
  %6030 = vmatpush1.msra.mxu0 0.0
  %6031 = vmatprep.subr.mxu0 0.0
  %6032 = vmatpush1.msra.mxu0 0.0
  %6033 = vmatprep.subr.mxu0 0.0
  %6034 = vmatpush1.msra.mxu0 0.0
  %6035 = vmatprep.subr.mxu0 0.0
  %6036 = vmatpush1.msra.mxu0 0.0
  %6037 = vmatprep.subr.mxu0 0.0
  %6038 = vmatpush1.msra.mxu0 0.0
  %6039 = vmatprep.subr.mxu0 0.0
  %6040 = vmatpush1.msra.mxu0 0.0
  %6041 = vmatprep.subr.mxu0 0.0
  %6042 = vmatpush1.msra.mxu0 0.0
  %6043 = vmatprep.subr.mxu0 0.0
  %6044 = vmatpush1.msra.mxu0 0.0
  %6045 = vmatprep.subr.mxu0 0.0
  %6046 = vmatpush1.msra.mxu0 0.0
  %6047 = vmatprep.subr.mxu0 0.0
  %6048 = vmatpush1.msra.mxu0 0.0
  %6049 = vmatprep.subr.mxu0 0.0
  %6050 = vmatpush1.msra.mxu0 0.0
  %6051 = vmatprep.subr.mxu0 0.0
  %6052 = vmatpush1.msra.mxu0 0.0
  %6053 = vmatprep.subr.mxu0 0.0
  %6054 = vmatpush1.msra.mxu0 0.0
  %6055 = vmatprep.mubr.f32.mxu0 0.0
  %6056 = vmatmul.mubr.f32.gmra.mrb[0].mxu0 %v5989
  %v6057 = vpop.f32.mrb[0].mxu0
  %v6058 = vadd.f32 %v5885, %v6057
  %v6059 = vpop.f32.mrb[0].mxu0
  %6060 = vdwg.mxu0
  %v6061 = vadd.f32 %v5863, %v6058
  %v6062 = vxor.u32 %v6061, 2147483648
  %v6063 = vmul.f32 %v6062, 1.442695
  %v6064 = vpow.pop %v6063
  %v6065 = vadd.f32 %v6064, 1.0
  %v6066 = vrcp.pop %v6065
  %v6067 = vmul.f32 1.0, %v6066
  %6069 = vrot.lane.b32.xlu0 %v6058, 108
  %v6070 = vpop.permute.xlu0 %6069
  %v6072 = vmul.f32 %v6067, %v6070
  %6074 = vrot.lane.b32.xlu0 %v6072, 20
  %v6075 = vpop.permute.xlu0 %6074
  %v6077 = vadd.f32 %v5863, %v6075
  %v6078 = vtanh.pop %v6077
  %v6079 = vsub.f32 1.0, %v6067
  %6081 = vrot.lane.b32.xlu0 %v6078, 118
  %v6082 = vpop.permute.xlu0 %6081
  %v6084 = vmul.f32 %v6079, %v6082
  %v6085 = vmul.f32 %v6067, %v5985
  %v6086 = vadd.f32 %v6084, %v6085
  %6088 = vrot.lane.b32.xlu0 %v6086, 118
  %v6089 = vpop.permute.xlu0 %6088
  %v6090 = vsel %vm77, %v6089, 0
  %6092 = vmatprep.subr.mxu0 0.0
  %6093 = vmatpush1.msra.mxu0 %v5877
  %6094 = vmatprep.subr.mxu0 0.0
  %6095 = vmatpush1.msra.mxu0 %v5888
  %6096 = vmatprep.subr.mxu0 0.0
  %6097 = vmatpush1.msra.mxu0 0.0
  %6098 = vmatprep.subr.mxu0 0.0
  %6099 = vmatpush1.msra.mxu0 0.0
  %6100 = vmatprep.subr.mxu0 0.0
  %6101 = vmatpush1.msra.mxu0 0.0
  %6102 = vmatprep.subr.mxu0 0.0
  %6103 = vmatpush1.msra.mxu0 0.0
  %6104 = vmatprep.subr.mxu0 0.0
  %6105 = vmatpush1.msra.mxu0 0.0
  %6106 = vmatprep.subr.mxu0 0.0
  %6107 = vmatpush1.msra.mxu0 0.0
  %6108 = vmatprep.subr.mxu0 0.0
  %6109 = vmatpush1.msra.mxu0 0.0
  %6110 = vmatprep.subr.mxu0 0.0
  %6111 = vmatpush1.msra.mxu0 0.0
  %6112 = vmatprep.subr.mxu0 0.0
  %6113 = vmatpush1.msra.mxu0 0.0
  %6114 = vmatprep.subr.mxu0 0.0
  %6115 = vmatpush1.msra.mxu0 0.0
  %6116 = vmatprep.subr.mxu0 0.0
  %6117 = vmatpush1.msra.mxu0 0.0
  %6118 = vmatprep.subr.mxu0 0.0
  %6119 = vmatpush1.msra.mxu0 0.0
  %6120 = vmatprep.subr.mxu0 0.0
  %6121 = vmatpush1.msra.mxu0 0.0
  %6122 = vmatprep.subr.mxu0 0.0
  %6123 = vmatpush1.msra.mxu0 0.0
  %6124 = vmatprep.subr.mxu0 0.0
  %6125 = vmatpush1.msra.mxu0 0.0
  %6126 = vmatprep.subr.mxu0 0.0
  %6127 = vmatpush1.msra.mxu0 0.0
  %6128 = vmatprep.subr.mxu0 0.0
  %6129 = vmatpush1.msra.mxu0 0.0
  %6130 = vmatprep.subr.mxu0 0.0
  %6131 = vmatpush1.msra.mxu0 0.0
  %6132 = vmatprep.subr.mxu0 0.0
  %6133 = vmatpush1.msra.mxu0 0.0
  %6134 = vmatprep.subr.mxu0 0.0
  %6135 = vmatpush1.msra.mxu0 0.0
  %6136 = vmatprep.subr.mxu0 0.0
  %6137 = vmatpush1.msra.mxu0 0.0
  %6138 = vmatprep.subr.mxu0 0.0
  %6139 = vmatpush1.msra.mxu0 0.0
  %6140 = vmatprep.subr.mxu0 0.0
  %6141 = vmatpush1.msra.mxu0 0.0
  %6142 = vmatprep.subr.mxu0 0.0
  %6143 = vmatpush1.msra.mxu0 0.0
  %6144 = vmatprep.subr.mxu0 0.0
  %6145 = vmatpush1.msra.mxu0 0.0
  %6146 = vmatprep.subr.mxu0 0.0
  %6147 = vmatpush1.msra.mxu0 0.0
  %6148 = vmatprep.subr.mxu0 0.0
  %6149 = vmatpush1.msra.mxu0 0.0
  %6150 = vmatprep.subr.mxu0 0.0
  %6151 = vmatpush1.msra.mxu0 0.0
  %6152 = vmatprep.subr.mxu0 0.0
  %6153 = vmatpush1.msra.mxu0 0.0
  %6154 = vmatprep.subr.mxu0 0.0
  %6155 = vmatpush1.msra.mxu0 0.0
  %6156 = vmatprep.mubr.f32.mxu0 0.0
  %6157 = vmatmul.mubr.f32.gmra.mrb[0].mxu0 %v6090
  %v6158 = vpop.f32.mrb[0].mxu0
  %v6159 = vadd.f32 %v5885, %v6158
  %v6160 = vpop.f32.mrb[0].mxu0
  %6161 = vdwg.mxu0
  %v6162 = vadd.f32 %v5868, %v6159
  %v6163 = vxor.u32 %v6162, 2147483648
  %v6164 = vmul.f32 %v6163, 1.442695
  %v6165 = vpow.pop %v6164
  %v6166 = vadd.f32 %v6165, 1.0
  %v6167 = vrcp.pop %v6166
  %v6168 = vmul.f32 1.0, %v6167
  %6170 = vrot.lane.b32.xlu0 %v6159, 108
  %v6171 = vpop.permute.xlu0 %6170
  %v6173 = vmul.f32 %v6168, %v6171
  %6175 = vrot.lane.b32.xlu0 %v6173, 20
  %v6176 = vpop.permute.xlu0 %6175
  %v6178 = vadd.f32 %v5868, %v6176
  %v6179 = vtanh.pop %v6178
  %v6180 = vsub.f32 1.0, %v6168
  %6182 = vrot.lane.b32.xlu0 %v6179, 118
  %v6183 = vpop.permute.xlu0 %6182
  %v6185 = vmul.f32 %v6180, %v6183
  %v6186 = vmul.f32 %v6168, %v6086
  %v6187 = vadd.f32 %v6185, %v6186
  %6189 = vrot.lane.b32.xlu0 %v6187, 118
  %v6190 = vpop.permute.xlu0 %6189
  %v6191 = vsel %vm77, %v6190, 0
  %6193 = vmatprep.subr.mxu0 0.0
  %6194 = vmatpush1.msra.mxu0 %v5877
  %6195 = vmatprep.subr.mxu0 0.0
  %6196 = vmatpush1.msra.mxu0 %v5888
  %6197 = vmatprep.subr.mxu0 0.0
  %6198 = vmatpush1.msra.mxu0 0.0
  %6199 = vmatprep.subr.mxu0 0.0
  %6200 = vmatpush1.msra.mxu0 0.0
  %6201 = vmatprep.subr.mxu0 0.0
  %6202 = vmatpush1.msra.mxu0 0.0
  %6203 = vmatprep.subr.mxu0 0.0
  %6204 = vmatpush1.msra.mxu0 0.0
  %6205 = vmatprep.subr.mxu0 0.0
  %6206 = vmatpush1.msra.mxu0 0.0
  %6207 = vmatprep.subr.mxu0 0.0
  %6208 = vmatpush1.msra.mxu0 0.0
  %6209 = vmatprep.subr.mxu0 0.0
  %6210 = vmatpush1.msra.mxu0 0.0
  %6211 = vmatprep.subr.mxu0 0.0
  %6212 = vmatpush1.msra.mxu0 0.0
  %6213 = vmatprep.subr.mxu0 0.0
  %6214 = vmatpush1.msra.mxu0 0.0
  %6215 = vmatprep.subr.mxu0 0.0
  %6216 = vmatpush1.msra.mxu0 0.0
  %6217 = vmatprep.subr.mxu0 0.0
  %6218 = vmatpush1.msra.mxu0 0.0
  %6219 = vmatprep.subr.mxu0 0.0
  %6220 = vmatpush1.msra.mxu0 0.0
  %6221 = vmatprep.subr.mxu0 0.0
  %6222 = vmatpush1.msra.mxu0 0.0
  %6223 = vmatprep.subr.mxu0 0.0
  %6224 = vmatpush1.msra.mxu0 0.0
  %6225 = vmatprep.subr.mxu0 0.0
  %6226 = vmatpush1.msra.mxu0 0.0
  %6227 = vmatprep.subr.mxu0 0.0
  %6228 = vmatpush1.msra.mxu0 0.0
  %6229 = vmatprep.subr.mxu0 0.0
  %6230 = vmatpush1.msra.mxu0 0.0
  %6231 = vmatprep.subr.mxu0 0.0
  %6232 = vmatpush1.msra.mxu0 0.0
  %6233 = vmatprep.subr.mxu0 0.0
  %6234 = vmatpush1.msra.mxu0 0.0
  %6235 = vmatprep.subr.mxu0 0.0
  %6236 = vmatpush1.msra.mxu0 0.0
  %6237 = vmatprep.subr.mxu0 0.0
  %6238 = vmatpush1.msra.mxu0 0.0
  %6239 = vmatprep.subr.mxu0 0.0
  %6240 = vmatpush1.msra.mxu0 0.0
  %6241 = vmatprep.subr.mxu0 0.0
  %6242 = vmatpush1.msra.mxu0 0.0
  %6243 = vmatprep.subr.mxu0 0.0
  %6244 = vmatpush1.msra.mxu0 0.0
  %6245 = vmatprep.subr.mxu0 0.0
  %6246 = vmatpush1.msra.mxu0 0.0
  %6247 = vmatprep.subr.mxu0 0.0
  %6248 = vmatpush1.msra.mxu0 0.0
  %6249 = vmatprep.subr.mxu0 0.0
  %6250 = vmatpush1.msra.mxu0 0.0
  %6251 = vmatprep.subr.mxu0 0.0
  %6252 = vmatpush1.msra.mxu0 0.0
  %6253 = vmatprep.subr.mxu0 0.0
  %6254 = vmatpush1.msra.mxu0 0.0
  %6255 = vmatprep.subr.mxu0 0.0
  %6256 = vmatpush1.msra.mxu0 0.0
  %6257 = vmatprep.mubr.f32.mxu0 0.0
  %6258 = vmatmul.mubr.f32.gmra.mrb[0].mxu0 %v6191
  %v6259 = vpop.f32.mrb[0].mxu0
  %v6260 = vadd.f32 %v5885, %v6259
  %v6261 = vpop.f32.mrb[0].mxu0
  %6262 = vdwg.mxu0
  %v6263 = vadd.f32 %v5873, %v6260
  %v6264 = vxor.u32 %v6263, 2147483648
  %v6265 = vmul.f32 %v6264, 1.442695
  %v6266 = vpow.pop %v6265
  %v6267 = vadd.f32 %v6266, 1.0
  %v6268 = vrcp.pop %v6267
  %v6269 = vmul.f32 1.0, %v6268
  %6271 = vrot.lane.b32.xlu0 %v6260, 108
  %v6272 = vpop.permute.xlu0 %6271
  %v6274 = vmul.f32 %v6269, %v6272
  %6276 = vrot.lane.b32.xlu0 %v6274, 20
  %v6277 = vpop.permute.xlu0 %6276
  %v6279 = vadd.f32 %v5873, %v6277
  %v6280 = vtanh.pop %v6279
  %v6281 = vsub.f32 1.0, %v6269
  %6283 = vrot.lane.b32.xlu0 %v6280, 118
  %v6284 = vpop.permute.xlu0 %6283
  %v6286 = vmul.f32 %v6281, %v6284
  %v6287 = vmul.f32 %v6269, %v6187
  %v6288 = vadd.f32 %v6286, %v6287
  %6291 = vrot.lane.b32.xlu0 %v6288, 118
  %v6292 = vpop.permute.xlu0 %6291
  %v6294 = vsel %vm2401, %v5988, %v6292
  %v6297 = vsel %vm2401, %v6089, %v6190
  %v6298 = vsel %vm2401, %v6190, %v6089
  %v6299 = vsel %vm2401, %v6292, %v5988
  %v6300 = vld [vmem:[%s9] sm:$0xff]
  %v6301 = vld [vmem:[%s9 + $0x8] sm:$0x3]
  %v6302 = vld [vmem:[%s10] sm:$0x1]
  %v6304 = vlaneseq
  %v6305 = vshrl.u32 %v6304, 7
  %v6306 = vsub.s32 0, %v6305
  %v6307 = vrot.slane %v6302, %v6306
  %v6310 = vsel %vm77, %v6294, 0
  %v6313 = vsel %vm77, %v6297, 0
  %v6316 = vsel %vm77, %v6298, 0
  %v6319 = vsel %vm77, %v6299, 0
  %v6322 = vsel %vm81, %v6301, 0
  %6324 = vmatprep.subr.mxu0 0.0
  %6325 = vmatpush1.msra.mxu0 %v6300
  %6326 = vmatprep.subr.mxu0 0.0
  %6327 = vmatpush1.msra.mxu0 %v6322
  %6328 = vmatprep.subr.mxu0 0.0
  %6329 = vmatpush1.msra.mxu0 0.0
  %6330 = vmatprep.subr.mxu0 0.0
  %6331 = vmatpush1.msra.mxu0 0.0
  %6332 = vmatprep.subr.mxu0 0.0
  %6333 = vmatpush1.msra.mxu0 0.0
  %6334 = vmatprep.subr.mxu0 0.0
  %6335 = vmatpush1.msra.mxu0 0.0
  %6336 = vmatprep.subr.mxu0 0.0
  %6337 = vmatpush1.msra.mxu0 0.0
  %6338 = vmatprep.subr.mxu0 0.0
  %6339 = vmatpush1.msra.mxu0 0.0
  %6340 = vmatprep.subr.mxu0 0.0
  %6341 = vmatpush1.msra.mxu0 0.0
  %6342 = vmatprep.subr.mxu0 0.0
  %6343 = vmatpush1.msra.mxu0 0.0
  %6344 = vmatprep.subr.mxu0 0.0
  %6345 = vmatpush1.msra.mxu0 0.0
  %6346 = vmatprep.subr.mxu0 0.0
  %6347 = vmatpush1.msra.mxu0 0.0
  %6348 = vmatprep.subr.mxu0 0.0
  %6349 = vmatpush1.msra.mxu0 0.0
  %6350 = vmatprep.subr.mxu0 0.0
  %6351 = vmatpush1.msra.mxu0 0.0
  %6352 = vmatprep.subr.mxu0 0.0
  %6353 = vmatpush1.msra.mxu0 0.0
  %6354 = vmatprep.subr.mxu0 0.0
  %6355 = vmatpush1.msra.mxu0 0.0
  %6356 = vmatprep.subr.mxu0 0.0
  %6357 = vmatpush1.msra.mxu0 0.0
  %6358 = vmatprep.subr.mxu0 0.0
  %6359 = vmatpush1.msra.mxu0 0.0
  %6360 = vmatprep.subr.mxu0 0.0
  %6361 = vmatpush1.msra.mxu0 0.0
  %6362 = vmatprep.subr.mxu0 0.0
  %6363 = vmatpush1.msra.mxu0 0.0
  %6364 = vmatprep.subr.mxu0 0.0
  %6365 = vmatpush1.msra.mxu0 0.0
  %6366 = vmatprep.subr.mxu0 0.0
  %6367 = vmatpush1.msra.mxu0 0.0
  %6368 = vmatprep.subr.mxu0 0.0
  %6369 = vmatpush1.msra.mxu0 0.0
  %6370 = vmatprep.subr.mxu0 0.0
  %6371 = vmatpush1.msra.mxu0 0.0
  %6372 = vmatprep.subr.mxu0 0.0
  %6373 = vmatpush1.msra.mxu0 0.0
  %6374 = vmatprep.subr.mxu0 0.0
  %6375 = vmatpush1.msra.mxu0 0.0
  %6376 = vmatprep.subr.mxu0 0.0
  %6377 = vmatpush1.msra.mxu0 0.0
  %6378 = vmatprep.subr.mxu0 0.0
  %6379 = vmatpush1.msra.mxu0 0.0
  %6380 = vmatprep.subr.mxu0 0.0
  %6381 = vmatpush1.msra.mxu0 0.0
  %6382 = vmatprep.subr.mxu0 0.0
  %6383 = vmatpush1.msra.mxu0 0.0
  %6384 = vmatprep.subr.mxu0 0.0
  %6385 = vmatpush1.msra.mxu0 0.0
  %6386 = vmatprep.subr.mxu0 0.0
  %6387 = vmatpush1.msra.mxu0 0.0
  %6388 = vmatprep.mubr.f32.mxu0 0.0
  %6389 = vmatmul.mubr.f32.gmra.mrb[0].mxu0 %v6310
  %v6390 = vpop.f32.mrb[0].mxu0
  %v6391 = vadd.f32 %v6307, %v6390
  %v6392 = vpop.f32.mrb[0].mxu0
  %6393 = vmatprep.mubr.f32.mxu0 0.0
  %6394 = vmatmul.mubr.f32.gmra.mrb[0].mxu0 %v6313
  %v6395 = vpop.f32.mrb[0].mxu0
  %v6396 = vadd.f32 %v6307, %v6395
  %v6397 = vpop.f32.mrb[0].mxu0
  %6398 = vmatprep.mubr.f32.mxu0 0.0
  %6399 = vmatmul.mubr.f32.gmra.mrb[0].mxu0 %v6316
  %v6400 = vpop.f32.mrb[0].mxu0
  %v6401 = vadd.f32 %v6307, %v6400
  %v6402 = vpop.f32.mrb[0].mxu0
  %6403 = vmatprep.mubr.f32.mxu0 0.0
  %6404 = vmatmul.mubr.f32.gmra.mrb[0].mxu0 %v6319
  %v6405 = vpop.f32.mrb[0].mxu0
  %v6406 = vadd.f32 %v6307, %v6405
  %v6407 = vpop.f32.mrb[0].mxu0
  %6408 = vdwg.mxu0
  %6409 = vst.msk [vmem:[%s11] sm:$0xff] %vm316, %v6391
  %6410 = vst.msk [vmem:[%s11 + $0x8] sm:$0xff] %vm316, %v6396
  %6411 = vst.msk [vmem:[%s11 + $0x10] sm:$0xff] %vm316, %v6401
  %6412 = vst.msk [vmem:[%s11 + $0x18] sm:$0xff] %vm316, %v6406
  // Predicated region
  $region46: #{model_forward.1} parent=0 // pred_check
    _
  $region47: #{model_forward.1} parent=0 // pred_check_branch
    %6414 = sbr.rel (0) target = $region49
  $region48: #{model_forward.1} parent=0 // pred_region
    _
  $region49: #{model_forward.1} parent=0 // pred_fallthru
    _
  // Predicated region
  $region50: #{model_forward.1} parent=0 // pred_check
    _
  $region51: #{model_forward.1} parent=0 // pred_check_branch
    %6416 = sbr.rel (0) target = $region53
  $region52: #{model_forward.1} parent=0 // pred_region
    _
  $region53: #{model_forward.1} parent=0 // pred_fallthru
    _

</llo_original>
